<compile_context>
chip_gen: v6e
topology: v6e:2x2x1
jax: 0.10.0
libtpu: 0.0.40
codegen_flags: <defaults>
</compile_context>

<pallas_src>
import functools

import jax
import jax.numpy as jnp
from jax.experimental import pallas as pl
from jax.experimental.pallas import tpu as pltpu


# --------------------------------------------------------------------------
# helpers
# --------------------------------------------------------------------------

def _pad_to(x, m):
    return ((x + m - 1) // m) * m


# --------------------------------------------------------------------------
# Fused conv(GEMM) + BatchNorm(batch stats) + residual + ReLU Pallas kernel
# --------------------------------------------------------------------------

def _fused_conv_bn_kernel(a_ref, b_ref, gamma_ref, beta_ref, *rest,
                          relu, has_res, m_real, eps):
    """One conv layer in a single kernel.

    grid = (Kp // tk,)  ("arbitrary"):
      * every step: acc += A_tile @ B_tile on the MXU (bf16 in, f32 acc)
      * k == last : per-channel mean / centered variance over the real rows of
                    the in-VMEM accumulator, scale/shift, (+residual), (+ReLU),
                    bf16 store.  No intermediate slab ever touches HBM.
    """
    if has_res:
        res_ref, o_ref, acc_ref = rest
    else:
        o_ref, acc_ref = rest

    @pl.when(pl.program_id(0) == 0)
    def _init():
        acc_ref[...] = jnp.zeros_like(acc_ref)

    acc_ref[...] += jnp.dot(a_ref[...], b_ref[...],
                            preferred_element_type=jnp.float32)

    @pl.when(pl.program_id(0) == pl.num_programs(0) - 1)
    def _epilogue():
        acc = acc_ref[...]                                   # (Mp, Np) f32
        inv_m = 1.0 / float(m_real)
        # Padded rows of A are zero, so they contribute 0 to the sum.
        mean = jnp.sum(acc, axis=0, keepdims=True) * inv_m
        # Exact two-pass (centered) variance, masking the zero-padded rows.
        row = jax.lax.broadcasted_iota(jnp.int32, acc.shape, 0)
        centered = jnp.where(row < m_real, acc - mean, 0.0)
        var = jnp.sum(centered * centered, axis=0, keepdims=True) * inv_m
        scale = gamma_ref[...] * jax.lax.rsqrt(var + eps)
        shift = beta_ref[...] - mean * scale
        y = acc * scale + shift                              # f32 vector math
        if has_res:
            y = y + res_ref[...].astype(jnp.float32)
        if relu:
            y = jnp.maximum(y, 0.0)
        o_ref[...] = y.astype(o_ref.dtype)                   # bf16 store


def fused_conv_bn(a_bf16, b_bf16, gamma, beta, residual_bf16, relu, m_real,
                  eps=1e-5):
    """(Mp,Kp)bf16 @ (Kp,Np)bf16 -> BN(batch) -> (+res) -> (+ReLU) -> (Mp,Np)bf16."""
    mp, kp = a_bf16.shape
    kp2, np_ = b_bf16.shape
    assert kp == kp2 and mp % 16 == 0 and kp % 128 == 0 and np_ % 128 == 0

    tk = 256 if kp % 256 == 0 else 128       # full-depth MXU tiles (v6e/v7x);
    grid = (kp // tk,)                       # 128 also matches v5e MXU depth.

    has_res = residual_bf16 is not None
    kern = functools.partial(_fused_conv_bn_kernel, relu=relu,
                             has_res=has_res, m_real=int(m_real), eps=eps)

    in_specs = [pl.BlockSpec((mp, tk), lambda k: (0, k)),
                pl.BlockSpec((tk, np_), lambda k: (k, 0)),
                pl.BlockSpec((1, np_), lambda k: (0, 0)),
                pl.BlockSpec((1, np_), lambda k: (0, 0))]
    args = [a_bf16, b_bf16, gamma, beta]
    if has_res:
        in_specs.append(pl.BlockSpec((mp, np_), lambda k: (0, 0)))
        args.append(residual_bf16)

    bytes_accessed = (mp * kp * 2 + kp * np_ * 2 + mp * np_ * 2
                      + (mp * np_ * 2 if has_res else 0) + 2 * np_ * 4)
    return pl.pallas_call(
        kern,
        grid=grid,
        out_shape=jax.ShapeDtypeStruct((mp, np_), jnp.bfloat16),
        in_specs=in_specs,
        out_specs=pl.BlockSpec((mp, np_), lambda k: (0, 0)),
        scratch_shapes=[pltpu.VMEM((mp, np_), jnp.float32)],
        compiler_params=pltpu.CompilerParams(
            dimension_semantics=("arbitrary",),
            vmem_limit_bytes=32 * 1024 * 1024),
        cost_estimate=pl.CostEstimate(
            flops=2 * mp * kp * np_,
            transcendentals=np_,
            bytes_accessed=bytes_accessed),
    )(*args)


# --------------------------------------------------------------------------
# Plain-JAX glue: im2col, conv wrapper, pooling, heads, loss
# --------------------------------------------------------------------------

def _im2col(x, kh, kw, stride, pad):
    """x (N,H,W,C) -> ((N*Ho*Wo, kh*kw*C), Ho, Wo); feature order (kh,kw,C)."""
    n, h, w, c = x.shape
    xp = jnp.pad(x, ((0, 0), (pad, pad), (pad, pad), (0, 0)))
    ho = (h + 2 * pad - kh) // stride + 1
    wo = (w + 2 * pad - kw) // stride + 1
    cols = [xp[:, i:i + stride * ho:stride, j:j + stride * wo:stride, :]
            for i in range(kh) for j in range(kw)]
    patches = jnp.stack(cols, axis=3)                     # (N,Ho,Wo,kh*kw,C)
    return patches.reshape(n * ho * wo, kh * kw * c), ho, wo


def conv_bn_act(x, w, bn_p, stride, pad, relu=True, residual=None, eps=1e-5):
    """One fused pallas_call per conv layer.  x: NHWC bf16; w: (kh,kw,Cin,Cout)."""
    n = x.shape[0]
    kh, kw, cin, cout = w.shape

    patches, ho, wo = _im2col(x.astype(jnp.bfloat16), kh, kw, stride, pad)
    m, k = patches.shape

    # Alignment padding: M->16 (bf16 sublanes), K->128, N->128 (lane-dense).
    mp = _pad_to(m, 16)
    kp = _pad_to(k, 128)
    np_ = _pad_to(cout, 128)
    a = jnp.pad(patches, ((0, mp - m), (0, kp - k)))
    b = jnp.pad(w.reshape(k, cout).astype(jnp.bfloat16),
                ((0, kp - k), (0, np_ - cout)))
    gamma = jnp.pad(bn_p["gamma"], ((0, 0), (0, np_ - cout)))
    beta = jnp.pad(bn_p["beta"], ((0, 0), (0, np_ - cout)))

    res = None
    if residual is not None:
        r = residual.reshape(m, cout).astype(jnp.bfloat16)
        res = jnp.pad(r, ((0, mp - m), (0, np_ - cout)))

    y = fused_conv_bn(a, b, gamma, beta, res, relu, m, eps)   # (Mp, Np) bf16
    return y[:m, :cout].reshape(n, ho, wo, cout)


def maxpool2d(x, k=3, stride=2, pad=1):
    """Running-max tree over the 9 shifted views (XLA fuses; no 9x stack)."""
    n, h, w, c = x.shape
    xp = jnp.pad(x, ((0, 0), (pad, pad), (pad, pad), (0, 0)),
                 constant_values=-jnp.inf)
    ho = (h + 2 * pad - k) // stride + 1
    wo = (w + 2 * pad - k) // stride + 1
    out = None
    for i in range(k):
        for j in range(k):
            v = xp[:, i:i + stride * ho:stride, j:j + stride * wo:stride, :]
            out = v if out is None else jnp.maximum(out, v)
    return out


def basic_block(x, p, stride):
    out = conv_bn_act(x, p["conv1"], p["bn1"], stride=stride, pad=1, relu=True)
    if "down_conv" in p:
        sc = conv_bn_act(x, p["down_conv"], p["down_bn"], stride=stride, pad=0,
                         relu=False)
    else:
        sc = x
    # conv2 + BN + residual add + ReLU fused inside the single pallas_call.
    return conv_bn_act(out, p["conv2"], p["bn2"], stride=1, pad=1, relu=True,
                       residual=sc)


def global_avg_pool(x):
    # Tiny (B<=2, HW<=64) reduction -> pure XLA per perf review.
    return jnp.mean(x.astype(jnp.float32), axis=(1, 2))


def aux_head(x, bn_p, eps=1e-5):
    """AdaptiveAvgPool2d(1) + Flatten + BatchNorm1d (tiny -> plain XLA)."""
    pooled = global_avg_pool(x)                           # (B, C) f32
    mean = jnp.mean(pooled, axis=0, keepdims=True)
    var = jnp.mean((pooled - mean) ** 2, axis=0, keepdims=True)
    return (pooled - mean) * jax.lax.rsqrt(var + eps) * bn_p["gamma"] \
        + bn_p["beta"]


def _linear(f, p):
    # (B,C)x(C,1): launch-overhead dominated -> plain XLA per perf review.
    return jnp.dot(f, p["w"]) + p["b"]


def _bce_mean(logits, y):
    z = logits.reshape(-1)
    per = jnp.maximum(z, 0.0) - z * y + jnp.log1p(jnp.exp(-jnp.abs(z)))
    return jnp.mean(per)


# ----------------------------- parameters ---------------------------------

def init_params(key, stem_ch=16, channels=(16, 32, 64, 128)):
    keys = iter(jax.random.split(key, 128))

    def conv_w(cin, cout, k):
        fan = k * k * cin
        return (jax.random.normal(next(keys), (k, k, cin, cout), jnp.float32)
                / jnp.sqrt(float(fan)))

    def bn_p(c):
        return {"gamma": 1.0 + 0.1 * jax.random.normal(next(keys), (1, c), jnp.float32),
                "beta": 0.1 * jax.random.normal(next(keys), (1, c), jnp.float32)}

    def lin_p(cin, cout=1):
        return {"w": jax.random.normal(next(keys), (cin, cout), jnp.float32)
                      / jnp.sqrt(float(cin)),
                "b": 0.01 * jax.random.normal(next(keys), (1, cout), jnp.float32)}

    def block_p(cin, cout, stride):
        p = {"conv1": conv_w(cin, cout, 3), "bn1": bn_p(cout),
             "conv2": conv_w(cout, cout, 3), "bn2": bn_p(cout)}
        if stride != 1 or cin != cout:
            p["down_conv"] = conv_w(cin, cout, 1)
            p["down_bn"] = bn_p(cout)
        return p

    c1, c2, c3, c4 = channels
    num_features = c4 + c1 + c2 + c3
    return {
        "conv1": conv_w(1, stem_ch, 7), "bn1": bn_p(stem_ch),
        "layer1": block_p(stem_ch, c1, 1),
        "layer2": block_p(c1, c2, 2),
        "layer3": block_p(c2, c3, 2),
        "layer4": block_p(c3, c4, 2),
        "aux_bn1": bn_p(c1), "aux_bn2": bn_p(c2), "aux_bn4": bn_p(c3),
        "aux_lin1": lin_p(c1), "aux_lin2": lin_p(c2), "aux_lin4": lin_p(c3),
        "linear": lin_p(num_features),
    }


# ------------------------------ forward -----------------------------------

def resnet_forward(params, images_nchw, labels):
    """images_nchw: (B, 1, H, W) float32 ; labels: (B,) float in {0,1}.
    Returns (loss_scalar, logits (B,1), features (B, num_features))."""
    # NHWC, bf16 activations (f32 accumulation inside each fused conv kernel).
    x = jnp.transpose(images_nchw, (0, 2, 3, 1)).astype(jnp.bfloat16)

    # stem: conv1 -> bn1 -> act1 -> maxpool
    x = conv_bn_act(x, params["conv1"], params["bn1"], stride=2, pad=3, relu=True)
    x = maxpool2d(x, k=3, stride=2, pad=1)

    x = basic_block(x, params["layer1"], stride=1)
    f1 = aux_head(x, params["aux_bn1"])
    x = basic_block(x, params["layer2"], stride=2)
    f2 = aux_head(x, params["aux_bn2"])
    x = basic_block(x, params["layer3"], stride=2)
    f4 = aux_head(x, params["aux_bn4"])
    x = basic_block(x, params["layer4"], stride=2)
    fg = global_avg_pool(x)                                 # backbone global_pool

    logits1 = _linear(f1, params["aux_lin1"])
    logits2 = _linear(f2, params["aux_lin2"])
    logits4 = _linear(f4, params["aux_lin4"])

    features = jnp.concatenate([f1, f2, f4, fg], axis=1)    # (B, num_features)
    logits = _linear(features, params["linear"])            # (B, 1)

    y = labels.astype(jnp.float32).reshape(-1)
    loss = (_bce_mean(logits, y)
            + 0.25 * _bce_mean(logits1, y)
            + 0.50 * _bce_mean(logits2, y)
            + 0.75 * _bce_mean(logits4, y))
    return loss, logits, features


# --------------------------------------------------------------------------

if __name__ == "__main__":
    key = jax.random.PRNGKey(0)
    k_params, k_img, k_lab = jax.random.split(key, 3)

    B, C_IN, H, W = 2, 1, 32, 32
    images = jax.random.normal(k_img, (B, C_IN, H, W), jnp.float32)
    labels = jax.random.bernoulli(k_lab, 0.5, (B,)).astype(jnp.float32)

    params = init_params(k_params)

    fwd = jax.jit(resnet_forward)
    loss, logits, features = fwd(params, images, labels)
    jax.block_until_ready((loss, logits, features))

    assert logits.shape == (B, 1)
    assert features.shape == (B, 16 + 32 + 64 + 128)
    assert bool(jnp.isfinite(loss))
    print("KERNEL_OK")
</pallas_src>

<mosaic_0001>
module attributes {stable_mosaic.version = 11 : i64} {
  func.func @_fused_conv_bn_kernel(%arg0: i32, %arg1: memref<512x128xbf16, #tpu.memory_space<vmem>>, %arg2: memref<128x128xbf16, #tpu.memory_space<vmem>>, %arg3: memref<1x128xf32, #tpu.memory_space<vmem>>, %arg4: memref<1x128xf32, #tpu.memory_space<vmem>>, %arg5: memref<512x128xbf16, #tpu.memory_space<vmem>>, %arg6: memref<512x128xf32, #tpu.memory_space<vmem>>) attributes {dimension_semantics = [#tpu.dimension_semantics<arbitrary>], iteration_bounds = array<i64: 1>, scalar_prefetch = 0 : i64, scratch_operands = 1 : i64, tpu.core_type = #tpu.core_type<tc>, window_params = [{transform_indices = @transform_0, window_bounds = array<i64: 512, 128>}, {transform_indices = @transform_1, window_bounds = array<i64: 128, 128>}, {pipeline_mode = #tpu.pipeline_mode<synchronous>, transform_indices = @transform_2, window_bounds = array<i64: 1, 128>}, {pipeline_mode = #tpu.pipeline_mode<synchronous>, transform_indices = @transform_3, window_bounds = array<i64: 1, 128>}, {pipeline_mode = #tpu.pipeline_mode<synchronous>, transform_indices = @transform_4, window_bounds = array<i64: 512, 128>}]} {
    %c0_i32 = arith.constant 0 : i32
    %0 = arith.cmpi eq, %arg0, %c0_i32 : i32
    %1 = arith.extui %0 : i1 to i32
    %c0_i32_0 = arith.constant 0 : i32
    %2 = arith.cmpi ne, %1, %c0_i32_0 : i32
    scf.if %2 {
      %cst_10 = arith.constant 0.000000e+00 : f32
      %12 = vector.broadcast %cst_10 : f32 to vector<512x128xf32>
      %c0_11 = arith.constant 0 : index
      %c0_12 = arith.constant 0 : index
      %13 = vector.load %arg6[%c0_11, %c0_12] : memref<512x128xf32, #tpu.memory_space<vmem>>, vector<512x128xf32>
      tpu.vector_store %arg6[%c0_11, %c0_12], %12 {strides = array<i32>} : memref<512x128xf32, #tpu.memory_space<vmem>>, vector<512x128xf32>,
    } else {
    }
    %c0 = arith.constant 0 : index
    %c0_1 = arith.constant 0 : index
    %3 = vector.load %arg6[%c0, %c0_1] : memref<512x128xf32, #tpu.memory_space<vmem>>, vector<512x128xf32>
    %c0_2 = arith.constant 0 : index
    %c0_3 = arith.constant 0 : index
    %4 = vector.load %arg1[%c0_2, %c0_3] : memref<512x128xbf16, #tpu.memory_space<vmem>>, vector<512x128xbf16>
    %c0_4 = arith.constant 0 : index
    %c0_5 = arith.constant 0 : index
    %5 = vector.load %arg2[%c0_4, %c0_5] : memref<128x128xbf16, #tpu.memory_space<vmem>>, vector<128x128xbf16>
    %cst = arith.constant dense<0.000000e+00> : vector<512x128xf32>
    %6 = tpu.matmul %4, %5, %cst {dimension_numbers = #tpu.dot_dimension_numbers<[1], [0], [0], [1], [0, 0, 1, 1], [], []>} : vector<512x128xbf16>, vector<128x128xbf16>, vector<512x128xf32> -> vector<512x128xf32>
    %7 = arith.addf %3, %6 : vector<512x128xf32>
    %c0_6 = arith.constant 0 : index
    %c0_7 = arith.constant 0 : index
    %8 = vector.load %arg6[%c0_6, %c0_7] : memref<512x128xf32, #tpu.memory_space<vmem>>, vector<512x128xf32>
    tpu.vector_store %arg6[%c0_6, %c0_7], %7 {strides = array<i32>} : memref<512x128xf32, #tpu.memory_space<vmem>>, vector<512x128xf32>,
    %c0_i32_8 = arith.constant 0 : i32
    %9 = arith.cmpi eq, %arg0, %c0_i32_8 : i32
    %10 = arith.extui %9 : i1 to i32
    %c0_i32_9 = arith.constant 0 : i32
    %11 = arith.cmpi ne, %10, %c0_i32_9 : i32
    scf.if %11 {
      %c0_10 = arith.constant 0 : index
      %c0_11 = arith.constant 0 : index
      %12 = vector.load %arg6[%c0_10, %c0_11] : memref<512x128xf32, #tpu.memory_space<vmem>>, vector<512x128xf32>
      %cst_12 = arith.constant dense<0.000000e+00> : vector<128xf32>
      %13 = vector.multi_reduction <add>, %12, %cst_12 [0] : vector<512x128xf32> to vector<128xf32>
      %14 = vector.shape_cast %13 : vector<128xf32> to vector<1x128xf32>
      %cst_13 = arith.constant 0.001953125 : f32
      %15 = vector.broadcast %cst_13 : f32 to vector<1x128xf32>
      %16 = arith.mulf %14, %15 : vector<1x128xf32>
      %17 = tpu.iota {dimensions = array<i32: 0>} : vector<512x128xi32>
      %c512_i32 = arith.constant 512 : i32
      %18 = vector.broadcast %c512_i32 : i32 to vector<512x128xi32>
      %19 = arith.cmpi slt, %17, %18 : vector<512x128xi32>
      %20 = vector.broadcast %16 : vector<1x128xf32> to vector<512x128xf32>
      %21 = arith.subf %12, %20 : vector<512x128xf32>
      %cst_14 = arith.constant 0.000000e+00 : f32
      %22 = vector.broadcast %cst_14 : f32 to vector<512x128xf32>
      %23 = arith.select %19, %21, %22 : vector<512x128xi1>, vector<512x128xf32>
      %24 = arith.mulf %23, %23 : vector<512x128xf32>
      %cst_15 = arith.constant dense<0.000000e+00> : vector<128xf32>
      %25 = vector.multi_reduction <add>, %24, %cst_15 [0] : vector<512x128xf32> to vector<128xf32>
      %26 = vector.shape_cast %25 : vector<128xf32> to vector<1x128xf32>
      %cst_16 = arith.constant 0.001953125 : f32
      %27 = vector.broadcast %cst_16 : f32 to vector<1x128xf32>
      %28 = arith.mulf %26, %27 : vector<1x128xf32>
      %c0_17 = arith.constant 0 : index
      %c0_18 = arith.constant 0 : index
      %29 = vector.load %arg3[%c0_17, %c0_18] : memref<1x128xf32, #tpu.memory_space<vmem>>, vector<1x128xf32>
      %cst_19 = arith.constant 9.99999974E-6 : f32
      %30 = vector.broadcast %cst_19 : f32 to vector<1x128xf32>
      %31 = arith.addf %28, %30 : vector<1x128xf32>
      %32 = math.rsqrt %31 : vector<1x128xf32>
      %33 = arith.mulf %29, %32 : vector<1x128xf32>
      %c0_20 = arith.constant 0 : index
      %c0_21 = arith.constant 0 : index
      %34 = vector.load %arg4[%c0_20, %c0_21] : memref<1x128xf32, #tpu.memory_space<vmem>>, vector<1x128xf32>
      %35 = arith.mulf %16, %33 : vector<1x128xf32>
      %36 = arith.subf %34, %35 : vector<1x128xf32>
      %37 = vector.broadcast %33 : vector<1x128xf32> to vector<512x128xf32>
      %38 = arith.mulf %12, %37 : vector<512x128xf32>
      %39 = vector.broadcast %36 : vector<1x128xf32> to vector<512x128xf32>
      %40 = arith.addf %38, %39 : vector<512x128xf32>
      %cst_22 = arith.constant 0.000000e+00 : f32
      %41 = vector.broadcast %cst_22 : f32 to vector<512x128xf32>
      %42 = arith.maximumf %40, %41 : vector<512x128xf32>
      %43 = arith.truncf %42 : vector<512x128xf32> to vector<512x128xbf16>
      %c0_23 = arith.constant 0 : index
      %c0_24 = arith.constant 0 : index
      %44 = vector.load %arg5[%c0_23, %c0_24] : memref<512x128xbf16, #tpu.memory_space<vmem>>, vector<512x128xbf16>
      tpu.vector_store %arg5[%c0_23, %c0_24], %43 {strides = array<i32>} : memref<512x128xbf16, #tpu.memory_space<vmem>>, vector<512x128xbf16>,
    } else {
    }
    return
  }
  func.func @transform_0(%arg0: i32) -> (i32, i32) {
    %c0_i32 = arith.constant 0 : i32
    %c0_i32_0 = arith.constant 0 : i32
    return %c0_i32, %arg0 : i32, i32
  }
  func.func @transform_1(%arg0: i32) -> (i32, i32) {
    %c0_i32 = arith.constant 0 : i32
    %c0_i32_0 = arith.constant 0 : i32
    return %arg0, %c0_i32 : i32, i32
  }
  func.func @transform_2(%arg0: i32) -> (i32, i32) {
    %c0_i32 = arith.constant 0 : i32
    %c0_i32_0 = arith.constant 0 : i32
    %c0_i32_1 = arith.constant 0 : i32
    return %c0_i32, %c0_i32_0 : i32, i32
  }
  func.func @transform_3(%arg0: i32) -> (i32, i32) {
    %c0_i32 = arith.constant 0 : i32
    %c0_i32_0 = arith.constant 0 : i32
    %c0_i32_1 = arith.constant 0 : i32
    return %c0_i32, %c0_i32_0 : i32, i32
  }
  func.func @transform_4(%arg0: i32) -> (i32, i32) {
    %c0_i32 = arith.constant 0 : i32
    %c0_i32_0 = arith.constant 0 : i32
    %c0_i32_1 = arith.constant 0 : i32
    return %c0_i32, %c0_i32_0 : i32, i32
  }
}

module attributes {stable_mosaic.version = 11 : i64} {
  func.func @_fused_conv_bn_kernel(%arg0: i32, %arg1: memref<128x256xbf16, #tpu.memory_space<vmem>>, %arg2: memref<256x128xbf16, #tpu.memory_space<vmem>>, %arg3: memref<1x128xf32, #tpu.memory_space<vmem>>, %arg4: memref<1x128xf32, #tpu.memory_space<vmem>>, %arg5: memref<128x128xbf16, #tpu.memory_space<vmem>>, %arg6: memref<128x128xf32, #tpu.memory_space<vmem>>) attributes {dimension_semantics = [#tpu.dimension_semantics<arbitrary>], iteration_bounds = array<i64: 1>, scalar_prefetch = 0 : i64, scratch_operands = 1 : i64, tpu.core_type = #tpu.core_type<tc>, window_params = [{transform_indices = @transform_0, window_bounds = array<i64: 128, 256>}, {transform_indices = @transform_1, window_bounds = array<i64: 256, 128>}, {pipeline_mode = #tpu.pipeline_mode<synchronous>, transform_indices = @transform_2, window_bounds = array<i64: 1, 128>}, {pipeline_mode = #tpu.pipeline_mode<synchronous>, transform_indices = @transform_3, window_bounds = array<i64: 1, 128>}, {pipeline_mode = #tpu.pipeline_mode<synchronous>, transform_indices = @transform_4, window_bounds = array<i64: 128, 128>}]} {
    %c0_i32 = arith.constant 0 : i32
    %0 = arith.cmpi eq, %arg0, %c0_i32 : i32
    %1 = arith.extui %0 : i1 to i32
    %c0_i32_0 = arith.constant 0 : i32
    %2 = arith.cmpi ne, %1, %c0_i32_0 : i32
    scf.if %2 {
      %cst_10 = arith.constant 0.000000e+00 : f32
      %12 = vector.broadcast %cst_10 : f32 to vector<128x128xf32>
      %c0_11 = arith.constant 0 : index
      %c0_12 = arith.constant 0 : index
      %13 = vector.load %arg6[%c0_11, %c0_12] : memref<128x128xf32, #tpu.memory_space<vmem>>, vector<128x128xf32>
      tpu.vector_store %arg6[%c0_11, %c0_12], %12 {strides = array<i32>} : memref<128x128xf32, #tpu.memory_space<vmem>>, vector<128x128xf32>,
    } else {
    }
    %c0 = arith.constant 0 : index
    %c0_1 = arith.constant 0 : index
    %3 = vector.load %arg6[%c0, %c0_1] : memref<128x128xf32, #tpu.memory_space<vmem>>, vector<128x128xf32>
    %c0_2 = arith.constant 0 : index
    %c0_3 = arith.constant 0 : index
    %4 = vector.load %arg1[%c0_2, %c0_3] : memref<128x256xbf16, #tpu.memory_space<vmem>>, vector<128x256xbf16>
    %c0_4 = arith.constant 0 : index
    %c0_5 = arith.constant 0 : index
    %5 = vector.load %arg2[%c0_4, %c0_5] : memref<256x128xbf16, #tpu.memory_space<vmem>>, vector<256x128xbf16>
    %cst = arith.constant dense<0.000000e+00> : vector<128x128xf32>
    %6 = tpu.matmul %4, %5, %cst {dimension_numbers = #tpu.dot_dimension_numbers<[1], [0], [0], [1], [0, 0, 1, 1], [], []>} : vector<128x256xbf16>, vector<256x128xbf16>, vector<128x128xf32> -> vector<128x128xf32>
    %7 = arith.addf %3, %6 : vector<128x128xf32>
    %c0_6 = arith.constant 0 : index
    %c0_7 = arith.constant 0 : index
    %8 = vector.load %arg6[%c0_6, %c0_7] : memref<128x128xf32, #tpu.memory_space<vmem>>, vector<128x128xf32>
    tpu.vector_store %arg6[%c0_6, %c0_7], %7 {strides = array<i32>} : memref<128x128xf32, #tpu.memory_space<vmem>>, vector<128x128xf32>,
    %c0_i32_8 = arith.constant 0 : i32
    %9 = arith.cmpi eq, %arg0, %c0_i32_8 : i32
    %10 = arith.extui %9 : i1 to i32
    %c0_i32_9 = arith.constant 0 : i32
    %11 = arith.cmpi ne, %10, %c0_i32_9 : i32
    scf.if %11 {
      %c0_10 = arith.constant 0 : index
      %c0_11 = arith.constant 0 : index
      %12 = vector.load %arg6[%c0_10, %c0_11] : memref<128x128xf32, #tpu.memory_space<vmem>>, vector<128x128xf32>
      %cst_12 = arith.constant dense<0.000000e+00> : vector<128xf32>
      %13 = vector.multi_reduction <add>, %12, %cst_12 [0] : vector<128x128xf32> to vector<128xf32>
      %14 = vector.shape_cast %13 : vector<128xf32> to vector<1x128xf32>
      %cst_13 = arith.constant 7.812500e-03 : f32
      %15 = vector.broadcast %cst_13 : f32 to vector<1x128xf32>
      %16 = arith.mulf %14, %15 : vector<1x128xf32>
      %17 = tpu.iota {dimensions = array<i32: 0>} : vector<128x128xi32>
      %c128_i32 = arith.constant 128 : i32
      %18 = vector.broadcast %c128_i32 : i32 to vector<128x128xi32>
      %19 = arith.cmpi slt, %17, %18 : vector<128x128xi32>
      %20 = vector.broadcast %16 : vector<1x128xf32> to vector<128x128xf32>
      %21 = arith.subf %12, %20 : vector<128x128xf32>
      %cst_14 = arith.constant 0.000000e+00 : f32
      %22 = vector.broadcast %cst_14 : f32 to vector<128x128xf32>
      %23 = arith.select %19, %21, %22 : vector<128x128xi1>, vector<128x128xf32>
      %24 = arith.mulf %23, %23 : vector<128x128xf32>
      %cst_15 = arith.constant dense<0.000000e+00> : vector<128xf32>
      %25 = vector.multi_reduction <add>, %24, %cst_15 [0] : vector<128x128xf32> to vector<128xf32>
      %26 = vector.shape_cast %25 : vector<128xf32> to vector<1x128xf32>
      %cst_16 = arith.constant 7.812500e-03 : f32
      %27 = vector.broadcast %cst_16 : f32 to vector<1x128xf32>
      %28 = arith.mulf %26, %27 : vector<1x128xf32>
      %c0_17 = arith.constant 0 : index
      %c0_18 = arith.constant 0 : index
      %29 = vector.load %arg3[%c0_17, %c0_18] : memref<1x128xf32, #tpu.memory_space<vmem>>, vector<1x128xf32>
      %cst_19 = arith.constant 9.99999974E-6 : f32
      %30 = vector.broadcast %cst_19 : f32 to vector<1x128xf32>
      %31 = arith.addf %28, %30 : vector<1x128xf32>
      %32 = math.rsqrt %31 : vector<1x128xf32>
      %33 = arith.mulf %29, %32 : vector<1x128xf32>
      %c0_20 = arith.constant 0 : index
      %c0_21 = arith.constant 0 : index
      %34 = vector.load %arg4[%c0_20, %c0_21] : memref<1x128xf32, #tpu.memory_space<vmem>>, vector<1x128xf32>
      %35 = arith.mulf %16, %33 : vector<1x128xf32>
      %36 = arith.subf %34, %35 : vector<1x128xf32>
      %37 = vector.broadcast %33 : vector<1x128xf32> to vector<128x128xf32>
      %38 = arith.mulf %12, %37 : vector<128x128xf32>
      %39 = vector.broadcast %36 : vector<1x128xf32> to vector<128x128xf32>
      %40 = arith.addf %38, %39 : vector<128x128xf32>
      %cst_22 = arith.constant 0.000000e+00 : f32
      %41 = vector.broadcast %cst_22 : f32 to vector<128x128xf32>
      %42 = arith.maximumf %40, %41 : vector<128x128xf32>
      %43 = arith.truncf %42 : vector<128x128xf32> to vector<128x128xbf16>
      %c0_23 = arith.constant 0 : index
      %c0_24 = arith.constant 0 : index
      %44 = vector.load %arg5[%c0_23, %c0_24] : memref<128x128xbf16, #tpu.memory_space<vmem>>, vector<128x128xbf16>
      tpu.vector_store %arg5[%c0_23, %c0_24], %43 {strides = array<i32>} : memref<128x128xbf16, #tpu.memory_space<vmem>>, vector<128x128xbf16>,
    } else {
    }
    return
  }
  func.func @transform_0(%arg0: i32) -> (i32, i32) {
    %c0_i32 = arith.constant 0 : i32
    %c0_i32_0 = arith.constant 0 : i32
    return %c0_i32, %arg0 : i32, i32
  }
  func.func @transform_1(%arg0: i32) -> (i32, i32) {
    %c0_i32 = arith.constant 0 : i32
    %c0_i32_0 = arith.constant 0 : i32
    return %arg0, %c0_i32 : i32, i32
  }
  func.func @transform_2(%arg0: i32) -> (i32, i32) {
    %c0_i32 = arith.constant 0 : i32
    %c0_i32_0 = arith.constant 0 : i32
    %c0_i32_1 = arith.constant 0 : i32
    return %c0_i32, %c0_i32_0 : i32, i32
  }
  func.func @transform_3(%arg0: i32) -> (i32, i32) {
    %c0_i32 = arith.constant 0 : i32
    %c0_i32_0 = arith.constant 0 : i32
    %c0_i32_1 = arith.constant 0 : i32
    return %c0_i32, %c0_i32_0 : i32, i32
  }
  func.func @transform_4(%arg0: i32) -> (i32, i32) {
    %c0_i32 = arith.constant 0 : i32
    %c0_i32_0 = arith.constant 0 : i32
    %c0_i32_1 = arith.constant 0 : i32
    return %c0_i32, %c0_i32_0 : i32, i32
  }
}

module attributes {stable_mosaic.version = 11 : i64} {
  func.func @_fused_conv_bn_kernel(%arg0: i32, %arg1: memref<128x256xbf16, #tpu.memory_space<vmem>>, %arg2: memref<256x128xbf16, #tpu.memory_space<vmem>>, %arg3: memref<1x128xf32, #tpu.memory_space<vmem>>, %arg4: memref<1x128xf32, #tpu.memory_space<vmem>>, %arg5: memref<128x128xbf16, #tpu.memory_space<vmem>>, %arg6: memref<128x128xbf16, #tpu.memory_space<vmem>>, %arg7: memref<128x128xf32, #tpu.memory_space<vmem>>) attributes {dimension_semantics = [#tpu.dimension_semantics<arbitrary>], iteration_bounds = array<i64: 1>, scalar_prefetch = 0 : i64, scratch_operands = 1 : i64, tpu.core_type = #tpu.core_type<tc>, window_params = [{transform_indices = @transform_0, window_bounds = array<i64: 128, 256>}, {transform_indices = @transform_1, window_bounds = array<i64: 256, 128>}, {pipeline_mode = #tpu.pipeline_mode<synchronous>, transform_indices = @transform_2, window_bounds = array<i64: 1, 128>}, {pipeline_mode = #tpu.pipeline_mode<synchronous>, transform_indices = @transform_3, window_bounds = array<i64: 1, 128>}, {pipeline_mode = #tpu.pipeline_mode<synchronous>, transform_indices = @transform_4, window_bounds = array<i64: 128, 128>}, {pipeline_mode = #tpu.pipeline_mode<synchronous>, transform_indices = @transform_5, window_bounds = array<i64: 128, 128>}]} {
    %c0_i32 = arith.constant 0 : i32
    %0 = arith.cmpi eq, %arg0, %c0_i32 : i32
    %1 = arith.extui %0 : i1 to i32
    %c0_i32_0 = arith.constant 0 : i32
    %2 = arith.cmpi ne, %1, %c0_i32_0 : i32
    scf.if %2 {
      %cst_10 = arith.constant 0.000000e+00 : f32
      %12 = vector.broadcast %cst_10 : f32 to vector<128x128xf32>
      %c0_11 = arith.constant 0 : index
      %c0_12 = arith.constant 0 : index
      %13 = vector.load %arg7[%c0_11, %c0_12] : memref<128x128xf32, #tpu.memory_space<vmem>>, vector<128x128xf32>
      tpu.vector_store %arg7[%c0_11, %c0_12], %12 {strides = array<i32>} : memref<128x128xf32, #tpu.memory_space<vmem>>, vector<128x128xf32>,
    } else {
    }
    %c0 = arith.constant 0 : index
    %c0_1 = arith.constant 0 : index
    %3 = vector.load %arg7[%c0, %c0_1] : memref<128x128xf32, #tpu.memory_space<vmem>>, vector<128x128xf32>
    %c0_2 = arith.constant 0 : index
    %c0_3 = arith.constant 0 : index
    %4 = vector.load %arg1[%c0_2, %c0_3] : memref<128x256xbf16, #tpu.memory_space<vmem>>, vector<128x256xbf16>
    %c0_4 = arith.constant 0 : index
    %c0_5 = arith.constant 0 : index
    %5 = vector.load %arg2[%c0_4, %c0_5] : memref<256x128xbf16, #tpu.memory_space<vmem>>, vector<256x128xbf16>
    %cst = arith.constant dense<0.000000e+00> : vector<128x128xf32>
    %6 = tpu.matmul %4, %5, %cst {dimension_numbers = #tpu.dot_dimension_numbers<[1], [0], [0], [1], [0, 0, 1, 1], [], []>} : vector<128x256xbf16>, vector<256x128xbf16>, vector<128x128xf32> -> vector<128x128xf32>
    %7 = arith.addf %3, %6 : vector<128x128xf32>
    %c0_6 = arith.constant 0 : index
    %c0_7 = arith.constant 0 : index
    %8 = vector.load %arg7[%c0_6, %c0_7] : memref<128x128xf32, #tpu.memory_space<vmem>>, vector<128x128xf32>
    tpu.vector_store %arg7[%c0_6, %c0_7], %7 {strides = array<i32>} : memref<128x128xf32, #tpu.memory_space<vmem>>, vector<128x128xf32>,
    %c0_i32_8 = arith.constant 0 : i32
    %9 = arith.cmpi eq, %arg0, %c0_i32_8 : i32
    %10 = arith.extui %9 : i1 to i32
    %c0_i32_9 = arith.constant 0 : i32
    %11 = arith.cmpi ne, %10, %c0_i32_9 : i32
    scf.if %11 {
      %c0_10 = arith.constant 0 : index
      %c0_11 = arith.constant 0 : index
      %12 = vector.load %arg7[%c0_10, %c0_11] : memref<128x128xf32, #tpu.memory_space<vmem>>, vector<128x128xf32>
      %cst_12 = arith.constant dense<0.000000e+00> : vector<128xf32>
      %13 = vector.multi_reduction <add>, %12, %cst_12 [0] : vector<128x128xf32> to vector<128xf32>
      %14 = vector.shape_cast %13 : vector<128xf32> to vector<1x128xf32>
      %cst_13 = arith.constant 7.812500e-03 : f32
      %15 = vector.broadcast %cst_13 : f32 to vector<1x128xf32>
      %16 = arith.mulf %14, %15 : vector<1x128xf32>
      %17 = tpu.iota {dimensions = array<i32: 0>} : vector<128x128xi32>
      %c128_i32 = arith.constant 128 : i32
      %18 = vector.broadcast %c128_i32 : i32 to vector<128x128xi32>
      %19 = arith.cmpi slt, %17, %18 : vector<128x128xi32>
      %20 = vector.broadcast %16 : vector<1x128xf32> to vector<128x128xf32>
      %21 = arith.subf %12, %20 : vector<128x128xf32>
      %cst_14 = arith.constant 0.000000e+00 : f32
      %22 = vector.broadcast %cst_14 : f32 to vector<128x128xf32>
      %23 = arith.select %19, %21, %22 : vector<128x128xi1>, vector<128x128xf32>
      %24 = arith.mulf %23, %23 : vector<128x128xf32>
      %cst_15 = arith.constant dense<0.000000e+00> : vector<128xf32>
      %25 = vector.multi_reduction <add>, %24, %cst_15 [0] : vector<128x128xf32> to vector<128xf32>
      %26 = vector.shape_cast %25 : vector<128xf32> to vector<1x128xf32>
      %cst_16 = arith.constant 7.812500e-03 : f32
      %27 = vector.broadcast %cst_16 : f32 to vector<1x128xf32>
      %28 = arith.mulf %26, %27 : vector<1x128xf32>
      %c0_17 = arith.constant 0 : index
      %c0_18 = arith.constant 0 : index
      %29 = vector.load %arg3[%c0_17, %c0_18] : memref<1x128xf32, #tpu.memory_space<vmem>>, vector<1x128xf32>
      %cst_19 = arith.constant 9.99999974E-6 : f32
      %30 = vector.broadcast %cst_19 : f32 to vector<1x128xf32>
      %31 = arith.addf %28, %30 : vector<1x128xf32>
      %32 = math.rsqrt %31 : vector<1x128xf32>
      %33 = arith.mulf %29, %32 : vector<1x128xf32>
      %c0_20 = arith.constant 0 : index
      %c0_21 = arith.constant 0 : index
      %34 = vector.load %arg4[%c0_20, %c0_21] : memref<1x128xf32, #tpu.memory_space<vmem>>, vector<1x128xf32>
      %35 = arith.mulf %16, %33 : vector<1x128xf32>
      %36 = arith.subf %34, %35 : vector<1x128xf32>
      %37 = vector.broadcast %33 : vector<1x128xf32> to vector<128x128xf32>
      %38 = arith.mulf %12, %37 : vector<128x128xf32>
      %39 = vector.broadcast %36 : vector<1x128xf32> to vector<128x128xf32>
      %40 = arith.addf %38, %39 : vector<128x128xf32>
      %c0_22 = arith.constant 0 : index
      %c0_23 = arith.constant 0 : index
      %41 = vector.load %arg5[%c0_22, %c0_23] : memref<128x128xbf16, #tpu.memory_space<vmem>>, vector<128x128xbf16>
      %42 = arith.extf %41 : vector<128x128xbf16> to vector<128x128xf32>
      %43 = arith.addf %40, %42 : vector<128x128xf32>
      %cst_24 = arith.constant 0.000000e+00 : f32
      %44 = vector.broadcast %cst_24 : f32 to vector<128x128xf32>
      %45 = arith.maximumf %43, %44 : vector<128x128xf32>
      %46 = arith.truncf %45 : vector<128x128xf32> to vector<128x128xbf16>
      %c0_25 = arith.constant 0 : index
      %c0_26 = arith.constant 0 : index
      %47 = vector.load %arg6[%c0_25, %c0_26] : memref<128x128xbf16, #tpu.memory_space<vmem>>, vector<128x128xbf16>
      tpu.vector_store %arg6[%c0_25, %c0_26], %46 {strides = array<i32>} : memref<128x128xbf16, #tpu.memory_space<vmem>>, vector<128x128xbf16>,
    } else {
    }
    return
  }
  func.func @transform_0(%arg0: i32) -> (i32, i32) {
    %c0_i32 = arith.constant 0 : i32
    %c0_i32_0 = arith.constant 0 : i32
    return %c0_i32, %arg0 : i32, i32
  }
  func.func @transform_1(%arg0: i32) -> (i32, i32) {
    %c0_i32 = arith.constant 0 : i32
    %c0_i32_0 = arith.constant 0 : i32
    return %arg0, %c0_i32 : i32, i32
  }
  func.func @transform_2(%arg0: i32) -> (i32, i32) {
    %c0_i32 = arith.constant 0 : i32
    %c0_i32_0 = arith.constant 0 : i32
    %c0_i32_1 = arith.constant 0 : i32
    return %c0_i32, %c0_i32_0 : i32, i32
  }
  func.func @transform_3(%arg0: i32) -> (i32, i32) {
    %c0_i32 = arith.constant 0 : i32
    %c0_i32_0 = arith.constant 0 : i32
    %c0_i32_1 = arith.constant 0 : i32
    return %c0_i32, %c0_i32_0 : i32, i32
  }
  func.func @transform_4(%arg0: i32) -> (i32, i32) {
    %c0_i32 = arith.constant 0 : i32
    %c0_i32_0 = arith.constant 0 : i32
    %c0_i32_1 = arith.constant 0 : i32
    return %c0_i32, %c0_i32_0 : i32, i32
  }
  func.func @transform_5(%arg0: i32) -> (i32, i32) {
    %c0_i32 = arith.constant 0 : i32
    %c0_i32_0 = arith.constant 0 : i32
    %c0_i32_1 = arith.constant 0 : i32
    return %c0_i32, %c0_i32_0 : i32, i32
  }
}

module attributes {stable_mosaic.version = 11 : i64} {
  func.func @_fused_conv_bn_kernel(%arg0: i32, %arg1: memref<32x256xbf16, #tpu.memory_space<vmem>>, %arg2: memref<256x128xbf16, #tpu.memory_space<vmem>>, %arg3: memref<1x128xf32, #tpu.memory_space<vmem>>, %arg4: memref<1x128xf32, #tpu.memory_space<vmem>>, %arg5: memref<32x128xbf16, #tpu.memory_space<vmem>>, %arg6: memref<32x128xf32, #tpu.memory_space<vmem>>) attributes {dimension_semantics = [#tpu.dimension_semantics<arbitrary>], iteration_bounds = array<i64: 1>, scalar_prefetch = 0 : i64, scratch_operands = 1 : i64, tpu.core_type = #tpu.core_type<tc>, window_params = [{transform_indices = @transform_0, window_bounds = array<i64: 32, 256>}, {transform_indices = @transform_1, window_bounds = array<i64: 256, 128>}, {pipeline_mode = #tpu.pipeline_mode<synchronous>, transform_indices = @transform_2, window_bounds = array<i64: 1, 128>}, {pipeline_mode = #tpu.pipeline_mode<synchronous>, transform_indices = @transform_3, window_bounds = array<i64: 1, 128>}, {pipeline_mode = #tpu.pipeline_mode<synchronous>, transform_indices = @transform_4, window_bounds = array<i64: 32, 128>}]} {
    %c0_i32 = arith.constant 0 : i32
    %0 = arith.cmpi eq, %arg0, %c0_i32 : i32
    %1 = arith.extui %0 : i1 to i32
    %c0_i32_0 = arith.constant 0 : i32
    %2 = arith.cmpi ne, %1, %c0_i32_0 : i32
    scf.if %2 {
      %cst_10 = arith.constant 0.000000e+00 : f32
      %12 = vector.broadcast %cst_10 : f32 to vector<32x128xf32>
      %c0_11 = arith.constant 0 : index
      %c0_12 = arith.constant 0 : index
      %13 = vector.load %arg6[%c0_11, %c0_12] : memref<32x128xf32, #tpu.memory_space<vmem>>, vector<32x128xf32>
      tpu.vector_store %arg6[%c0_11, %c0_12], %12 {strides = array<i32>} : memref<32x128xf32, #tpu.memory_space<vmem>>, vector<32x128xf32>,
    } else {
    }
    %c0 = arith.constant 0 : index
    %c0_1 = arith.constant 0 : index
    %3 = vector.load %arg6[%c0, %c0_1] : memref<32x128xf32, #tpu.memory_space<vmem>>, vector<32x128xf32>
    %c0_2 = arith.constant 0 : index
    %c0_3 = arith.constant 0 : index
    %4 = vector.load %arg1[%c0_2, %c0_3] : memref<32x256xbf16, #tpu.memory_space<vmem>>, vector<32x256xbf16>
    %c0_4 = arith.constant 0 : index
    %c0_5 = arith.constant 0 : index
    %5 = vector.load %arg2[%c0_4, %c0_5] : memref<256x128xbf16, #tpu.memory_space<vmem>>, vector<256x128xbf16>
    %cst = arith.constant dense<0.000000e+00> : vector<32x128xf32>
    %6 = tpu.matmul %4, %5, %cst {dimension_numbers = #tpu.dot_dimension_numbers<[1], [0], [0], [1], [0, 0, 1, 1], [], []>} : vector<32x256xbf16>, vector<256x128xbf16>, vector<32x128xf32> -> vector<32x128xf32>
    %7 = arith.addf %3, %6 : vector<32x128xf32>
    %c0_6 = arith.constant 0 : index
    %c0_7 = arith.constant 0 : index
    %8 = vector.load %arg6[%c0_6, %c0_7] : memref<32x128xf32, #tpu.memory_space<vmem>>, vector<32x128xf32>
    tpu.vector_store %arg6[%c0_6, %c0_7], %7 {strides = array<i32>} : memref<32x128xf32, #tpu.memory_space<vmem>>, vector<32x128xf32>,
    %c0_i32_8 = arith.constant 0 : i32
    %9 = arith.cmpi eq, %arg0, %c0_i32_8 : i32
    %10 = arith.extui %9 : i1 to i32
    %c0_i32_9 = arith.constant 0 : i32
    %11 = arith.cmpi ne, %10, %c0_i32_9 : i32
    scf.if %11 {
      %c0_10 = arith.constant 0 : index
      %c0_11 = arith.constant 0 : index
      %12 = vector.load %arg6[%c0_10, %c0_11] : memref<32x128xf32, #tpu.memory_space<vmem>>, vector<32x128xf32>
      %cst_12 = arith.constant dense<0.000000e+00> : vector<128xf32>
      %13 = vector.multi_reduction <add>, %12, %cst_12 [0] : vector<32x128xf32> to vector<128xf32>
      %14 = vector.shape_cast %13 : vector<128xf32> to vector<1x128xf32>
      %cst_13 = arith.constant 3.125000e-02 : f32
      %15 = vector.broadcast %cst_13 : f32 to vector<1x128xf32>
      %16 = arith.mulf %14, %15 : vector<1x128xf32>
      %17 = tpu.iota {dimensions = array<i32: 0>} : vector<32x128xi32>
      %c32_i32 = arith.constant 32 : i32
      %18 = vector.broadcast %c32_i32 : i32 to vector<32x128xi32>
      %19 = arith.cmpi slt, %17, %18 : vector<32x128xi32>
      %20 = vector.broadcast %16 : vector<1x128xf32> to vector<32x128xf32>
      %21 = arith.subf %12, %20 : vector<32x128xf32>
      %cst_14 = arith.constant 0.000000e+00 : f32
      %22 = vector.broadcast %cst_14 : f32 to vector<32x128xf32>
      %23 = arith.select %19, %21, %22 : vector<32x128xi1>, vector<32x128xf32>
      %24 = arith.mulf %23, %23 : vector<32x128xf32>
      %cst_15 = arith.constant dense<0.000000e+00> : vector<128xf32>
      %25 = vector.multi_reduction <add>, %24, %cst_15 [0] : vector<32x128xf32> to vector<128xf32>
      %26 = vector.shape_cast %25 : vector<128xf32> to vector<1x128xf32>
      %cst_16 = arith.constant 3.125000e-02 : f32
      %27 = vector.broadcast %cst_16 : f32 to vector<1x128xf32>
      %28 = arith.mulf %26, %27 : vector<1x128xf32>
      %c0_17 = arith.constant 0 : index
      %c0_18 = arith.constant 0 : index
      %29 = vector.load %arg3[%c0_17, %c0_18] : memref<1x128xf32, #tpu.memory_space<vmem>>, vector<1x128xf32>
      %cst_19 = arith.constant 9.99999974E-6 : f32
      %30 = vector.broadcast %cst_19 : f32 to vector<1x128xf32>
      %31 = arith.addf %28, %30 : vector<1x128xf32>
      %32 = math.rsqrt %31 : vector<1x128xf32>
      %33 = arith.mulf %29, %32 : vector<1x128xf32>
      %c0_20 = arith.constant 0 : index
      %c0_21 = arith.constant 0 : index
      %34 = vector.load %arg4[%c0_20, %c0_21] : memref<1x128xf32, #tpu.memory_space<vmem>>, vector<1x128xf32>
      %35 = arith.mulf %16, %33 : vector<1x128xf32>
      %36 = arith.subf %34, %35 : vector<1x128xf32>
      %37 = vector.broadcast %33 : vector<1x128xf32> to vector<32x128xf32>
      %38 = arith.mulf %12, %37 : vector<32x128xf32>
      %39 = vector.broadcast %36 : vector<1x128xf32> to vector<32x128xf32>
      %40 = arith.addf %38, %39 : vector<32x128xf32>
      %cst_22 = arith.constant 0.000000e+00 : f32
      %41 = vector.broadcast %cst_22 : f32 to vector<32x128xf32>
      %42 = arith.maximumf %40, %41 : vector<32x128xf32>
      %43 = arith.truncf %42 : vector<32x128xf32> to vector<32x128xbf16>
      %c0_23 = arith.constant 0 : index
      %c0_24 = arith.constant 0 : index
      %44 = vector.load %arg5[%c0_23, %c0_24] : memref<32x128xbf16, #tpu.memory_space<vmem>>, vector<32x128xbf16>
      tpu.vector_store %arg5[%c0_23, %c0_24], %43 {strides = array<i32>} : memref<32x128xbf16, #tpu.memory_space<vmem>>, vector<32x128xbf16>,
    } else {
    }
    return
  }
  func.func @transform_0(%arg0: i32) -> (i32, i32) {
    %c0_i32 = arith.constant 0 : i32
    %c0_i32_0 = arith.constant 0 : i32
    return %c0_i32, %arg0 : i32, i32
  }
  func.func @transform_1(%arg0: i32) -> (i32, i32) {
    %c0_i32 = arith.constant 0 : i32
    %c0_i32_0 = arith.constant 0 : i32
    return %arg0, %c0_i32 : i32, i32
  }
  func.func @transform_2(%arg0: i32) -> (i32, i32) {
    %c0_i32 = arith.constant 0 : i32
    %c0_i32_0 = arith.constant 0 : i32
    %c0_i32_1 = arith.constant 0 : i32
    return %c0_i32, %c0_i32_0 : i32, i32
  }
  func.func @transform_3(%arg0: i32) -> (i32, i32) {
    %c0_i32 = arith.constant 0 : i32
    %c0_i32_0 = arith.constant 0 : i32
    %c0_i32_1 = arith.constant 0 : i32
    return %c0_i32, %c0_i32_0 : i32, i32
  }
  func.func @transform_4(%arg0: i32) -> (i32, i32) {
    %c0_i32 = arith.constant 0 : i32
    %c0_i32_0 = arith.constant 0 : i32
    %c0_i32_1 = arith.constant 0 : i32
    return %c0_i32, %c0_i32_0 : i32, i32
  }
}

module attributes {stable_mosaic.version = 11 : i64} {
  func.func @_fused_conv_bn_kernel(%arg0: i32, %arg1: memref<32x128xbf16, #tpu.memory_space<vmem>>, %arg2: memref<128x128xbf16, #tpu.memory_space<vmem>>, %arg3: memref<1x128xf32, #tpu.memory_space<vmem>>, %arg4: memref<1x128xf32, #tpu.memory_space<vmem>>, %arg5: memref<32x128xbf16, #tpu.memory_space<vmem>>, %arg6: memref<32x128xbf16, #tpu.memory_space<vmem>>, %arg7: memref<32x128xf32, #tpu.memory_space<vmem>>) attributes {dimension_semantics = [#tpu.dimension_semantics<arbitrary>], iteration_bounds = array<i64: 3>, scalar_prefetch = 0 : i64, scratch_operands = 1 : i64, tpu.core_type = #tpu.core_type<tc>, window_params = [{transform_indices = @transform_0, window_bounds = array<i64: 32, 128>}, {transform_indices = @transform_1, window_bounds = array<i64: 128, 128>}, {pipeline_mode = #tpu.pipeline_mode<synchronous>, transform_indices = @transform_2, window_bounds = array<i64: 1, 128>}, {pipeline_mode = #tpu.pipeline_mode<synchronous>, transform_indices = @transform_3, window_bounds = array<i64: 1, 128>}, {pipeline_mode = #tpu.pipeline_mode<synchronous>, transform_indices = @transform_4, window_bounds = array<i64: 32, 128>}, {pipeline_mode = #tpu.pipeline_mode<synchronous>, transform_indices = @transform_5, window_bounds = array<i64: 32, 128>}]} {
    %c0_i32 = arith.constant 0 : i32
    %0 = arith.cmpi eq, %arg0, %c0_i32 : i32
    %1 = arith.extui %0 : i1 to i32
    %c0_i32_0 = arith.constant 0 : i32
    %2 = arith.cmpi ne, %1, %c0_i32_0 : i32
    scf.if %2 {
      %cst_9 = arith.constant 0.000000e+00 : f32
      %12 = vector.broadcast %cst_9 : f32 to vector<32x128xf32>
      %c0_10 = arith.constant 0 : index
      %c0_11 = arith.constant 0 : index
      %13 = vector.load %arg7[%c0_10, %c0_11] : memref<32x128xf32, #tpu.memory_space<vmem>>, vector<32x128xf32>
      tpu.vector_store %arg7[%c0_10, %c0_11], %12 {strides = array<i32>} : memref<32x128xf32, #tpu.memory_space<vmem>>, vector<32x128xf32>,
    } else {
    }
    %c0 = arith.constant 0 : index
    %c0_1 = arith.constant 0 : index
    %3 = vector.load %arg7[%c0, %c0_1] : memref<32x128xf32, #tpu.memory_space<vmem>>, vector<32x128xf32>
    %c0_2 = arith.constant 0 : index
    %c0_3 = arith.constant 0 : index
    %4 = vector.load %arg1[%c0_2, %c0_3] : memref<32x128xbf16, #tpu.memory_space<vmem>>, vector<32x128xbf16>
    %c0_4 = arith.constant 0 : index
    %c0_5 = arith.constant 0 : index
    %5 = vector.load %arg2[%c0_4, %c0_5] : memref<128x128xbf16, #tpu.memory_space<vmem>>, vector<128x128xbf16>
    %cst = arith.constant dense<0.000000e+00> : vector<32x128xf32>
    %6 = tpu.matmul %4, %5, %cst {dimension_numbers = #tpu.dot_dimension_numbers<[1], [0], [0], [1], [0, 0, 1, 1], [], []>} : vector<32x128xbf16>, vector<128x128xbf16>, vector<32x128xf32> -> vector<32x128xf32>
    %7 = arith.addf %3, %6 : vector<32x128xf32>
    %c0_6 = arith.constant 0 : index
    %c0_7 = arith.constant 0 : index
    %8 = vector.load %arg7[%c0_6, %c0_7] : memref<32x128xf32, #tpu.memory_space<vmem>>, vector<32x128xf32>
    tpu.vector_store %arg7[%c0_6, %c0_7], %7 {strides = array<i32>} : memref<32x128xf32, #tpu.memory_space<vmem>>, vector<32x128xf32>,
    %c2_i32 = arith.constant 2 : i32
    %9 = arith.cmpi eq, %arg0, %c2_i32 : i32
    %10 = arith.extui %9 : i1 to i32
    %c0_i32_8 = arith.constant 0 : i32
    %11 = arith.cmpi ne, %10, %c0_i32_8 : i32
    scf.if %11 {
      %c0_9 = arith.constant 0 : index
      %c0_10 = arith.constant 0 : index
      %12 = vector.load %arg7[%c0_9, %c0_10] : memref<32x128xf32, #tpu.memory_space<vmem>>, vector<32x128xf32>
      %cst_11 = arith.constant dense<0.000000e+00> : vector<128xf32>
      %13 = vector.multi_reduction <add>, %12, %cst_11 [0] : vector<32x128xf32> to vector<128xf32>
      %14 = vector.shape_cast %13 : vector<128xf32> to vector<1x128xf32>
      %cst_12 = arith.constant 3.125000e-02 : f32
      %15 = vector.broadcast %cst_12 : f32 to vector<1x128xf32>
      %16 = arith.mulf %14, %15 : vector<1x128xf32>
      %17 = tpu.iota {dimensions = array<i32: 0>} : vector<32x128xi32>
      %c32_i32 = arith.constant 32 : i32
      %18 = vector.broadcast %c32_i32 : i32 to vector<32x128xi32>
      %19 = arith.cmpi slt, %17, %18 : vector<32x128xi32>
      %20 = vector.broadcast %16 : vector<1x128xf32> to vector<32x128xf32>
      %21 = arith.subf %12, %20 : vector<32x128xf32>
      %cst_13 = arith.constant 0.000000e+00 : f32
      %22 = vector.broadcast %cst_13 : f32 to vector<32x128xf32>
      %23 = arith.select %19, %21, %22 : vector<32x128xi1>, vector<32x128xf32>
      %24 = arith.mulf %23, %23 : vector<32x128xf32>
      %cst_14 = arith.constant dense<0.000000e+00> : vector<128xf32>
      %25 = vector.multi_reduction <add>, %24, %cst_14 [0] : vector<32x128xf32> to vector<128xf32>
      %26 = vector.shape_cast %25 : vector<128xf32> to vector<1x128xf32>
      %cst_15 = arith.constant 3.125000e-02 : f32
      %27 = vector.broadcast %cst_15 : f32 to vector<1x128xf32>
      %28 = arith.mulf %26, %27 : vector<1x128xf32>
      %c0_16 = arith.constant 0 : index
      %c0_17 = arith.constant 0 : index
      %29 = vector.load %arg3[%c0_16, %c0_17] : memref<1x128xf32, #tpu.memory_space<vmem>>, vector<1x128xf32>
      %cst_18 = arith.constant 9.99999974E-6 : f32
      %30 = vector.broadcast %cst_18 : f32 to vector<1x128xf32>
      %31 = arith.addf %28, %30 : vector<1x128xf32>
      %32 = math.rsqrt %31 : vector<1x128xf32>
      %33 = arith.mulf %29, %32 : vector<1x128xf32>
      %c0_19 = arith.constant 0 : index
      %c0_20 = arith.constant 0 : index
      %34 = vector.load %arg4[%c0_19, %c0_20] : memref<1x128xf32, #tpu.memory_space<vmem>>, vector<1x128xf32>
      %35 = arith.mulf %16, %33 : vector<1x128xf32>
      %36 = arith.subf %34, %35 : vector<1x128xf32>
      %37 = vector.broadcast %33 : vector<1x128xf32> to vector<32x128xf32>
      %38 = arith.mulf %12, %37 : vector<32x128xf32>
      %39 = vector.broadcast %36 : vector<1x128xf32> to vector<32x128xf32>
      %40 = arith.addf %38, %39 : vector<32x128xf32>
      %c0_21 = arith.constant 0 : index
      %c0_22 = arith.constant 0 : index
      %41 = vector.load %arg5[%c0_21, %c0_22] : memref<32x128xbf16, #tpu.memory_space<vmem>>, vector<32x128xbf16>
      %42 = arith.extf %41 : vector<32x128xbf16> to vector<32x128xf32>
      %43 = arith.addf %40, %42 : vector<32x128xf32>
      %cst_23 = arith.constant 0.000000e+00 : f32
      %44 = vector.broadcast %cst_23 : f32 to vector<32x128xf32>
      %45 = arith.maximumf %43, %44 : vector<32x128xf32>
      %46 = arith.truncf %45 : vector<32x128xf32> to vector<32x128xbf16>
      %c0_24 = arith.constant 0 : index
      %c0_25 = arith.constant 0 : index
      %47 = vector.load %arg6[%c0_24, %c0_25] : memref<32x128xbf16, #tpu.memory_space<vmem>>, vector<32x128xbf16>
      tpu.vector_store %arg6[%c0_24, %c0_25], %46 {strides = array<i32>} : memref<32x128xbf16, #tpu.memory_space<vmem>>, vector<32x128xbf16>,
    } else {
    }
    return
  }
  func.func @transform_0(%arg0: i32) -> (i32, i32) {
    %c0_i32 = arith.constant 0 : i32
    %c0_i32_0 = arith.constant 0 : i32
    return %c0_i32, %arg0 : i32, i32
  }
  func.func @transform_1(%arg0: i32) -> (i32, i32) {
    %c0_i32 = arith.constant 0 : i32
    %c0_i32_0 = arith.constant 0 : i32
    return %arg0, %c0_i32 : i32, i32
  }
  func.func @transform_2(%arg0: i32) -> (i32, i32) {
    %c0_i32 = arith.constant 0 : i32
    %c0_i32_0 = arith.constant 0 : i32
    %c0_i32_1 = arith.constant 0 : i32
    return %c0_i32, %c0_i32_0 : i32, i32
  }
  func.func @transform_3(%arg0: i32) -> (i32, i32) {
    %c0_i32 = arith.constant 0 : i32
    %c0_i32_0 = arith.constant 0 : i32
    %c0_i32_1 = arith.constant 0 : i32
    return %c0_i32, %c0_i32_0 : i32, i32
  }
  func.func @transform_4(%arg0: i32) -> (i32, i32) {
    %c0_i32 = arith.constant 0 : i32
    %c0_i32_0 = arith.constant 0 : i32
    %c0_i32_1 = arith.constant 0 : i32
    return %c0_i32, %c0_i32_0 : i32, i32
  }
  func.func @transform_5(%arg0: i32) -> (i32, i32) {
    %c0_i32 = arith.constant 0 : i32
    %c0_i32_0 = arith.constant 0 : i32
    %c0_i32_1 = arith.constant 0 : i32
    return %c0_i32, %c0_i32_0 : i32, i32
  }
}

module attributes {stable_mosaic.version = 11 : i64} {
  func.func @_fused_conv_bn_kernel(%arg0: i32, %arg1: memref<32x128xbf16, #tpu.memory_space<vmem>>, %arg2: memref<128x128xbf16, #tpu.memory_space<vmem>>, %arg3: memref<1x128xf32, #tpu.memory_space<vmem>>, %arg4: memref<1x128xf32, #tpu.memory_space<vmem>>, %arg5: memref<32x128xbf16, #tpu.memory_space<vmem>>, %arg6: memref<32x128xf32, #tpu.memory_space<vmem>>) attributes {dimension_semantics = [#tpu.dimension_semantics<arbitrary>], iteration_bounds = array<i64: 1>, scalar_prefetch = 0 : i64, scratch_operands = 1 : i64, tpu.core_type = #tpu.core_type<tc>, window_params = [{transform_indices = @transform_0, window_bounds = array<i64: 32, 128>}, {transform_indices = @transform_1, window_bounds = array<i64: 128, 128>}, {pipeline_mode = #tpu.pipeline_mode<synchronous>, transform_indices = @transform_2, window_bounds = array<i64: 1, 128>}, {pipeline_mode = #tpu.pipeline_mode<synchronous>, transform_indices = @transform_3, window_bounds = array<i64: 1, 128>}, {pipeline_mode = #tpu.pipeline_mode<synchronous>, transform_indices = @transform_4, window_bounds = array<i64: 32, 128>}]} {
    %c0_i32 = arith.constant 0 : i32
    %0 = arith.cmpi eq, %arg0, %c0_i32 : i32
    %1 = arith.extui %0 : i1 to i32
    %c0_i32_0 = arith.constant 0 : i32
    %2 = arith.cmpi ne, %1, %c0_i32_0 : i32
    scf.if %2 {
      %cst_10 = arith.constant 0.000000e+00 : f32
      %12 = vector.broadcast %cst_10 : f32 to vector<32x128xf32>
      %c0_11 = arith.constant 0 : index
      %c0_12 = arith.constant 0 : index
      %13 = vector.load %arg6[%c0_11, %c0_12] : memref<32x128xf32, #tpu.memory_space<vmem>>, vector<32x128xf32>
      tpu.vector_store %arg6[%c0_11, %c0_12], %12 {strides = array<i32>} : memref<32x128xf32, #tpu.memory_space<vmem>>, vector<32x128xf32>,
    } else {
    }
    %c0 = arith.constant 0 : index
    %c0_1 = arith.constant 0 : index
    %3 = vector.load %arg6[%c0, %c0_1] : memref<32x128xf32, #tpu.memory_space<vmem>>, vector<32x128xf32>
    %c0_2 = arith.constant 0 : index
    %c0_3 = arith.constant 0 : index
    %4 = vector.load %arg1[%c0_2, %c0_3] : memref<32x128xbf16, #tpu.memory_space<vmem>>, vector<32x128xbf16>
    %c0_4 = arith.constant 0 : index
    %c0_5 = arith.constant 0 : index
    %5 = vector.load %arg2[%c0_4, %c0_5] : memref<128x128xbf16, #tpu.memory_space<vmem>>, vector<128x128xbf16>
    %cst = arith.constant dense<0.000000e+00> : vector<32x128xf32>
    %6 = tpu.matmul %4, %5, %cst {dimension_numbers = #tpu.dot_dimension_numbers<[1], [0], [0], [1], [0, 0, 1, 1], [], []>} : vector<32x128xbf16>, vector<128x128xbf16>, vector<32x128xf32> -> vector<32x128xf32>
    %7 = arith.addf %3, %6 : vector<32x128xf32>
    %c0_6 = arith.constant 0 : index
    %c0_7 = arith.constant 0 : index
    %8 = vector.load %arg6[%c0_6, %c0_7] : memref<32x128xf32, #tpu.memory_space<vmem>>, vector<32x128xf32>
    tpu.vector_store %arg6[%c0_6, %c0_7], %7 {strides = array<i32>} : memref<32x128xf32, #tpu.memory_space<vmem>>, vector<32x128xf32>,
    %c0_i32_8 = arith.constant 0 : i32
    %9 = arith.cmpi eq, %arg0, %c0_i32_8 : i32
    %10 = arith.extui %9 : i1 to i32
    %c0_i32_9 = arith.constant 0 : i32
    %11 = arith.cmpi ne, %10, %c0_i32_9 : i32
    scf.if %11 {
      %c0_10 = arith.constant 0 : index
      %c0_11 = arith.constant 0 : index
      %12 = vector.load %arg6[%c0_10, %c0_11] : memref<32x128xf32, #tpu.memory_space<vmem>>, vector<32x128xf32>
      %cst_12 = arith.constant dense<0.000000e+00> : vector<128xf32>
      %13 = vector.multi_reduction <add>, %12, %cst_12 [0] : vector<32x128xf32> to vector<128xf32>
      %14 = vector.shape_cast %13 : vector<128xf32> to vector<1x128xf32>
      %cst_13 = arith.constant 3.125000e-02 : f32
      %15 = vector.broadcast %cst_13 : f32 to vector<1x128xf32>
      %16 = arith.mulf %14, %15 : vector<1x128xf32>
      %17 = tpu.iota {dimensions = array<i32: 0>} : vector<32x128xi32>
      %c32_i32 = arith.constant 32 : i32
      %18 = vector.broadcast %c32_i32 : i32 to vector<32x128xi32>
      %19 = arith.cmpi slt, %17, %18 : vector<32x128xi32>
      %20 = vector.broadcast %16 : vector<1x128xf32> to vector<32x128xf32>
      %21 = arith.subf %12, %20 : vector<32x128xf32>
      %cst_14 = arith.constant 0.000000e+00 : f32
      %22 = vector.broadcast %cst_14 : f32 to vector<32x128xf32>
      %23 = arith.select %19, %21, %22 : vector<32x128xi1>, vector<32x128xf32>
      %24 = arith.mulf %23, %23 : vector<32x128xf32>
      %cst_15 = arith.constant dense<0.000000e+00> : vector<128xf32>
      %25 = vector.multi_reduction <add>, %24, %cst_15 [0] : vector<32x128xf32> to vector<128xf32>
      %26 = vector.shape_cast %25 : vector<128xf32> to vector<1x128xf32>
      %cst_16 = arith.constant 3.125000e-02 : f32
      %27 = vector.broadcast %cst_16 : f32 to vector<1x128xf32>
      %28 = arith.mulf %26, %27 : vector<1x128xf32>
      %c0_17 = arith.constant 0 : index
      %c0_18 = arith.constant 0 : index
      %29 = vector.load %arg3[%c0_17, %c0_18] : memref<1x128xf32, #tpu.memory_space<vmem>>, vector<1x128xf32>
      %cst_19 = arith.constant 9.99999974E-6 : f32
      %30 = vector.broadcast %cst_19 : f32 to vector<1x128xf32>
      %31 = arith.addf %28, %30 : vector<1x128xf32>
      %32 = math.rsqrt %31 : vector<1x128xf32>
      %33 = arith.mulf %29, %32 : vector<1x128xf32>
      %c0_20 = arith.constant 0 : index
      %c0_21 = arith.constant 0 : index
      %34 = vector.load %arg4[%c0_20, %c0_21] : memref<1x128xf32, #tpu.memory_space<vmem>>, vector<1x128xf32>
      %35 = arith.mulf %16, %33 : vector<1x128xf32>
      %36 = arith.subf %34, %35 : vector<1x128xf32>
      %37 = vector.broadcast %33 : vector<1x128xf32> to vector<32x128xf32>
      %38 = arith.mulf %12, %37 : vector<32x128xf32>
      %39 = vector.broadcast %36 : vector<1x128xf32> to vector<32x128xf32>
      %40 = arith.addf %38, %39 : vector<32x128xf32>
      %41 = arith.truncf %40 : vector<32x128xf32> to vector<32x128xbf16>
      %c0_22 = arith.constant 0 : index
      %c0_23 = arith.constant 0 : index
      %42 = vector.load %arg5[%c0_22, %c0_23] : memref<32x128xbf16, #tpu.memory_space<vmem>>, vector<32x128xbf16>
      tpu.vector_store %arg5[%c0_22, %c0_23], %41 {strides = array<i32>} : memref<32x128xbf16, #tpu.memory_space<vmem>>, vector<32x128xbf16>,
    } else {
    }
    return
  }
  func.func @transform_0(%arg0: i32) -> (i32, i32) {
    %c0_i32 = arith.constant 0 : i32
    %c0_i32_0 = arith.constant 0 : i32
    return %c0_i32, %arg0 : i32, i32
  }
  func.func @transform_1(%arg0: i32) -> (i32, i32) {
    %c0_i32 = arith.constant 0 : i32
    %c0_i32_0 = arith.constant 0 : i32
    return %arg0, %c0_i32 : i32, i32
  }
  func.func @transform_2(%arg0: i32) -> (i32, i32) {
    %c0_i32 = arith.constant 0 : i32
    %c0_i32_0 = arith.constant 0 : i32
    %c0_i32_1 = arith.constant 0 : i32
    return %c0_i32, %c0_i32_0 : i32, i32
  }
  func.func @transform_3(%arg0: i32) -> (i32, i32) {
    %c0_i32 = arith.constant 0 : i32
    %c0_i32_0 = arith.constant 0 : i32
    %c0_i32_1 = arith.constant 0 : i32
    return %c0_i32, %c0_i32_0 : i32, i32
  }
  func.func @transform_4(%arg0: i32) -> (i32, i32) {
    %c0_i32 = arith.constant 0 : i32
    %c0_i32_0 = arith.constant 0 : i32
    %c0_i32_1 = arith.constant 0 : i32
    return %c0_i32, %c0_i32_0 : i32, i32
  }
}

module attributes {stable_mosaic.version = 11 : i64} {
  func.func @_fused_conv_bn_kernel(%arg0: i32, %arg1: memref<16x128xbf16, #tpu.memory_space<vmem>>, %arg2: memref<128x128xbf16, #tpu.memory_space<vmem>>, %arg3: memref<1x128xf32, #tpu.memory_space<vmem>>, %arg4: memref<1x128xf32, #tpu.memory_space<vmem>>, %arg5: memref<16x128xbf16, #tpu.memory_space<vmem>>, %arg6: memref<16x128xf32, #tpu.memory_space<vmem>>) attributes {dimension_semantics = [#tpu.dimension_semantics<arbitrary>], iteration_bounds = array<i64: 3>, scalar_prefetch = 0 : i64, scratch_operands = 1 : i64, tpu.core_type = #tpu.core_type<tc>, window_params = [{transform_indices = @transform_0, window_bounds = array<i64: 16, 128>}, {transform_indices = @transform_1, window_bounds = array<i64: 128, 128>}, {pipeline_mode = #tpu.pipeline_mode<synchronous>, transform_indices = @transform_2, window_bounds = array<i64: 1, 128>}, {pipeline_mode = #tpu.pipeline_mode<synchronous>, transform_indices = @transform_3, window_bounds = array<i64: 1, 128>}, {pipeline_mode = #tpu.pipeline_mode<synchronous>, transform_indices = @transform_4, window_bounds = array<i64: 16, 128>}]} {
    %c0_i32 = arith.constant 0 : i32
    %0 = arith.cmpi eq, %arg0, %c0_i32 : i32
    %1 = arith.extui %0 : i1 to i32
    %c0_i32_0 = arith.constant 0 : i32
    %2 = arith.cmpi ne, %1, %c0_i32_0 : i32
    scf.if %2 {
      %cst_9 = arith.constant 0.000000e+00 : f32
      %12 = vector.broadcast %cst_9 : f32 to vector<16x128xf32>
      %c0_10 = arith.constant 0 : index
      %c0_11 = arith.constant 0 : index
      %13 = vector.load %arg6[%c0_10, %c0_11] : memref<16x128xf32, #tpu.memory_space<vmem>>, vector<16x128xf32>
      tpu.vector_store %arg6[%c0_10, %c0_11], %12 {strides = array<i32>} : memref<16x128xf32, #tpu.memory_space<vmem>>, vector<16x128xf32>,
    } else {
    }
    %c0 = arith.constant 0 : index
    %c0_1 = arith.constant 0 : index
    %3 = vector.load %arg6[%c0, %c0_1] : memref<16x128xf32, #tpu.memory_space<vmem>>, vector<16x128xf32>
    %c0_2 = arith.constant 0 : index
    %c0_3 = arith.constant 0 : index
    %4 = vector.load %arg1[%c0_2, %c0_3] : memref<16x128xbf16, #tpu.memory_space<vmem>>, vector<16x128xbf16>
    %c0_4 = arith.constant 0 : index
    %c0_5 = arith.constant 0 : index
    %5 = vector.load %arg2[%c0_4, %c0_5] : memref<128x128xbf16, #tpu.memory_space<vmem>>, vector<128x128xbf16>
    %cst = arith.constant dense<0.000000e+00> : vector<16x128xf32>
    %6 = tpu.matmul %4, %5, %cst {dimension_numbers = #tpu.dot_dimension_numbers<[1], [0], [0], [1], [0, 0, 1, 1], [], []>} : vector<16x128xbf16>, vector<128x128xbf16>, vector<16x128xf32> -> vector<16x128xf32>
    %7 = arith.addf %3, %6 : vector<16x128xf32>
    %c0_6 = arith.constant 0 : index
    %c0_7 = arith.constant 0 : index
    %8 = vector.load %arg6[%c0_6, %c0_7] : memref<16x128xf32, #tpu.memory_space<vmem>>, vector<16x128xf32>
    tpu.vector_store %arg6[%c0_6, %c0_7], %7 {strides = array<i32>} : memref<16x128xf32, #tpu.memory_space<vmem>>, vector<16x128xf32>,
    %c2_i32 = arith.constant 2 : i32
    %9 = arith.cmpi eq, %arg0, %c2_i32 : i32
    %10 = arith.extui %9 : i1 to i32
    %c0_i32_8 = arith.constant 0 : i32
    %11 = arith.cmpi ne, %10, %c0_i32_8 : i32
    scf.if %11 {
      %c0_9 = arith.constant 0 : index
      %c0_10 = arith.constant 0 : index
      %12 = vector.load %arg6[%c0_9, %c0_10] : memref<16x128xf32, #tpu.memory_space<vmem>>, vector<16x128xf32>
      %cst_11 = arith.constant dense<0.000000e+00> : vector<128xf32>
      %13 = vector.multi_reduction <add>, %12, %cst_11 [0] : vector<16x128xf32> to vector<128xf32>
      %14 = vector.shape_cast %13 : vector<128xf32> to vector<1x128xf32>
      %cst_12 = arith.constant 1.250000e-01 : f32
      %15 = vector.broadcast %cst_12 : f32 to vector<1x128xf32>
      %16 = arith.mulf %14, %15 : vector<1x128xf32>
      %17 = tpu.iota {dimensions = array<i32: 0>} : vector<16x128xi32>
      %c8_i32 = arith.constant 8 : i32
      %18 = vector.broadcast %c8_i32 : i32 to vector<16x128xi32>
      %19 = arith.cmpi slt, %17, %18 : vector<16x128xi32>
      %20 = vector.broadcast %16 : vector<1x128xf32> to vector<16x128xf32>
      %21 = arith.subf %12, %20 : vector<16x128xf32>
      %cst_13 = arith.constant 0.000000e+00 : f32
      %22 = vector.broadcast %cst_13 : f32 to vector<16x128xf32>
      %23 = arith.select %19, %21, %22 : vector<16x128xi1>, vector<16x128xf32>
      %24 = arith.mulf %23, %23 : vector<16x128xf32>
      %cst_14 = arith.constant dense<0.000000e+00> : vector<128xf32>
      %25 = vector.multi_reduction <add>, %24, %cst_14 [0] : vector<16x128xf32> to vector<128xf32>
      %26 = vector.shape_cast %25 : vector<128xf32> to vector<1x128xf32>
      %cst_15 = arith.constant 1.250000e-01 : f32
      %27 = vector.broadcast %cst_15 : f32 to vector<1x128xf32>
      %28 = arith.mulf %26, %27 : vector<1x128xf32>
      %c0_16 = arith.constant 0 : index
      %c0_17 = arith.constant 0 : index
      %29 = vector.load %arg3[%c0_16, %c0_17] : memref<1x128xf32, #tpu.memory_space<vmem>>, vector<1x128xf32>
      %cst_18 = arith.constant 9.99999974E-6 : f32
      %30 = vector.broadcast %cst_18 : f32 to vector<1x128xf32>
      %31 = arith.addf %28, %30 : vector<1x128xf32>
      %32 = math.rsqrt %31 : vector<1x128xf32>
      %33 = arith.mulf %29, %32 : vector<1x128xf32>
      %c0_19 = arith.constant 0 : index
      %c0_20 = arith.constant 0 : index
      %34 = vector.load %arg4[%c0_19, %c0_20] : memref<1x128xf32, #tpu.memory_space<vmem>>, vector<1x128xf32>
      %35 = arith.mulf %16, %33 : vector<1x128xf32>
      %36 = arith.subf %34, %35 : vector<1x128xf32>
      %37 = vector.broadcast %33 : vector<1x128xf32> to vector<16x128xf32>
      %38 = arith.mulf %12, %37 : vector<16x128xf32>
      %39 = vector.broadcast %36 : vector<1x128xf32> to vector<16x128xf32>
      %40 = arith.addf %38, %39 : vector<16x128xf32>
      %cst_21 = arith.constant 0.000000e+00 : f32
      %41 = vector.broadcast %cst_21 : f32 to vector<16x128xf32>
      %42 = arith.maximumf %40, %41 : vector<16x128xf32>
      %43 = arith.truncf %42 : vector<16x128xf32> to vector<16x128xbf16>
      %c0_22 = arith.constant 0 : index
      %c0_23 = arith.constant 0 : index
      %44 = vector.load %arg5[%c0_22, %c0_23] : memref<16x128xbf16, #tpu.memory_space<vmem>>, vector<16x128xbf16>
      tpu.vector_store %arg5[%c0_22, %c0_23], %43 {strides = array<i32>} : memref<16x128xbf16, #tpu.memory_space<vmem>>, vector<16x128xbf16>,
    } else {
    }
    return
  }
  func.func @transform_0(%arg0: i32) -> (i32, i32) {
    %c0_i32 = arith.constant 0 : i32
    %c0_i32_0 = arith.constant 0 : i32
    return %c0_i32, %arg0 : i32, i32
  }
  func.func @transform_1(%arg0: i32) -> (i32, i32) {
    %c0_i32 = arith.constant 0 : i32
    %c0_i32_0 = arith.constant 0 : i32
    return %arg0, %c0_i32 : i32, i32
  }
  func.func @transform_2(%arg0: i32) -> (i32, i32) {
    %c0_i32 = arith.constant 0 : i32
    %c0_i32_0 = arith.constant 0 : i32
    %c0_i32_1 = arith.constant 0 : i32
    return %c0_i32, %c0_i32_0 : i32, i32
  }
  func.func @transform_3(%arg0: i32) -> (i32, i32) {
    %c0_i32 = arith.constant 0 : i32
    %c0_i32_0 = arith.constant 0 : i32
    %c0_i32_1 = arith.constant 0 : i32
    return %c0_i32, %c0_i32_0 : i32, i32
  }
  func.func @transform_4(%arg0: i32) -> (i32, i32) {
    %c0_i32 = arith.constant 0 : i32
    %c0_i32_0 = arith.constant 0 : i32
    %c0_i32_1 = arith.constant 0 : i32
    return %c0_i32, %c0_i32_0 : i32, i32
  }
}

module attributes {stable_mosaic.version = 11 : i64} {
  func.func @_fused_conv_bn_kernel(%arg0: i32, %arg1: memref<16x128xbf16, #tpu.memory_space<vmem>>, %arg2: memref<128x128xbf16, #tpu.memory_space<vmem>>, %arg3: memref<1x128xf32, #tpu.memory_space<vmem>>, %arg4: memref<1x128xf32, #tpu.memory_space<vmem>>, %arg5: memref<16x128xbf16, #tpu.memory_space<vmem>>, %arg6: memref<16x128xf32, #tpu.memory_space<vmem>>) attributes {dimension_semantics = [#tpu.dimension_semantics<arbitrary>], iteration_bounds = array<i64: 1>, scalar_prefetch = 0 : i64, scratch_operands = 1 : i64, tpu.core_type = #tpu.core_type<tc>, window_params = [{transform_indices = @transform_0, window_bounds = array<i64: 16, 128>}, {transform_indices = @transform_1, window_bounds = array<i64: 128, 128>}, {pipeline_mode = #tpu.pipeline_mode<synchronous>, transform_indices = @transform_2, window_bounds = array<i64: 1, 128>}, {pipeline_mode = #tpu.pipeline_mode<synchronous>, transform_indices = @transform_3, window_bounds = array<i64: 1, 128>}, {pipeline_mode = #tpu.pipeline_mode<synchronous>, transform_indices = @transform_4, window_bounds = array<i64: 16, 128>}]} {
    %c0_i32 = arith.constant 0 : i32
    %0 = arith.cmpi eq, %arg0, %c0_i32 : i32
    %1 = arith.extui %0 : i1 to i32
    %c0_i32_0 = arith.constant 0 : i32
    %2 = arith.cmpi ne, %1, %c0_i32_0 : i32
    scf.if %2 {
      %cst_10 = arith.constant 0.000000e+00 : f32
      %12 = vector.broadcast %cst_10 : f32 to vector<16x128xf32>
      %c0_11 = arith.constant 0 : index
      %c0_12 = arith.constant 0 : index
      %13 = vector.load %arg6[%c0_11, %c0_12] : memref<16x128xf32, #tpu.memory_space<vmem>>, vector<16x128xf32>
      tpu.vector_store %arg6[%c0_11, %c0_12], %12 {strides = array<i32>} : memref<16x128xf32, #tpu.memory_space<vmem>>, vector<16x128xf32>,
    } else {
    }
    %c0 = arith.constant 0 : index
    %c0_1 = arith.constant 0 : index
    %3 = vector.load %arg6[%c0, %c0_1] : memref<16x128xf32, #tpu.memory_space<vmem>>, vector<16x128xf32>
    %c0_2 = arith.constant 0 : index
    %c0_3 = arith.constant 0 : index
    %4 = vector.load %arg1[%c0_2, %c0_3] : memref<16x128xbf16, #tpu.memory_space<vmem>>, vector<16x128xbf16>
    %c0_4 = arith.constant 0 : index
    %c0_5 = arith.constant 0 : index
    %5 = vector.load %arg2[%c0_4, %c0_5] : memref<128x128xbf16, #tpu.memory_space<vmem>>, vector<128x128xbf16>
    %cst = arith.constant dense<0.000000e+00> : vector<16x128xf32>
    %6 = tpu.matmul %4, %5, %cst {dimension_numbers = #tpu.dot_dimension_numbers<[1], [0], [0], [1], [0, 0, 1, 1], [], []>} : vector<16x128xbf16>, vector<128x128xbf16>, vector<16x128xf32> -> vector<16x128xf32>
    %7 = arith.addf %3, %6 : vector<16x128xf32>
    %c0_6 = arith.constant 0 : index
    %c0_7 = arith.constant 0 : index
    %8 = vector.load %arg6[%c0_6, %c0_7] : memref<16x128xf32, #tpu.memory_space<vmem>>, vector<16x128xf32>
    tpu.vector_store %arg6[%c0_6, %c0_7], %7 {strides = array<i32>} : memref<16x128xf32, #tpu.memory_space<vmem>>, vector<16x128xf32>,
    %c0_i32_8 = arith.constant 0 : i32
    %9 = arith.cmpi eq, %arg0, %c0_i32_8 : i32
    %10 = arith.extui %9 : i1 to i32
    %c0_i32_9 = arith.constant 0 : i32
    %11 = arith.cmpi ne, %10, %c0_i32_9 : i32
    scf.if %11 {
      %c0_10 = arith.constant 0 : index
      %c0_11 = arith.constant 0 : index
      %12 = vector.load %arg6[%c0_10, %c0_11] : memref<16x128xf32, #tpu.memory_space<vmem>>, vector<16x128xf32>
      %cst_12 = arith.constant dense<0.000000e+00> : vector<128xf32>
      %13 = vector.multi_reduction <add>, %12, %cst_12 [0] : vector<16x128xf32> to vector<128xf32>
      %14 = vector.shape_cast %13 : vector<128xf32> to vector<1x128xf32>
      %cst_13 = arith.constant 1.250000e-01 : f32
      %15 = vector.broadcast %cst_13 : f32 to vector<1x128xf32>
      %16 = arith.mulf %14, %15 : vector<1x128xf32>
      %17 = tpu.iota {dimensions = array<i32: 0>} : vector<16x128xi32>
      %c8_i32 = arith.constant 8 : i32
      %18 = vector.broadcast %c8_i32 : i32 to vector<16x128xi32>
      %19 = arith.cmpi slt, %17, %18 : vector<16x128xi32>
      %20 = vector.broadcast %16 : vector<1x128xf32> to vector<16x128xf32>
      %21 = arith.subf %12, %20 : vector<16x128xf32>
      %cst_14 = arith.constant 0.000000e+00 : f32
      %22 = vector.broadcast %cst_14 : f32 to vector<16x128xf32>
      %23 = arith.select %19, %21, %22 : vector<16x128xi1>, vector<16x128xf32>
      %24 = arith.mulf %23, %23 : vector<16x128xf32>
      %cst_15 = arith.constant dense<0.000000e+00> : vector<128xf32>
      %25 = vector.multi_reduction <add>, %24, %cst_15 [0] : vector<16x128xf32> to vector<128xf32>
      %26 = vector.shape_cast %25 : vector<128xf32> to vector<1x128xf32>
      %cst_16 = arith.constant 1.250000e-01 : f32
      %27 = vector.broadcast %cst_16 : f32 to vector<1x128xf32>
      %28 = arith.mulf %26, %27 : vector<1x128xf32>
      %c0_17 = arith.constant 0 : index
      %c0_18 = arith.constant 0 : index
      %29 = vector.load %arg3[%c0_17, %c0_18] : memref<1x128xf32, #tpu.memory_space<vmem>>, vector<1x128xf32>
      %cst_19 = arith.constant 9.99999974E-6 : f32
      %30 = vector.broadcast %cst_19 : f32 to vector<1x128xf32>
      %31 = arith.addf %28, %30 : vector<1x128xf32>
      %32 = math.rsqrt %31 : vector<1x128xf32>
      %33 = arith.mulf %29, %32 : vector<1x128xf32>
      %c0_20 = arith.constant 0 : index
      %c0_21 = arith.constant 0 : index
      %34 = vector.load %arg4[%c0_20, %c0_21] : memref<1x128xf32, #tpu.memory_space<vmem>>, vector<1x128xf32>
      %35 = arith.mulf %16, %33 : vector<1x128xf32>
      %36 = arith.subf %34, %35 : vector<1x128xf32>
      %37 = vector.broadcast %33 : vector<1x128xf32> to vector<16x128xf32>
      %38 = arith.mulf %12, %37 : vector<16x128xf32>
      %39 = vector.broadcast %36 : vector<1x128xf32> to vector<16x128xf32>
      %40 = arith.addf %38, %39 : vector<16x128xf32>
      %41 = arith.truncf %40 : vector<16x128xf32> to vector<16x128xbf16>
      %c0_22 = arith.constant 0 : index
      %c0_23 = arith.constant 0 : index
      %42 = vector.load %arg5[%c0_22, %c0_23] : memref<16x128xbf16, #tpu.memory_space<vmem>>, vector<16x128xbf16>
      tpu.vector_store %arg5[%c0_22, %c0_23], %41 {strides = array<i32>} : memref<16x128xbf16, #tpu.memory_space<vmem>>, vector<16x128xbf16>,
    } else {
    }
    return
  }
  func.func @transform_0(%arg0: i32) -> (i32, i32) {
    %c0_i32 = arith.constant 0 : i32
    %c0_i32_0 = arith.constant 0 : i32
    return %c0_i32, %arg0 : i32, i32
  }
  func.func @transform_1(%arg0: i32) -> (i32, i32) {
    %c0_i32 = arith.constant 0 : i32
    %c0_i32_0 = arith.constant 0 : i32
    return %arg0, %c0_i32 : i32, i32
  }
  func.func @transform_2(%arg0: i32) -> (i32, i32) {
    %c0_i32 = arith.constant 0 : i32
    %c0_i32_0 = arith.constant 0 : i32
    %c0_i32_1 = arith.constant 0 : i32
    return %c0_i32, %c0_i32_0 : i32, i32
  }
  func.func @transform_3(%arg0: i32) -> (i32, i32) {
    %c0_i32 = arith.constant 0 : i32
    %c0_i32_0 = arith.constant 0 : i32
    %c0_i32_1 = arith.constant 0 : i32
    return %c0_i32, %c0_i32_0 : i32, i32
  }
  func.func @transform_4(%arg0: i32) -> (i32, i32) {
    %c0_i32 = arith.constant 0 : i32
    %c0_i32_0 = arith.constant 0 : i32
    %c0_i32_1 = arith.constant 0 : i32
    return %c0_i32, %c0_i32_0 : i32, i32
  }
}

module attributes {stable_mosaic.version = 11 : i64} {
  func.func @_fused_conv_bn_kernel(%arg0: i32, %arg1: memref<16x128xbf16, #tpu.memory_space<vmem>>, %arg2: memref<128x128xbf16, #tpu.memory_space<vmem>>, %arg3: memref<1x128xf32, #tpu.memory_space<vmem>>, %arg4: memref<1x128xf32, #tpu.memory_space<vmem>>, %arg5: memref<16x128xbf16, #tpu.memory_space<vmem>>, %arg6: memref<16x128xbf16, #tpu.memory_space<vmem>>, %arg7: memref<16x128xf32, #tpu.memory_space<vmem>>) attributes {dimension_semantics = [#tpu.dimension_semantics<arbitrary>], iteration_bounds = array<i64: 5>, scalar_prefetch = 0 : i64, scratch_operands = 1 : i64, tpu.core_type = #tpu.core_type<tc>, window_params = [{transform_indices = @transform_0, window_bounds = array<i64: 16, 128>}, {transform_indices = @transform_1, window_bounds = array<i64: 128, 128>}, {pipeline_mode = #tpu.pipeline_mode<synchronous>, transform_indices = @transform_2, window_bounds = array<i64: 1, 128>}, {pipeline_mode = #tpu.pipeline_mode<synchronous>, transform_indices = @transform_3, window_bounds = array<i64: 1, 128>}, {pipeline_mode = #tpu.pipeline_mode<synchronous>, transform_indices = @transform_4, window_bounds = array<i64: 16, 128>}, {pipeline_mode = #tpu.pipeline_mode<synchronous>, transform_indices = @transform_5, window_bounds = array<i64: 16, 128>}]} {
    %c0_i32 = arith.constant 0 : i32
    %0 = arith.cmpi eq, %arg0, %c0_i32 : i32
    %1 = arith.extui %0 : i1 to i32
    %c0_i32_0 = arith.constant 0 : i32
    %2 = arith.cmpi ne, %1, %c0_i32_0 : i32
    scf.if %2 {
      %cst_9 = arith.constant 0.000000e+00 : f32
      %12 = vector.broadcast %cst_9 : f32 to vector<16x128xf32>
      %c0_10 = arith.constant 0 : index
      %c0_11 = arith.constant 0 : index
      %13 = vector.load %arg7[%c0_10, %c0_11] : memref<16x128xf32, #tpu.memory_space<vmem>>, vector<16x128xf32>
      tpu.vector_store %arg7[%c0_10, %c0_11], %12 {strides = array<i32>} : memref<16x128xf32, #tpu.memory_space<vmem>>, vector<16x128xf32>,
    } else {
    }
    %c0 = arith.constant 0 : index
    %c0_1 = arith.constant 0 : index
    %3 = vector.load %arg7[%c0, %c0_1] : memref<16x128xf32, #tpu.memory_space<vmem>>, vector<16x128xf32>
    %c0_2 = arith.constant 0 : index
    %c0_3 = arith.constant 0 : index
    %4 = vector.load %arg1[%c0_2, %c0_3] : memref<16x128xbf16, #tpu.memory_space<vmem>>, vector<16x128xbf16>
    %c0_4 = arith.constant 0 : index
    %c0_5 = arith.constant 0 : index
    %5 = vector.load %arg2[%c0_4, %c0_5] : memref<128x128xbf16, #tpu.memory_space<vmem>>, vector<128x128xbf16>
    %cst = arith.constant dense<0.000000e+00> : vector<16x128xf32>
    %6 = tpu.matmul %4, %5, %cst {dimension_numbers = #tpu.dot_dimension_numbers<[1], [0], [0], [1], [0, 0, 1, 1], [], []>} : vector<16x128xbf16>, vector<128x128xbf16>, vector<16x128xf32> -> vector<16x128xf32>
    %7 = arith.addf %3, %6 : vector<16x128xf32>
    %c0_6 = arith.constant 0 : index
    %c0_7 = arith.constant 0 : index
    %8 = vector.load %arg7[%c0_6, %c0_7] : memref<16x128xf32, #tpu.memory_space<vmem>>, vector<16x128xf32>
    tpu.vector_store %arg7[%c0_6, %c0_7], %7 {strides = array<i32>} : memref<16x128xf32, #tpu.memory_space<vmem>>, vector<16x128xf32>,
    %c4_i32 = arith.constant 4 : i32
    %9 = arith.cmpi eq, %arg0, %c4_i32 : i32
    %10 = arith.extui %9 : i1 to i32
    %c0_i32_8 = arith.constant 0 : i32
    %11 = arith.cmpi ne, %10, %c0_i32_8 : i32
    scf.if %11 {
      %c0_9 = arith.constant 0 : index
      %c0_10 = arith.constant 0 : index
      %12 = vector.load %arg7[%c0_9, %c0_10] : memref<16x128xf32, #tpu.memory_space<vmem>>, vector<16x128xf32>
      %cst_11 = arith.constant dense<0.000000e+00> : vector<128xf32>
      %13 = vector.multi_reduction <add>, %12, %cst_11 [0] : vector<16x128xf32> to vector<128xf32>
      %14 = vector.shape_cast %13 : vector<128xf32> to vector<1x128xf32>
      %cst_12 = arith.constant 1.250000e-01 : f32
      %15 = vector.broadcast %cst_12 : f32 to vector<1x128xf32>
      %16 = arith.mulf %14, %15 : vector<1x128xf32>
      %17 = tpu.iota {dimensions = array<i32: 0>} : vector<16x128xi32>
      %c8_i32 = arith.constant 8 : i32
      %18 = vector.broadcast %c8_i32 : i32 to vector<16x128xi32>
      %19 = arith.cmpi slt, %17, %18 : vector<16x128xi32>
      %20 = vector.broadcast %16 : vector<1x128xf32> to vector<16x128xf32>
      %21 = arith.subf %12, %20 : vector<16x128xf32>
      %cst_13 = arith.constant 0.000000e+00 : f32
      %22 = vector.broadcast %cst_13 : f32 to vector<16x128xf32>
      %23 = arith.select %19, %21, %22 : vector<16x128xi1>, vector<16x128xf32>
      %24 = arith.mulf %23, %23 : vector<16x128xf32>
      %cst_14 = arith.constant dense<0.000000e+00> : vector<128xf32>
      %25 = vector.multi_reduction <add>, %24, %cst_14 [0] : vector<16x128xf32> to vector<128xf32>
      %26 = vector.shape_cast %25 : vector<128xf32> to vector<1x128xf32>
      %cst_15 = arith.constant 1.250000e-01 : f32
      %27 = vector.broadcast %cst_15 : f32 to vector<1x128xf32>
      %28 = arith.mulf %26, %27 : vector<1x128xf32>
      %c0_16 = arith.constant 0 : index
      %c0_17 = arith.constant 0 : index
      %29 = vector.load %arg3[%c0_16, %c0_17] : memref<1x128xf32, #tpu.memory_space<vmem>>, vector<1x128xf32>
      %cst_18 = arith.constant 9.99999974E-6 : f32
      %30 = vector.broadcast %cst_18 : f32 to vector<1x128xf32>
      %31 = arith.addf %28, %30 : vector<1x128xf32>
      %32 = math.rsqrt %31 : vector<1x128xf32>
      %33 = arith.mulf %29, %32 : vector<1x128xf32>
      %c0_19 = arith.constant 0 : index
      %c0_20 = arith.constant 0 : index
      %34 = vector.load %arg4[%c0_19, %c0_20] : memref<1x128xf32, #tpu.memory_space<vmem>>, vector<1x128xf32>
      %35 = arith.mulf %16, %33 : vector<1x128xf32>
      %36 = arith.subf %34, %35 : vector<1x128xf32>
      %37 = vector.broadcast %33 : vector<1x128xf32> to vector<16x128xf32>
      %38 = arith.mulf %12, %37 : vector<16x128xf32>
      %39 = vector.broadcast %36 : vector<1x128xf32> to vector<16x128xf32>
      %40 = arith.addf %38, %39 : vector<16x128xf32>
      %c0_21 = arith.constant 0 : index
      %c0_22 = arith.constant 0 : index
      %41 = vector.load %arg5[%c0_21, %c0_22] : memref<16x128xbf16, #tpu.memory_space<vmem>>, vector<16x128xbf16>
      %42 = arith.extf %41 : vector<16x128xbf16> to vector<16x128xf32>
      %43 = arith.addf %40, %42 : vector<16x128xf32>
      %cst_23 = arith.constant 0.000000e+00 : f32
      %44 = vector.broadcast %cst_23 : f32 to vector<16x128xf32>
      %45 = arith.maximumf %43, %44 : vector<16x128xf32>
      %46 = arith.truncf %45 : vector<16x128xf32> to vector<16x128xbf16>
      %c0_24 = arith.constant 0 : index
      %c0_25 = arith.constant 0 : index
      %47 = vector.load %arg6[%c0_24, %c0_25] : memref<16x128xbf16, #tpu.memory_space<vmem>>, vector<16x128xbf16>
      tpu.vector_store %arg6[%c0_24, %c0_25], %46 {strides = array<i32>} : memref<16x128xbf16, #tpu.memory_space<vmem>>, vector<16x128xbf16>,
    } else {
    }
    return
  }
  func.func @transform_0(%arg0: i32) -> (i32, i32) {
    %c0_i32 = arith.constant 0 : i32
    %c0_i32_0 = arith.constant 0 : i32
    return %c0_i32, %arg0 : i32, i32
  }
  func.func @transform_1(%arg0: i32) -> (i32, i32) {
    %c0_i32 = arith.constant 0 : i32
    %c0_i32_0 = arith.constant 0 : i32
    return %arg0, %c0_i32 : i32, i32
  }
  func.func @transform_2(%arg0: i32) -> (i32, i32) {
    %c0_i32 = arith.constant 0 : i32
    %c0_i32_0 = arith.constant 0 : i32
    %c0_i32_1 = arith.constant 0 : i32
    return %c0_i32, %c0_i32_0 : i32, i32
  }
  func.func @transform_3(%arg0: i32) -> (i32, i32) {
    %c0_i32 = arith.constant 0 : i32
    %c0_i32_0 = arith.constant 0 : i32
    %c0_i32_1 = arith.constant 0 : i32
    return %c0_i32, %c0_i32_0 : i32, i32
  }
  func.func @transform_4(%arg0: i32) -> (i32, i32) {
    %c0_i32 = arith.constant 0 : i32
    %c0_i32_0 = arith.constant 0 : i32
    %c0_i32_1 = arith.constant 0 : i32
    return %c0_i32, %c0_i32_0 : i32, i32
  }
  func.func @transform_5(%arg0: i32) -> (i32, i32) {
    %c0_i32 = arith.constant 0 : i32
    %c0_i32_0 = arith.constant 0 : i32
    %c0_i32_1 = arith.constant 0 : i32
    return %c0_i32, %c0_i32_0 : i32, i32
  }
}

module attributes {stable_mosaic.version = 11 : i64} {
  func.func @_fused_conv_bn_kernel(%arg0: i32, %arg1: memref<16x128xbf16, #tpu.memory_space<vmem>>, %arg2: memref<128x128xbf16, #tpu.memory_space<vmem>>, %arg3: memref<1x128xf32, #tpu.memory_space<vmem>>, %arg4: memref<1x128xf32, #tpu.memory_space<vmem>>, %arg5: memref<16x128xbf16, #tpu.memory_space<vmem>>, %arg6: memref<16x128xf32, #tpu.memory_space<vmem>>) attributes {dimension_semantics = [#tpu.dimension_semantics<arbitrary>], iteration_bounds = array<i64: 5>, scalar_prefetch = 0 : i64, scratch_operands = 1 : i64, tpu.core_type = #tpu.core_type<tc>, window_params = [{transform_indices = @transform_0, window_bounds = array<i64: 16, 128>}, {transform_indices = @transform_1, window_bounds = array<i64: 128, 128>}, {pipeline_mode = #tpu.pipeline_mode<synchronous>, transform_indices = @transform_2, window_bounds = array<i64: 1, 128>}, {pipeline_mode = #tpu.pipeline_mode<synchronous>, transform_indices = @transform_3, window_bounds = array<i64: 1, 128>}, {pipeline_mode = #tpu.pipeline_mode<synchronous>, transform_indices = @transform_4, window_bounds = array<i64: 16, 128>}]} {
    %c0_i32 = arith.constant 0 : i32
    %0 = arith.cmpi eq, %arg0, %c0_i32 : i32
    %1 = arith.extui %0 : i1 to i32
    %c0_i32_0 = arith.constant 0 : i32
    %2 = arith.cmpi ne, %1, %c0_i32_0 : i32
    scf.if %2 {
      %cst_9 = arith.constant 0.000000e+00 : f32
      %12 = vector.broadcast %cst_9 : f32 to vector<16x128xf32>
      %c0_10 = arith.constant 0 : index
      %c0_11 = arith.constant 0 : index
      %13 = vector.load %arg6[%c0_10, %c0_11] : memref<16x128xf32, #tpu.memory_space<vmem>>, vector<16x128xf32>
      tpu.vector_store %arg6[%c0_10, %c0_11], %12 {strides = array<i32>} : memref<16x128xf32, #tpu.memory_space<vmem>>, vector<16x128xf32>,
    } else {
    }
    %c0 = arith.constant 0 : index
    %c0_1 = arith.constant 0 : index
    %3 = vector.load %arg6[%c0, %c0_1] : memref<16x128xf32, #tpu.memory_space<vmem>>, vector<16x128xf32>
    %c0_2 = arith.constant 0 : index
    %c0_3 = arith.constant 0 : index
    %4 = vector.load %arg1[%c0_2, %c0_3] : memref<16x128xbf16, #tpu.memory_space<vmem>>, vector<16x128xbf16>
    %c0_4 = arith.constant 0 : index
    %c0_5 = arith.constant 0 : index
    %5 = vector.load %arg2[%c0_4, %c0_5] : memref<128x128xbf16, #tpu.memory_space<vmem>>, vector<128x128xbf16>
    %cst = arith.constant dense<0.000000e+00> : vector<16x128xf32>
    %6 = tpu.matmul %4, %5, %cst {dimension_numbers = #tpu.dot_dimension_numbers<[1], [0], [0], [1], [0, 0, 1, 1], [], []>} : vector<16x128xbf16>, vector<128x128xbf16>, vector<16x128xf32> -> vector<16x128xf32>
    %7 = arith.addf %3, %6 : vector<16x128xf32>
    %c0_6 = arith.constant 0 : index
    %c0_7 = arith.constant 0 : index
    %8 = vector.load %arg6[%c0_6, %c0_7] : memref<16x128xf32, #tpu.memory_space<vmem>>, vector<16x128xf32>
    tpu.vector_store %arg6[%c0_6, %c0_7], %7 {strides = array<i32>} : memref<16x128xf32, #tpu.memory_space<vmem>>, vector<16x128xf32>,
    %c4_i32 = arith.constant 4 : i32
    %9 = arith.cmpi eq, %arg0, %c4_i32 : i32
    %10 = arith.extui %9 : i1 to i32
    %c0_i32_8 = arith.constant 0 : i32
    %11 = arith.cmpi ne, %10, %c0_i32_8 : i32
    scf.if %11 {
      %c0_9 = arith.constant 0 : index
      %c0_10 = arith.constant 0 : index
      %12 = vector.load %arg6[%c0_9, %c0_10] : memref<16x128xf32, #tpu.memory_space<vmem>>, vector<16x128xf32>
      %cst_11 = arith.constant dense<0.000000e+00> : vector<128xf32>
      %13 = vector.multi_reduction <add>, %12, %cst_11 [0] : vector<16x128xf32> to vector<128xf32>
      %14 = vector.shape_cast %13 : vector<128xf32> to vector<1x128xf32>
      %cst_12 = arith.constant 5.000000e-01 : f32
      %15 = vector.broadcast %cst_12 : f32 to vector<1x128xf32>
      %16 = arith.mulf %14, %15 : vector<1x128xf32>
      %17 = tpu.iota {dimensions = array<i32: 0>} : vector<16x128xi32>
      %c2_i32 = arith.constant 2 : i32
      %18 = vector.broadcast %c2_i32 : i32 to vector<16x128xi32>
      %19 = arith.cmpi slt, %17, %18 : vector<16x128xi32>
      %20 = vector.broadcast %16 : vector<1x128xf32> to vector<16x128xf32>
      %21 = arith.subf %12, %20 : vector<16x128xf32>
      %cst_13 = arith.constant 0.000000e+00 : f32
      %22 = vector.broadcast %cst_13 : f32 to vector<16x128xf32>
      %23 = arith.select %19, %21, %22 : vector<16x128xi1>, vector<16x128xf32>
      %24 = arith.mulf %23, %23 : vector<16x128xf32>
      %cst_14 = arith.constant dense<0.000000e+00> : vector<128xf32>
      %25 = vector.multi_reduction <add>, %24, %cst_14 [0] : vector<16x128xf32> to vector<128xf32>
      %26 = vector.shape_cast %25 : vector<128xf32> to vector<1x128xf32>
      %cst_15 = arith.constant 5.000000e-01 : f32
      %27 = vector.broadcast %cst_15 : f32 to vector<1x128xf32>
      %28 = arith.mulf %26, %27 : vector<1x128xf32>
      %c0_16 = arith.constant 0 : index
      %c0_17 = arith.constant 0 : index
      %29 = vector.load %arg3[%c0_16, %c0_17] : memref<1x128xf32, #tpu.memory_space<vmem>>, vector<1x128xf32>
      %cst_18 = arith.constant 9.99999974E-6 : f32
      %30 = vector.broadcast %cst_18 : f32 to vector<1x128xf32>
      %31 = arith.addf %28, %30 : vector<1x128xf32>
      %32 = math.rsqrt %31 : vector<1x128xf32>
      %33 = arith.mulf %29, %32 : vector<1x128xf32>
      %c0_19 = arith.constant 0 : index
      %c0_20 = arith.constant 0 : index
      %34 = vector.load %arg4[%c0_19, %c0_20] : memref<1x128xf32, #tpu.memory_space<vmem>>, vector<1x128xf32>
      %35 = arith.mulf %16, %33 : vector<1x128xf32>
      %36 = arith.subf %34, %35 : vector<1x128xf32>
      %37 = vector.broadcast %33 : vector<1x128xf32> to vector<16x128xf32>
      %38 = arith.mulf %12, %37 : vector<16x128xf32>
      %39 = vector.broadcast %36 : vector<1x128xf32> to vector<16x128xf32>
      %40 = arith.addf %38, %39 : vector<16x128xf32>
      %cst_21 = arith.constant 0.000000e+00 : f32
      %41 = vector.broadcast %cst_21 : f32 to vector<16x128xf32>
      %42 = arith.maximumf %40, %41 : vector<16x128xf32>
      %43 = arith.truncf %42 : vector<16x128xf32> to vector<16x128xbf16>
      %c0_22 = arith.constant 0 : index
      %c0_23 = arith.constant 0 : index
      %44 = vector.load %arg5[%c0_22, %c0_23] : memref<16x128xbf16, #tpu.memory_space<vmem>>, vector<16x128xbf16>
      tpu.vector_store %arg5[%c0_22, %c0_23], %43 {strides = array<i32>} : memref<16x128xbf16, #tpu.memory_space<vmem>>, vector<16x128xbf16>,
    } else {
    }
    return
  }
  func.func @transform_0(%arg0: i32) -> (i32, i32) {
    %c0_i32 = arith.constant 0 : i32
    %c0_i32_0 = arith.constant 0 : i32
    return %c0_i32, %arg0 : i32, i32
  }
  func.func @transform_1(%arg0: i32) -> (i32, i32) {
    %c0_i32 = arith.constant 0 : i32
    %c0_i32_0 = arith.constant 0 : i32
    return %arg0, %c0_i32 : i32, i32
  }
  func.func @transform_2(%arg0: i32) -> (i32, i32) {
    %c0_i32 = arith.constant 0 : i32
    %c0_i32_0 = arith.constant 0 : i32
    %c0_i32_1 = arith.constant 0 : i32
    return %c0_i32, %c0_i32_0 : i32, i32
  }
  func.func @transform_3(%arg0: i32) -> (i32, i32) {
    %c0_i32 = arith.constant 0 : i32
    %c0_i32_0 = arith.constant 0 : i32
    %c0_i32_1 = arith.constant 0 : i32
    return %c0_i32, %c0_i32_0 : i32, i32
  }
  func.func @transform_4(%arg0: i32) -> (i32, i32) {
    %c0_i32 = arith.constant 0 : i32
    %c0_i32_0 = arith.constant 0 : i32
    %c0_i32_1 = arith.constant 0 : i32
    return %c0_i32, %c0_i32_0 : i32, i32
  }
}

module attributes {stable_mosaic.version = 11 : i64} {
  func.func @_fused_conv_bn_kernel(%arg0: i32, %arg1: memref<16x128xbf16, #tpu.memory_space<vmem>>, %arg2: memref<128x128xbf16, #tpu.memory_space<vmem>>, %arg3: memref<1x128xf32, #tpu.memory_space<vmem>>, %arg4: memref<1x128xf32, #tpu.memory_space<vmem>>, %arg5: memref<16x128xbf16, #tpu.memory_space<vmem>>, %arg6: memref<16x128xf32, #tpu.memory_space<vmem>>) attributes {dimension_semantics = [#tpu.dimension_semantics<arbitrary>], iteration_bounds = array<i64: 1>, scalar_prefetch = 0 : i64, scratch_operands = 1 : i64, tpu.core_type = #tpu.core_type<tc>, window_params = [{transform_indices = @transform_0, window_bounds = array<i64: 16, 128>}, {transform_indices = @transform_1, window_bounds = array<i64: 128, 128>}, {pipeline_mode = #tpu.pipeline_mode<synchronous>, transform_indices = @transform_2, window_bounds = array<i64: 1, 128>}, {pipeline_mode = #tpu.pipeline_mode<synchronous>, transform_indices = @transform_3, window_bounds = array<i64: 1, 128>}, {pipeline_mode = #tpu.pipeline_mode<synchronous>, transform_indices = @transform_4, window_bounds = array<i64: 16, 128>}]} {
    %c0_i32 = arith.constant 0 : i32
    %0 = arith.cmpi eq, %arg0, %c0_i32 : i32
    %1 = arith.extui %0 : i1 to i32
    %c0_i32_0 = arith.constant 0 : i32
    %2 = arith.cmpi ne, %1, %c0_i32_0 : i32
    scf.if %2 {
      %cst_10 = arith.constant 0.000000e+00 : f32
      %12 = vector.broadcast %cst_10 : f32 to vector<16x128xf32>
      %c0_11 = arith.constant 0 : index
      %c0_12 = arith.constant 0 : index
      %13 = vector.load %arg6[%c0_11, %c0_12] : memref<16x128xf32, #tpu.memory_space<vmem>>, vector<16x128xf32>
      tpu.vector_store %arg6[%c0_11, %c0_12], %12 {strides = array<i32>} : memref<16x128xf32, #tpu.memory_space<vmem>>, vector<16x128xf32>,
    } else {
    }
    %c0 = arith.constant 0 : index
    %c0_1 = arith.constant 0 : index
    %3 = vector.load %arg6[%c0, %c0_1] : memref<16x128xf32, #tpu.memory_space<vmem>>, vector<16x128xf32>
    %c0_2 = arith.constant 0 : index
    %c0_3 = arith.constant 0 : index
    %4 = vector.load %arg1[%c0_2, %c0_3] : memref<16x128xbf16, #tpu.memory_space<vmem>>, vector<16x128xbf16>
    %c0_4 = arith.constant 0 : index
    %c0_5 = arith.constant 0 : index
    %5 = vector.load %arg2[%c0_4, %c0_5] : memref<128x128xbf16, #tpu.memory_space<vmem>>, vector<128x128xbf16>
    %cst = arith.constant dense<0.000000e+00> : vector<16x128xf32>
    %6 = tpu.matmul %4, %5, %cst {dimension_numbers = #tpu.dot_dimension_numbers<[1], [0], [0], [1], [0, 0, 1, 1], [], []>} : vector<16x128xbf16>, vector<128x128xbf16>, vector<16x128xf32> -> vector<16x128xf32>
    %7 = arith.addf %3, %6 : vector<16x128xf32>
    %c0_6 = arith.constant 0 : index
    %c0_7 = arith.constant 0 : index
    %8 = vector.load %arg6[%c0_6, %c0_7] : memref<16x128xf32, #tpu.memory_space<vmem>>, vector<16x128xf32>
    tpu.vector_store %arg6[%c0_6, %c0_7], %7 {strides = array<i32>} : memref<16x128xf32, #tpu.memory_space<vmem>>, vector<16x128xf32>,
    %c0_i32_8 = arith.constant 0 : i32
    %9 = arith.cmpi eq, %arg0, %c0_i32_8 : i32
    %10 = arith.extui %9 : i1 to i32
    %c0_i32_9 = arith.constant 0 : i32
    %11 = arith.cmpi ne, %10, %c0_i32_9 : i32
    scf.if %11 {
      %c0_10 = arith.constant 0 : index
      %c0_11 = arith.constant 0 : index
      %12 = vector.load %arg6[%c0_10, %c0_11] : memref<16x128xf32, #tpu.memory_space<vmem>>, vector<16x128xf32>
      %cst_12 = arith.constant dense<0.000000e+00> : vector<128xf32>
      %13 = vector.multi_reduction <add>, %12, %cst_12 [0] : vector<16x128xf32> to vector<128xf32>
      %14 = vector.shape_cast %13 : vector<128xf32> to vector<1x128xf32>
      %cst_13 = arith.constant 5.000000e-01 : f32
      %15 = vector.broadcast %cst_13 : f32 to vector<1x128xf32>
      %16 = arith.mulf %14, %15 : vector<1x128xf32>
      %17 = tpu.iota {dimensions = array<i32: 0>} : vector<16x128xi32>
      %c2_i32 = arith.constant 2 : i32
      %18 = vector.broadcast %c2_i32 : i32 to vector<16x128xi32>
      %19 = arith.cmpi slt, %17, %18 : vector<16x128xi32>
      %20 = vector.broadcast %16 : vector<1x128xf32> to vector<16x128xf32>
      %21 = arith.subf %12, %20 : vector<16x128xf32>
      %cst_14 = arith.constant 0.000000e+00 : f32
      %22 = vector.broadcast %cst_14 : f32 to vector<16x128xf32>
      %23 = arith.select %19, %21, %22 : vector<16x128xi1>, vector<16x128xf32>
      %24 = arith.mulf %23, %23 : vector<16x128xf32>
      %cst_15 = arith.constant dense<0.000000e+00> : vector<128xf32>
      %25 = vector.multi_reduction <add>, %24, %cst_15 [0] : vector<16x128xf32> to vector<128xf32>
      %26 = vector.shape_cast %25 : vector<128xf32> to vector<1x128xf32>
      %cst_16 = arith.constant 5.000000e-01 : f32
      %27 = vector.broadcast %cst_16 : f32 to vector<1x128xf32>
      %28 = arith.mulf %26, %27 : vector<1x128xf32>
      %c0_17 = arith.constant 0 : index
      %c0_18 = arith.constant 0 : index
      %29 = vector.load %arg3[%c0_17, %c0_18] : memref<1x128xf32, #tpu.memory_space<vmem>>, vector<1x128xf32>
      %cst_19 = arith.constant 9.99999974E-6 : f32
      %30 = vector.broadcast %cst_19 : f32 to vector<1x128xf32>
      %31 = arith.addf %28, %30 : vector<1x128xf32>
      %32 = math.rsqrt %31 : vector<1x128xf32>
      %33 = arith.mulf %29, %32 : vector<1x128xf32>
      %c0_20 = arith.constant 0 : index
      %c0_21 = arith.constant 0 : index
      %34 = vector.load %arg4[%c0_20, %c0_21] : memref<1x128xf32, #tpu.memory_space<vmem>>, vector<1x128xf32>
      %35 = arith.mulf %16, %33 : vector<1x128xf32>
      %36 = arith.subf %34, %35 : vector<1x128xf32>
      %37 = vector.broadcast %33 : vector<1x128xf32> to vector<16x128xf32>
      %38 = arith.mulf %12, %37 : vector<16x128xf32>
      %39 = vector.broadcast %36 : vector<1x128xf32> to vector<16x128xf32>
      %40 = arith.addf %38, %39 : vector<16x128xf32>
      %41 = arith.truncf %40 : vector<16x128xf32> to vector<16x128xbf16>
      %c0_22 = arith.constant 0 : index
      %c0_23 = arith.constant 0 : index
      %42 = vector.load %arg5[%c0_22, %c0_23] : memref<16x128xbf16, #tpu.memory_space<vmem>>, vector<16x128xbf16>
      tpu.vector_store %arg5[%c0_22, %c0_23], %41 {strides = array<i32>} : memref<16x128xbf16, #tpu.memory_space<vmem>>, vector<16x128xbf16>,
    } else {
    }
    return
  }
  func.func @transform_0(%arg0: i32) -> (i32, i32) {
    %c0_i32 = arith.constant 0 : i32
    %c0_i32_0 = arith.constant 0 : i32
    return %c0_i32, %arg0 : i32, i32
  }
  func.func @transform_1(%arg0: i32) -> (i32, i32) {
    %c0_i32 = arith.constant 0 : i32
    %c0_i32_0 = arith.constant 0 : i32
    return %arg0, %c0_i32 : i32, i32
  }
  func.func @transform_2(%arg0: i32) -> (i32, i32) {
    %c0_i32 = arith.constant 0 : i32
    %c0_i32_0 = arith.constant 0 : i32
    %c0_i32_1 = arith.constant 0 : i32
    return %c0_i32, %c0_i32_0 : i32, i32
  }
  func.func @transform_3(%arg0: i32) -> (i32, i32) {
    %c0_i32 = arith.constant 0 : i32
    %c0_i32_0 = arith.constant 0 : i32
    %c0_i32_1 = arith.constant 0 : i32
    return %c0_i32, %c0_i32_0 : i32, i32
  }
  func.func @transform_4(%arg0: i32) -> (i32, i32) {
    %c0_i32 = arith.constant 0 : i32
    %c0_i32_0 = arith.constant 0 : i32
    %c0_i32_1 = arith.constant 0 : i32
    return %c0_i32, %c0_i32_0 : i32, i32
  }
}

module attributes {stable_mosaic.version = 11 : i64} {
  func.func @_fused_conv_bn_kernel(%arg0: i32, %arg1: memref<16x128xbf16, #tpu.memory_space<vmem>>, %arg2: memref<128x128xbf16, #tpu.memory_space<vmem>>, %arg3: memref<1x128xf32, #tpu.memory_space<vmem>>, %arg4: memref<1x128xf32, #tpu.memory_space<vmem>>, %arg5: memref<16x128xbf16, #tpu.memory_space<vmem>>, %arg6: memref<16x128xbf16, #tpu.memory_space<vmem>>, %arg7: memref<16x128xf32, #tpu.memory_space<vmem>>) attributes {dimension_semantics = [#tpu.dimension_semantics<arbitrary>], iteration_bounds = array<i64: 9>, scalar_prefetch = 0 : i64, scratch_operands = 1 : i64, tpu.core_type = #tpu.core_type<tc>, window_params = [{transform_indices = @transform_0, window_bounds = array<i64: 16, 128>}, {transform_indices = @transform_1, window_bounds = array<i64: 128, 128>}, {pipeline_mode = #tpu.pipeline_mode<synchronous>, transform_indices = @transform_2, window_bounds = array<i64: 1, 128>}, {pipeline_mode = #tpu.pipeline_mode<synchronous>, transform_indices = @transform_3, window_bounds = array<i64: 1, 128>}, {pipeline_mode = #tpu.pipeline_mode<synchronous>, transform_indices = @transform_4, window_bounds = array<i64: 16, 128>}, {pipeline_mode = #tpu.pipeline_mode<synchronous>, transform_indices = @transform_5, window_bounds = array<i64: 16, 128>}]} {
    %c0_i32 = arith.constant 0 : i32
    %0 = arith.cmpi eq, %arg0, %c0_i32 : i32
    %1 = arith.extui %0 : i1 to i32
    %c0_i32_0 = arith.constant 0 : i32
    %2 = arith.cmpi ne, %1, %c0_i32_0 : i32
    scf.if %2 {
      %cst_9 = arith.constant 0.000000e+00 : f32
      %12 = vector.broadcast %cst_9 : f32 to vector<16x128xf32>
      %c0_10 = arith.constant 0 : index
      %c0_11 = arith.constant 0 : index
      %13 = vector.load %arg7[%c0_10, %c0_11] : memref<16x128xf32, #tpu.memory_space<vmem>>, vector<16x128xf32>
      tpu.vector_store %arg7[%c0_10, %c0_11], %12 {strides = array<i32>} : memref<16x128xf32, #tpu.memory_space<vmem>>, vector<16x128xf32>,
    } else {
    }
    %c0 = arith.constant 0 : index
    %c0_1 = arith.constant 0 : index
    %3 = vector.load %arg7[%c0, %c0_1] : memref<16x128xf32, #tpu.memory_space<vmem>>, vector<16x128xf32>
    %c0_2 = arith.constant 0 : index
    %c0_3 = arith.constant 0 : index
    %4 = vector.load %arg1[%c0_2, %c0_3] : memref<16x128xbf16, #tpu.memory_space<vmem>>, vector<16x128xbf16>
    %c0_4 = arith.constant 0 : index
    %c0_5 = arith.constant 0 : index
    %5 = vector.load %arg2[%c0_4, %c0_5] : memref<128x128xbf16, #tpu.memory_space<vmem>>, vector<128x128xbf16>
    %cst = arith.constant dense<0.000000e+00> : vector<16x128xf32>
    %6 = tpu.matmul %4, %5, %cst {dimension_numbers = #tpu.dot_dimension_numbers<[1], [0], [0], [1], [0, 0, 1, 1], [], []>} : vector<16x128xbf16>, vector<128x128xbf16>, vector<16x128xf32> -> vector<16x128xf32>
    %7 = arith.addf %3, %6 : vector<16x128xf32>
    %c0_6 = arith.constant 0 : index
    %c0_7 = arith.constant 0 : index
    %8 = vector.load %arg7[%c0_6, %c0_7] : memref<16x128xf32, #tpu.memory_space<vmem>>, vector<16x128xf32>
    tpu.vector_store %arg7[%c0_6, %c0_7], %7 {strides = array<i32>} : memref<16x128xf32, #tpu.memory_space<vmem>>, vector<16x128xf32>,
    %c8_i32 = arith.constant 8 : i32
    %9 = arith.cmpi eq, %arg0, %c8_i32 : i32
    %10 = arith.extui %9 : i1 to i32
    %c0_i32_8 = arith.constant 0 : i32
    %11 = arith.cmpi ne, %10, %c0_i32_8 : i32
    scf.if %11 {
      %c0_9 = arith.constant 0 : index
      %c0_10 = arith.constant 0 : index
      %12 = vector.load %arg7[%c0_9, %c0_10] : memref<16x128xf32, #tpu.memory_space<vmem>>, vector<16x128xf32>
      %cst_11 = arith.constant dense<0.000000e+00> : vector<128xf32>
      %13 = vector.multi_reduction <add>, %12, %cst_11 [0] : vector<16x128xf32> to vector<128xf32>
      %14 = vector.shape_cast %13 : vector<128xf32> to vector<1x128xf32>
      %cst_12 = arith.constant 5.000000e-01 : f32
      %15 = vector.broadcast %cst_12 : f32 to vector<1x128xf32>
      %16 = arith.mulf %14, %15 : vector<1x128xf32>
      %17 = tpu.iota {dimensions = array<i32: 0>} : vector<16x128xi32>
      %c2_i32 = arith.constant 2 : i32
      %18 = vector.broadcast %c2_i32 : i32 to vector<16x128xi32>
      %19 = arith.cmpi slt, %17, %18 : vector<16x128xi32>
      %20 = vector.broadcast %16 : vector<1x128xf32> to vector<16x128xf32>
      %21 = arith.subf %12, %20 : vector<16x128xf32>
      %cst_13 = arith.constant 0.000000e+00 : f32
      %22 = vector.broadcast %cst_13 : f32 to vector<16x128xf32>
      %23 = arith.select %19, %21, %22 : vector<16x128xi1>, vector<16x128xf32>
      %24 = arith.mulf %23, %23 : vector<16x128xf32>
      %cst_14 = arith.constant dense<0.000000e+00> : vector<128xf32>
      %25 = vector.multi_reduction <add>, %24, %cst_14 [0] : vector<16x128xf32> to vector<128xf32>
      %26 = vector.shape_cast %25 : vector<128xf32> to vector<1x128xf32>
      %cst_15 = arith.constant 5.000000e-01 : f32
      %27 = vector.broadcast %cst_15 : f32 to vector<1x128xf32>
      %28 = arith.mulf %26, %27 : vector<1x128xf32>
      %c0_16 = arith.constant 0 : index
      %c0_17 = arith.constant 0 : index
      %29 = vector.load %arg3[%c0_16, %c0_17] : memref<1x128xf32, #tpu.memory_space<vmem>>, vector<1x128xf32>
      %cst_18 = arith.constant 9.99999974E-6 : f32
      %30 = vector.broadcast %cst_18 : f32 to vector<1x128xf32>
      %31 = arith.addf %28, %30 : vector<1x128xf32>
      %32 = math.rsqrt %31 : vector<1x128xf32>
      %33 = arith.mulf %29, %32 : vector<1x128xf32>
      %c0_19 = arith.constant 0 : index
      %c0_20 = arith.constant 0 : index
      %34 = vector.load %arg4[%c0_19, %c0_20] : memref<1x128xf32, #tpu.memory_space<vmem>>, vector<1x128xf32>
      %35 = arith.mulf %16, %33 : vector<1x128xf32>
      %36 = arith.subf %34, %35 : vector<1x128xf32>
      %37 = vector.broadcast %33 : vector<1x128xf32> to vector<16x128xf32>
      %38 = arith.mulf %12, %37 : vector<16x128xf32>
      %39 = vector.broadcast %36 : vector<1x128xf32> to vector<16x128xf32>
      %40 = arith.addf %38, %39 : vector<16x128xf32>
      %c0_21 = arith.constant 0 : index
      %c0_22 = arith.constant 0 : index
      %41 = vector.load %arg5[%c0_21, %c0_22] : memref<16x128xbf16, #tpu.memory_space<vmem>>, vector<16x128xbf16>
      %42 = arith.extf %41 : vector<16x128xbf16> to vector<16x128xf32>
      %43 = arith.addf %40, %42 : vector<16x128xf32>
      %cst_23 = arith.constant 0.000000e+00 : f32
      %44 = vector.broadcast %cst_23 : f32 to vector<16x128xf32>
      %45 = arith.maximumf %43, %44 : vector<16x128xf32>
      %46 = arith.truncf %45 : vector<16x128xf32> to vector<16x128xbf16>
      %c0_24 = arith.constant 0 : index
      %c0_25 = arith.constant 0 : index
      %47 = vector.load %arg6[%c0_24, %c0_25] : memref<16x128xbf16, #tpu.memory_space<vmem>>, vector<16x128xbf16>
      tpu.vector_store %arg6[%c0_24, %c0_25], %46 {strides = array<i32>} : memref<16x128xbf16, #tpu.memory_space<vmem>>, vector<16x128xbf16>,
    } else {
    }
    return
  }
  func.func @transform_0(%arg0: i32) -> (i32, i32) {
    %c0_i32 = arith.constant 0 : i32
    %c0_i32_0 = arith.constant 0 : i32
    return %c0_i32, %arg0 : i32, i32
  }
  func.func @transform_1(%arg0: i32) -> (i32, i32) {
    %c0_i32 = arith.constant 0 : i32
    %c0_i32_0 = arith.constant 0 : i32
    return %arg0, %c0_i32 : i32, i32
  }
  func.func @transform_2(%arg0: i32) -> (i32, i32) {
    %c0_i32 = arith.constant 0 : i32
    %c0_i32_0 = arith.constant 0 : i32
    %c0_i32_1 = arith.constant 0 : i32
    return %c0_i32, %c0_i32_0 : i32, i32
  }
  func.func @transform_3(%arg0: i32) -> (i32, i32) {
    %c0_i32 = arith.constant 0 : i32
    %c0_i32_0 = arith.constant 0 : i32
    %c0_i32_1 = arith.constant 0 : i32
    return %c0_i32, %c0_i32_0 : i32, i32
  }
  func.func @transform_4(%arg0: i32) -> (i32, i32) {
    %c0_i32 = arith.constant 0 : i32
    %c0_i32_0 = arith.constant 0 : i32
    %c0_i32_1 = arith.constant 0 : i32
    return %c0_i32, %c0_i32_0 : i32, i32
  }
  func.func @transform_5(%arg0: i32) -> (i32, i32) {
    %c0_i32 = arith.constant 0 : i32
    %c0_i32_0 = arith.constant 0 : i32
    %c0_i32_1 = arith.constant 0 : i32
    return %c0_i32, %c0_i32_0 : i32, i32
  }
}

</mosaic_0001>

<llo_original>
// kernel: resnet_forward.12
$region0: #{resnet_forward.12}
  #allocation0 [shape = 'u32[]', space=smem, size = 0x4, offset = 0x4, fixed_abs, tag = 'smem constant byte address 0x4 - core index']
  #allocation1 [shape = 'u32[144,128]{1,0:T(1,128)}', space=vmem, size = 0x12000, scoped, tag = 'internal scratch']
  #allocation2 [shape = 'f32[512,128]{1,0:T(8,128)}', space=vmem, size = 0x40000, scoped, tag = 'scratch operand']
  %s0 = inlined_call_operand.vmem [shape: bf16[512,128], index: 0, kind: input, shape index: {}]
  %s1 = inlined_call_operand.vmem [shape: bf16[128,128], index: 1, kind: input, shape index: {}]
  %s2 = inlined_call_operand.vmem [shape: f32[1,128], index: 2, kind: input, shape index: {}]
  %s3 = inlined_call_operand.vmem [shape: f32[1,128], index: 3, kind: input, shape index: {}]
  %s4 = inlined_call_operand.vmem [shape: bf16[512,128], index: 4, kind: output, shape index: {}]
  %s5 = sld [smem:[#allocation0]]
  $region34: #{resnet_forward.12} parent=0
    _
  %s7 = ssub.s32 1, %s5
  %s8 = scalar_select 0, %s7, %s5
  // Predicated region
  $region2: #{resnet_forward.12} parent=0 // pred_check
    _
  $region3: #{resnet_forward.12} parent=0 // pred_check_branch
    %10 = sbr.rel (0) target = $region5
  $region4: #{resnet_forward.12} parent=0 // pred_region
    _
  $region5: #{resnet_forward.12} parent=0 // pred_fallthru
    _
  // Predicated region
  $region6: #{resnet_forward.12} parent=0 // pred_check
    _
  $region7: #{resnet_forward.12} parent=0 // pred_check_branch
    %12 = sbr.rel (0) target = $region9
  $region8: #{resnet_forward.12} parent=0 // pred_region
    _
  $region9: #{resnet_forward.12} parent=0 // pred_fallthru
    _
  // Predicated region
  $region10: #{resnet_forward.12} parent=0 // pred_check
    _
  $region11: #{resnet_forward.12} parent=0 // pred_check_branch
    %14 = sbr.rel (0) target = $region13
  $region12: #{resnet_forward.12} parent=0 // pred_region
    _
  $region13: #{resnet_forward.12} parent=0 // pred_fallthru
    _
  // Predicated region
  $region14: #{resnet_forward.12} parent=0 // pred_check
    _
  $region15: #{resnet_forward.12} parent=0 // pred_check_branch
    %16 = sbr.rel (0) target = $region17
  $region16: #{resnet_forward.12} parent=0 // pred_region
    _
  $region17: #{resnet_forward.12} parent=0 // pred_fallthru
    _
  %p18 = scmp.eq.s32.totalorder 0, 0
  // Predicated region
  $region18: #{resnet_forward.12} parent=0 // pred_check
    %p19 = pneg %p18
  $region19: #{resnet_forward.12} parent=0 // pred_check_branch
    %21 = sbr.rel (%p19) target = $region21
  $region20: #{resnet_forward.12} parent=0 // pred_region
    %22 = vst [vmem:[#allocation2] sm:$0xff] 0.0
    %23 = vst [vmem:[#allocation2 + $0x8] sm:$0xff] 0.0
    %24 = vst [vmem:[#allocation2 + $0x10] sm:$0xff] 0.0
    %25 = vst [vmem:[#allocation2 + $0x18] sm:$0xff] 0.0
    %26 = vst [vmem:[#allocation2 + $0x20] sm:$0xff] 0.0
    %27 = vst [vmem:[#allocation2 + $0x28] sm:$0xff] 0.0
    %28 = vst [vmem:[#allocation2 + $0x30] sm:$0xff] 0.0
    %29 = vst [vmem:[#allocation2 + $0x38] sm:$0xff] 0.0
    %30 = vst [vmem:[#allocation2 + $0x40] sm:$0xff] 0.0
    %31 = vst [vmem:[#allocation2 + $0x48] sm:$0xff] 0.0
    %32 = vst [vmem:[#allocation2 + $0x50] sm:$0xff] 0.0
    %33 = vst [vmem:[#allocation2 + $0x58] sm:$0xff] 0.0
    %34 = vst [vmem:[#allocation2 + $0x60] sm:$0xff] 0.0
    %35 = vst [vmem:[#allocation2 + $0x68] sm:$0xff] 0.0
    %36 = vst [vmem:[#allocation2 + $0x70] sm:$0xff] 0.0
    %37 = vst [vmem:[#allocation2 + $0x78] sm:$0xff] 0.0
    %38 = vst [vmem:[#allocation2 + $0x80] sm:$0xff] 0.0
    %39 = vst [vmem:[#allocation2 + $0x88] sm:$0xff] 0.0
    %40 = vst [vmem:[#allocation2 + $0x90] sm:$0xff] 0.0
    %41 = vst [vmem:[#allocation2 + $0x98] sm:$0xff] 0.0
    %42 = vst [vmem:[#allocation2 + $0xa0] sm:$0xff] 0.0
    %43 = vst [vmem:[#allocation2 + $0xa8] sm:$0xff] 0.0
    %44 = vst [vmem:[#allocation2 + $0xb0] sm:$0xff] 0.0
    %45 = vst [vmem:[#allocation2 + $0xb8] sm:$0xff] 0.0
    %46 = vst [vmem:[#allocation2 + $0xc0] sm:$0xff] 0.0
    %47 = vst [vmem:[#allocation2 + $0xc8] sm:$0xff] 0.0
    %48 = vst [vmem:[#allocation2 + $0xd0] sm:$0xff] 0.0
    %49 = vst [vmem:[#allocation2 + $0xd8] sm:$0xff] 0.0
    %50 = vst [vmem:[#allocation2 + $0xe0] sm:$0xff] 0.0
    %51 = vst [vmem:[#allocation2 + $0xe8] sm:$0xff] 0.0
    %52 = vst [vmem:[#allocation2 + $0xf0] sm:$0xff] 0.0
    %53 = vst [vmem:[#allocation2 + $0xf8] sm:$0xff] 0.0
    %54 = vst [vmem:[#allocation2 + $0x100] sm:$0xff] 0.0
    %55 = vst [vmem:[#allocation2 + $0x108] sm:$0xff] 0.0
    %56 = vst [vmem:[#allocation2 + $0x110] sm:$0xff] 0.0
    %57 = vst [vmem:[#allocation2 + $0x118] sm:$0xff] 0.0
    %58 = vst [vmem:[#allocation2 + $0x120] sm:$0xff] 0.0
    %59 = vst [vmem:[#allocation2 + $0x128] sm:$0xff] 0.0
    %60 = vst [vmem:[#allocation2 + $0x130] sm:$0xff] 0.0
    %61 = vst [vmem:[#allocation2 + $0x138] sm:$0xff] 0.0
    %62 = vst [vmem:[#allocation2 + $0x140] sm:$0xff] 0.0
    %63 = vst [vmem:[#allocation2 + $0x148] sm:$0xff] 0.0
    %64 = vst [vmem:[#allocation2 + $0x150] sm:$0xff] 0.0
    %65 = vst [vmem:[#allocation2 + $0x158] sm:$0xff] 0.0
    %66 = vst [vmem:[#allocation2 + $0x160] sm:$0xff] 0.0
    %67 = vst [vmem:[#allocation2 + $0x168] sm:$0xff] 0.0
    %68 = vst [vmem:[#allocation2 + $0x170] sm:$0xff] 0.0
    %69 = vst [vmem:[#allocation2 + $0x178] sm:$0xff] 0.0
    %70 = vst [vmem:[#allocation2 + $0x180] sm:$0xff] 0.0
    %71 = vst [vmem:[#allocation2 + $0x188] sm:$0xff] 0.0
    %72 = vst [vmem:[#allocation2 + $0x190] sm:$0xff] 0.0
    %73 = vst [vmem:[#allocation2 + $0x198] sm:$0xff] 0.0
    %74 = vst [vmem:[#allocation2 + $0x1a0] sm:$0xff] 0.0
    %75 = vst [vmem:[#allocation2 + $0x1a8] sm:$0xff] 0.0
    %76 = vst [vmem:[#allocation2 + $0x1b0] sm:$0xff] 0.0
    %77 = vst [vmem:[#allocation2 + $0x1b8] sm:$0xff] 0.0
    %78 = vst [vmem:[#allocation2 + $0x1c0] sm:$0xff] 0.0
    %79 = vst [vmem:[#allocation2 + $0x1c8] sm:$0xff] 0.0
    %80 = vst [vmem:[#allocation2 + $0x1d0] sm:$0xff] 0.0
    %81 = vst [vmem:[#allocation2 + $0x1d8] sm:$0xff] 0.0
    %82 = vst [vmem:[#allocation2 + $0x1e0] sm:$0xff] 0.0
    %83 = vst [vmem:[#allocation2 + $0x1e8] sm:$0xff] 0.0
    %84 = vst [vmem:[#allocation2 + $0x1f0] sm:$0xff] 0.0
    %85 = vst [vmem:[#allocation2 + $0x1f8] sm:$0xff] 0.0
  $region21: #{resnet_forward.12} parent=0 // pred_fallthru
    _
  %v86 = vld [vmem:[#allocation2] sm:$0xff]
  %v87 = vld [vmem:[#allocation2 + $0x8] sm:$0xff]
  %v88 = vld [vmem:[#allocation2 + $0x10] sm:$0xff]
  %v89 = vld [vmem:[#allocation2 + $0x18] sm:$0xff]
  %v90 = vld [vmem:[#allocation2 + $0x20] sm:$0xff]
  %v91 = vld [vmem:[#allocation2 + $0x28] sm:$0xff]
  %v92 = vld [vmem:[#allocation2 + $0x30] sm:$0xff]
  %v93 = vld [vmem:[#allocation2 + $0x38] sm:$0xff]
  %v94 = vld [vmem:[#allocation2 + $0x40] sm:$0xff]
  %v95 = vld [vmem:[#allocation2 + $0x48] sm:$0xff]
  %v96 = vld [vmem:[#allocation2 + $0x50] sm:$0xff]
  %v97 = vld [vmem:[#allocation2 + $0x58] sm:$0xff]
  %v98 = vld [vmem:[#allocation2 + $0x60] sm:$0xff]
  %v99 = vld [vmem:[#allocation2 + $0x68] sm:$0xff]
  %v100 = vld [vmem:[#allocation2 + $0x70] sm:$0xff]
  %v101 = vld [vmem:[#allocation2 + $0x78] sm:$0xff]
  %v102 = vld [vmem:[#allocation2 + $0x80] sm:$0xff]
  %v103 = vld [vmem:[#allocation2 + $0x88] sm:$0xff]
  %v104 = vld [vmem:[#allocation2 + $0x90] sm:$0xff]
  %v105 = vld [vmem:[#allocation2 + $0x98] sm:$0xff]
  %v106 = vld [vmem:[#allocation2 + $0xa0] sm:$0xff]
  %v107 = vld [vmem:[#allocation2 + $0xa8] sm:$0xff]
  %v108 = vld [vmem:[#allocation2 + $0xb0] sm:$0xff]
  %v109 = vld [vmem:[#allocation2 + $0xb8] sm:$0xff]
  %v110 = vld [vmem:[#allocation2 + $0xc0] sm:$0xff]
  %v111 = vld [vmem:[#allocation2 + $0xc8] sm:$0xff]
  %v112 = vld [vmem:[#allocation2 + $0xd0] sm:$0xff]
  %v113 = vld [vmem:[#allocation2 + $0xd8] sm:$0xff]
  %v114 = vld [vmem:[#allocation2 + $0xe0] sm:$0xff]
  %v115 = vld [vmem:[#allocation2 + $0xe8] sm:$0xff]
  %v116 = vld [vmem:[#allocation2 + $0xf0] sm:$0xff]
  %v117 = vld [vmem:[#allocation2 + $0xf8] sm:$0xff]
  %v118 = vld [vmem:[#allocation2 + $0x100] sm:$0xff]
  %v119 = vld [vmem:[#allocation2 + $0x108] sm:$0xff]
  %v120 = vld [vmem:[#allocation2 + $0x110] sm:$0xff]
  %v121 = vld [vmem:[#allocation2 + $0x118] sm:$0xff]
  %v122 = vld [vmem:[#allocation2 + $0x120] sm:$0xff]
  %v123 = vld [vmem:[#allocation2 + $0x128] sm:$0xff]
  %v124 = vld [vmem:[#allocation2 + $0x130] sm:$0xff]
  %v125 = vld [vmem:[#allocation2 + $0x138] sm:$0xff]
  %v126 = vld [vmem:[#allocation2 + $0x140] sm:$0xff]
  %v127 = vld [vmem:[#allocation2 + $0x148] sm:$0xff]
  %v128 = vld [vmem:[#allocation2 + $0x150] sm:$0xff]
  %v129 = vld [vmem:[#allocation2 + $0x158] sm:$0xff]
  %v130 = vld [vmem:[#allocation2 + $0x160] sm:$0xff]
  %v131 = vld [vmem:[#allocation2 + $0x168] sm:$0xff]
  %v132 = vld [vmem:[#allocation2 + $0x170] sm:$0xff]
  %v133 = vld [vmem:[#allocation2 + $0x178] sm:$0xff]
  %v134 = vld [vmem:[#allocation2 + $0x180] sm:$0xff]
  %v135 = vld [vmem:[#allocation2 + $0x188] sm:$0xff]
  %v136 = vld [vmem:[#allocation2 + $0x190] sm:$0xff]
  %v137 = vld [vmem:[#allocation2 + $0x198] sm:$0xff]
  %v138 = vld [vmem:[#allocation2 + $0x1a0] sm:$0xff]
  %v139 = vld [vmem:[#allocation2 + $0x1a8] sm:$0xff]
  %v140 = vld [vmem:[#allocation2 + $0x1b0] sm:$0xff]
  %v141 = vld [vmem:[#allocation2 + $0x1b8] sm:$0xff]
  %v142 = vld [vmem:[#allocation2 + $0x1c0] sm:$0xff]
  %v143 = vld [vmem:[#allocation2 + $0x1c8] sm:$0xff]
  %v144 = vld [vmem:[#allocation2 + $0x1d0] sm:$0xff]
  %v145 = vld [vmem:[#allocation2 + $0x1d8] sm:$0xff]
  %v146 = vld [vmem:[#allocation2 + $0x1e0] sm:$0xff]
  %v147 = vld [vmem:[#allocation2 + $0x1e8] sm:$0xff]
  %v148 = vld [vmem:[#allocation2 + $0x1f0] sm:$0xff]
  %v149 = vld [vmem:[#allocation2 + $0x1f8] sm:$0xff]
  %v150 = vld [vmem:[%s0] sm:$0xf]
  %v151 = vld [vmem:[%s0 + $0x4] sm:$0xf]
  %v152 = vld [vmem:[%s0 + $0x8] sm:$0xf]
  %v153 = vld [vmem:[%s0 + $0xc] sm:$0xf]
  %v154 = vld [vmem:[%s0 + $0x10] sm:$0xf]
  %v155 = vld [vmem:[%s0 + $0x14] sm:$0xf]
  %v156 = vld [vmem:[%s0 + $0x18] sm:$0xf]
  %v157 = vld [vmem:[%s0 + $0x1c] sm:$0xf]
  %v158 = vld [vmem:[%s0 + $0x20] sm:$0xf]
  %v159 = vld [vmem:[%s0 + $0x24] sm:$0xf]
  %v160 = vld [vmem:[%s0 + $0x28] sm:$0xf]
  %v161 = vld [vmem:[%s0 + $0x2c] sm:$0xf]
  %v162 = vld [vmem:[%s0 + $0x30] sm:$0xf]
  %v163 = vld [vmem:[%s0 + $0x34] sm:$0xf]
  %v164 = vld [vmem:[%s0 + $0x38] sm:$0xf]
  %v165 = vld [vmem:[%s0 + $0x3c] sm:$0xf]
  %v166 = vld [vmem:[%s0 + $0x40] sm:$0xf]
  %v167 = vld [vmem:[%s0 + $0x44] sm:$0xf]
  %v168 = vld [vmem:[%s0 + $0x48] sm:$0xf]
  %v169 = vld [vmem:[%s0 + $0x4c] sm:$0xf]
  %v170 = vld [vmem:[%s0 + $0x50] sm:$0xf]
  %v171 = vld [vmem:[%s0 + $0x54] sm:$0xf]
  %v172 = vld [vmem:[%s0 + $0x58] sm:$0xf]
  %v173 = vld [vmem:[%s0 + $0x5c] sm:$0xf]
  %v174 = vld [vmem:[%s0 + $0x60] sm:$0xf]
  %v175 = vld [vmem:[%s0 + $0x64] sm:$0xf]
  %v176 = vld [vmem:[%s0 + $0x68] sm:$0xf]
  %v177 = vld [vmem:[%s0 + $0x6c] sm:$0xf]
  %v178 = vld [vmem:[%s0 + $0x70] sm:$0xf]
  %v179 = vld [vmem:[%s0 + $0x74] sm:$0xf]
  %v180 = vld [vmem:[%s0 + $0x78] sm:$0xf]
  %v181 = vld [vmem:[%s0 + $0x7c] sm:$0xf]
  %v182 = vld [vmem:[%s0 + $0x80] sm:$0xf]
  %v183 = vld [vmem:[%s0 + $0x84] sm:$0xf]
  %v184 = vld [vmem:[%s0 + $0x88] sm:$0xf]
  %v185 = vld [vmem:[%s0 + $0x8c] sm:$0xf]
  %v186 = vld [vmem:[%s0 + $0x90] sm:$0xf]
  %v187 = vld [vmem:[%s0 + $0x94] sm:$0xf]
  %v188 = vld [vmem:[%s0 + $0x98] sm:$0xf]
  %v189 = vld [vmem:[%s0 + $0x9c] sm:$0xf]
  %v190 = vld [vmem:[%s0 + $0xa0] sm:$0xf]
  %v191 = vld [vmem:[%s0 + $0xa4] sm:$0xf]
  %v192 = vld [vmem:[%s0 + $0xa8] sm:$0xf]
  %v193 = vld [vmem:[%s0 + $0xac] sm:$0xf]
  %v194 = vld [vmem:[%s0 + $0xb0] sm:$0xf]
  %v195 = vld [vmem:[%s0 + $0xb4] sm:$0xf]
  %v196 = vld [vmem:[%s0 + $0xb8] sm:$0xf]
  %v197 = vld [vmem:[%s0 + $0xbc] sm:$0xf]
  %v198 = vld [vmem:[%s0 + $0xc0] sm:$0xf]
  %v199 = vld [vmem:[%s0 + $0xc4] sm:$0xf]
  %v200 = vld [vmem:[%s0 + $0xc8] sm:$0xf]
  %v201 = vld [vmem:[%s0 + $0xcc] sm:$0xf]
  %v202 = vld [vmem:[%s0 + $0xd0] sm:$0xf]
  %v203 = vld [vmem:[%s0 + $0xd4] sm:$0xf]
  %v204 = vld [vmem:[%s0 + $0xd8] sm:$0xf]
  %v205 = vld [vmem:[%s0 + $0xdc] sm:$0xf]
  %v206 = vld [vmem:[%s0 + $0xe0] sm:$0xf]
  %v207 = vld [vmem:[%s0 + $0xe4] sm:$0xf]
  %v208 = vld [vmem:[%s0 + $0xe8] sm:$0xf]
  %v209 = vld [vmem:[%s0 + $0xec] sm:$0xf]
  %v210 = vld [vmem:[%s0 + $0xf0] sm:$0xf]
  %v211 = vld [vmem:[%s0 + $0xf4] sm:$0xf]
  %v212 = vld [vmem:[%s0 + $0xf8] sm:$0xf]
  %v213 = vld [vmem:[%s0 + $0xfc] sm:$0xf]
  %v214 = vld [vmem:[%s1] sm:$0xf]
  %v215 = vld [vmem:[%s1 + $0x4] sm:$0xf]
  %v216 = vld [vmem:[%s1 + $0x8] sm:$0xf]
  %v217 = vld [vmem:[%s1 + $0xc] sm:$0xf]
  %v218 = vld [vmem:[%s1 + $0x10] sm:$0xf]
  %v219 = vld [vmem:[%s1 + $0x14] sm:$0xf]
  %v220 = vld [vmem:[%s1 + $0x18] sm:$0xf]
  %v221 = vld [vmem:[%s1 + $0x1c] sm:$0xf]
  %v222 = vld [vmem:[%s1 + $0x20] sm:$0xf]
  %v223 = vld [vmem:[%s1 + $0x24] sm:$0xf]
  %v224 = vld [vmem:[%s1 + $0x28] sm:$0xf]
  %v225 = vld [vmem:[%s1 + $0x2c] sm:$0xf]
  %v226 = vld [vmem:[%s1 + $0x30] sm:$0xf]
  %v227 = vld [vmem:[%s1 + $0x34] sm:$0xf]
  %v228 = vld [vmem:[%s1 + $0x38] sm:$0xf]
  %v229 = vld [vmem:[%s1 + $0x3c] sm:$0xf]
  %v294 = vunpack.c.l.b16 %v150
  %v295 = vunpack.c.l.b16 %v151
  %v296 = vunpack.c.l.b16 %v152
  %v297 = vunpack.c.l.b16 %v153
  %v298 = vunpack.c.l.b16 %v154
  %v299 = vunpack.c.l.b16 %v155
  %v300 = vunpack.c.l.b16 %v156
  %v301 = vunpack.c.l.b16 %v157
  %v302 = vunpack.c.l.b16 %v158
  %v303 = vunpack.c.l.b16 %v159
  %v304 = vunpack.c.l.b16 %v160
  %v305 = vunpack.c.l.b16 %v161
  %v306 = vunpack.c.l.b16 %v162
  %v307 = vunpack.c.l.b16 %v163
  %v308 = vunpack.c.l.b16 %v164
  %v309 = vunpack.c.l.b16 %v165
  %v310 = vunpack.c.l.b16 %v166
  %v311 = vunpack.c.l.b16 %v167
  %v312 = vunpack.c.l.b16 %v168
  %v313 = vunpack.c.l.b16 %v169
  %v314 = vunpack.c.l.b16 %v170
  %v315 = vunpack.c.l.b16 %v171
  %v316 = vunpack.c.l.b16 %v172
  %v317 = vunpack.c.l.b16 %v173
  %v318 = vunpack.c.l.b16 %v174
  %v319 = vunpack.c.l.b16 %v175
  %v320 = vunpack.c.l.b16 %v176
  %v321 = vunpack.c.l.b16 %v177
  %v322 = vunpack.c.l.b16 %v178
  %v323 = vunpack.c.l.b16 %v179
  %v324 = vunpack.c.l.b16 %v180
  %v325 = vunpack.c.l.b16 %v181
  %v326 = vunpack.c.l.b16 %v182
  %v327 = vunpack.c.l.b16 %v183
  %v328 = vunpack.c.l.b16 %v184
  %v329 = vunpack.c.l.b16 %v185
  %v330 = vunpack.c.l.b16 %v186
  %v331 = vunpack.c.l.b16 %v187
  %v332 = vunpack.c.l.b16 %v188
  %v333 = vunpack.c.l.b16 %v189
  %v334 = vunpack.c.l.b16 %v190
  %v335 = vunpack.c.l.b16 %v191
  %v336 = vunpack.c.l.b16 %v192
  %v337 = vunpack.c.l.b16 %v193
  %v338 = vunpack.c.l.b16 %v194
  %v339 = vunpack.c.l.b16 %v195
  %v340 = vunpack.c.l.b16 %v196
  %v341 = vunpack.c.l.b16 %v197
  %v342 = vunpack.c.l.b16 %v198
  %v343 = vunpack.c.l.b16 %v199
  %v344 = vunpack.c.l.b16 %v200
  %v345 = vunpack.c.l.b16 %v201
  %v346 = vunpack.c.l.b16 %v202
  %v347 = vunpack.c.l.b16 %v203
  %v348 = vunpack.c.l.b16 %v204
  %v349 = vunpack.c.l.b16 %v205
  %v350 = vunpack.c.l.b16 %v206
  %v351 = vunpack.c.l.b16 %v207
  %v352 = vunpack.c.l.b16 %v208
  %v353 = vunpack.c.l.b16 %v209
  %v354 = vunpack.c.l.b16 %v210
  %v355 = vunpack.c.l.b16 %v211
  %v356 = vunpack.c.l.b16 %v212
  %v357 = vunpack.c.l.b16 %v213
  %v358 = vpack.c.b16 %v295, %v294
  %v359 = vpack.c.b16 %v297, %v296
  %v360 = vpack.c.b16 %v299, %v298
  %v361 = vpack.c.b16 %v301, %v300
  %v362 = vpack.c.b16 %v303, %v302
  %v363 = vpack.c.b16 %v305, %v304
  %v364 = vpack.c.b16 %v307, %v306
  %v365 = vpack.c.b16 %v309, %v308
  %v366 = vpack.c.b16 %v311, %v310
  %v367 = vpack.c.b16 %v313, %v312
  %v368 = vpack.c.b16 %v315, %v314
  %v369 = vpack.c.b16 %v317, %v316
  %v370 = vpack.c.b16 %v319, %v318
  %v371 = vpack.c.b16 %v321, %v320
  %v372 = vpack.c.b16 %v323, %v322
  %v373 = vpack.c.b16 %v325, %v324
  %v374 = vpack.c.b16 %v327, %v326
  %v375 = vpack.c.b16 %v329, %v328
  %v376 = vpack.c.b16 %v331, %v330
  %v377 = vpack.c.b16 %v333, %v332
  %v378 = vpack.c.b16 %v335, %v334
  %v379 = vpack.c.b16 %v337, %v336
  %v380 = vpack.c.b16 %v339, %v338
  %v381 = vpack.c.b16 %v341, %v340
  %v382 = vpack.c.b16 %v343, %v342
  %v383 = vpack.c.b16 %v345, %v344
  %v384 = vpack.c.b16 %v347, %v346
  %v385 = vpack.c.b16 %v349, %v348
  %v386 = vpack.c.b16 %v351, %v350
  %v387 = vpack.c.b16 %v353, %v352
  %v388 = vpack.c.b16 %v355, %v354
  %v389 = vpack.c.b16 %v357, %v356
  %v438 = vunpack.c.l.b16 %v214
  %v439 = vunpack.c.l.b16 %v215
  %v440 = vunpack.c.l.b16 %v216
  %v441 = vunpack.c.l.b16 %v217
  %v442 = vunpack.c.l.b16 %v218
  %v443 = vunpack.c.l.b16 %v219
  %v444 = vunpack.c.l.b16 %v220
  %v445 = vunpack.c.l.b16 %v221
  %v446 = vunpack.c.l.b16 %v222
  %v447 = vunpack.c.l.b16 %v223
  %v448 = vunpack.c.l.b16 %v224
  %v449 = vunpack.c.l.b16 %v225
  %v450 = vunpack.c.l.b16 %v226
  %v451 = vunpack.c.l.b16 %v227
  %v452 = vunpack.c.l.b16 %v228
  %v453 = vunpack.c.l.b16 %v229
  %v454 = vpack.c.b16 %v439, %v438
  %v455 = vpack.c.b16 %v441, %v440
  %v456 = vpack.c.b16 %v443, %v442
  %v457 = vpack.c.b16 %v445, %v444
  %v458 = vpack.c.b16 %v447, %v446
  %v459 = vpack.c.b16 %v449, %v448
  %v460 = vpack.c.b16 %v451, %v450
  %v461 = vpack.c.b16 %v453, %v452
  %470 = vmatprep.subr.bf16.mxu0 0
  %471 = vmatpush1.bf16.msra.mxu0 %v461
  %472 = vmatprep.subr.bf16.mxu0 0
  %473 = vmatpush1.bf16.msra.mxu0 %v460
  %474 = vmatprep.subr.bf16.mxu0 0
  %475 = vmatpush1.bf16.msra.mxu0 %v459
  %476 = vmatprep.subr.bf16.mxu0 0
  %477 = vmatpush1.bf16.msra.mxu0 %v458
  %478 = vmatprep.subr.bf16.mxu0 0
  %479 = vmatpush1.bf16.msra.mxu0 %v457
  %480 = vmatprep.subr.bf16.mxu0 0
  %481 = vmatpush1.bf16.msra.mxu0 %v456
  %482 = vmatprep.subr.bf16.mxu0 0
  %483 = vmatpush1.bf16.msra.mxu0 %v455
  %484 = vmatprep.subr.bf16.mxu0 0
  %485 = vmatpush1.bf16.msra.mxu0 %v454
  %486 = vmatprep.subr.bf16.mxu0 0
  %487 = vmatpush2.bf16.msra.mxu0 0
  %488 = vmatprep.subr.bf16.mxu0 0
  %489 = vmatpush2.bf16.msra.mxu0 0
  %490 = vmatprep.subr.bf16.mxu0 0
  %491 = vmatpush2.bf16.msra.mxu0 0
  %492 = vmatprep.subr.bf16.mxu0 0
  %493 = vmatpush2.bf16.msra.mxu0 0
  %494 = vmatprep.subr.bf16.mxu0 0
  %495 = vmatpush2.bf16.msra.mxu0 0
  %496 = vmatprep.subr.bf16.mxu0 0
  %497 = vmatpush2.bf16.msra.mxu0 0
  %498 = vmatprep.subr.bf16.mxu0 0
  %499 = vmatpush2.bf16.msra.mxu0 0
  %500 = vmatprep.subr.bf16.mxu0 0
  %501 = vmatpush2.bf16.msra.mxu0 0
  %502 = vmatprep.mubr.bf16.mxu0 0
  %503 = vmatmul.mubr.bf16.gmra.mxu0 %v358
  %v504 = vpop.f32.mrf.mxu0
  %v505 = vadd.f32 0.0, %v504
  %v506 = vpop.f32.mrf.mxu0
  %v507 = vpop.f32.mrf.mxu0
  %v508 = vadd.f32 0.0, %v507
  %v509 = vpop.f32.mrf.mxu0
  %510 = vmatprep.mubr.bf16.mxu0 0
  %511 = vmatmul.mubr.bf16.gmra.mxu0 %v359
  %v512 = vpop.f32.mrf.mxu0
  %v513 = vadd.f32 0.0, %v512
  %v514 = vpop.f32.mrf.mxu0
  %v515 = vpop.f32.mrf.mxu0
  %v516 = vadd.f32 0.0, %v515
  %v517 = vpop.f32.mrf.mxu0
  %518 = vmatprep.mubr.bf16.mxu0 0
  %519 = vmatmul.mubr.bf16.gmra.mxu0 %v360
  %v520 = vpop.f32.mrf.mxu0
  %v521 = vadd.f32 0.0, %v520
  %v522 = vpop.f32.mrf.mxu0
  %v523 = vpop.f32.mrf.mxu0
  %v524 = vadd.f32 0.0, %v523
  %v525 = vpop.f32.mrf.mxu0
  %526 = vmatprep.mubr.bf16.mxu0 0
  %527 = vmatmul.mubr.bf16.gmra.mxu0 %v361
  %v528 = vpop.f32.mrf.mxu0
  %v529 = vadd.f32 0.0, %v528
  %v530 = vpop.f32.mrf.mxu0
  %v531 = vpop.f32.mrf.mxu0
  %v532 = vadd.f32 0.0, %v531
  %v533 = vpop.f32.mrf.mxu0
  %534 = vmatprep.mubr.bf16.mxu0 0
  %535 = vmatmul.mubr.bf16.gmra.mxu0 %v362
  %v536 = vpop.f32.mrf.mxu0
  %v537 = vadd.f32 0.0, %v536
  %v538 = vpop.f32.mrf.mxu0
  %v539 = vpop.f32.mrf.mxu0
  %v540 = vadd.f32 0.0, %v539
  %v541 = vpop.f32.mrf.mxu0
  %542 = vmatprep.mubr.bf16.mxu0 0
  %543 = vmatmul.mubr.bf16.gmra.mxu0 %v363
  %v544 = vpop.f32.mrf.mxu0
  %v545 = vadd.f32 0.0, %v544
  %v546 = vpop.f32.mrf.mxu0
  %v547 = vpop.f32.mrf.mxu0
  %v548 = vadd.f32 0.0, %v547
  %v549 = vpop.f32.mrf.mxu0
  %550 = vmatprep.mubr.bf16.mxu0 0
  %551 = vmatmul.mubr.bf16.gmra.mxu0 %v364
  %v552 = vpop.f32.mrf.mxu0
  %v553 = vadd.f32 0.0, %v552
  %v554 = vpop.f32.mrf.mxu0
  %v555 = vpop.f32.mrf.mxu0
  %v556 = vadd.f32 0.0, %v555
  %v557 = vpop.f32.mrf.mxu0
  %558 = vmatprep.mubr.bf16.mxu0 0
  %559 = vmatmul.mubr.bf16.gmra.mxu0 %v365
  %v560 = vpop.f32.mrf.mxu0
  %v561 = vadd.f32 0.0, %v560
  %v562 = vpop.f32.mrf.mxu0
  %v563 = vpop.f32.mrf.mxu0
  %v564 = vadd.f32 0.0, %v563
  %v565 = vpop.f32.mrf.mxu0
  %566 = vmatprep.mubr.bf16.mxu0 0
  %567 = vmatmul.mubr.bf16.gmra.mxu0 %v366
  %v568 = vpop.f32.mrf.mxu0
  %v569 = vadd.f32 0.0, %v568
  %v570 = vpop.f32.mrf.mxu0
  %v571 = vpop.f32.mrf.mxu0
  %v572 = vadd.f32 0.0, %v571
  %v573 = vpop.f32.mrf.mxu0
  %574 = vmatprep.mubr.bf16.mxu0 0
  %575 = vmatmul.mubr.bf16.gmra.mxu0 %v367
  %v576 = vpop.f32.mrf.mxu0
  %v577 = vadd.f32 0.0, %v576
  %v578 = vpop.f32.mrf.mxu0
  %v579 = vpop.f32.mrf.mxu0
  %v580 = vadd.f32 0.0, %v579
  %v581 = vpop.f32.mrf.mxu0
  %582 = vmatprep.mubr.bf16.mxu0 0
  %583 = vmatmul.mubr.bf16.gmra.mxu0 %v368
  %v584 = vpop.f32.mrf.mxu0
  %v585 = vadd.f32 0.0, %v584
  %v586 = vpop.f32.mrf.mxu0
  %v587 = vpop.f32.mrf.mxu0
  %v588 = vadd.f32 0.0, %v587
  %v589 = vpop.f32.mrf.mxu0
  %590 = vmatprep.mubr.bf16.mxu0 0
  %591 = vmatmul.mubr.bf16.gmra.mxu0 %v369
  %v592 = vpop.f32.mrf.mxu0
  %v593 = vadd.f32 0.0, %v592
  %v594 = vpop.f32.mrf.mxu0
  %v595 = vpop.f32.mrf.mxu0
  %v596 = vadd.f32 0.0, %v595
  %v597 = vpop.f32.mrf.mxu0
  %598 = vmatprep.mubr.bf16.mxu0 0
  %599 = vmatmul.mubr.bf16.gmra.mxu0 %v370
  %v600 = vpop.f32.mrf.mxu0
  %v601 = vadd.f32 0.0, %v600
  %v602 = vpop.f32.mrf.mxu0
  %v603 = vpop.f32.mrf.mxu0
  %v604 = vadd.f32 0.0, %v603
  %v605 = vpop.f32.mrf.mxu0
  %606 = vmatprep.mubr.bf16.mxu0 0
  %607 = vmatmul.mubr.bf16.gmra.mxu0 %v371
  %v608 = vpop.f32.mrf.mxu0
  %v609 = vadd.f32 0.0, %v608
  %v610 = vpop.f32.mrf.mxu0
  %v611 = vpop.f32.mrf.mxu0
  %v612 = vadd.f32 0.0, %v611
  %v613 = vpop.f32.mrf.mxu0
  %614 = vmatprep.mubr.bf16.mxu0 0
  %615 = vmatmul.mubr.bf16.gmra.mxu0 %v372
  %v616 = vpop.f32.mrf.mxu0
  %v617 = vadd.f32 0.0, %v616
  %v618 = vpop.f32.mrf.mxu0
  %v619 = vpop.f32.mrf.mxu0
  %v620 = vadd.f32 0.0, %v619
  %v621 = vpop.f32.mrf.mxu0
  %622 = vmatprep.mubr.bf16.mxu0 0
  %623 = vmatmul.mubr.bf16.gmra.mxu0 %v373
  %v624 = vpop.f32.mrf.mxu0
  %v625 = vadd.f32 0.0, %v624
  %v626 = vpop.f32.mrf.mxu0
  %v627 = vpop.f32.mrf.mxu0
  %v628 = vadd.f32 0.0, %v627
  %v629 = vpop.f32.mrf.mxu0
  %630 = vmatprep.mubr.bf16.mxu0 0
  %631 = vmatmul.mubr.bf16.gmra.mxu0 %v374
  %v632 = vpop.f32.mrf.mxu0
  %v633 = vadd.f32 0.0, %v632
  %v634 = vpop.f32.mrf.mxu0
  %v635 = vpop.f32.mrf.mxu0
  %v636 = vadd.f32 0.0, %v635
  %v637 = vpop.f32.mrf.mxu0
  %638 = vmatprep.mubr.bf16.mxu0 0
  %639 = vmatmul.mubr.bf16.gmra.mxu0 %v375
  %v640 = vpop.f32.mrf.mxu0
  %v641 = vadd.f32 0.0, %v640
  %v642 = vpop.f32.mrf.mxu0
  %v643 = vpop.f32.mrf.mxu0
  %v644 = vadd.f32 0.0, %v643
  %v645 = vpop.f32.mrf.mxu0
  %646 = vmatprep.mubr.bf16.mxu0 0
  %647 = vmatmul.mubr.bf16.gmra.mxu0 %v376
  %v648 = vpop.f32.mrf.mxu0
  %v649 = vadd.f32 0.0, %v648
  %v650 = vpop.f32.mrf.mxu0
  %v651 = vpop.f32.mrf.mxu0
  %v652 = vadd.f32 0.0, %v651
  %v653 = vpop.f32.mrf.mxu0
  %654 = vmatprep.mubr.bf16.mxu0 0
  %655 = vmatmul.mubr.bf16.gmra.mxu0 %v377
  %v656 = vpop.f32.mrf.mxu0
  %v657 = vadd.f32 0.0, %v656
  %v658 = vpop.f32.mrf.mxu0
  %v659 = vpop.f32.mrf.mxu0
  %v660 = vadd.f32 0.0, %v659
  %v661 = vpop.f32.mrf.mxu0
  %662 = vmatprep.mubr.bf16.mxu0 0
  %663 = vmatmul.mubr.bf16.gmra.mxu0 %v378
  %v664 = vpop.f32.mrf.mxu0
  %v665 = vadd.f32 0.0, %v664
  %v666 = vpop.f32.mrf.mxu0
  %v667 = vpop.f32.mrf.mxu0
  %v668 = vadd.f32 0.0, %v667
  %v669 = vpop.f32.mrf.mxu0
  %670 = vmatprep.mubr.bf16.mxu0 0
  %671 = vmatmul.mubr.bf16.gmra.mxu0 %v379
  %v672 = vpop.f32.mrf.mxu0
  %v673 = vadd.f32 0.0, %v672
  %v674 = vpop.f32.mrf.mxu0
  %v675 = vpop.f32.mrf.mxu0
  %v676 = vadd.f32 0.0, %v675
  %v677 = vpop.f32.mrf.mxu0
  %678 = vmatprep.mubr.bf16.mxu0 0
  %679 = vmatmul.mubr.bf16.gmra.mxu0 %v380
  %v680 = vpop.f32.mrf.mxu0
  %v681 = vadd.f32 0.0, %v680
  %v682 = vpop.f32.mrf.mxu0
  %v683 = vpop.f32.mrf.mxu0
  %v684 = vadd.f32 0.0, %v683
  %v685 = vpop.f32.mrf.mxu0
  %686 = vmatprep.mubr.bf16.mxu0 0
  %687 = vmatmul.mubr.bf16.gmra.mxu0 %v381
  %v688 = vpop.f32.mrf.mxu0
  %v689 = vadd.f32 0.0, %v688
  %v690 = vpop.f32.mrf.mxu0
  %v691 = vpop.f32.mrf.mxu0
  %v692 = vadd.f32 0.0, %v691
  %v693 = vpop.f32.mrf.mxu0
  %694 = vmatprep.mubr.bf16.mxu0 0
  %695 = vmatmul.mubr.bf16.gmra.mxu0 %v382
  %v696 = vpop.f32.mrf.mxu0
  %v697 = vadd.f32 0.0, %v696
  %v698 = vpop.f32.mrf.mxu0
  %v699 = vpop.f32.mrf.mxu0
  %v700 = vadd.f32 0.0, %v699
  %v701 = vpop.f32.mrf.mxu0
  %702 = vmatprep.mubr.bf16.mxu0 0
  %703 = vmatmul.mubr.bf16.gmra.mxu0 %v383
  %v704 = vpop.f32.mrf.mxu0
  %v705 = vadd.f32 0.0, %v704
  %v706 = vpop.f32.mrf.mxu0
  %v707 = vpop.f32.mrf.mxu0
  %v708 = vadd.f32 0.0, %v707
  %v709 = vpop.f32.mrf.mxu0
  %710 = vmatprep.mubr.bf16.mxu0 0
  %711 = vmatmul.mubr.bf16.gmra.mxu0 %v384
  %v712 = vpop.f32.mrf.mxu0
  %v713 = vadd.f32 0.0, %v712
  %v714 = vpop.f32.mrf.mxu0
  %v715 = vpop.f32.mrf.mxu0
  %v716 = vadd.f32 0.0, %v715
  %v717 = vpop.f32.mrf.mxu0
  %718 = vmatprep.mubr.bf16.mxu0 0
  %719 = vmatmul.mubr.bf16.gmra.mxu0 %v385
  %v720 = vpop.f32.mrf.mxu0
  %v721 = vadd.f32 0.0, %v720
  %v722 = vpop.f32.mrf.mxu0
  %v723 = vpop.f32.mrf.mxu0
  %v724 = vadd.f32 0.0, %v723
  %v725 = vpop.f32.mrf.mxu0
  %726 = vmatprep.mubr.bf16.mxu0 0
  %727 = vmatmul.mubr.bf16.gmra.mxu0 %v386
  %v728 = vpop.f32.mrf.mxu0
  %v729 = vadd.f32 0.0, %v728
  %v730 = vpop.f32.mrf.mxu0
  %v731 = vpop.f32.mrf.mxu0
  %v732 = vadd.f32 0.0, %v731
  %v733 = vpop.f32.mrf.mxu0
  %734 = vmatprep.mubr.bf16.mxu0 0
  %735 = vmatmul.mubr.bf16.gmra.mxu0 %v387
  %v736 = vpop.f32.mrf.mxu0
  %v737 = vadd.f32 0.0, %v736
  %v738 = vpop.f32.mrf.mxu0
  %v739 = vpop.f32.mrf.mxu0
  %v740 = vadd.f32 0.0, %v739
  %v741 = vpop.f32.mrf.mxu0
  %742 = vmatprep.mubr.bf16.mxu0 0
  %743 = vmatmul.mubr.bf16.gmra.mxu0 %v388
  %v744 = vpop.f32.mrf.mxu0
  %v745 = vadd.f32 0.0, %v744
  %v746 = vpop.f32.mrf.mxu0
  %v747 = vpop.f32.mrf.mxu0
  %v748 = vadd.f32 0.0, %v747
  %v749 = vpop.f32.mrf.mxu0
  %750 = vmatprep.mubr.bf16.mxu0 0
  %751 = vmatmul.mubr.bf16.gmra.mxu0 %v389
  %v752 = vpop.f32.mrf.mxu0
  %v753 = vadd.f32 0.0, %v752
  %v754 = vpop.f32.mrf.mxu0
  %v755 = vpop.f32.mrf.mxu0
  %v756 = vadd.f32 0.0, %v755
  %v757 = vpop.f32.mrf.mxu0
  %758 = vdwg.mxu0
  %v759 = vadd.f32 %v86, %v505
  %v760 = vadd.f32 %v87, %v508
  %v761 = vadd.f32 %v88, %v513
  %v762 = vadd.f32 %v89, %v516
  %v763 = vadd.f32 %v90, %v521
  %v764 = vadd.f32 %v91, %v524
  %v765 = vadd.f32 %v92, %v529
  %v766 = vadd.f32 %v93, %v532
  %v767 = vadd.f32 %v94, %v537
  %v768 = vadd.f32 %v95, %v540
  %v769 = vadd.f32 %v96, %v545
  %v770 = vadd.f32 %v97, %v548
  %v771 = vadd.f32 %v98, %v553
  %v772 = vadd.f32 %v99, %v556
  %v773 = vadd.f32 %v100, %v561
  %v774 = vadd.f32 %v101, %v564
  %v775 = vadd.f32 %v102, %v569
  %v776 = vadd.f32 %v103, %v572
  %v777 = vadd.f32 %v104, %v577
  %v778 = vadd.f32 %v105, %v580
  %v779 = vadd.f32 %v106, %v585
  %v780 = vadd.f32 %v107, %v588
  %v781 = vadd.f32 %v108, %v593
  %v782 = vadd.f32 %v109, %v596
  %v783 = vadd.f32 %v110, %v601
  %v784 = vadd.f32 %v111, %v604
  %v785 = vadd.f32 %v112, %v609
  %v786 = vadd.f32 %v113, %v612
  %v787 = vadd.f32 %v114, %v617
  %v788 = vadd.f32 %v115, %v620
  %v789 = vadd.f32 %v116, %v625
  %v790 = vadd.f32 %v117, %v628
  %v791 = vadd.f32 %v118, %v633
  %v792 = vadd.f32 %v119, %v636
  %v793 = vadd.f32 %v120, %v641
  %v794 = vadd.f32 %v121, %v644
  %v795 = vadd.f32 %v122, %v649
  %v796 = vadd.f32 %v123, %v652
  %v797 = vadd.f32 %v124, %v657
  %v798 = vadd.f32 %v125, %v660
  %v799 = vadd.f32 %v126, %v665
  %v800 = vadd.f32 %v127, %v668
  %v801 = vadd.f32 %v128, %v673
  %v802 = vadd.f32 %v129, %v676
  %v803 = vadd.f32 %v130, %v681
  %v804 = vadd.f32 %v131, %v684
  %v805 = vadd.f32 %v132, %v689
  %v806 = vadd.f32 %v133, %v692
  %v807 = vadd.f32 %v134, %v697
  %v808 = vadd.f32 %v135, %v700
  %v809 = vadd.f32 %v136, %v705
  %v810 = vadd.f32 %v137, %v708
  %v811 = vadd.f32 %v138, %v713
  %v812 = vadd.f32 %v139, %v716
  %v813 = vadd.f32 %v140, %v721
  %v814 = vadd.f32 %v141, %v724
  %v815 = vadd.f32 %v142, %v729
  %v816 = vadd.f32 %v143, %v732
  %v817 = vadd.f32 %v144, %v737
  %v818 = vadd.f32 %v145, %v740
  %v819 = vadd.f32 %v146, %v745
  %v820 = vadd.f32 %v147, %v748
  %v821 = vadd.f32 %v148, %v753
  %v822 = vadd.f32 %v149, %v756
  %823 = vst [vmem:[#allocation2] sm:$0xff] %v759
  %824 = vst [vmem:[#allocation2 + $0x8] sm:$0xff] %v760
  %825 = vst [vmem:[#allocation2 + $0x10] sm:$0xff] %v761
  %826 = vst [vmem:[#allocation2 + $0x18] sm:$0xff] %v762
  %827 = vst [vmem:[#allocation2 + $0x20] sm:$0xff] %v763
  %828 = vst [vmem:[#allocation2 + $0x28] sm:$0xff] %v764
  %829 = vst [vmem:[#allocation2 + $0x30] sm:$0xff] %v765
  %830 = vst [vmem:[#allocation2 + $0x38] sm:$0xff] %v766
  %831 = vst [vmem:[#allocation2 + $0x40] sm:$0xff] %v767
  %832 = vst [vmem:[#allocation2 + $0x48] sm:$0xff] %v768
  %833 = vst [vmem:[#allocation2 + $0x50] sm:$0xff] %v769
  %834 = vst [vmem:[#allocation2 + $0x58] sm:$0xff] %v770
  %835 = vst [vmem:[#allocation2 + $0x60] sm:$0xff] %v771
  %836 = vst [vmem:[#allocation2 + $0x68] sm:$0xff] %v772
  %837 = vst [vmem:[#allocation2 + $0x70] sm:$0xff] %v773
  %838 = vst [vmem:[#allocation2 + $0x78] sm:$0xff] %v774
  %839 = vst [vmem:[#allocation2 + $0x80] sm:$0xff] %v775
  %840 = vst [vmem:[#allocation2 + $0x88] sm:$0xff] %v776
  %841 = vst [vmem:[#allocation2 + $0x90] sm:$0xff] %v777
  %842 = vst [vmem:[#allocation2 + $0x98] sm:$0xff] %v778
  %843 = vst [vmem:[#allocation2 + $0xa0] sm:$0xff] %v779
  %844 = vst [vmem:[#allocation2 + $0xa8] sm:$0xff] %v780
  %845 = vst [vmem:[#allocation2 + $0xb0] sm:$0xff] %v781
  %846 = vst [vmem:[#allocation2 + $0xb8] sm:$0xff] %v782
  %847 = vst [vmem:[#allocation2 + $0xc0] sm:$0xff] %v783
  %848 = vst [vmem:[#allocation2 + $0xc8] sm:$0xff] %v784
  %849 = vst [vmem:[#allocation2 + $0xd0] sm:$0xff] %v785
  %850 = vst [vmem:[#allocation2 + $0xd8] sm:$0xff] %v786
  %851 = vst [vmem:[#allocation2 + $0xe0] sm:$0xff] %v787
  %852 = vst [vmem:[#allocation2 + $0xe8] sm:$0xff] %v788
  %853 = vst [vmem:[#allocation2 + $0xf0] sm:$0xff] %v789
  %854 = vst [vmem:[#allocation2 + $0xf8] sm:$0xff] %v790
  %855 = vst [vmem:[#allocation2 + $0x100] sm:$0xff] %v791
  %856 = vst [vmem:[#allocation2 + $0x108] sm:$0xff] %v792
  %857 = vst [vmem:[#allocation2 + $0x110] sm:$0xff] %v793
  %858 = vst [vmem:[#allocation2 + $0x118] sm:$0xff] %v794
  %859 = vst [vmem:[#allocation2 + $0x120] sm:$0xff] %v795
  %860 = vst [vmem:[#allocation2 + $0x128] sm:$0xff] %v796
  %861 = vst [vmem:[#allocation2 + $0x130] sm:$0xff] %v797
  %862 = vst [vmem:[#allocation2 + $0x138] sm:$0xff] %v798
  %863 = vst [vmem:[#allocation2 + $0x140] sm:$0xff] %v799
  %864 = vst [vmem:[#allocation2 + $0x148] sm:$0xff] %v800
  %865 = vst [vmem:[#allocation2 + $0x150] sm:$0xff] %v801
  %866 = vst [vmem:[#allocation2 + $0x158] sm:$0xff] %v802
  %867 = vst [vmem:[#allocation2 + $0x160] sm:$0xff] %v803
  %868 = vst [vmem:[#allocation2 + $0x168] sm:$0xff] %v804
  %869 = vst [vmem:[#allocation2 + $0x170] sm:$0xff] %v805
  %870 = vst [vmem:[#allocation2 + $0x178] sm:$0xff] %v806
  %871 = vst [vmem:[#allocation2 + $0x180] sm:$0xff] %v807
  %872 = vst [vmem:[#allocation2 + $0x188] sm:$0xff] %v808
  %873 = vst [vmem:[#allocation2 + $0x190] sm:$0xff] %v809
  %874 = vst [vmem:[#allocation2 + $0x198] sm:$0xff] %v810
  %875 = vst [vmem:[#allocation2 + $0x1a0] sm:$0xff] %v811
  %876 = vst [vmem:[#allocation2 + $0x1a8] sm:$0xff] %v812
  %877 = vst [vmem:[#allocation2 + $0x1b0] sm:$0xff] %v813
  %878 = vst [vmem:[#allocation2 + $0x1b8] sm:$0xff] %v814
  %879 = vst [vmem:[#allocation2 + $0x1c0] sm:$0xff] %v815
  %880 = vst [vmem:[#allocation2 + $0x1c8] sm:$0xff] %v816
  %881 = vst [vmem:[#allocation2 + $0x1d0] sm:$0xff] %v817
  %882 = vst [vmem:[#allocation2 + $0x1d8] sm:$0xff] %v818
  %883 = vst [vmem:[#allocation2 + $0x1e0] sm:$0xff] %v819
  %884 = vst [vmem:[#allocation2 + $0x1e8] sm:$0xff] %v820
  %885 = vst [vmem:[#allocation2 + $0x1f0] sm:$0xff] %v821
  %886 = vst [vmem:[#allocation2 + $0x1f8] sm:$0xff] %v822
  // Predicated region
  $region22: #{resnet_forward.12} parent=0 // pred_check
    %p887 = pneg %p18
  $region23: #{resnet_forward.12} parent=0 // pred_check_branch
    %889 = sbr.rel (%p887) target = $region25
  $region24: #{resnet_forward.12} parent=0 // pred_region
    %v890 = vld [vmem:[#allocation2] sm:$0xff]
    %v891 = vld [vmem:[#allocation2 + $0x8] sm:$0xff]
    %v892 = vld [vmem:[#allocation2 + $0x10] sm:$0xff]
    %v893 = vld [vmem:[#allocation2 + $0x18] sm:$0xff]
    %v894 = vld [vmem:[#allocation2 + $0x20] sm:$0xff]
    %v895 = vld [vmem:[#allocation2 + $0x28] sm:$0xff]
    %v896 = vld [vmem:[#allocation2 + $0x30] sm:$0xff]
    %v897 = vld [vmem:[#allocation2 + $0x38] sm:$0xff]
    %v898 = vld [vmem:[#allocation2 + $0x40] sm:$0xff]
    %v899 = vld [vmem:[#allocation2 + $0x48] sm:$0xff]
    %v900 = vld [vmem:[#allocation2 + $0x50] sm:$0xff]
    %v901 = vld [vmem:[#allocation2 + $0x58] sm:$0xff]
    %v902 = vld [vmem:[#allocation2 + $0x60] sm:$0xff]
    %v903 = vld [vmem:[#allocation2 + $0x68] sm:$0xff]
    %v904 = vld [vmem:[#allocation2 + $0x70] sm:$0xff]
    %v905 = vld [vmem:[#allocation2 + $0x78] sm:$0xff]
    %v906 = vld [vmem:[#allocation2 + $0x80] sm:$0xff]
    %v907 = vld [vmem:[#allocation2 + $0x88] sm:$0xff]
    %v908 = vld [vmem:[#allocation2 + $0x90] sm:$0xff]
    %v909 = vld [vmem:[#allocation2 + $0x98] sm:$0xff]
    %v910 = vld [vmem:[#allocation2 + $0xa0] sm:$0xff]
    %v911 = vld [vmem:[#allocation2 + $0xa8] sm:$0xff]
    %v912 = vld [vmem:[#allocation2 + $0xb0] sm:$0xff]
    %v913 = vld [vmem:[#allocation2 + $0xb8] sm:$0xff]
    %v914 = vld [vmem:[#allocation2 + $0xc0] sm:$0xff]
    %v915 = vld [vmem:[#allocation2 + $0xc8] sm:$0xff]
    %v916 = vld [vmem:[#allocation2 + $0xd0] sm:$0xff]
    %v917 = vld [vmem:[#allocation2 + $0xd8] sm:$0xff]
    %v918 = vld [vmem:[#allocation2 + $0xe0] sm:$0xff]
    %v919 = vld [vmem:[#allocation2 + $0xe8] sm:$0xff]
    %v920 = vld [vmem:[#allocation2 + $0xf0] sm:$0xff]
    %v921 = vld [vmem:[#allocation2 + $0xf8] sm:$0xff]
    %v922 = vld [vmem:[#allocation2 + $0x100] sm:$0xff]
    %v923 = vld [vmem:[#allocation2 + $0x108] sm:$0xff]
    %v924 = vld [vmem:[#allocation2 + $0x110] sm:$0xff]
    %v925 = vld [vmem:[#allocation2 + $0x118] sm:$0xff]
    %v926 = vld [vmem:[#allocation2 + $0x120] sm:$0xff]
    %v927 = vld [vmem:[#allocation2 + $0x128] sm:$0xff]
    %v928 = vld [vmem:[#allocation2 + $0x130] sm:$0xff]
    %v929 = vld [vmem:[#allocation2 + $0x138] sm:$0xff]
    %v930 = vld [vmem:[#allocation2 + $0x140] sm:$0xff]
    %v931 = vld [vmem:[#allocation2 + $0x148] sm:$0xff]
    %v932 = vld [vmem:[#allocation2 + $0x150] sm:$0xff]
    %v933 = vld [vmem:[#allocation2 + $0x158] sm:$0xff]
    %v934 = vld [vmem:[#allocation2 + $0x160] sm:$0xff]
    %v935 = vld [vmem:[#allocation2 + $0x168] sm:$0xff]
    %v936 = vld [vmem:[#allocation2 + $0x170] sm:$0xff]
    %v937 = vld [vmem:[#allocation2 + $0x178] sm:$0xff]
    %v938 = vld [vmem:[#allocation2 + $0x180] sm:$0xff]
    %v939 = vld [vmem:[#allocation2 + $0x188] sm:$0xff]
    %v940 = vld [vmem:[#allocation2 + $0x190] sm:$0xff]
    %v941 = vld [vmem:[#allocation2 + $0x198] sm:$0xff]
    %v942 = vld [vmem:[#allocation2 + $0x1a0] sm:$0xff]
    %v943 = vld [vmem:[#allocation2 + $0x1a8] sm:$0xff]
    %v944 = vld [vmem:[#allocation2 + $0x1b0] sm:$0xff]
    %v945 = vld [vmem:[#allocation2 + $0x1b8] sm:$0xff]
    %v946 = vld [vmem:[#allocation2 + $0x1c0] sm:$0xff]
    %v947 = vld [vmem:[#allocation2 + $0x1c8] sm:$0xff]
    %v948 = vld [vmem:[#allocation2 + $0x1d0] sm:$0xff]
    %v949 = vld [vmem:[#allocation2 + $0x1d8] sm:$0xff]
    %v950 = vld [vmem:[#allocation2 + $0x1e0] sm:$0xff]
    %v951 = vld [vmem:[#allocation2 + $0x1e8] sm:$0xff]
    %v952 = vld [vmem:[#allocation2 + $0x1f0] sm:$0xff]
    %v953 = vld [vmem:[#allocation2 + $0x1f8] sm:$0xff]
    %v954 = vadd.f32 %v890, %v891
    %v955 = vadd.f32 %v954, %v892
    %v956 = vadd.f32 %v955, %v893
    %v957 = vadd.f32 %v956, %v894
    %v958 = vadd.f32 %v957, %v895
    %v959 = vadd.f32 %v958, %v896
    %v960 = vadd.f32 %v959, %v897
    %v961 = vadd.f32 %v960, %v898
    %v962 = vadd.f32 %v961, %v899
    %v963 = vadd.f32 %v962, %v900
    %v964 = vadd.f32 %v963, %v901
    %v965 = vadd.f32 %v964, %v902
    %v966 = vadd.f32 %v965, %v903
    %v967 = vadd.f32 %v966, %v904
    %v968 = vadd.f32 %v967, %v905
    %v969 = vadd.f32 %v968, %v906
    %v970 = vadd.f32 %v969, %v907
    %v971 = vadd.f32 %v970, %v908
    %v972 = vadd.f32 %v971, %v909
    %v973 = vadd.f32 %v972, %v910
    %v974 = vadd.f32 %v973, %v911
    %v975 = vadd.f32 %v974, %v912
    %v976 = vadd.f32 %v975, %v913
    %v977 = vadd.f32 %v976, %v914
    %v978 = vadd.f32 %v977, %v915
    %v979 = vadd.f32 %v978, %v916
    %v980 = vadd.f32 %v979, %v917
    %v981 = vadd.f32 %v980, %v918
    %v982 = vadd.f32 %v981, %v919
    %v983 = vadd.f32 %v982, %v920
    %v984 = vadd.f32 %v983, %v921
    %v985 = vadd.f32 %v984, %v922
    %v986 = vadd.f32 %v985, %v923
    %v987 = vadd.f32 %v986, %v924
    %v988 = vadd.f32 %v987, %v925
    %v989 = vadd.f32 %v988, %v926
    %v990 = vadd.f32 %v989, %v927
    %v991 = vadd.f32 %v990, %v928
    %v992 = vadd.f32 %v991, %v929
    %v993 = vadd.f32 %v992, %v930
    %v994 = vadd.f32 %v993, %v931
    %v995 = vadd.f32 %v994, %v932
    %v996 = vadd.f32 %v995, %v933
    %v997 = vadd.f32 %v996, %v934
    %v998 = vadd.f32 %v997, %v935
    %v999 = vadd.f32 %v998, %v936
    %v1000 = vadd.f32 %v999, %v937
    %v1001 = vadd.f32 %v1000, %v938
    %v1002 = vadd.f32 %v1001, %v939
    %v1003 = vadd.f32 %v1002, %v940
    %v1004 = vadd.f32 %v1003, %v941
    %v1005 = vadd.f32 %v1004, %v942
    %v1006 = vadd.f32 %v1005, %v943
    %v1007 = vadd.f32 %v1006, %v944
    %v1008 = vadd.f32 %v1007, %v945
    %v1009 = vadd.f32 %v1008, %v946
    %v1010 = vadd.f32 %v1009, %v947
    %v1011 = vadd.f32 %v1010, %v948
    %v1012 = vadd.f32 %v1011, %v949
    %v1013 = vadd.f32 %v1012, %v950
    %v1014 = vadd.f32 %v1013, %v951
    %v1015 = vadd.f32 %v1014, %v952
    %v1016 = vadd.f32 %v1015, %v953
    %v1017 = vrot.slane %v1016, 4
    %v1018 = vadd.f32 %v1016, %v1017
    %v1019 = vrot.slane %v1018, 2
    %v1020 = vadd.f32 %v1018, %v1019
    %v1021 = vrot.slane %v1020, 1
    %v1022 = vadd.f32 %v1020, %v1021
    %v1023 = vmul.f32 %v1022, 0.001953125
    %v1024 = vlaneseq
    %v1025 = vshrl.u32 %v1024, 7
    %v1026 = vadd.s32 %v1025, 8
    %v1027 = vadd.s32 %v1025, 16
    %v1028 = vadd.s32 %v1025, 24
    %v1029 = vadd.s32 %v1025, 32
    %v1030 = vadd.s32 %v1025, 40
    %v1031 = vadd.s32 %v1025, 48
    %v1032 = vadd.s32 %v1025, 56
    %v1033 = vadd.s32 %v1025, 64
    %v1034 = vadd.s32 %v1025, 72
    %v1035 = vadd.s32 %v1025, 80
    %v1036 = vadd.s32 %v1025, 88
    %v1037 = vadd.s32 %v1025, 96
    %v1038 = vadd.s32 %v1025, 104
    %v1039 = vadd.s32 %v1025, 112
    %v1040 = vadd.s32 %v1025, 120
    %v1041 = vadd.s32 %v1025, 128
    %v1042 = vadd.s32 %v1025, 136
    %v1043 = vadd.s32 %v1025, 144
    %v1044 = vadd.s32 %v1025, 152
    %v1045 = vadd.s32 %v1025, 160
    %v1046 = vadd.s32 %v1025, 168
    %v1047 = vadd.s32 %v1025, 176
    %v1048 = vadd.s32 %v1025, 184
    %v1049 = vadd.s32 %v1025, 192
    %v1050 = vadd.s32 %v1025, 200
    %v1051 = vadd.s32 %v1025, 208
    %v1052 = vadd.s32 %v1025, 216
    %v1053 = vadd.s32 %v1025, 224
    %v1054 = vadd.s32 %v1025, 232
    %v1055 = vadd.s32 %v1025, 240
    %v1056 = vadd.s32 %v1025, 248
    %v1057 = vadd.s32 %v1025, 256
    %v1058 = vadd.s32 %v1025, 264
    %v1059 = vadd.s32 %v1025, 272
    %v1060 = vadd.s32 %v1025, 280
    %v1061 = vadd.s32 %v1025, 288
    %v1062 = vadd.s32 %v1025, 296
    %v1063 = vadd.s32 %v1025, 304
    %v1064 = vadd.s32 %v1025, 312
    %v1065 = vadd.s32 %v1025, 320
    %v1066 = vadd.s32 %v1025, 328
    %v1067 = vadd.s32 %v1025, 336
    %v1068 = vadd.s32 %v1025, 344
    %v1069 = vadd.s32 %v1025, 352
    %v1070 = vadd.s32 %v1025, 360
    %v1071 = vadd.s32 %v1025, 368
    %v1072 = vadd.s32 %v1025, 376
    %v1073 = vadd.s32 %v1025, 384
    %v1074 = vadd.s32 %v1025, 392
    %v1075 = vadd.s32 %v1025, 400
    %v1076 = vadd.s32 %v1025, 408
    %v1077 = vadd.s32 %v1025, 416
    %v1078 = vadd.s32 %v1025, 424
    %v1079 = vadd.s32 %v1025, 432
    %v1080 = vadd.s32 %v1025, 440
    %v1081 = vadd.s32 %v1025, 448
    %v1082 = vadd.s32 %v1025, 456
    %v1083 = vadd.s32 %v1025, 464
    %v1084 = vadd.s32 %v1025, 472
    %v1085 = vadd.s32 %v1025, 480
    %v1086 = vadd.s32 %v1025, 488
    %v1087 = vadd.s32 %v1025, 496
    %v1088 = vadd.s32 %v1025, 504
    %vm1089 = vcmp.lt.s32.totalorder %v1025, 512
    %vm1090 = vcmp.lt.s32.totalorder %v1026, 512
    %vm1091 = vcmp.lt.s32.totalorder %v1027, 512
    %vm1092 = vcmp.lt.s32.totalorder %v1028, 512
    %vm1093 = vcmp.lt.s32.totalorder %v1029, 512
    %vm1094 = vcmp.lt.s32.totalorder %v1030, 512
    %vm1095 = vcmp.lt.s32.totalorder %v1031, 512
    %vm1096 = vcmp.lt.s32.totalorder %v1032, 512
    %vm1097 = vcmp.lt.s32.totalorder %v1033, 512
    %vm1098 = vcmp.lt.s32.totalorder %v1034, 512
    %vm1099 = vcmp.lt.s32.totalorder %v1035, 512
    %vm1100 = vcmp.lt.s32.totalorder %v1036, 512
    %vm1101 = vcmp.lt.s32.totalorder %v1037, 512
    %vm1102 = vcmp.lt.s32.totalorder %v1038, 512
    %vm1103 = vcmp.lt.s32.totalorder %v1039, 512
    %vm1104 = vcmp.lt.s32.totalorder %v1040, 512
    %vm1105 = vcmp.lt.s32.totalorder %v1041, 512
    %vm1106 = vcmp.lt.s32.totalorder %v1042, 512
    %vm1107 = vcmp.lt.s32.totalorder %v1043, 512
    %vm1108 = vcmp.lt.s32.totalorder %v1044, 512
    %vm1109 = vcmp.lt.s32.totalorder %v1045, 512
    %vm1110 = vcmp.lt.s32.totalorder %v1046, 512
    %vm1111 = vcmp.lt.s32.totalorder %v1047, 512
    %vm1112 = vcmp.lt.s32.totalorder %v1048, 512
    %vm1113 = vcmp.lt.s32.totalorder %v1049, 512
    %vm1114 = vcmp.lt.s32.totalorder %v1050, 512
    %vm1115 = vcmp.lt.s32.totalorder %v1051, 512
    %vm1116 = vcmp.lt.s32.totalorder %v1052, 512
    %vm1117 = vcmp.lt.s32.totalorder %v1053, 512
    %vm1118 = vcmp.lt.s32.totalorder %v1054, 512
    %vm1119 = vcmp.lt.s32.totalorder %v1055, 512
    %vm1120 = vcmp.lt.s32.totalorder %v1056, 512
    %vm1121 = vcmp.lt.s32.totalorder %v1057, 512
    %vm1122 = vcmp.lt.s32.totalorder %v1058, 512
    %vm1123 = vcmp.lt.s32.totalorder %v1059, 512
    %vm1124 = vcmp.lt.s32.totalorder %v1060, 512
    %vm1125 = vcmp.lt.s32.totalorder %v1061, 512
    %vm1126 = vcmp.lt.s32.totalorder %v1062, 512
    %vm1127 = vcmp.lt.s32.totalorder %v1063, 512
    %vm1128 = vcmp.lt.s32.totalorder %v1064, 512
    %vm1129 = vcmp.lt.s32.totalorder %v1065, 512
    %vm1130 = vcmp.lt.s32.totalorder %v1066, 512
    %vm1131 = vcmp.lt.s32.totalorder %v1067, 512
    %vm1132 = vcmp.lt.s32.totalorder %v1068, 512
    %vm1133 = vcmp.lt.s32.totalorder %v1069, 512
    %vm1134 = vcmp.lt.s32.totalorder %v1070, 512
    %vm1135 = vcmp.lt.s32.totalorder %v1071, 512
    %vm1136 = vcmp.lt.s32.totalorder %v1072, 512
    %vm1137 = vcmp.lt.s32.totalorder %v1073, 512
    %vm1138 = vcmp.lt.s32.totalorder %v1074, 512
    %vm1139 = vcmp.lt.s32.totalorder %v1075, 512
    %vm1140 = vcmp.lt.s32.totalorder %v1076, 512
    %vm1141 = vcmp.lt.s32.totalorder %v1077, 512
    %vm1142 = vcmp.lt.s32.totalorder %v1078, 512
    %vm1143 = vcmp.lt.s32.totalorder %v1079, 512
    %vm1144 = vcmp.lt.s32.totalorder %v1080, 512
    %vm1145 = vcmp.lt.s32.totalorder %v1081, 512
    %vm1146 = vcmp.lt.s32.totalorder %v1082, 512
    %vm1147 = vcmp.lt.s32.totalorder %v1083, 512
    %vm1148 = vcmp.lt.s32.totalorder %v1084, 512
    %vm1149 = vcmp.lt.s32.totalorder %v1085, 512
    %vm1150 = vcmp.lt.s32.totalorder %v1086, 512
    %vm1151 = vcmp.lt.s32.totalorder %v1087, 512
    %vm1152 = vcmp.lt.s32.totalorder %v1088, 512
    %v1153 = vsub.f32 %v890, %v1023
    %v1154 = vsub.f32 %v891, %v1023
    %v1155 = vsub.f32 %v892, %v1023
    %v1156 = vsub.f32 %v893, %v1023
    %v1157 = vsub.f32 %v894, %v1023
    %v1158 = vsub.f32 %v895, %v1023
    %v1159 = vsub.f32 %v896, %v1023
    %v1160 = vsub.f32 %v897, %v1023
    %v1161 = vsub.f32 %v898, %v1023
    %v1162 = vsub.f32 %v899, %v1023
    %v1163 = vsub.f32 %v900, %v1023
    %v1164 = vsub.f32 %v901, %v1023
    %v1165 = vsub.f32 %v902, %v1023
    %v1166 = vsub.f32 %v903, %v1023
    %v1167 = vsub.f32 %v904, %v1023
    %v1168 = vsub.f32 %v905, %v1023
    %v1169 = vsub.f32 %v906, %v1023
    %v1170 = vsub.f32 %v907, %v1023
    %v1171 = vsub.f32 %v908, %v1023
    %v1172 = vsub.f32 %v909, %v1023
    %v1173 = vsub.f32 %v910, %v1023
    %v1174 = vsub.f32 %v911, %v1023
    %v1175 = vsub.f32 %v912, %v1023
    %v1176 = vsub.f32 %v913, %v1023
    %v1177 = vsub.f32 %v914, %v1023
    %v1178 = vsub.f32 %v915, %v1023
    %v1179 = vsub.f32 %v916, %v1023
    %v1180 = vsub.f32 %v917, %v1023
    %v1181 = vsub.f32 %v918, %v1023
    %v1182 = vsub.f32 %v919, %v1023
    %v1183 = vsub.f32 %v920, %v1023
    %v1184 = vsub.f32 %v921, %v1023
    %v1185 = vsub.f32 %v922, %v1023
    %v1186 = vsub.f32 %v923, %v1023
    %v1187 = vsub.f32 %v924, %v1023
    %v1188 = vsub.f32 %v925, %v1023
    %v1189 = vsub.f32 %v926, %v1023
    %v1190 = vsub.f32 %v927, %v1023
    %v1191 = vsub.f32 %v928, %v1023
    %v1192 = vsub.f32 %v929, %v1023
    %v1193 = vsub.f32 %v930, %v1023
    %v1194 = vsub.f32 %v931, %v1023
    %v1195 = vsub.f32 %v932, %v1023
    %v1196 = vsub.f32 %v933, %v1023
    %v1197 = vsub.f32 %v934, %v1023
    %v1198 = vsub.f32 %v935, %v1023
    %v1199 = vsub.f32 %v936, %v1023
    %v1200 = vsub.f32 %v937, %v1023
    %v1201 = vsub.f32 %v938, %v1023
    %v1202 = vsub.f32 %v939, %v1023
    %v1203 = vsub.f32 %v940, %v1023
    %v1204 = vsub.f32 %v941, %v1023
    %v1205 = vsub.f32 %v942, %v1023
    %v1206 = vsub.f32 %v943, %v1023
    %v1207 = vsub.f32 %v944, %v1023
    %v1208 = vsub.f32 %v945, %v1023
    %v1209 = vsub.f32 %v946, %v1023
    %v1210 = vsub.f32 %v947, %v1023
    %v1211 = vsub.f32 %v948, %v1023
    %v1212 = vsub.f32 %v949, %v1023
    %v1213 = vsub.f32 %v950, %v1023
    %v1214 = vsub.f32 %v951, %v1023
    %v1215 = vsub.f32 %v952, %v1023
    %v1216 = vsub.f32 %v953, %v1023
    %v1217 = vsel %vm1089, %v1153, 0.0
    %v1218 = vsel %vm1090, %v1154, 0.0
    %v1219 = vsel %vm1091, %v1155, 0.0
    %v1220 = vsel %vm1092, %v1156, 0.0
    %v1221 = vsel %vm1093, %v1157, 0.0
    %v1222 = vsel %vm1094, %v1158, 0.0
    %v1223 = vsel %vm1095, %v1159, 0.0
    %v1224 = vsel %vm1096, %v1160, 0.0
    %v1225 = vsel %vm1097, %v1161, 0.0
    %v1226 = vsel %vm1098, %v1162, 0.0
    %v1227 = vsel %vm1099, %v1163, 0.0
    %v1228 = vsel %vm1100, %v1164, 0.0
    %v1229 = vsel %vm1101, %v1165, 0.0
    %v1230 = vsel %vm1102, %v1166, 0.0
    %v1231 = vsel %vm1103, %v1167, 0.0
    %v1232 = vsel %vm1104, %v1168, 0.0
    %v1233 = vsel %vm1105, %v1169, 0.0
    %v1234 = vsel %vm1106, %v1170, 0.0
    %v1235 = vsel %vm1107, %v1171, 0.0
    %v1236 = vsel %vm1108, %v1172, 0.0
    %v1237 = vsel %vm1109, %v1173, 0.0
    %v1238 = vsel %vm1110, %v1174, 0.0
    %v1239 = vsel %vm1111, %v1175, 0.0
    %v1240 = vsel %vm1112, %v1176, 0.0
    %v1241 = vsel %vm1113, %v1177, 0.0
    %v1242 = vsel %vm1114, %v1178, 0.0
    %v1243 = vsel %vm1115, %v1179, 0.0
    %v1244 = vsel %vm1116, %v1180, 0.0
    %v1245 = vsel %vm1117, %v1181, 0.0
    %v1246 = vsel %vm1118, %v1182, 0.0
    %v1247 = vsel %vm1119, %v1183, 0.0
    %v1248 = vsel %vm1120, %v1184, 0.0
    %v1249 = vsel %vm1121, %v1185, 0.0
    %v1250 = vsel %vm1122, %v1186, 0.0
    %v1251 = vsel %vm1123, %v1187, 0.0
    %v1252 = vsel %vm1124, %v1188, 0.0
    %v1253 = vsel %vm1125, %v1189, 0.0
    %v1254 = vsel %vm1126, %v1190, 0.0
    %v1255 = vsel %vm1127, %v1191, 0.0
    %v1256 = vsel %vm1128, %v1192, 0.0
    %v1257 = vsel %vm1129, %v1193, 0.0
    %v1258 = vsel %vm1130, %v1194, 0.0
    %v1259 = vsel %vm1131, %v1195, 0.0
    %v1260 = vsel %vm1132, %v1196, 0.0
    %v1261 = vsel %vm1133, %v1197, 0.0
    %v1262 = vsel %vm1134, %v1198, 0.0
    %v1263 = vsel %vm1135, %v1199, 0.0
    %v1264 = vsel %vm1136, %v1200, 0.0
    %v1265 = vsel %vm1137, %v1201, 0.0
    %v1266 = vsel %vm1138, %v1202, 0.0
    %v1267 = vsel %vm1139, %v1203, 0.0
    %v1268 = vsel %vm1140, %v1204, 0.0
    %v1269 = vsel %vm1141, %v1205, 0.0
    %v1270 = vsel %vm1142, %v1206, 0.0
    %v1271 = vsel %vm1143, %v1207, 0.0
    %v1272 = vsel %vm1144, %v1208, 0.0
    %v1273 = vsel %vm1145, %v1209, 0.0
    %v1274 = vsel %vm1146, %v1210, 0.0
    %v1275 = vsel %vm1147, %v1211, 0.0
    %v1276 = vsel %vm1148, %v1212, 0.0
    %v1277 = vsel %vm1149, %v1213, 0.0
    %v1278 = vsel %vm1150, %v1214, 0.0
    %v1279 = vsel %vm1151, %v1215, 0.0
    %v1280 = vsel %vm1152, %v1216, 0.0
    %v1281 = vmul.f32 %v1217, %v1217
    %v1282 = vmul.f32 %v1218, %v1218
    %v1283 = vmul.f32 %v1219, %v1219
    %v1284 = vmul.f32 %v1220, %v1220
    %v1285 = vmul.f32 %v1221, %v1221
    %v1286 = vmul.f32 %v1222, %v1222
    %v1287 = vmul.f32 %v1223, %v1223
    %v1288 = vmul.f32 %v1224, %v1224
    %v1289 = vmul.f32 %v1225, %v1225
    %v1290 = vmul.f32 %v1226, %v1226
    %v1291 = vmul.f32 %v1227, %v1227
    %v1292 = vmul.f32 %v1228, %v1228
    %v1293 = vmul.f32 %v1229, %v1229
    %v1294 = vmul.f32 %v1230, %v1230
    %v1295 = vmul.f32 %v1231, %v1231
    %v1296 = vmul.f32 %v1232, %v1232
    %v1297 = vmul.f32 %v1233, %v1233
    %v1298 = vmul.f32 %v1234, %v1234
    %v1299 = vmul.f32 %v1235, %v1235
    %v1300 = vmul.f32 %v1236, %v1236
    %v1301 = vmul.f32 %v1237, %v1237
    %v1302 = vmul.f32 %v1238, %v1238
    %v1303 = vmul.f32 %v1239, %v1239
    %v1304 = vmul.f32 %v1240, %v1240
    %v1305 = vmul.f32 %v1241, %v1241
    %v1306 = vmul.f32 %v1242, %v1242
    %v1307 = vmul.f32 %v1243, %v1243
    %v1308 = vmul.f32 %v1244, %v1244
    %v1309 = vmul.f32 %v1245, %v1245
    %v1310 = vmul.f32 %v1246, %v1246
    %v1311 = vmul.f32 %v1247, %v1247
    %v1312 = vmul.f32 %v1248, %v1248
    %v1313 = vmul.f32 %v1249, %v1249
    %v1314 = vmul.f32 %v1250, %v1250
    %v1315 = vmul.f32 %v1251, %v1251
    %v1316 = vmul.f32 %v1252, %v1252
    %v1317 = vmul.f32 %v1253, %v1253
    %v1318 = vmul.f32 %v1254, %v1254
    %v1319 = vmul.f32 %v1255, %v1255
    %v1320 = vmul.f32 %v1256, %v1256
    %v1321 = vmul.f32 %v1257, %v1257
    %v1322 = vmul.f32 %v1258, %v1258
    %v1323 = vmul.f32 %v1259, %v1259
    %v1324 = vmul.f32 %v1260, %v1260
    %v1325 = vmul.f32 %v1261, %v1261
    %v1326 = vmul.f32 %v1262, %v1262
    %v1327 = vmul.f32 %v1263, %v1263
    %v1328 = vmul.f32 %v1264, %v1264
    %v1329 = vmul.f32 %v1265, %v1265
    %v1330 = vmul.f32 %v1266, %v1266
    %v1331 = vmul.f32 %v1267, %v1267
    %v1332 = vmul.f32 %v1268, %v1268
    %v1333 = vmul.f32 %v1269, %v1269
    %v1334 = vmul.f32 %v1270, %v1270
    %v1335 = vmul.f32 %v1271, %v1271
    %v1336 = vmul.f32 %v1272, %v1272
    %v1337 = vmul.f32 %v1273, %v1273
    %v1338 = vmul.f32 %v1274, %v1274
    %v1339 = vmul.f32 %v1275, %v1275
    %v1340 = vmul.f32 %v1276, %v1276
    %v1341 = vmul.f32 %v1277, %v1277
    %v1342 = vmul.f32 %v1278, %v1278
    %v1343 = vmul.f32 %v1279, %v1279
    %v1344 = vmul.f32 %v1280, %v1280
    %v1345 = vadd.f32 %v1281, %v1282
    %v1346 = vadd.f32 %v1345, %v1283
    %v1347 = vadd.f32 %v1346, %v1284
    %v1348 = vadd.f32 %v1347, %v1285
    %v1349 = vadd.f32 %v1348, %v1286
    %v1350 = vadd.f32 %v1349, %v1287
    %v1351 = vadd.f32 %v1350, %v1288
    %v1352 = vadd.f32 %v1351, %v1289
    %v1353 = vadd.f32 %v1352, %v1290
    %v1354 = vadd.f32 %v1353, %v1291
    %v1355 = vadd.f32 %v1354, %v1292
    %v1356 = vadd.f32 %v1355, %v1293
    %v1357 = vadd.f32 %v1356, %v1294
    %v1358 = vadd.f32 %v1357, %v1295
    %v1359 = vadd.f32 %v1358, %v1296
    %v1360 = vadd.f32 %v1359, %v1297
    %v1361 = vadd.f32 %v1360, %v1298
    %v1362 = vadd.f32 %v1361, %v1299
    %v1363 = vadd.f32 %v1362, %v1300
    %v1364 = vadd.f32 %v1363, %v1301
    %v1365 = vadd.f32 %v1364, %v1302
    %v1366 = vadd.f32 %v1365, %v1303
    %v1367 = vadd.f32 %v1366, %v1304
    %v1368 = vadd.f32 %v1367, %v1305
    %v1369 = vadd.f32 %v1368, %v1306
    %v1370 = vadd.f32 %v1369, %v1307
    %v1371 = vadd.f32 %v1370, %v1308
    %v1372 = vadd.f32 %v1371, %v1309
    %v1373 = vadd.f32 %v1372, %v1310
    %v1374 = vadd.f32 %v1373, %v1311
    %v1375 = vadd.f32 %v1374, %v1312
    %v1376 = vadd.f32 %v1375, %v1313
    %v1377 = vadd.f32 %v1376, %v1314
    %v1378 = vadd.f32 %v1377, %v1315
    %v1379 = vadd.f32 %v1378, %v1316
    %v1380 = vadd.f32 %v1379, %v1317
    %v1381 = vadd.f32 %v1380, %v1318
    %v1382 = vadd.f32 %v1381, %v1319
    %v1383 = vadd.f32 %v1382, %v1320
    %v1384 = vadd.f32 %v1383, %v1321
    %v1385 = vadd.f32 %v1384, %v1322
    %v1386 = vadd.f32 %v1385, %v1323
    %v1387 = vadd.f32 %v1386, %v1324
    %v1388 = vadd.f32 %v1387, %v1325
    %v1389 = vadd.f32 %v1388, %v1326
    %v1390 = vadd.f32 %v1389, %v1327
    %v1391 = vadd.f32 %v1390, %v1328
    %v1392 = vadd.f32 %v1391, %v1329
    %v1393 = vadd.f32 %v1392, %v1330
    %v1394 = vadd.f32 %v1393, %v1331
    %v1395 = vadd.f32 %v1394, %v1332
    %v1396 = vadd.f32 %v1395, %v1333
    %v1397 = vadd.f32 %v1396, %v1334
    %v1398 = vadd.f32 %v1397, %v1335
    %v1399 = vadd.f32 %v1398, %v1336
    %v1400 = vadd.f32 %v1399, %v1337
    %v1401 = vadd.f32 %v1400, %v1338
    %v1402 = vadd.f32 %v1401, %v1339
    %v1403 = vadd.f32 %v1402, %v1340
    %v1404 = vadd.f32 %v1403, %v1341
    %v1405 = vadd.f32 %v1404, %v1342
    %v1406 = vadd.f32 %v1405, %v1343
    %v1407 = vadd.f32 %v1406, %v1344
    %v1408 = vrot.slane %v1407, 4
    %v1409 = vadd.f32 %v1407, %v1408
    %v1410 = vrot.slane %v1409, 2
    %v1411 = vadd.f32 %v1409, %v1410
    %v1412 = vrot.slane %v1411, 1
    %v1413 = vadd.f32 %v1411, %v1412
    %v1414 = vmul.f32 %v1413, 0.001953125
    %v1415 = vld [vmem:[%s2] sm:$0x1]
    %v1416 = vadd.f32 %v1414, 1e-05
    %v1417 = vrsqrt.pop %v1416
    %v1418 = vmul.f32 %v1415, %v1417
    %v1419 = vld [vmem:[%s3] sm:$0x1]
    %v1420 = vmul.f32 %v1023, %v1418
    %v1421 = vsub.f32 %v1419, %v1420
    %v1423 = vlaneseq
    %v1424 = vshrl.u32 %v1423, 7
    %v1425 = vsub.s32 0, %v1424
    %v1426 = vrot.slane %v1418, %v1425
    %v1428 = vmul.f32 %v890, %v1426
    %v1429 = vmul.f32 %v891, %v1426
    %v1430 = vmul.f32 %v892, %v1426
    %v1431 = vmul.f32 %v893, %v1426
    %v1432 = vmul.f32 %v894, %v1426
    %v1433 = vmul.f32 %v895, %v1426
    %v1434 = vmul.f32 %v896, %v1426
    %v1435 = vmul.f32 %v897, %v1426
    %v1436 = vmul.f32 %v898, %v1426
    %v1437 = vmul.f32 %v899, %v1426
    %v1438 = vmul.f32 %v900, %v1426
    %v1439 = vmul.f32 %v901, %v1426
    %v1440 = vmul.f32 %v902, %v1426
    %v1441 = vmul.f32 %v903, %v1426
    %v1442 = vmul.f32 %v904, %v1426
    %v1443 = vmul.f32 %v905, %v1426
    %v1444 = vmul.f32 %v906, %v1426
    %v1445 = vmul.f32 %v907, %v1426
    %v1446 = vmul.f32 %v908, %v1426
    %v1447 = vmul.f32 %v909, %v1426
    %v1448 = vmul.f32 %v910, %v1426
    %v1449 = vmul.f32 %v911, %v1426
    %v1450 = vmul.f32 %v912, %v1426
    %v1451 = vmul.f32 %v913, %v1426
    %v1452 = vmul.f32 %v914, %v1426
    %v1453 = vmul.f32 %v915, %v1426
    %v1454 = vmul.f32 %v916, %v1426
    %v1455 = vmul.f32 %v917, %v1426
    %v1456 = vmul.f32 %v918, %v1426
    %v1457 = vmul.f32 %v919, %v1426
    %v1458 = vmul.f32 %v920, %v1426
    %v1459 = vmul.f32 %v921, %v1426
    %v1460 = vmul.f32 %v922, %v1426
    %v1461 = vmul.f32 %v923, %v1426
    %v1462 = vmul.f32 %v924, %v1426
    %v1463 = vmul.f32 %v925, %v1426
    %v1464 = vmul.f32 %v926, %v1426
    %v1465 = vmul.f32 %v927, %v1426
    %v1466 = vmul.f32 %v928, %v1426
    %v1467 = vmul.f32 %v929, %v1426
    %v1468 = vmul.f32 %v930, %v1426
    %v1469 = vmul.f32 %v931, %v1426
    %v1470 = vmul.f32 %v932, %v1426
    %v1471 = vmul.f32 %v933, %v1426
    %v1472 = vmul.f32 %v934, %v1426
    %v1473 = vmul.f32 %v935, %v1426
    %v1474 = vmul.f32 %v936, %v1426
    %v1475 = vmul.f32 %v937, %v1426
    %v1476 = vmul.f32 %v938, %v1426
    %v1477 = vmul.f32 %v939, %v1426
    %v1478 = vmul.f32 %v940, %v1426
    %v1479 = vmul.f32 %v941, %v1426
    %v1480 = vmul.f32 %v942, %v1426
    %v1481 = vmul.f32 %v943, %v1426
    %v1482 = vmul.f32 %v944, %v1426
    %v1483 = vmul.f32 %v945, %v1426
    %v1484 = vmul.f32 %v946, %v1426
    %v1485 = vmul.f32 %v947, %v1426
    %v1486 = vmul.f32 %v948, %v1426
    %v1487 = vmul.f32 %v949, %v1426
    %v1488 = vmul.f32 %v950, %v1426
    %v1489 = vmul.f32 %v951, %v1426
    %v1490 = vmul.f32 %v952, %v1426
    %v1491 = vmul.f32 %v953, %v1426
    %v1493 = vlaneseq
    %v1494 = vshrl.u32 %v1493, 7
    %v1495 = vsub.s32 0, %v1494
    %v1496 = vrot.slane %v1421, %v1495
    %v1498 = vadd.f32 %v1428, %v1496
    %v1499 = vadd.f32 %v1429, %v1496
    %v1500 = vadd.f32 %v1430, %v1496
    %v1501 = vadd.f32 %v1431, %v1496
    %v1502 = vadd.f32 %v1432, %v1496
    %v1503 = vadd.f32 %v1433, %v1496
    %v1504 = vadd.f32 %v1434, %v1496
    %v1505 = vadd.f32 %v1435, %v1496
    %v1506 = vadd.f32 %v1436, %v1496
    %v1507 = vadd.f32 %v1437, %v1496
    %v1508 = vadd.f32 %v1438, %v1496
    %v1509 = vadd.f32 %v1439, %v1496
    %v1510 = vadd.f32 %v1440, %v1496
    %v1511 = vadd.f32 %v1441, %v1496
    %v1512 = vadd.f32 %v1442, %v1496
    %v1513 = vadd.f32 %v1443, %v1496
    %v1514 = vadd.f32 %v1444, %v1496
    %v1515 = vadd.f32 %v1445, %v1496
    %v1516 = vadd.f32 %v1446, %v1496
    %v1517 = vadd.f32 %v1447, %v1496
    %v1518 = vadd.f32 %v1448, %v1496
    %v1519 = vadd.f32 %v1449, %v1496
    %v1520 = vadd.f32 %v1450, %v1496
    %v1521 = vadd.f32 %v1451, %v1496
    %v1522 = vadd.f32 %v1452, %v1496
    %v1523 = vadd.f32 %v1453, %v1496
    %v1524 = vadd.f32 %v1454, %v1496
    %v1525 = vadd.f32 %v1455, %v1496
    %v1526 = vadd.f32 %v1456, %v1496
    %v1527 = vadd.f32 %v1457, %v1496
    %v1528 = vadd.f32 %v1458, %v1496
    %v1529 = vadd.f32 %v1459, %v1496
    %v1530 = vadd.f32 %v1460, %v1496
    %v1531 = vadd.f32 %v1461, %v1496
    %v1532 = vadd.f32 %v1462, %v1496
    %v1533 = vadd.f32 %v1463, %v1496
    %v1534 = vadd.f32 %v1464, %v1496
    %v1535 = vadd.f32 %v1465, %v1496
    %v1536 = vadd.f32 %v1466, %v1496
    %v1537 = vadd.f32 %v1467, %v1496
    %v1538 = vadd.f32 %v1468, %v1496
    %v1539 = vadd.f32 %v1469, %v1496
    %v1540 = vadd.f32 %v1470, %v1496
    %v1541 = vadd.f32 %v1471, %v1496
    %v1542 = vadd.f32 %v1472, %v1496
    %v1543 = vadd.f32 %v1473, %v1496
    %v1544 = vadd.f32 %v1474, %v1496
    %v1545 = vadd.f32 %v1475, %v1496
    %v1546 = vadd.f32 %v1476, %v1496
    %v1547 = vadd.f32 %v1477, %v1496
    %v1548 = vadd.f32 %v1478, %v1496
    %v1549 = vadd.f32 %v1479, %v1496
    %v1550 = vadd.f32 %v1480, %v1496
    %v1551 = vadd.f32 %v1481, %v1496
    %v1552 = vadd.f32 %v1482, %v1496
    %v1553 = vadd.f32 %v1483, %v1496
    %v1554 = vadd.f32 %v1484, %v1496
    %v1555 = vadd.f32 %v1485, %v1496
    %v1556 = vadd.f32 %v1486, %v1496
    %v1557 = vadd.f32 %v1487, %v1496
    %v1558 = vadd.f32 %v1488, %v1496
    %v1559 = vadd.f32 %v1489, %v1496
    %v1560 = vadd.f32 %v1490, %v1496
    %v1561 = vadd.f32 %v1491, %v1496
    %v1562 = vmax.f32 %v1498, 0.0
    %v1563 = vmax.f32 %v1499, 0.0
    %v1564 = vmax.f32 %v1500, 0.0
    %v1565 = vmax.f32 %v1501, 0.0
    %v1566 = vmax.f32 %v1502, 0.0
    %v1567 = vmax.f32 %v1503, 0.0
    %v1568 = vmax.f32 %v1504, 0.0
    %v1569 = vmax.f32 %v1505, 0.0
    %v1570 = vmax.f32 %v1506, 0.0
    %v1571 = vmax.f32 %v1507, 0.0
    %v1572 = vmax.f32 %v1508, 0.0
    %v1573 = vmax.f32 %v1509, 0.0
    %v1574 = vmax.f32 %v1510, 0.0
    %v1575 = vmax.f32 %v1511, 0.0
    %v1576 = vmax.f32 %v1512, 0.0
    %v1577 = vmax.f32 %v1513, 0.0
    %v1578 = vmax.f32 %v1514, 0.0
    %v1579 = vmax.f32 %v1515, 0.0
    %v1580 = vmax.f32 %v1516, 0.0
    %v1581 = vmax.f32 %v1517, 0.0
    %v1582 = vmax.f32 %v1518, 0.0
    %v1583 = vmax.f32 %v1519, 0.0
    %v1584 = vmax.f32 %v1520, 0.0
    %v1585 = vmax.f32 %v1521, 0.0
    %v1586 = vmax.f32 %v1522, 0.0
    %v1587 = vmax.f32 %v1523, 0.0
    %v1588 = vmax.f32 %v1524, 0.0
    %v1589 = vmax.f32 %v1525, 0.0
    %v1590 = vmax.f32 %v1526, 0.0
    %v1591 = vmax.f32 %v1527, 0.0
    %v1592 = vmax.f32 %v1528, 0.0
    %v1593 = vmax.f32 %v1529, 0.0
    %v1594 = vmax.f32 %v1530, 0.0
    %v1595 = vmax.f32 %v1531, 0.0
    %v1596 = vmax.f32 %v1532, 0.0
    %v1597 = vmax.f32 %v1533, 0.0
    %v1598 = vmax.f32 %v1534, 0.0
    %v1599 = vmax.f32 %v1535, 0.0
    %v1600 = vmax.f32 %v1536, 0.0
    %v1601 = vmax.f32 %v1537, 0.0
    %v1602 = vmax.f32 %v1538, 0.0
    %v1603 = vmax.f32 %v1539, 0.0
    %v1604 = vmax.f32 %v1540, 0.0
    %v1605 = vmax.f32 %v1541, 0.0
    %v1606 = vmax.f32 %v1542, 0.0
    %v1607 = vmax.f32 %v1543, 0.0
    %v1608 = vmax.f32 %v1544, 0.0
    %v1609 = vmax.f32 %v1545, 0.0
    %v1610 = vmax.f32 %v1546, 0.0
    %v1611 = vmax.f32 %v1547, 0.0
    %v1612 = vmax.f32 %v1548, 0.0
    %v1613 = vmax.f32 %v1549, 0.0
    %v1614 = vmax.f32 %v1550, 0.0
    %v1615 = vmax.f32 %v1551, 0.0
    %v1616 = vmax.f32 %v1552, 0.0
    %v1617 = vmax.f32 %v1553, 0.0
    %v1618 = vmax.f32 %v1554, 0.0
    %v1619 = vmax.f32 %v1555, 0.0
    %v1620 = vmax.f32 %v1556, 0.0
    %v1621 = vmax.f32 %v1557, 0.0
    %v1622 = vmax.f32 %v1558, 0.0
    %v1623 = vmax.f32 %v1559, 0.0
    %v1624 = vmax.f32 %v1560, 0.0
    %v1625 = vmax.f32 %v1561, 0.0
    %v1626 = vpack.c.bf16 %v1563, %v1562
    %v1627 = vpack.c.bf16 %v1565, %v1564
    %v1628 = vpack.c.bf16 %v1567, %v1566
    %v1629 = vpack.c.bf16 %v1569, %v1568
    %v1630 = vpack.c.bf16 %v1571, %v1570
    %v1631 = vpack.c.bf16 %v1573, %v1572
    %v1632 = vpack.c.bf16 %v1575, %v1574
    %v1633 = vpack.c.bf16 %v1577, %v1576
    %v1634 = vpack.c.bf16 %v1579, %v1578
    %v1635 = vpack.c.bf16 %v1581, %v1580
    %v1636 = vpack.c.bf16 %v1583, %v1582
    %v1637 = vpack.c.bf16 %v1585, %v1584
    %v1638 = vpack.c.bf16 %v1587, %v1586
    %v1639 = vpack.c.bf16 %v1589, %v1588
    %v1640 = vpack.c.bf16 %v1591, %v1590
    %v1641 = vpack.c.bf16 %v1593, %v1592
    %v1642 = vpack.c.bf16 %v1595, %v1594
    %v1643 = vpack.c.bf16 %v1597, %v1596
    %v1644 = vpack.c.bf16 %v1599, %v1598
    %v1645 = vpack.c.bf16 %v1601, %v1600
    %v1646 = vpack.c.bf16 %v1603, %v1602
    %v1647 = vpack.c.bf16 %v1605, %v1604
    %v1648 = vpack.c.bf16 %v1607, %v1606
    %v1649 = vpack.c.bf16 %v1609, %v1608
    %v1650 = vpack.c.bf16 %v1611, %v1610
    %v1651 = vpack.c.bf16 %v1613, %v1612
    %v1652 = vpack.c.bf16 %v1615, %v1614
    %v1653 = vpack.c.bf16 %v1617, %v1616
    %v1654 = vpack.c.bf16 %v1619, %v1618
    %v1655 = vpack.c.bf16 %v1621, %v1620
    %v1656 = vpack.c.bf16 %v1623, %v1622
    %v1657 = vpack.c.bf16 %v1625, %v1624
    %v1690 = vunpack.c.l.b16 %v1626
    %v1691 = vunpack.c.h.b16 %v1626
    %v1692 = vunpack.c.l.b16 %v1627
    %v1693 = vunpack.c.h.b16 %v1627
    %v1694 = vunpack.c.l.b16 %v1628
    %v1695 = vunpack.c.h.b16 %v1628
    %v1696 = vunpack.c.l.b16 %v1629
    %v1697 = vunpack.c.h.b16 %v1629
    %v1698 = vunpack.c.l.b16 %v1630
    %v1699 = vunpack.c.h.b16 %v1630
    %v1700 = vunpack.c.l.b16 %v1631
    %v1701 = vunpack.c.h.b16 %v1631
    %v1702 = vunpack.c.l.b16 %v1632
    %v1703 = vunpack.c.h.b16 %v1632
    %v1704 = vunpack.c.l.b16 %v1633
    %v1705 = vunpack.c.h.b16 %v1633
    %v1706 = vunpack.c.l.b16 %v1634
    %v1707 = vunpack.c.h.b16 %v1634
    %v1708 = vunpack.c.l.b16 %v1635
    %v1709 = vunpack.c.h.b16 %v1635
    %v1710 = vunpack.c.l.b16 %v1636
    %v1711 = vunpack.c.h.b16 %v1636
    %v1712 = vunpack.c.l.b16 %v1637
    %v1713 = vunpack.c.h.b16 %v1637
    %v1714 = vunpack.c.l.b16 %v1638
    %v1715 = vunpack.c.h.b16 %v1638
    %v1716 = vunpack.c.l.b16 %v1639
    %v1717 = vunpack.c.h.b16 %v1639
    %v1718 = vunpack.c.l.b16 %v1640
    %v1719 = vunpack.c.h.b16 %v1640
    %v1720 = vunpack.c.l.b16 %v1641
    %v1721 = vunpack.c.h.b16 %v1641
    %v1722 = vunpack.c.l.b16 %v1642
    %v1723 = vunpack.c.h.b16 %v1642
    %v1724 = vunpack.c.l.b16 %v1643
    %v1725 = vunpack.c.h.b16 %v1643
    %v1726 = vunpack.c.l.b16 %v1644
    %v1727 = vunpack.c.h.b16 %v1644
    %v1728 = vunpack.c.l.b16 %v1645
    %v1729 = vunpack.c.h.b16 %v1645
    %v1730 = vunpack.c.l.b16 %v1646
    %v1731 = vunpack.c.h.b16 %v1646
    %v1732 = vunpack.c.l.b16 %v1647
    %v1733 = vunpack.c.h.b16 %v1647
    %v1734 = vunpack.c.l.b16 %v1648
    %v1735 = vunpack.c.h.b16 %v1648
    %v1736 = vunpack.c.l.b16 %v1649
    %v1737 = vunpack.c.h.b16 %v1649
    %v1738 = vunpack.c.l.b16 %v1650
    %v1739 = vunpack.c.h.b16 %v1650
    %v1740 = vunpack.c.l.b16 %v1651
    %v1741 = vunpack.c.h.b16 %v1651
    %v1742 = vunpack.c.l.b16 %v1652
    %v1743 = vunpack.c.h.b16 %v1652
    %v1744 = vunpack.c.l.b16 %v1653
    %v1745 = vunpack.c.h.b16 %v1653
    %v1746 = vunpack.c.l.b16 %v1654
    %v1747 = vunpack.c.h.b16 %v1654
    %v1748 = vunpack.c.l.b16 %v1655
    %v1749 = vunpack.c.h.b16 %v1655
    %v1750 = vunpack.c.l.b16 %v1656
    %v1751 = vunpack.c.h.b16 %v1656
    %v1752 = vunpack.c.l.b16 %v1657
    %v1753 = vunpack.c.h.b16 %v1657
    %v1754 = vpack.c.b16 %v1690, %v1690
    %v1755 = vpack.c.b16 %v1691, %v1691
    %v1756 = vpack.c.b16 %v1692, %v1692
    %v1757 = vpack.c.b16 %v1693, %v1693
    %v1758 = vpack.c.b16 %v1694, %v1694
    %v1759 = vpack.c.b16 %v1695, %v1695
    %v1760 = vpack.c.b16 %v1696, %v1696
    %v1761 = vpack.c.b16 %v1697, %v1697
    %v1762 = vpack.c.b16 %v1698, %v1698
    %v1763 = vpack.c.b16 %v1699, %v1699
    %v1764 = vpack.c.b16 %v1700, %v1700
    %v1765 = vpack.c.b16 %v1701, %v1701
    %v1766 = vpack.c.b16 %v1702, %v1702
    %v1767 = vpack.c.b16 %v1703, %v1703
    %v1768 = vpack.c.b16 %v1704, %v1704
    %v1769 = vpack.c.b16 %v1705, %v1705
    %v1770 = vpack.c.b16 %v1706, %v1706
    %v1771 = vpack.c.b16 %v1707, %v1707
    %v1772 = vpack.c.b16 %v1708, %v1708
    %v1773 = vpack.c.b16 %v1709, %v1709
    %v1774 = vpack.c.b16 %v1710, %v1710
    %v1775 = vpack.c.b16 %v1711, %v1711
    %v1776 = vpack.c.b16 %v1712, %v1712
    %v1777 = vpack.c.b16 %v1713, %v1713
    %v1778 = vpack.c.b16 %v1714, %v1714
    %v1779 = vpack.c.b16 %v1715, %v1715
    %v1780 = vpack.c.b16 %v1716, %v1716
    %v1781 = vpack.c.b16 %v1717, %v1717
    %v1782 = vpack.c.b16 %v1718, %v1718
    %v1783 = vpack.c.b16 %v1719, %v1719
    %v1784 = vpack.c.b16 %v1720, %v1720
    %v1785 = vpack.c.b16 %v1721, %v1721
    %v1786 = vpack.c.b16 %v1722, %v1722
    %v1787 = vpack.c.b16 %v1723, %v1723
    %v1788 = vpack.c.b16 %v1724, %v1724
    %v1789 = vpack.c.b16 %v1725, %v1725
    %v1790 = vpack.c.b16 %v1726, %v1726
    %v1791 = vpack.c.b16 %v1727, %v1727
    %v1792 = vpack.c.b16 %v1728, %v1728
    %v1793 = vpack.c.b16 %v1729, %v1729
    %v1794 = vpack.c.b16 %v1730, %v1730
    %v1795 = vpack.c.b16 %v1731, %v1731
    %v1796 = vpack.c.b16 %v1732, %v1732
    %v1797 = vpack.c.b16 %v1733, %v1733
    %v1798 = vpack.c.b16 %v1734, %v1734
    %v1799 = vpack.c.b16 %v1735, %v1735
    %v1800 = vpack.c.b16 %v1736, %v1736
    %v1801 = vpack.c.b16 %v1737, %v1737
    %v1802 = vpack.c.b16 %v1738, %v1738
    %v1803 = vpack.c.b16 %v1739, %v1739
    %v1804 = vpack.c.b16 %v1740, %v1740
    %v1805 = vpack.c.b16 %v1741, %v1741
    %v1806 = vpack.c.b16 %v1742, %v1742
    %v1807 = vpack.c.b16 %v1743, %v1743
    %v1808 = vpack.c.b16 %v1744, %v1744
    %v1809 = vpack.c.b16 %v1745, %v1745
    %v1810 = vpack.c.b16 %v1746, %v1746
    %v1811 = vpack.c.b16 %v1747, %v1747
    %v1812 = vpack.c.b16 %v1748, %v1748
    %v1813 = vpack.c.b16 %v1749, %v1749
    %v1814 = vpack.c.b16 %v1750, %v1750
    %v1815 = vpack.c.b16 %v1751, %v1751
    %v1816 = vpack.c.b16 %v1752, %v1752
    %v1817 = vpack.c.b16 %v1753, %v1753
    %1882 = vst [vmem:[%s4] sm:$0xf] %v1754
    %1883 = vst [vmem:[%s4 + $0x4] sm:$0xf] %v1755
    %1884 = vst [vmem:[%s4 + $0x8] sm:$0xf] %v1756
    %1885 = vst [vmem:[%s4 + $0xc] sm:$0xf] %v1757
    %1886 = vst [vmem:[%s4 + $0x10] sm:$0xf] %v1758
    %1887 = vst [vmem:[%s4 + $0x14] sm:$0xf] %v1759
    %1888 = vst [vmem:[%s4 + $0x18] sm:$0xf] %v1760
    %1889 = vst [vmem:[%s4 + $0x1c] sm:$0xf] %v1761
    %1890 = vst [vmem:[%s4 + $0x20] sm:$0xf] %v1762
    %1891 = vst [vmem:[%s4 + $0x24] sm:$0xf] %v1763
    %1892 = vst [vmem:[%s4 + $0x28] sm:$0xf] %v1764
    %1893 = vst [vmem:[%s4 + $0x2c] sm:$0xf] %v1765
    %1894 = vst [vmem:[%s4 + $0x30] sm:$0xf] %v1766
    %1895 = vst [vmem:[%s4 + $0x34] sm:$0xf] %v1767
    %1896 = vst [vmem:[%s4 + $0x38] sm:$0xf] %v1768
    %1897 = vst [vmem:[%s4 + $0x3c] sm:$0xf] %v1769
    %1898 = vst [vmem:[%s4 + $0x40] sm:$0xf] %v1770
    %1899 = vst [vmem:[%s4 + $0x44] sm:$0xf] %v1771
    %1900 = vst [vmem:[%s4 + $0x48] sm:$0xf] %v1772
    %1901 = vst [vmem:[%s4 + $0x4c] sm:$0xf] %v1773
    %1902 = vst [vmem:[%s4 + $0x50] sm:$0xf] %v1774
    %1903 = vst [vmem:[%s4 + $0x54] sm:$0xf] %v1775
    %1904 = vst [vmem:[%s4 + $0x58] sm:$0xf] %v1776
    %1905 = vst [vmem:[%s4 + $0x5c] sm:$0xf] %v1777
    %1906 = vst [vmem:[%s4 + $0x60] sm:$0xf] %v1778
    %1907 = vst [vmem:[%s4 + $0x64] sm:$0xf] %v1779
    %1908 = vst [vmem:[%s4 + $0x68] sm:$0xf] %v1780
    %1909 = vst [vmem:[%s4 + $0x6c] sm:$0xf] %v1781
    %1910 = vst [vmem:[%s4 + $0x70] sm:$0xf] %v1782
    %1911 = vst [vmem:[%s4 + $0x74] sm:$0xf] %v1783
    %1912 = vst [vmem:[%s4 + $0x78] sm:$0xf] %v1784
    %1913 = vst [vmem:[%s4 + $0x7c] sm:$0xf] %v1785
    %1914 = vst [vmem:[%s4 + $0x80] sm:$0xf] %v1786
    %1915 = vst [vmem:[%s4 + $0x84] sm:$0xf] %v1787
    %1916 = vst [vmem:[%s4 + $0x88] sm:$0xf] %v1788
    %1917 = vst [vmem:[%s4 + $0x8c] sm:$0xf] %v1789
    %1918 = vst [vmem:[%s4 + $0x90] sm:$0xf] %v1790
    %1919 = vst [vmem:[%s4 + $0x94] sm:$0xf] %v1791
    %1920 = vst [vmem:[%s4 + $0x98] sm:$0xf] %v1792
    %1921 = vst [vmem:[%s4 + $0x9c] sm:$0xf] %v1793
    %1922 = vst [vmem:[%s4 + $0xa0] sm:$0xf] %v1794
    %1923 = vst [vmem:[%s4 + $0xa4] sm:$0xf] %v1795
    %1924 = vst [vmem:[%s4 + $0xa8] sm:$0xf] %v1796
    %1925 = vst [vmem:[%s4 + $0xac] sm:$0xf] %v1797
    %1926 = vst [vmem:[%s4 + $0xb0] sm:$0xf] %v1798
    %1927 = vst [vmem:[%s4 + $0xb4] sm:$0xf] %v1799
    %1928 = vst [vmem:[%s4 + $0xb8] sm:$0xf] %v1800
    %1929 = vst [vmem:[%s4 + $0xbc] sm:$0xf] %v1801
    %1930 = vst [vmem:[%s4 + $0xc0] sm:$0xf] %v1802
    %1931 = vst [vmem:[%s4 + $0xc4] sm:$0xf] %v1803
    %1932 = vst [vmem:[%s4 + $0xc8] sm:$0xf] %v1804
    %1933 = vst [vmem:[%s4 + $0xcc] sm:$0xf] %v1805
    %1934 = vst [vmem:[%s4 + $0xd0] sm:$0xf] %v1806
    %1935 = vst [vmem:[%s4 + $0xd4] sm:$0xf] %v1807
    %1936 = vst [vmem:[%s4 + $0xd8] sm:$0xf] %v1808
    %1937 = vst [vmem:[%s4 + $0xdc] sm:$0xf] %v1809
    %1938 = vst [vmem:[%s4 + $0xe0] sm:$0xf] %v1810
    %1939 = vst [vmem:[%s4 + $0xe4] sm:$0xf] %v1811
    %1940 = vst [vmem:[%s4 + $0xe8] sm:$0xf] %v1812
    %1941 = vst [vmem:[%s4 + $0xec] sm:$0xf] %v1813
    %1942 = vst [vmem:[%s4 + $0xf0] sm:$0xf] %v1814
    %1943 = vst [vmem:[%s4 + $0xf4] sm:$0xf] %v1815
    %1944 = vst [vmem:[%s4 + $0xf8] sm:$0xf] %v1816
    %1945 = vst [vmem:[%s4 + $0xfc] sm:$0xf] %v1817
  $region25: #{resnet_forward.12} parent=0 // pred_fallthru
    _
  // Predicated region
  $region26: #{resnet_forward.12} parent=0 // pred_check
    _
  $region27: #{resnet_forward.12} parent=0 // pred_check_branch
    %1947 = sbr.rel (0) target = $region29
  $region28: #{resnet_forward.12} parent=0 // pred_region
    _
  $region29: #{resnet_forward.12} parent=0 // pred_fallthru
    _
  // Predicated region
  $region30: #{resnet_forward.12} parent=0 // pred_check
    _
  $region31: #{resnet_forward.12} parent=0 // pred_check_branch
    %1949 = sbr.rel (0) target = $region33
  $region32: #{resnet_forward.12} parent=0 // pred_region
    _
  $region33: #{resnet_forward.12} parent=0 // pred_fallthru
    _

// kernel: resnet_forward.13
$region0: #{resnet_forward.13}
  #allocation0 [shape = 'u32[]', space=smem, size = 0x4, offset = 0x4, fixed_abs, tag = 'smem constant byte address 0x4 - core index']
  #allocation1 [shape = 'u32[144,128]{1,0:T(1,128)}', space=vmem, size = 0x12000, scoped, tag = 'internal scratch']
  #allocation2 [shape = 'f32[128,128]{1,0:T(8,128)}', space=vmem, size = 0x10000, scoped, tag = 'scratch operand']
  %s0 = inlined_call_operand.vmem [shape: bf16[128,256], index: 0, kind: input, shape index: {}]
  %s1 = inlined_call_operand.vmem [shape: bf16[256,128], index: 1, kind: input, shape index: {}]
  %s2 = inlined_call_operand.vmem [shape: f32[1,128], index: 2, kind: input, shape index: {}]
  %s3 = inlined_call_operand.vmem [shape: f32[1,128], index: 3, kind: input, shape index: {}]
  %s4 = inlined_call_operand.vmem [shape: bf16[128,128], index: 4, kind: output, shape index: {}]
  %s5 = sld [smem:[#allocation0]]
  $region34: #{resnet_forward.13} parent=0
    _
  %s7 = ssub.s32 1, %s5
  %s8 = scalar_select 0, %s7, %s5
  // Predicated region
  $region2: #{resnet_forward.13} parent=0 // pred_check
    _
  $region3: #{resnet_forward.13} parent=0 // pred_check_branch
    %10 = sbr.rel (0) target = $region5
  $region4: #{resnet_forward.13} parent=0 // pred_region
    _
  $region5: #{resnet_forward.13} parent=0 // pred_fallthru
    _
  // Predicated region
  $region6: #{resnet_forward.13} parent=0 // pred_check
    _
  $region7: #{resnet_forward.13} parent=0 // pred_check_branch
    %12 = sbr.rel (0) target = $region9
  $region8: #{resnet_forward.13} parent=0 // pred_region
    _
  $region9: #{resnet_forward.13} parent=0 // pred_fallthru
    _
  // Predicated region
  $region10: #{resnet_forward.13} parent=0 // pred_check
    _
  $region11: #{resnet_forward.13} parent=0 // pred_check_branch
    %14 = sbr.rel (0) target = $region13
  $region12: #{resnet_forward.13} parent=0 // pred_region
    _
  $region13: #{resnet_forward.13} parent=0 // pred_fallthru
    _
  // Predicated region
  $region14: #{resnet_forward.13} parent=0 // pred_check
    _
  $region15: #{resnet_forward.13} parent=0 // pred_check_branch
    %16 = sbr.rel (0) target = $region17
  $region16: #{resnet_forward.13} parent=0 // pred_region
    _
  $region17: #{resnet_forward.13} parent=0 // pred_fallthru
    _
  %p18 = scmp.eq.s32.totalorder 0, 0
  // Predicated region
  $region18: #{resnet_forward.13} parent=0 // pred_check
    %p19 = pneg %p18
  $region19: #{resnet_forward.13} parent=0 // pred_check_branch
    %21 = sbr.rel (%p19) target = $region21
  $region20: #{resnet_forward.13} parent=0 // pred_region
    %22 = vst [vmem:[#allocation2] sm:$0xff] 0.0
    %23 = vst [vmem:[#allocation2 + $0x8] sm:$0xff] 0.0
    %24 = vst [vmem:[#allocation2 + $0x10] sm:$0xff] 0.0
    %25 = vst [vmem:[#allocation2 + $0x18] sm:$0xff] 0.0
    %26 = vst [vmem:[#allocation2 + $0x20] sm:$0xff] 0.0
    %27 = vst [vmem:[#allocation2 + $0x28] sm:$0xff] 0.0
    %28 = vst [vmem:[#allocation2 + $0x30] sm:$0xff] 0.0
    %29 = vst [vmem:[#allocation2 + $0x38] sm:$0xff] 0.0
    %30 = vst [vmem:[#allocation2 + $0x40] sm:$0xff] 0.0
    %31 = vst [vmem:[#allocation2 + $0x48] sm:$0xff] 0.0
    %32 = vst [vmem:[#allocation2 + $0x50] sm:$0xff] 0.0
    %33 = vst [vmem:[#allocation2 + $0x58] sm:$0xff] 0.0
    %34 = vst [vmem:[#allocation2 + $0x60] sm:$0xff] 0.0
    %35 = vst [vmem:[#allocation2 + $0x68] sm:$0xff] 0.0
    %36 = vst [vmem:[#allocation2 + $0x70] sm:$0xff] 0.0
    %37 = vst [vmem:[#allocation2 + $0x78] sm:$0xff] 0.0
  $region21: #{resnet_forward.13} parent=0 // pred_fallthru
    _
  %v38 = vld [vmem:[#allocation2] sm:$0xff]
  %v39 = vld [vmem:[#allocation2 + $0x8] sm:$0xff]
  %v40 = vld [vmem:[#allocation2 + $0x10] sm:$0xff]
  %v41 = vld [vmem:[#allocation2 + $0x18] sm:$0xff]
  %v42 = vld [vmem:[#allocation2 + $0x20] sm:$0xff]
  %v43 = vld [vmem:[#allocation2 + $0x28] sm:$0xff]
  %v44 = vld [vmem:[#allocation2 + $0x30] sm:$0xff]
  %v45 = vld [vmem:[#allocation2 + $0x38] sm:$0xff]
  %v46 = vld [vmem:[#allocation2 + $0x40] sm:$0xff]
  %v47 = vld [vmem:[#allocation2 + $0x48] sm:$0xff]
  %v48 = vld [vmem:[#allocation2 + $0x50] sm:$0xff]
  %v49 = vld [vmem:[#allocation2 + $0x58] sm:$0xff]
  %v50 = vld [vmem:[#allocation2 + $0x60] sm:$0xff]
  %v51 = vld [vmem:[#allocation2 + $0x68] sm:$0xff]
  %v52 = vld [vmem:[#allocation2 + $0x70] sm:$0xff]
  %v53 = vld [vmem:[#allocation2 + $0x78] sm:$0xff]
  %v54 = vld [vmem:[%s0] sm:$0xff]
  %v55 = vld [vmem:[%s0 + $0x8] sm:$0xff]
  %v56 = vld [vmem:[%s0 + $0x10] sm:$0xff]
  %v57 = vld [vmem:[%s0 + $0x18] sm:$0xff]
  %v58 = vld [vmem:[%s0 + $0x20] sm:$0xff]
  %v59 = vld [vmem:[%s0 + $0x28] sm:$0xff]
  %v60 = vld [vmem:[%s0 + $0x30] sm:$0xff]
  %v61 = vld [vmem:[%s0 + $0x38] sm:$0xff]
  %v62 = vld [vmem:[%s0 + $0x40] sm:$0xff]
  %v63 = vld [vmem:[%s0 + $0x48] sm:$0xff]
  %v64 = vld [vmem:[%s0 + $0x50] sm:$0xff]
  %v65 = vld [vmem:[%s0 + $0x58] sm:$0xff]
  %v66 = vld [vmem:[%s0 + $0x60] sm:$0xff]
  %v67 = vld [vmem:[%s0 + $0x68] sm:$0xff]
  %v68 = vld [vmem:[%s0 + $0x70] sm:$0xff]
  %v69 = vld [vmem:[%s0 + $0x78] sm:$0xff]
  %v70 = vld [vmem:[%s1] sm:$0xf]
  %v71 = vld [vmem:[%s1 + $0x4] sm:$0xf]
  %v72 = vld [vmem:[%s1 + $0x8] sm:$0xf]
  %v73 = vld [vmem:[%s1 + $0xc] sm:$0xf]
  %v74 = vld [vmem:[%s1 + $0x10] sm:$0xf]
  %v75 = vld [vmem:[%s1 + $0x14] sm:$0xf]
  %v76 = vld [vmem:[%s1 + $0x18] sm:$0xf]
  %v77 = vld [vmem:[%s1 + $0x1c] sm:$0xf]
  %v78 = vld [vmem:[%s1 + $0x20] sm:$0xf]
  %v79 = vld [vmem:[%s1 + $0x24] sm:$0xf]
  %v80 = vld [vmem:[%s1 + $0x28] sm:$0xf]
  %v81 = vld [vmem:[%s1 + $0x2c] sm:$0xf]
  %v82 = vld [vmem:[%s1 + $0x30] sm:$0xf]
  %v83 = vld [vmem:[%s1 + $0x34] sm:$0xf]
  %v84 = vld [vmem:[%s1 + $0x38] sm:$0xf]
  %v85 = vld [vmem:[%s1 + $0x3c] sm:$0xf]
  %v86 = vld [vmem:[%s1 + $0x40] sm:$0xf]
  %v87 = vld [vmem:[%s1 + $0x44] sm:$0xf]
  %v88 = vld [vmem:[%s1 + $0x48] sm:$0xf]
  %v89 = vld [vmem:[%s1 + $0x4c] sm:$0xf]
  %v90 = vld [vmem:[%s1 + $0x50] sm:$0xf]
  %v91 = vld [vmem:[%s1 + $0x54] sm:$0xf]
  %v92 = vld [vmem:[%s1 + $0x58] sm:$0xf]
  %v93 = vld [vmem:[%s1 + $0x5c] sm:$0xf]
  %v94 = vld [vmem:[%s1 + $0x60] sm:$0xf]
  %v95 = vld [vmem:[%s1 + $0x64] sm:$0xf]
  %v96 = vld [vmem:[%s1 + $0x68] sm:$0xf]
  %v97 = vld [vmem:[%s1 + $0x6c] sm:$0xf]
  %v98 = vld [vmem:[%s1 + $0x70] sm:$0xf]
  %v99 = vld [vmem:[%s1 + $0x74] sm:$0xf]
  %v100 = vld [vmem:[%s1 + $0x78] sm:$0xf]
  %v101 = vld [vmem:[%s1 + $0x7c] sm:$0xf]
  %v118 = vunpack.c.l.b16 %v54
  %v119 = vunpack.c.h.b16 %v54
  %v120 = vunpack.c.l.b16 %v55
  %v121 = vunpack.c.h.b16 %v55
  %v122 = vunpack.c.l.b16 %v56
  %v123 = vunpack.c.h.b16 %v56
  %v124 = vunpack.c.l.b16 %v57
  %v125 = vunpack.c.h.b16 %v57
  %v126 = vunpack.c.l.b16 %v58
  %v127 = vunpack.c.h.b16 %v58
  %v128 = vunpack.c.l.b16 %v59
  %v129 = vunpack.c.h.b16 %v59
  %v130 = vunpack.c.l.b16 %v60
  %v131 = vunpack.c.h.b16 %v60
  %v132 = vunpack.c.l.b16 %v61
  %v133 = vunpack.c.h.b16 %v61
  %v134 = vunpack.c.l.b16 %v62
  %v135 = vunpack.c.h.b16 %v62
  %v136 = vunpack.c.l.b16 %v63
  %v137 = vunpack.c.h.b16 %v63
  %v138 = vunpack.c.l.b16 %v64
  %v139 = vunpack.c.h.b16 %v64
  %v140 = vunpack.c.l.b16 %v65
  %v141 = vunpack.c.h.b16 %v65
  %v142 = vunpack.c.l.b16 %v66
  %v143 = vunpack.c.h.b16 %v66
  %v144 = vunpack.c.l.b16 %v67
  %v145 = vunpack.c.h.b16 %v67
  %v146 = vunpack.c.l.b16 %v68
  %v147 = vunpack.c.h.b16 %v68
  %v148 = vunpack.c.l.b16 %v69
  %v149 = vunpack.c.h.b16 %v69
  %v150 = vpack.c.b16 %v120, %v118
  %v151 = vpack.c.b16 %v121, %v119
  %v152 = vpack.c.b16 %v124, %v122
  %v153 = vpack.c.b16 %v125, %v123
  %v154 = vpack.c.b16 %v128, %v126
  %v155 = vpack.c.b16 %v129, %v127
  %v156 = vpack.c.b16 %v132, %v130
  %v157 = vpack.c.b16 %v133, %v131
  %v158 = vpack.c.b16 %v136, %v134
  %v159 = vpack.c.b16 %v137, %v135
  %v160 = vpack.c.b16 %v140, %v138
  %v161 = vpack.c.b16 %v141, %v139
  %v162 = vpack.c.b16 %v144, %v142
  %v163 = vpack.c.b16 %v145, %v143
  %v164 = vpack.c.b16 %v148, %v146
  %v165 = vpack.c.b16 %v149, %v147
  %v214 = vunpack.c.l.b16 %v70
  %v215 = vunpack.c.l.b16 %v71
  %v216 = vunpack.c.l.b16 %v72
  %v217 = vunpack.c.l.b16 %v73
  %v218 = vunpack.c.l.b16 %v74
  %v219 = vunpack.c.l.b16 %v75
  %v220 = vunpack.c.l.b16 %v76
  %v221 = vunpack.c.l.b16 %v77
  %v222 = vunpack.c.l.b16 %v78
  %v223 = vunpack.c.l.b16 %v79
  %v224 = vunpack.c.l.b16 %v80
  %v225 = vunpack.c.l.b16 %v81
  %v226 = vunpack.c.l.b16 %v82
  %v227 = vunpack.c.l.b16 %v83
  %v228 = vunpack.c.l.b16 %v84
  %v229 = vunpack.c.l.b16 %v85
  %v230 = vunpack.c.l.b16 %v86
  %v231 = vunpack.c.l.b16 %v87
  %v232 = vunpack.c.l.b16 %v88
  %v233 = vunpack.c.l.b16 %v89
  %v234 = vunpack.c.l.b16 %v90
  %v235 = vunpack.c.l.b16 %v91
  %v236 = vunpack.c.l.b16 %v92
  %v237 = vunpack.c.l.b16 %v93
  %v238 = vunpack.c.l.b16 %v94
  %v239 = vunpack.c.l.b16 %v95
  %v240 = vunpack.c.l.b16 %v96
  %v241 = vunpack.c.l.b16 %v97
  %v242 = vunpack.c.l.b16 %v98
  %v243 = vunpack.c.l.b16 %v99
  %v244 = vunpack.c.l.b16 %v100
  %v245 = vunpack.c.l.b16 %v101
  %v246 = vpack.c.b16 %v215, %v214
  %v247 = vpack.c.b16 %v217, %v216
  %v248 = vpack.c.b16 %v219, %v218
  %v249 = vpack.c.b16 %v221, %v220
  %v250 = vpack.c.b16 %v223, %v222
  %v251 = vpack.c.b16 %v225, %v224
  %v252 = vpack.c.b16 %v227, %v226
  %v253 = vpack.c.b16 %v229, %v228
  %v254 = vpack.c.b16 %v231, %v230
  %v255 = vpack.c.b16 %v233, %v232
  %v256 = vpack.c.b16 %v235, %v234
  %v257 = vpack.c.b16 %v237, %v236
  %v258 = vpack.c.b16 %v239, %v238
  %v259 = vpack.c.b16 %v241, %v240
  %v260 = vpack.c.b16 %v243, %v242
  %v261 = vpack.c.b16 %v245, %v244
  %278 = vmatprep.subr.bf16.mxu0 0
  %279 = vmatpush1.bf16.msra.mxu0 %v253
  %280 = vmatprep.subr.bf16.mxu0 0
  %281 = vmatpush1.bf16.msra.mxu0 %v252
  %282 = vmatprep.subr.bf16.mxu0 0
  %283 = vmatpush1.bf16.msra.mxu0 %v251
  %284 = vmatprep.subr.bf16.mxu0 0
  %285 = vmatpush1.bf16.msra.mxu0 %v250
  %286 = vmatprep.subr.bf16.mxu0 0
  %287 = vmatpush1.bf16.msra.mxu0 %v249
  %288 = vmatprep.subr.bf16.mxu0 0
  %289 = vmatpush1.bf16.msra.mxu0 %v248
  %290 = vmatprep.subr.bf16.mxu0 0
  %291 = vmatpush1.bf16.msra.mxu0 %v247
  %292 = vmatprep.subr.bf16.mxu0 0
  %293 = vmatpush1.bf16.msra.mxu0 %v246
  %294 = vmatprep.subr.bf16.mxu0 0
  %295 = vmatpush2.bf16.msra.mxu0 %v261
  %296 = vmatprep.subr.bf16.mxu0 0
  %297 = vmatpush2.bf16.msra.mxu0 %v260
  %298 = vmatprep.subr.bf16.mxu0 0
  %299 = vmatpush2.bf16.msra.mxu0 %v259
  %300 = vmatprep.subr.bf16.mxu0 0
  %301 = vmatpush2.bf16.msra.mxu0 %v258
  %302 = vmatprep.subr.bf16.mxu0 0
  %303 = vmatpush2.bf16.msra.mxu0 %v257
  %304 = vmatprep.subr.bf16.mxu0 0
  %305 = vmatpush2.bf16.msra.mxu0 %v256
  %306 = vmatprep.subr.bf16.mxu0 0
  %307 = vmatpush2.bf16.msra.mxu0 %v255
  %308 = vmatprep.subr.bf16.mxu0 0
  %309 = vmatpush2.bf16.msra.mxu0 %v254
  %310 = vmatprep.mubr.bf16.mxu0 %v151
  %311 = vmatmul.mubr.bf16.gmra.mxu0 %v150
  %v312 = vpop.f32.mrf.mxu0
  %v313 = vadd.f32 0.0, %v312
  %v314 = vpop.f32.mrf.mxu0
  %v315 = vpop.f32.mrf.mxu0
  %v316 = vadd.f32 0.0, %v315
  %v317 = vpop.f32.mrf.mxu0
  %318 = vmatprep.mubr.bf16.mxu0 %v153
  %319 = vmatmul.mubr.bf16.gmra.mxu0 %v152
  %v320 = vpop.f32.mrf.mxu0
  %v321 = vadd.f32 0.0, %v320
  %v322 = vpop.f32.mrf.mxu0
  %v323 = vpop.f32.mrf.mxu0
  %v324 = vadd.f32 0.0, %v323
  %v325 = vpop.f32.mrf.mxu0
  %326 = vmatprep.mubr.bf16.mxu0 %v155
  %327 = vmatmul.mubr.bf16.gmra.mxu0 %v154
  %v328 = vpop.f32.mrf.mxu0
  %v329 = vadd.f32 0.0, %v328
  %v330 = vpop.f32.mrf.mxu0
  %v331 = vpop.f32.mrf.mxu0
  %v332 = vadd.f32 0.0, %v331
  %v333 = vpop.f32.mrf.mxu0
  %334 = vmatprep.mubr.bf16.mxu0 %v157
  %335 = vmatmul.mubr.bf16.gmra.mxu0 %v156
  %v336 = vpop.f32.mrf.mxu0
  %v337 = vadd.f32 0.0, %v336
  %v338 = vpop.f32.mrf.mxu0
  %v339 = vpop.f32.mrf.mxu0
  %v340 = vadd.f32 0.0, %v339
  %v341 = vpop.f32.mrf.mxu0
  %342 = vmatprep.mubr.bf16.mxu0 %v159
  %343 = vmatmul.mubr.bf16.gmra.mxu0 %v158
  %v344 = vpop.f32.mrf.mxu0
  %v345 = vadd.f32 0.0, %v344
  %v346 = vpop.f32.mrf.mxu0
  %v347 = vpop.f32.mrf.mxu0
  %v348 = vadd.f32 0.0, %v347
  %v349 = vpop.f32.mrf.mxu0
  %350 = vmatprep.mubr.bf16.mxu0 %v161
  %351 = vmatmul.mubr.bf16.gmra.mxu0 %v160
  %v352 = vpop.f32.mrf.mxu0
  %v353 = vadd.f32 0.0, %v352
  %v354 = vpop.f32.mrf.mxu0
  %v355 = vpop.f32.mrf.mxu0
  %v356 = vadd.f32 0.0, %v355
  %v357 = vpop.f32.mrf.mxu0
  %358 = vmatprep.mubr.bf16.mxu0 %v163
  %359 = vmatmul.mubr.bf16.gmra.mxu0 %v162
  %v360 = vpop.f32.mrf.mxu0
  %v361 = vadd.f32 0.0, %v360
  %v362 = vpop.f32.mrf.mxu0
  %v363 = vpop.f32.mrf.mxu0
  %v364 = vadd.f32 0.0, %v363
  %v365 = vpop.f32.mrf.mxu0
  %366 = vmatprep.mubr.bf16.mxu0 %v165
  %367 = vmatmul.mubr.bf16.gmra.mxu0 %v164
  %v368 = vpop.f32.mrf.mxu0
  %v369 = vadd.f32 0.0, %v368
  %v370 = vpop.f32.mrf.mxu0
  %v371 = vpop.f32.mrf.mxu0
  %v372 = vadd.f32 0.0, %v371
  %v373 = vpop.f32.mrf.mxu0
  %374 = vdwg.mxu0
  %v375 = vadd.f32 %v38, %v313
  %v376 = vadd.f32 %v39, %v316
  %v377 = vadd.f32 %v40, %v321
  %v378 = vadd.f32 %v41, %v324
  %v379 = vadd.f32 %v42, %v329
  %v380 = vadd.f32 %v43, %v332
  %v381 = vadd.f32 %v44, %v337
  %v382 = vadd.f32 %v45, %v340
  %v383 = vadd.f32 %v46, %v345
  %v384 = vadd.f32 %v47, %v348
  %v385 = vadd.f32 %v48, %v353
  %v386 = vadd.f32 %v49, %v356
  %v387 = vadd.f32 %v50, %v361
  %v388 = vadd.f32 %v51, %v364
  %v389 = vadd.f32 %v52, %v369
  %v390 = vadd.f32 %v53, %v372
  %391 = vst [vmem:[#allocation2] sm:$0xff] %v375
  %392 = vst [vmem:[#allocation2 + $0x8] sm:$0xff] %v376
  %393 = vst [vmem:[#allocation2 + $0x10] sm:$0xff] %v377
  %394 = vst [vmem:[#allocation2 + $0x18] sm:$0xff] %v378
  %395 = vst [vmem:[#allocation2 + $0x20] sm:$0xff] %v379
  %396 = vst [vmem:[#allocation2 + $0x28] sm:$0xff] %v380
  %397 = vst [vmem:[#allocation2 + $0x30] sm:$0xff] %v381
  %398 = vst [vmem:[#allocation2 + $0x38] sm:$0xff] %v382
  %399 = vst [vmem:[#allocation2 + $0x40] sm:$0xff] %v383
  %400 = vst [vmem:[#allocation2 + $0x48] sm:$0xff] %v384
  %401 = vst [vmem:[#allocation2 + $0x50] sm:$0xff] %v385
  %402 = vst [vmem:[#allocation2 + $0x58] sm:$0xff] %v386
  %403 = vst [vmem:[#allocation2 + $0x60] sm:$0xff] %v387
  %404 = vst [vmem:[#allocation2 + $0x68] sm:$0xff] %v388
  %405 = vst [vmem:[#allocation2 + $0x70] sm:$0xff] %v389
  %406 = vst [vmem:[#allocation2 + $0x78] sm:$0xff] %v390
  // Predicated region
  $region22: #{resnet_forward.13} parent=0 // pred_check
    %p407 = pneg %p18
  $region23: #{resnet_forward.13} parent=0 // pred_check_branch
    %409 = sbr.rel (%p407) target = $region25
  $region24: #{resnet_forward.13} parent=0 // pred_region
    %v410 = vld [vmem:[#allocation2] sm:$0xff]
    %v411 = vld [vmem:[#allocation2 + $0x8] sm:$0xff]
    %v412 = vld [vmem:[#allocation2 + $0x10] sm:$0xff]
    %v413 = vld [vmem:[#allocation2 + $0x18] sm:$0xff]
    %v414 = vld [vmem:[#allocation2 + $0x20] sm:$0xff]
    %v415 = vld [vmem:[#allocation2 + $0x28] sm:$0xff]
    %v416 = vld [vmem:[#allocation2 + $0x30] sm:$0xff]
    %v417 = vld [vmem:[#allocation2 + $0x38] sm:$0xff]
    %v418 = vld [vmem:[#allocation2 + $0x40] sm:$0xff]
    %v419 = vld [vmem:[#allocation2 + $0x48] sm:$0xff]
    %v420 = vld [vmem:[#allocation2 + $0x50] sm:$0xff]
    %v421 = vld [vmem:[#allocation2 + $0x58] sm:$0xff]
    %v422 = vld [vmem:[#allocation2 + $0x60] sm:$0xff]
    %v423 = vld [vmem:[#allocation2 + $0x68] sm:$0xff]
    %v424 = vld [vmem:[#allocation2 + $0x70] sm:$0xff]
    %v425 = vld [vmem:[#allocation2 + $0x78] sm:$0xff]
    %v426 = vadd.f32 %v410, %v411
    %v427 = vadd.f32 %v426, %v412
    %v428 = vadd.f32 %v427, %v413
    %v429 = vadd.f32 %v428, %v414
    %v430 = vadd.f32 %v429, %v415
    %v431 = vadd.f32 %v430, %v416
    %v432 = vadd.f32 %v431, %v417
    %v433 = vadd.f32 %v432, %v418
    %v434 = vadd.f32 %v433, %v419
    %v435 = vadd.f32 %v434, %v420
    %v436 = vadd.f32 %v435, %v421
    %v437 = vadd.f32 %v436, %v422
    %v438 = vadd.f32 %v437, %v423
    %v439 = vadd.f32 %v438, %v424
    %v440 = vadd.f32 %v439, %v425
    %v441 = vrot.slane %v440, 4
    %v442 = vadd.f32 %v440, %v441
    %v443 = vrot.slane %v442, 2
    %v444 = vadd.f32 %v442, %v443
    %v445 = vrot.slane %v444, 1
    %v446 = vadd.f32 %v444, %v445
    %v447 = vmul.f32 %v446, 0.0078125
    %v448 = vlaneseq
    %v449 = vshrl.u32 %v448, 7
    %v450 = vadd.s32 %v449, 8
    %v451 = vadd.s32 %v449, 16
    %v452 = vadd.s32 %v449, 24
    %v453 = vadd.s32 %v449, 32
    %v454 = vadd.s32 %v449, 40
    %v455 = vadd.s32 %v449, 48
    %v456 = vadd.s32 %v449, 56
    %v457 = vadd.s32 %v449, 64
    %v458 = vadd.s32 %v449, 72
    %v459 = vadd.s32 %v449, 80
    %v460 = vadd.s32 %v449, 88
    %v461 = vadd.s32 %v449, 96
    %v462 = vadd.s32 %v449, 104
    %v463 = vadd.s32 %v449, 112
    %v464 = vadd.s32 %v449, 120
    %vm465 = vcmp.lt.s32.totalorder %v449, 128
    %vm466 = vcmp.lt.s32.totalorder %v450, 128
    %vm467 = vcmp.lt.s32.totalorder %v451, 128
    %vm468 = vcmp.lt.s32.totalorder %v452, 128
    %vm469 = vcmp.lt.s32.totalorder %v453, 128
    %vm470 = vcmp.lt.s32.totalorder %v454, 128
    %vm471 = vcmp.lt.s32.totalorder %v455, 128
    %vm472 = vcmp.lt.s32.totalorder %v456, 128
    %vm473 = vcmp.lt.s32.totalorder %v457, 128
    %vm474 = vcmp.lt.s32.totalorder %v458, 128
    %vm475 = vcmp.lt.s32.totalorder %v459, 128
    %vm476 = vcmp.lt.s32.totalorder %v460, 128
    %vm477 = vcmp.lt.s32.totalorder %v461, 128
    %vm478 = vcmp.lt.s32.totalorder %v462, 128
    %vm479 = vcmp.lt.s32.totalorder %v463, 128
    %vm480 = vcmp.lt.s32.totalorder %v464, 128
    %v481 = vsub.f32 %v410, %v447
    %v482 = vsub.f32 %v411, %v447
    %v483 = vsub.f32 %v412, %v447
    %v484 = vsub.f32 %v413, %v447
    %v485 = vsub.f32 %v414, %v447
    %v486 = vsub.f32 %v415, %v447
    %v487 = vsub.f32 %v416, %v447
    %v488 = vsub.f32 %v417, %v447
    %v489 = vsub.f32 %v418, %v447
    %v490 = vsub.f32 %v419, %v447
    %v491 = vsub.f32 %v420, %v447
    %v492 = vsub.f32 %v421, %v447
    %v493 = vsub.f32 %v422, %v447
    %v494 = vsub.f32 %v423, %v447
    %v495 = vsub.f32 %v424, %v447
    %v496 = vsub.f32 %v425, %v447
    %v497 = vsel %vm465, %v481, 0.0
    %v498 = vsel %vm466, %v482, 0.0
    %v499 = vsel %vm467, %v483, 0.0
    %v500 = vsel %vm468, %v484, 0.0
    %v501 = vsel %vm469, %v485, 0.0
    %v502 = vsel %vm470, %v486, 0.0
    %v503 = vsel %vm471, %v487, 0.0
    %v504 = vsel %vm472, %v488, 0.0
    %v505 = vsel %vm473, %v489, 0.0
    %v506 = vsel %vm474, %v490, 0.0
    %v507 = vsel %vm475, %v491, 0.0
    %v508 = vsel %vm476, %v492, 0.0
    %v509 = vsel %vm477, %v493, 0.0
    %v510 = vsel %vm478, %v494, 0.0
    %v511 = vsel %vm479, %v495, 0.0
    %v512 = vsel %vm480, %v496, 0.0
    %v513 = vmul.f32 %v497, %v497
    %v514 = vmul.f32 %v498, %v498
    %v515 = vmul.f32 %v499, %v499
    %v516 = vmul.f32 %v500, %v500
    %v517 = vmul.f32 %v501, %v501
    %v518 = vmul.f32 %v502, %v502
    %v519 = vmul.f32 %v503, %v503
    %v520 = vmul.f32 %v504, %v504
    %v521 = vmul.f32 %v505, %v505
    %v522 = vmul.f32 %v506, %v506
    %v523 = vmul.f32 %v507, %v507
    %v524 = vmul.f32 %v508, %v508
    %v525 = vmul.f32 %v509, %v509
    %v526 = vmul.f32 %v510, %v510
    %v527 = vmul.f32 %v511, %v511
    %v528 = vmul.f32 %v512, %v512
    %v529 = vadd.f32 %v513, %v514
    %v530 = vadd.f32 %v529, %v515
    %v531 = vadd.f32 %v530, %v516
    %v532 = vadd.f32 %v531, %v517
    %v533 = vadd.f32 %v532, %v518
    %v534 = vadd.f32 %v533, %v519
    %v535 = vadd.f32 %v534, %v520
    %v536 = vadd.f32 %v535, %v521
    %v537 = vadd.f32 %v536, %v522
    %v538 = vadd.f32 %v537, %v523
    %v539 = vadd.f32 %v538, %v524
    %v540 = vadd.f32 %v539, %v525
    %v541 = vadd.f32 %v540, %v526
    %v542 = vadd.f32 %v541, %v527
    %v543 = vadd.f32 %v542, %v528
    %v544 = vrot.slane %v543, 4
    %v545 = vadd.f32 %v543, %v544
    %v546 = vrot.slane %v545, 2
    %v547 = vadd.f32 %v545, %v546
    %v548 = vrot.slane %v547, 1
    %v549 = vadd.f32 %v547, %v548
    %v550 = vmul.f32 %v549, 0.0078125
    %v551 = vld [vmem:[%s2] sm:$0x1]
    %v552 = vadd.f32 %v550, 1e-05
    %v553 = vrsqrt.pop %v552
    %v554 = vmul.f32 %v551, %v553
    %v555 = vld [vmem:[%s3] sm:$0x1]
    %v556 = vmul.f32 %v447, %v554
    %v557 = vsub.f32 %v555, %v556
    %v559 = vlaneseq
    %v560 = vshrl.u32 %v559, 7
    %v561 = vsub.s32 0, %v560
    %v562 = vrot.slane %v554, %v561
    %v564 = vmul.f32 %v410, %v562
    %v565 = vmul.f32 %v411, %v562
    %v566 = vmul.f32 %v412, %v562
    %v567 = vmul.f32 %v413, %v562
    %v568 = vmul.f32 %v414, %v562
    %v569 = vmul.f32 %v415, %v562
    %v570 = vmul.f32 %v416, %v562
    %v571 = vmul.f32 %v417, %v562
    %v572 = vmul.f32 %v418, %v562
    %v573 = vmul.f32 %v419, %v562
    %v574 = vmul.f32 %v420, %v562
    %v575 = vmul.f32 %v421, %v562
    %v576 = vmul.f32 %v422, %v562
    %v577 = vmul.f32 %v423, %v562
    %v578 = vmul.f32 %v424, %v562
    %v579 = vmul.f32 %v425, %v562
    %v581 = vlaneseq
    %v582 = vshrl.u32 %v581, 7
    %v583 = vsub.s32 0, %v582
    %v584 = vrot.slane %v557, %v583
    %v586 = vadd.f32 %v564, %v584
    %v587 = vadd.f32 %v565, %v584
    %v588 = vadd.f32 %v566, %v584
    %v589 = vadd.f32 %v567, %v584
    %v590 = vadd.f32 %v568, %v584
    %v591 = vadd.f32 %v569, %v584
    %v592 = vadd.f32 %v570, %v584
    %v593 = vadd.f32 %v571, %v584
    %v594 = vadd.f32 %v572, %v584
    %v595 = vadd.f32 %v573, %v584
    %v596 = vadd.f32 %v574, %v584
    %v597 = vadd.f32 %v575, %v584
    %v598 = vadd.f32 %v576, %v584
    %v599 = vadd.f32 %v577, %v584
    %v600 = vadd.f32 %v578, %v584
    %v601 = vadd.f32 %v579, %v584
    %v602 = vmax.f32 %v586, 0.0
    %v603 = vmax.f32 %v587, 0.0
    %v604 = vmax.f32 %v588, 0.0
    %v605 = vmax.f32 %v589, 0.0
    %v606 = vmax.f32 %v590, 0.0
    %v607 = vmax.f32 %v591, 0.0
    %v608 = vmax.f32 %v592, 0.0
    %v609 = vmax.f32 %v593, 0.0
    %v610 = vmax.f32 %v594, 0.0
    %v611 = vmax.f32 %v595, 0.0
    %v612 = vmax.f32 %v596, 0.0
    %v613 = vmax.f32 %v597, 0.0
    %v614 = vmax.f32 %v598, 0.0
    %v615 = vmax.f32 %v599, 0.0
    %v616 = vmax.f32 %v600, 0.0
    %v617 = vmax.f32 %v601, 0.0
    %v618 = vpack.c.bf16 %v603, %v602
    %v619 = vpack.c.bf16 %v605, %v604
    %v620 = vpack.c.bf16 %v607, %v606
    %v621 = vpack.c.bf16 %v609, %v608
    %v622 = vpack.c.bf16 %v611, %v610
    %v623 = vpack.c.bf16 %v613, %v612
    %v624 = vpack.c.bf16 %v615, %v614
    %v625 = vpack.c.bf16 %v617, %v616
    %v634 = vunpack.c.l.b16 %v618
    %v635 = vunpack.c.h.b16 %v618
    %v636 = vunpack.c.l.b16 %v619
    %v637 = vunpack.c.h.b16 %v619
    %v638 = vunpack.c.l.b16 %v620
    %v639 = vunpack.c.h.b16 %v620
    %v640 = vunpack.c.l.b16 %v621
    %v641 = vunpack.c.h.b16 %v621
    %v642 = vunpack.c.l.b16 %v622
    %v643 = vunpack.c.h.b16 %v622
    %v644 = vunpack.c.l.b16 %v623
    %v645 = vunpack.c.h.b16 %v623
    %v646 = vunpack.c.l.b16 %v624
    %v647 = vunpack.c.h.b16 %v624
    %v648 = vunpack.c.l.b16 %v625
    %v649 = vunpack.c.h.b16 %v625
    %v650 = vpack.c.b16 %v634, %v634
    %v651 = vpack.c.b16 %v635, %v635
    %v652 = vpack.c.b16 %v636, %v636
    %v653 = vpack.c.b16 %v637, %v637
    %v654 = vpack.c.b16 %v638, %v638
    %v655 = vpack.c.b16 %v639, %v639
    %v656 = vpack.c.b16 %v640, %v640
    %v657 = vpack.c.b16 %v641, %v641
    %v658 = vpack.c.b16 %v642, %v642
    %v659 = vpack.c.b16 %v643, %v643
    %v660 = vpack.c.b16 %v644, %v644
    %v661 = vpack.c.b16 %v645, %v645
    %v662 = vpack.c.b16 %v646, %v646
    %v663 = vpack.c.b16 %v647, %v647
    %v664 = vpack.c.b16 %v648, %v648
    %v665 = vpack.c.b16 %v649, %v649
    %682 = vst [vmem:[%s4] sm:$0xf] %v650
    %683 = vst [vmem:[%s4 + $0x4] sm:$0xf] %v651
    %684 = vst [vmem:[%s4 + $0x8] sm:$0xf] %v652
    %685 = vst [vmem:[%s4 + $0xc] sm:$0xf] %v653
    %686 = vst [vmem:[%s4 + $0x10] sm:$0xf] %v654
    %687 = vst [vmem:[%s4 + $0x14] sm:$0xf] %v655
    %688 = vst [vmem:[%s4 + $0x18] sm:$0xf] %v656
    %689 = vst [vmem:[%s4 + $0x1c] sm:$0xf] %v657
    %690 = vst [vmem:[%s4 + $0x20] sm:$0xf] %v658
    %691 = vst [vmem:[%s4 + $0x24] sm:$0xf] %v659
    %692 = vst [vmem:[%s4 + $0x28] sm:$0xf] %v660
    %693 = vst [vmem:[%s4 + $0x2c] sm:$0xf] %v661
    %694 = vst [vmem:[%s4 + $0x30] sm:$0xf] %v662
    %695 = vst [vmem:[%s4 + $0x34] sm:$0xf] %v663
    %696 = vst [vmem:[%s4 + $0x38] sm:$0xf] %v664
    %697 = vst [vmem:[%s4 + $0x3c] sm:$0xf] %v665
  $region25: #{resnet_forward.13} parent=0 // pred_fallthru
    _
  // Predicated region
  $region26: #{resnet_forward.13} parent=0 // pred_check
    _
  $region27: #{resnet_forward.13} parent=0 // pred_check_branch
    %699 = sbr.rel (0) target = $region29
  $region28: #{resnet_forward.13} parent=0 // pred_region
    _
  $region29: #{resnet_forward.13} parent=0 // pred_fallthru
    _
  // Predicated region
  $region30: #{resnet_forward.13} parent=0 // pred_check
    _
  $region31: #{resnet_forward.13} parent=0 // pred_check_branch
    %701 = sbr.rel (0) target = $region33
  $region32: #{resnet_forward.13} parent=0 // pred_region
    _
  $region33: #{resnet_forward.13} parent=0 // pred_fallthru
    _

// kernel: resnet_forward.14
$region0: #{resnet_forward.14}
  #allocation0 [shape = 'u32[]', space=smem, size = 0x4, offset = 0x4, fixed_abs, tag = 'smem constant byte address 0x4 - core index']
  #allocation1 [shape = 'u32[144,128]{1,0:T(1,128)}', space=vmem, size = 0x12000, scoped, tag = 'internal scratch']
  #allocation2 [shape = 'f32[128,128]{1,0:T(8,128)}', space=vmem, size = 0x10000, scoped, tag = 'scratch operand']
  %s0 = inlined_call_operand.vmem [shape: bf16[128,256], index: 0, kind: input, shape index: {}]
  %s1 = inlined_call_operand.vmem [shape: bf16[256,128], index: 1, kind: input, shape index: {}]
  %s2 = inlined_call_operand.vmem [shape: f32[1,128], index: 2, kind: input, shape index: {}]
  %s3 = inlined_call_operand.vmem [shape: f32[1,128], index: 3, kind: input, shape index: {}]
  %s4 = inlined_call_operand.vmem [shape: bf16[128,128], index: 4, kind: input, shape index: {}]
  %s5 = inlined_call_operand.vmem [shape: bf16[128,128], index: 5, kind: output, shape index: {}]
  %s6 = sld [smem:[#allocation0]]
  $region38: #{resnet_forward.14} parent=0
    _
  %s8 = ssub.s32 1, %s6
  %s9 = scalar_select 0, %s8, %s6
  // Predicated region
  $region2: #{resnet_forward.14} parent=0 // pred_check
    _
  $region3: #{resnet_forward.14} parent=0 // pred_check_branch
    %11 = sbr.rel (0) target = $region5
  $region4: #{resnet_forward.14} parent=0 // pred_region
    _
  $region5: #{resnet_forward.14} parent=0 // pred_fallthru
    _
  // Predicated region
  $region6: #{resnet_forward.14} parent=0 // pred_check
    _
  $region7: #{resnet_forward.14} parent=0 // pred_check_branch
    %13 = sbr.rel (0) target = $region9
  $region8: #{resnet_forward.14} parent=0 // pred_region
    _
  $region9: #{resnet_forward.14} parent=0 // pred_fallthru
    _
  // Predicated region
  $region10: #{resnet_forward.14} parent=0 // pred_check
    _
  $region11: #{resnet_forward.14} parent=0 // pred_check_branch
    %15 = sbr.rel (0) target = $region13
  $region12: #{resnet_forward.14} parent=0 // pred_region
    _
  $region13: #{resnet_forward.14} parent=0 // pred_fallthru
    _
  // Predicated region
  $region14: #{resnet_forward.14} parent=0 // pred_check
    _
  $region15: #{resnet_forward.14} parent=0 // pred_check_branch
    %17 = sbr.rel (0) target = $region17
  $region16: #{resnet_forward.14} parent=0 // pred_region
    _
  $region17: #{resnet_forward.14} parent=0 // pred_fallthru
    _
  // Predicated region
  $region18: #{resnet_forward.14} parent=0 // pred_check
    _
  $region19: #{resnet_forward.14} parent=0 // pred_check_branch
    %19 = sbr.rel (0) target = $region21
  $region20: #{resnet_forward.14} parent=0 // pred_region
    _
  $region21: #{resnet_forward.14} parent=0 // pred_fallthru
    _
  %p21 = scmp.eq.s32.totalorder 0, 0
  // Predicated region
  $region22: #{resnet_forward.14} parent=0 // pred_check
    %p22 = pneg %p21
  $region23: #{resnet_forward.14} parent=0 // pred_check_branch
    %24 = sbr.rel (%p22) target = $region25
  $region24: #{resnet_forward.14} parent=0 // pred_region
    %25 = vst [vmem:[#allocation2] sm:$0xff] 0.0
    %26 = vst [vmem:[#allocation2 + $0x8] sm:$0xff] 0.0
    %27 = vst [vmem:[#allocation2 + $0x10] sm:$0xff] 0.0
    %28 = vst [vmem:[#allocation2 + $0x18] sm:$0xff] 0.0
    %29 = vst [vmem:[#allocation2 + $0x20] sm:$0xff] 0.0
    %30 = vst [vmem:[#allocation2 + $0x28] sm:$0xff] 0.0
    %31 = vst [vmem:[#allocation2 + $0x30] sm:$0xff] 0.0
    %32 = vst [vmem:[#allocation2 + $0x38] sm:$0xff] 0.0
    %33 = vst [vmem:[#allocation2 + $0x40] sm:$0xff] 0.0
    %34 = vst [vmem:[#allocation2 + $0x48] sm:$0xff] 0.0
    %35 = vst [vmem:[#allocation2 + $0x50] sm:$0xff] 0.0
    %36 = vst [vmem:[#allocation2 + $0x58] sm:$0xff] 0.0
    %37 = vst [vmem:[#allocation2 + $0x60] sm:$0xff] 0.0
    %38 = vst [vmem:[#allocation2 + $0x68] sm:$0xff] 0.0
    %39 = vst [vmem:[#allocation2 + $0x70] sm:$0xff] 0.0
    %40 = vst [vmem:[#allocation2 + $0x78] sm:$0xff] 0.0
  $region25: #{resnet_forward.14} parent=0 // pred_fallthru
    _
  %v41 = vld [vmem:[#allocation2] sm:$0xff]
  %v42 = vld [vmem:[#allocation2 + $0x8] sm:$0xff]
  %v43 = vld [vmem:[#allocation2 + $0x10] sm:$0xff]
  %v44 = vld [vmem:[#allocation2 + $0x18] sm:$0xff]
  %v45 = vld [vmem:[#allocation2 + $0x20] sm:$0xff]
  %v46 = vld [vmem:[#allocation2 + $0x28] sm:$0xff]
  %v47 = vld [vmem:[#allocation2 + $0x30] sm:$0xff]
  %v48 = vld [vmem:[#allocation2 + $0x38] sm:$0xff]
  %v49 = vld [vmem:[#allocation2 + $0x40] sm:$0xff]
  %v50 = vld [vmem:[#allocation2 + $0x48] sm:$0xff]
  %v51 = vld [vmem:[#allocation2 + $0x50] sm:$0xff]
  %v52 = vld [vmem:[#allocation2 + $0x58] sm:$0xff]
  %v53 = vld [vmem:[#allocation2 + $0x60] sm:$0xff]
  %v54 = vld [vmem:[#allocation2 + $0x68] sm:$0xff]
  %v55 = vld [vmem:[#allocation2 + $0x70] sm:$0xff]
  %v56 = vld [vmem:[#allocation2 + $0x78] sm:$0xff]
  %v57 = vld [vmem:[%s0] sm:$0xff]
  %v58 = vld [vmem:[%s0 + $0x8] sm:$0xff]
  %v59 = vld [vmem:[%s0 + $0x10] sm:$0xff]
  %v60 = vld [vmem:[%s0 + $0x18] sm:$0xff]
  %v61 = vld [vmem:[%s0 + $0x20] sm:$0xff]
  %v62 = vld [vmem:[%s0 + $0x28] sm:$0xff]
  %v63 = vld [vmem:[%s0 + $0x30] sm:$0xff]
  %v64 = vld [vmem:[%s0 + $0x38] sm:$0xff]
  %v65 = vld [vmem:[%s0 + $0x40] sm:$0xff]
  %v66 = vld [vmem:[%s0 + $0x48] sm:$0xff]
  %v67 = vld [vmem:[%s0 + $0x50] sm:$0xff]
  %v68 = vld [vmem:[%s0 + $0x58] sm:$0xff]
  %v69 = vld [vmem:[%s0 + $0x60] sm:$0xff]
  %v70 = vld [vmem:[%s0 + $0x68] sm:$0xff]
  %v71 = vld [vmem:[%s0 + $0x70] sm:$0xff]
  %v72 = vld [vmem:[%s0 + $0x78] sm:$0xff]
  %v73 = vld [vmem:[%s1] sm:$0xf]
  %v74 = vld [vmem:[%s1 + $0x4] sm:$0xf]
  %v75 = vld [vmem:[%s1 + $0x8] sm:$0xf]
  %v76 = vld [vmem:[%s1 + $0xc] sm:$0xf]
  %v77 = vld [vmem:[%s1 + $0x10] sm:$0xf]
  %v78 = vld [vmem:[%s1 + $0x14] sm:$0xf]
  %v79 = vld [vmem:[%s1 + $0x18] sm:$0xf]
  %v80 = vld [vmem:[%s1 + $0x1c] sm:$0xf]
  %v81 = vld [vmem:[%s1 + $0x20] sm:$0xf]
  %v82 = vld [vmem:[%s1 + $0x24] sm:$0xf]
  %v83 = vld [vmem:[%s1 + $0x28] sm:$0xf]
  %v84 = vld [vmem:[%s1 + $0x2c] sm:$0xf]
  %v85 = vld [vmem:[%s1 + $0x30] sm:$0xf]
  %v86 = vld [vmem:[%s1 + $0x34] sm:$0xf]
  %v87 = vld [vmem:[%s1 + $0x38] sm:$0xf]
  %v88 = vld [vmem:[%s1 + $0x3c] sm:$0xf]
  %v89 = vld [vmem:[%s1 + $0x40] sm:$0xf]
  %v90 = vld [vmem:[%s1 + $0x44] sm:$0xf]
  %v91 = vld [vmem:[%s1 + $0x48] sm:$0xf]
  %v92 = vld [vmem:[%s1 + $0x4c] sm:$0xf]
  %v93 = vld [vmem:[%s1 + $0x50] sm:$0xf]
  %v94 = vld [vmem:[%s1 + $0x54] sm:$0xf]
  %v95 = vld [vmem:[%s1 + $0x58] sm:$0xf]
  %v96 = vld [vmem:[%s1 + $0x5c] sm:$0xf]
  %v97 = vld [vmem:[%s1 + $0x60] sm:$0xf]
  %v98 = vld [vmem:[%s1 + $0x64] sm:$0xf]
  %v99 = vld [vmem:[%s1 + $0x68] sm:$0xf]
  %v100 = vld [vmem:[%s1 + $0x6c] sm:$0xf]
  %v101 = vld [vmem:[%s1 + $0x70] sm:$0xf]
  %v102 = vld [vmem:[%s1 + $0x74] sm:$0xf]
  %v103 = vld [vmem:[%s1 + $0x78] sm:$0xf]
  %v104 = vld [vmem:[%s1 + $0x7c] sm:$0xf]
  %v121 = vunpack.c.l.b16 %v57
  %v122 = vunpack.c.h.b16 %v57
  %v123 = vunpack.c.l.b16 %v58
  %v124 = vunpack.c.h.b16 %v58
  %v125 = vunpack.c.l.b16 %v59
  %v126 = vunpack.c.h.b16 %v59
  %v127 = vunpack.c.l.b16 %v60
  %v128 = vunpack.c.h.b16 %v60
  %v129 = vunpack.c.l.b16 %v61
  %v130 = vunpack.c.h.b16 %v61
  %v131 = vunpack.c.l.b16 %v62
  %v132 = vunpack.c.h.b16 %v62
  %v133 = vunpack.c.l.b16 %v63
  %v134 = vunpack.c.h.b16 %v63
  %v135 = vunpack.c.l.b16 %v64
  %v136 = vunpack.c.h.b16 %v64
  %v137 = vunpack.c.l.b16 %v65
  %v138 = vunpack.c.h.b16 %v65
  %v139 = vunpack.c.l.b16 %v66
  %v140 = vunpack.c.h.b16 %v66
  %v141 = vunpack.c.l.b16 %v67
  %v142 = vunpack.c.h.b16 %v67
  %v143 = vunpack.c.l.b16 %v68
  %v144 = vunpack.c.h.b16 %v68
  %v145 = vunpack.c.l.b16 %v69
  %v146 = vunpack.c.h.b16 %v69
  %v147 = vunpack.c.l.b16 %v70
  %v148 = vunpack.c.h.b16 %v70
  %v149 = vunpack.c.l.b16 %v71
  %v150 = vunpack.c.h.b16 %v71
  %v151 = vunpack.c.l.b16 %v72
  %v152 = vunpack.c.h.b16 %v72
  %v153 = vpack.c.b16 %v123, %v121
  %v154 = vpack.c.b16 %v124, %v122
  %v155 = vpack.c.b16 %v127, %v125
  %v156 = vpack.c.b16 %v128, %v126
  %v157 = vpack.c.b16 %v131, %v129
  %v158 = vpack.c.b16 %v132, %v130
  %v159 = vpack.c.b16 %v135, %v133
  %v160 = vpack.c.b16 %v136, %v134
  %v161 = vpack.c.b16 %v139, %v137
  %v162 = vpack.c.b16 %v140, %v138
  %v163 = vpack.c.b16 %v143, %v141
  %v164 = vpack.c.b16 %v144, %v142
  %v165 = vpack.c.b16 %v147, %v145
  %v166 = vpack.c.b16 %v148, %v146
  %v167 = vpack.c.b16 %v151, %v149
  %v168 = vpack.c.b16 %v152, %v150
  %v217 = vunpack.c.l.b16 %v73
  %v218 = vunpack.c.l.b16 %v74
  %v219 = vunpack.c.l.b16 %v75
  %v220 = vunpack.c.l.b16 %v76
  %v221 = vunpack.c.l.b16 %v77
  %v222 = vunpack.c.l.b16 %v78
  %v223 = vunpack.c.l.b16 %v79
  %v224 = vunpack.c.l.b16 %v80
  %v225 = vunpack.c.l.b16 %v81
  %v226 = vunpack.c.l.b16 %v82
  %v227 = vunpack.c.l.b16 %v83
  %v228 = vunpack.c.l.b16 %v84
  %v229 = vunpack.c.l.b16 %v85
  %v230 = vunpack.c.l.b16 %v86
  %v231 = vunpack.c.l.b16 %v87
  %v232 = vunpack.c.l.b16 %v88
  %v233 = vunpack.c.l.b16 %v89
  %v234 = vunpack.c.l.b16 %v90
  %v235 = vunpack.c.l.b16 %v91
  %v236 = vunpack.c.l.b16 %v92
  %v237 = vunpack.c.l.b16 %v93
  %v238 = vunpack.c.l.b16 %v94
  %v239 = vunpack.c.l.b16 %v95
  %v240 = vunpack.c.l.b16 %v96
  %v241 = vunpack.c.l.b16 %v97
  %v242 = vunpack.c.l.b16 %v98
  %v243 = vunpack.c.l.b16 %v99
  %v244 = vunpack.c.l.b16 %v100
  %v245 = vunpack.c.l.b16 %v101
  %v246 = vunpack.c.l.b16 %v102
  %v247 = vunpack.c.l.b16 %v103
  %v248 = vunpack.c.l.b16 %v104
  %v249 = vpack.c.b16 %v218, %v217
  %v250 = vpack.c.b16 %v220, %v219
  %v251 = vpack.c.b16 %v222, %v221
  %v252 = vpack.c.b16 %v224, %v223
  %v253 = vpack.c.b16 %v226, %v225
  %v254 = vpack.c.b16 %v228, %v227
  %v255 = vpack.c.b16 %v230, %v229
  %v256 = vpack.c.b16 %v232, %v231
  %v257 = vpack.c.b16 %v234, %v233
  %v258 = vpack.c.b16 %v236, %v235
  %v259 = vpack.c.b16 %v238, %v237
  %v260 = vpack.c.b16 %v240, %v239
  %v261 = vpack.c.b16 %v242, %v241
  %v262 = vpack.c.b16 %v244, %v243
  %v263 = vpack.c.b16 %v246, %v245
  %v264 = vpack.c.b16 %v248, %v247
  %281 = vmatprep.subr.bf16.mxu0 0
  %282 = vmatpush1.bf16.msra.mxu0 %v256
  %283 = vmatprep.subr.bf16.mxu0 0
  %284 = vmatpush1.bf16.msra.mxu0 %v255
  %285 = vmatprep.subr.bf16.mxu0 0
  %286 = vmatpush1.bf16.msra.mxu0 %v254
  %287 = vmatprep.subr.bf16.mxu0 0
  %288 = vmatpush1.bf16.msra.mxu0 %v253
  %289 = vmatprep.subr.bf16.mxu0 0
  %290 = vmatpush1.bf16.msra.mxu0 %v252
  %291 = vmatprep.subr.bf16.mxu0 0
  %292 = vmatpush1.bf16.msra.mxu0 %v251
  %293 = vmatprep.subr.bf16.mxu0 0
  %294 = vmatpush1.bf16.msra.mxu0 %v250
  %295 = vmatprep.subr.bf16.mxu0 0
  %296 = vmatpush1.bf16.msra.mxu0 %v249
  %297 = vmatprep.subr.bf16.mxu0 0
  %298 = vmatpush2.bf16.msra.mxu0 %v264
  %299 = vmatprep.subr.bf16.mxu0 0
  %300 = vmatpush2.bf16.msra.mxu0 %v263
  %301 = vmatprep.subr.bf16.mxu0 0
  %302 = vmatpush2.bf16.msra.mxu0 %v262
  %303 = vmatprep.subr.bf16.mxu0 0
  %304 = vmatpush2.bf16.msra.mxu0 %v261
  %305 = vmatprep.subr.bf16.mxu0 0
  %306 = vmatpush2.bf16.msra.mxu0 %v260
  %307 = vmatprep.subr.bf16.mxu0 0
  %308 = vmatpush2.bf16.msra.mxu0 %v259
  %309 = vmatprep.subr.bf16.mxu0 0
  %310 = vmatpush2.bf16.msra.mxu0 %v258
  %311 = vmatprep.subr.bf16.mxu0 0
  %312 = vmatpush2.bf16.msra.mxu0 %v257
  %313 = vmatprep.mubr.bf16.mxu0 %v154
  %314 = vmatmul.mubr.bf16.gmra.mxu0 %v153
  %v315 = vpop.f32.mrf.mxu0
  %v316 = vadd.f32 0.0, %v315
  %v317 = vpop.f32.mrf.mxu0
  %v318 = vpop.f32.mrf.mxu0
  %v319 = vadd.f32 0.0, %v318
  %v320 = vpop.f32.mrf.mxu0
  %321 = vmatprep.mubr.bf16.mxu0 %v156
  %322 = vmatmul.mubr.bf16.gmra.mxu0 %v155
  %v323 = vpop.f32.mrf.mxu0
  %v324 = vadd.f32 0.0, %v323
  %v325 = vpop.f32.mrf.mxu0
  %v326 = vpop.f32.mrf.mxu0
  %v327 = vadd.f32 0.0, %v326
  %v328 = vpop.f32.mrf.mxu0
  %329 = vmatprep.mubr.bf16.mxu0 %v158
  %330 = vmatmul.mubr.bf16.gmra.mxu0 %v157
  %v331 = vpop.f32.mrf.mxu0
  %v332 = vadd.f32 0.0, %v331
  %v333 = vpop.f32.mrf.mxu0
  %v334 = vpop.f32.mrf.mxu0
  %v335 = vadd.f32 0.0, %v334
  %v336 = vpop.f32.mrf.mxu0
  %337 = vmatprep.mubr.bf16.mxu0 %v160
  %338 = vmatmul.mubr.bf16.gmra.mxu0 %v159
  %v339 = vpop.f32.mrf.mxu0
  %v340 = vadd.f32 0.0, %v339
  %v341 = vpop.f32.mrf.mxu0
  %v342 = vpop.f32.mrf.mxu0
  %v343 = vadd.f32 0.0, %v342
  %v344 = vpop.f32.mrf.mxu0
  %345 = vmatprep.mubr.bf16.mxu0 %v162
  %346 = vmatmul.mubr.bf16.gmra.mxu0 %v161
  %v347 = vpop.f32.mrf.mxu0
  %v348 = vadd.f32 0.0, %v347
  %v349 = vpop.f32.mrf.mxu0
  %v350 = vpop.f32.mrf.mxu0
  %v351 = vadd.f32 0.0, %v350
  %v352 = vpop.f32.mrf.mxu0
  %353 = vmatprep.mubr.bf16.mxu0 %v164
  %354 = vmatmul.mubr.bf16.gmra.mxu0 %v163
  %v355 = vpop.f32.mrf.mxu0
  %v356 = vadd.f32 0.0, %v355
  %v357 = vpop.f32.mrf.mxu0
  %v358 = vpop.f32.mrf.mxu0
  %v359 = vadd.f32 0.0, %v358
  %v360 = vpop.f32.mrf.mxu0
  %361 = vmatprep.mubr.bf16.mxu0 %v166
  %362 = vmatmul.mubr.bf16.gmra.mxu0 %v165
  %v363 = vpop.f32.mrf.mxu0
  %v364 = vadd.f32 0.0, %v363
  %v365 = vpop.f32.mrf.mxu0
  %v366 = vpop.f32.mrf.mxu0
  %v367 = vadd.f32 0.0, %v366
  %v368 = vpop.f32.mrf.mxu0
  %369 = vmatprep.mubr.bf16.mxu0 %v168
  %370 = vmatmul.mubr.bf16.gmra.mxu0 %v167
  %v371 = vpop.f32.mrf.mxu0
  %v372 = vadd.f32 0.0, %v371
  %v373 = vpop.f32.mrf.mxu0
  %v374 = vpop.f32.mrf.mxu0
  %v375 = vadd.f32 0.0, %v374
  %v376 = vpop.f32.mrf.mxu0
  %377 = vdwg.mxu0
  %v378 = vadd.f32 %v41, %v316
  %v379 = vadd.f32 %v42, %v319
  %v380 = vadd.f32 %v43, %v324
  %v381 = vadd.f32 %v44, %v327
  %v382 = vadd.f32 %v45, %v332
  %v383 = vadd.f32 %v46, %v335
  %v384 = vadd.f32 %v47, %v340
  %v385 = vadd.f32 %v48, %v343
  %v386 = vadd.f32 %v49, %v348
  %v387 = vadd.f32 %v50, %v351
  %v388 = vadd.f32 %v51, %v356
  %v389 = vadd.f32 %v52, %v359
  %v390 = vadd.f32 %v53, %v364
  %v391 = vadd.f32 %v54, %v367
  %v392 = vadd.f32 %v55, %v372
  %v393 = vadd.f32 %v56, %v375
  %394 = vst [vmem:[#allocation2] sm:$0xff] %v378
  %395 = vst [vmem:[#allocation2 + $0x8] sm:$0xff] %v379
  %396 = vst [vmem:[#allocation2 + $0x10] sm:$0xff] %v380
  %397 = vst [vmem:[#allocation2 + $0x18] sm:$0xff] %v381
  %398 = vst [vmem:[#allocation2 + $0x20] sm:$0xff] %v382
  %399 = vst [vmem:[#allocation2 + $0x28] sm:$0xff] %v383
  %400 = vst [vmem:[#allocation2 + $0x30] sm:$0xff] %v384
  %401 = vst [vmem:[#allocation2 + $0x38] sm:$0xff] %v385
  %402 = vst [vmem:[#allocation2 + $0x40] sm:$0xff] %v386
  %403 = vst [vmem:[#allocation2 + $0x48] sm:$0xff] %v387
  %404 = vst [vmem:[#allocation2 + $0x50] sm:$0xff] %v388
  %405 = vst [vmem:[#allocation2 + $0x58] sm:$0xff] %v389
  %406 = vst [vmem:[#allocation2 + $0x60] sm:$0xff] %v390
  %407 = vst [vmem:[#allocation2 + $0x68] sm:$0xff] %v391
  %408 = vst [vmem:[#allocation2 + $0x70] sm:$0xff] %v392
  %409 = vst [vmem:[#allocation2 + $0x78] sm:$0xff] %v393
  // Predicated region
  $region26: #{resnet_forward.14} parent=0 // pred_check
    %p410 = pneg %p21
  $region27: #{resnet_forward.14} parent=0 // pred_check_branch
    %412 = sbr.rel (%p410) target = $region29
  $region28: #{resnet_forward.14} parent=0 // pred_region
    %v413 = vld [vmem:[#allocation2] sm:$0xff]
    %v414 = vld [vmem:[#allocation2 + $0x8] sm:$0xff]
    %v415 = vld [vmem:[#allocation2 + $0x10] sm:$0xff]
    %v416 = vld [vmem:[#allocation2 + $0x18] sm:$0xff]
    %v417 = vld [vmem:[#allocation2 + $0x20] sm:$0xff]
    %v418 = vld [vmem:[#allocation2 + $0x28] sm:$0xff]
    %v419 = vld [vmem:[#allocation2 + $0x30] sm:$0xff]
    %v420 = vld [vmem:[#allocation2 + $0x38] sm:$0xff]
    %v421 = vld [vmem:[#allocation2 + $0x40] sm:$0xff]
    %v422 = vld [vmem:[#allocation2 + $0x48] sm:$0xff]
    %v423 = vld [vmem:[#allocation2 + $0x50] sm:$0xff]
    %v424 = vld [vmem:[#allocation2 + $0x58] sm:$0xff]
    %v425 = vld [vmem:[#allocation2 + $0x60] sm:$0xff]
    %v426 = vld [vmem:[#allocation2 + $0x68] sm:$0xff]
    %v427 = vld [vmem:[#allocation2 + $0x70] sm:$0xff]
    %v428 = vld [vmem:[#allocation2 + $0x78] sm:$0xff]
    %v429 = vadd.f32 %v413, %v414
    %v430 = vadd.f32 %v429, %v415
    %v431 = vadd.f32 %v430, %v416
    %v432 = vadd.f32 %v431, %v417
    %v433 = vadd.f32 %v432, %v418
    %v434 = vadd.f32 %v433, %v419
    %v435 = vadd.f32 %v434, %v420
    %v436 = vadd.f32 %v435, %v421
    %v437 = vadd.f32 %v436, %v422
    %v438 = vadd.f32 %v437, %v423
    %v439 = vadd.f32 %v438, %v424
    %v440 = vadd.f32 %v439, %v425
    %v441 = vadd.f32 %v440, %v426
    %v442 = vadd.f32 %v441, %v427
    %v443 = vadd.f32 %v442, %v428
    %v444 = vrot.slane %v443, 4
    %v445 = vadd.f32 %v443, %v444
    %v446 = vrot.slane %v445, 2
    %v447 = vadd.f32 %v445, %v446
    %v448 = vrot.slane %v447, 1
    %v449 = vadd.f32 %v447, %v448
    %v450 = vmul.f32 %v449, 0.0078125
    %v451 = vlaneseq
    %v452 = vshrl.u32 %v451, 7
    %v453 = vadd.s32 %v452, 8
    %v454 = vadd.s32 %v452, 16
    %v455 = vadd.s32 %v452, 24
    %v456 = vadd.s32 %v452, 32
    %v457 = vadd.s32 %v452, 40
    %v458 = vadd.s32 %v452, 48
    %v459 = vadd.s32 %v452, 56
    %v460 = vadd.s32 %v452, 64
    %v461 = vadd.s32 %v452, 72
    %v462 = vadd.s32 %v452, 80
    %v463 = vadd.s32 %v452, 88
    %v464 = vadd.s32 %v452, 96
    %v465 = vadd.s32 %v452, 104
    %v466 = vadd.s32 %v452, 112
    %v467 = vadd.s32 %v452, 120
    %vm468 = vcmp.lt.s32.totalorder %v452, 128
    %vm469 = vcmp.lt.s32.totalorder %v453, 128
    %vm470 = vcmp.lt.s32.totalorder %v454, 128
    %vm471 = vcmp.lt.s32.totalorder %v455, 128
    %vm472 = vcmp.lt.s32.totalorder %v456, 128
    %vm473 = vcmp.lt.s32.totalorder %v457, 128
    %vm474 = vcmp.lt.s32.totalorder %v458, 128
    %vm475 = vcmp.lt.s32.totalorder %v459, 128
    %vm476 = vcmp.lt.s32.totalorder %v460, 128
    %vm477 = vcmp.lt.s32.totalorder %v461, 128
    %vm478 = vcmp.lt.s32.totalorder %v462, 128
    %vm479 = vcmp.lt.s32.totalorder %v463, 128
    %vm480 = vcmp.lt.s32.totalorder %v464, 128
    %vm481 = vcmp.lt.s32.totalorder %v465, 128
    %vm482 = vcmp.lt.s32.totalorder %v466, 128
    %vm483 = vcmp.lt.s32.totalorder %v467, 128
    %v484 = vsub.f32 %v413, %v450
    %v485 = vsub.f32 %v414, %v450
    %v486 = vsub.f32 %v415, %v450
    %v487 = vsub.f32 %v416, %v450
    %v488 = vsub.f32 %v417, %v450
    %v489 = vsub.f32 %v418, %v450
    %v490 = vsub.f32 %v419, %v450
    %v491 = vsub.f32 %v420, %v450
    %v492 = vsub.f32 %v421, %v450
    %v493 = vsub.f32 %v422, %v450
    %v494 = vsub.f32 %v423, %v450
    %v495 = vsub.f32 %v424, %v450
    %v496 = vsub.f32 %v425, %v450
    %v497 = vsub.f32 %v426, %v450
    %v498 = vsub.f32 %v427, %v450
    %v499 = vsub.f32 %v428, %v450
    %v500 = vsel %vm468, %v484, 0.0
    %v501 = vsel %vm469, %v485, 0.0
    %v502 = vsel %vm470, %v486, 0.0
    %v503 = vsel %vm471, %v487, 0.0
    %v504 = vsel %vm472, %v488, 0.0
    %v505 = vsel %vm473, %v489, 0.0
    %v506 = vsel %vm474, %v490, 0.0
    %v507 = vsel %vm475, %v491, 0.0
    %v508 = vsel %vm476, %v492, 0.0
    %v509 = vsel %vm477, %v493, 0.0
    %v510 = vsel %vm478, %v494, 0.0
    %v511 = vsel %vm479, %v495, 0.0
    %v512 = vsel %vm480, %v496, 0.0
    %v513 = vsel %vm481, %v497, 0.0
    %v514 = vsel %vm482, %v498, 0.0
    %v515 = vsel %vm483, %v499, 0.0
    %v516 = vmul.f32 %v500, %v500
    %v517 = vmul.f32 %v501, %v501
    %v518 = vmul.f32 %v502, %v502
    %v519 = vmul.f32 %v503, %v503
    %v520 = vmul.f32 %v504, %v504
    %v521 = vmul.f32 %v505, %v505
    %v522 = vmul.f32 %v506, %v506
    %v523 = vmul.f32 %v507, %v507
    %v524 = vmul.f32 %v508, %v508
    %v525 = vmul.f32 %v509, %v509
    %v526 = vmul.f32 %v510, %v510
    %v527 = vmul.f32 %v511, %v511
    %v528 = vmul.f32 %v512, %v512
    %v529 = vmul.f32 %v513, %v513
    %v530 = vmul.f32 %v514, %v514
    %v531 = vmul.f32 %v515, %v515
    %v532 = vadd.f32 %v516, %v517
    %v533 = vadd.f32 %v532, %v518
    %v534 = vadd.f32 %v533, %v519
    %v535 = vadd.f32 %v534, %v520
    %v536 = vadd.f32 %v535, %v521
    %v537 = vadd.f32 %v536, %v522
    %v538 = vadd.f32 %v537, %v523
    %v539 = vadd.f32 %v538, %v524
    %v540 = vadd.f32 %v539, %v525
    %v541 = vadd.f32 %v540, %v526
    %v542 = vadd.f32 %v541, %v527
    %v543 = vadd.f32 %v542, %v528
    %v544 = vadd.f32 %v543, %v529
    %v545 = vadd.f32 %v544, %v530
    %v546 = vadd.f32 %v545, %v531
    %v547 = vrot.slane %v546, 4
    %v548 = vadd.f32 %v546, %v547
    %v549 = vrot.slane %v548, 2
    %v550 = vadd.f32 %v548, %v549
    %v551 = vrot.slane %v550, 1
    %v552 = vadd.f32 %v550, %v551
    %v553 = vmul.f32 %v552, 0.0078125
    %v554 = vld [vmem:[%s2] sm:$0x1]
    %v555 = vadd.f32 %v553, 1e-05
    %v556 = vrsqrt.pop %v555
    %v557 = vmul.f32 %v554, %v556
    %v558 = vld [vmem:[%s3] sm:$0x1]
    %v559 = vmul.f32 %v450, %v557
    %v560 = vsub.f32 %v558, %v559
    %v562 = vlaneseq
    %v563 = vshrl.u32 %v562, 7
    %v564 = vsub.s32 0, %v563
    %v565 = vrot.slane %v557, %v564
    %v567 = vmul.f32 %v413, %v565
    %v568 = vmul.f32 %v414, %v565
    %v569 = vmul.f32 %v415, %v565
    %v570 = vmul.f32 %v416, %v565
    %v571 = vmul.f32 %v417, %v565
    %v572 = vmul.f32 %v418, %v565
    %v573 = vmul.f32 %v419, %v565
    %v574 = vmul.f32 %v420, %v565
    %v575 = vmul.f32 %v421, %v565
    %v576 = vmul.f32 %v422, %v565
    %v577 = vmul.f32 %v423, %v565
    %v578 = vmul.f32 %v424, %v565
    %v579 = vmul.f32 %v425, %v565
    %v580 = vmul.f32 %v426, %v565
    %v581 = vmul.f32 %v427, %v565
    %v582 = vmul.f32 %v428, %v565
    %v584 = vlaneseq
    %v585 = vshrl.u32 %v584, 7
    %v586 = vsub.s32 0, %v585
    %v587 = vrot.slane %v560, %v586
    %v589 = vadd.f32 %v567, %v587
    %v590 = vadd.f32 %v568, %v587
    %v591 = vadd.f32 %v569, %v587
    %v592 = vadd.f32 %v570, %v587
    %v593 = vadd.f32 %v571, %v587
    %v594 = vadd.f32 %v572, %v587
    %v595 = vadd.f32 %v573, %v587
    %v596 = vadd.f32 %v574, %v587
    %v597 = vadd.f32 %v575, %v587
    %v598 = vadd.f32 %v576, %v587
    %v599 = vadd.f32 %v577, %v587
    %v600 = vadd.f32 %v578, %v587
    %v601 = vadd.f32 %v579, %v587
    %v602 = vadd.f32 %v580, %v587
    %v603 = vadd.f32 %v581, %v587
    %v604 = vadd.f32 %v582, %v587
    %v605 = vld [vmem:[%s4] sm:$0xf]
    %v606 = vld [vmem:[%s4 + $0x4] sm:$0xf]
    %v607 = vld [vmem:[%s4 + $0x8] sm:$0xf]
    %v608 = vld [vmem:[%s4 + $0xc] sm:$0xf]
    %v609 = vld [vmem:[%s4 + $0x10] sm:$0xf]
    %v610 = vld [vmem:[%s4 + $0x14] sm:$0xf]
    %v611 = vld [vmem:[%s4 + $0x18] sm:$0xf]
    %v612 = vld [vmem:[%s4 + $0x1c] sm:$0xf]
    %v613 = vld [vmem:[%s4 + $0x20] sm:$0xf]
    %v614 = vld [vmem:[%s4 + $0x24] sm:$0xf]
    %v615 = vld [vmem:[%s4 + $0x28] sm:$0xf]
    %v616 = vld [vmem:[%s4 + $0x2c] sm:$0xf]
    %v617 = vld [vmem:[%s4 + $0x30] sm:$0xf]
    %v618 = vld [vmem:[%s4 + $0x34] sm:$0xf]
    %v619 = vld [vmem:[%s4 + $0x38] sm:$0xf]
    %v620 = vld [vmem:[%s4 + $0x3c] sm:$0xf]
    %v621 = vunpack.c.l.bf16 %v605
    %v622 = vunpack.c.l.bf16 %v606
    %v623 = vunpack.c.l.bf16 %v607
    %v624 = vunpack.c.l.bf16 %v608
    %v625 = vunpack.c.l.bf16 %v609
    %v626 = vunpack.c.l.bf16 %v610
    %v627 = vunpack.c.l.bf16 %v611
    %v628 = vunpack.c.l.bf16 %v612
    %v629 = vunpack.c.l.bf16 %v613
    %v630 = vunpack.c.l.bf16 %v614
    %v631 = vunpack.c.l.bf16 %v615
    %v632 = vunpack.c.l.bf16 %v616
    %v633 = vunpack.c.l.bf16 %v617
    %v634 = vunpack.c.l.bf16 %v618
    %v635 = vunpack.c.l.bf16 %v619
    %v636 = vunpack.c.l.bf16 %v620
    %v637 = vadd.f32 %v589, %v621
    %v638 = vadd.f32 %v590, %v622
    %v639 = vadd.f32 %v591, %v623
    %v640 = vadd.f32 %v592, %v624
    %v641 = vadd.f32 %v593, %v625
    %v642 = vadd.f32 %v594, %v626
    %v643 = vadd.f32 %v595, %v627
    %v644 = vadd.f32 %v596, %v628
    %v645 = vadd.f32 %v597, %v629
    %v646 = vadd.f32 %v598, %v630
    %v647 = vadd.f32 %v599, %v631
    %v648 = vadd.f32 %v600, %v632
    %v649 = vadd.f32 %v601, %v633
    %v650 = vadd.f32 %v602, %v634
    %v651 = vadd.f32 %v603, %v635
    %v652 = vadd.f32 %v604, %v636
    %v653 = vmax.f32 %v637, 0.0
    %v654 = vmax.f32 %v638, 0.0
    %v655 = vmax.f32 %v639, 0.0
    %v656 = vmax.f32 %v640, 0.0
    %v657 = vmax.f32 %v641, 0.0
    %v658 = vmax.f32 %v642, 0.0
    %v659 = vmax.f32 %v643, 0.0
    %v660 = vmax.f32 %v644, 0.0
    %v661 = vmax.f32 %v645, 0.0
    %v662 = vmax.f32 %v646, 0.0
    %v663 = vmax.f32 %v647, 0.0
    %v664 = vmax.f32 %v648, 0.0
    %v665 = vmax.f32 %v649, 0.0
    %v666 = vmax.f32 %v650, 0.0
    %v667 = vmax.f32 %v651, 0.0
    %v668 = vmax.f32 %v652, 0.0
    %v669 = vpack.c.bf16 %v654, %v653
    %v670 = vpack.c.bf16 %v656, %v655
    %v671 = vpack.c.bf16 %v658, %v657
    %v672 = vpack.c.bf16 %v660, %v659
    %v673 = vpack.c.bf16 %v662, %v661
    %v674 = vpack.c.bf16 %v664, %v663
    %v675 = vpack.c.bf16 %v666, %v665
    %v676 = vpack.c.bf16 %v668, %v667
    %v685 = vunpack.c.l.b16 %v669
    %v686 = vunpack.c.h.b16 %v669
    %v687 = vunpack.c.l.b16 %v670
    %v688 = vunpack.c.h.b16 %v670
    %v689 = vunpack.c.l.b16 %v671
    %v690 = vunpack.c.h.b16 %v671
    %v691 = vunpack.c.l.b16 %v672
    %v692 = vunpack.c.h.b16 %v672
    %v693 = vunpack.c.l.b16 %v673
    %v694 = vunpack.c.h.b16 %v673
    %v695 = vunpack.c.l.b16 %v674
    %v696 = vunpack.c.h.b16 %v674
    %v697 = vunpack.c.l.b16 %v675
    %v698 = vunpack.c.h.b16 %v675
    %v699 = vunpack.c.l.b16 %v676
    %v700 = vunpack.c.h.b16 %v676
    %v701 = vpack.c.b16 %v685, %v685
    %v702 = vpack.c.b16 %v686, %v686
    %v703 = vpack.c.b16 %v687, %v687
    %v704 = vpack.c.b16 %v688, %v688
    %v705 = vpack.c.b16 %v689, %v689
    %v706 = vpack.c.b16 %v690, %v690
    %v707 = vpack.c.b16 %v691, %v691
    %v708 = vpack.c.b16 %v692, %v692
    %v709 = vpack.c.b16 %v693, %v693
    %v710 = vpack.c.b16 %v694, %v694
    %v711 = vpack.c.b16 %v695, %v695
    %v712 = vpack.c.b16 %v696, %v696
    %v713 = vpack.c.b16 %v697, %v697
    %v714 = vpack.c.b16 %v698, %v698
    %v715 = vpack.c.b16 %v699, %v699
    %v716 = vpack.c.b16 %v700, %v700
    %733 = vst [vmem:[%s5] sm:$0xf] %v701
    %734 = vst [vmem:[%s5 + $0x4] sm:$0xf] %v702
    %735 = vst [vmem:[%s5 + $0x8] sm:$0xf] %v703
    %736 = vst [vmem:[%s5 + $0xc] sm:$0xf] %v704
    %737 = vst [vmem:[%s5 + $0x10] sm:$0xf] %v705
    %738 = vst [vmem:[%s5 + $0x14] sm:$0xf] %v706
    %739 = vst [vmem:[%s5 + $0x18] sm:$0xf] %v707
    %740 = vst [vmem:[%s5 + $0x1c] sm:$0xf] %v708
    %741 = vst [vmem:[%s5 + $0x20] sm:$0xf] %v709
    %742 = vst [vmem:[%s5 + $0x24] sm:$0xf] %v710
    %743 = vst [vmem:[%s5 + $0x28] sm:$0xf] %v711
    %744 = vst [vmem:[%s5 + $0x2c] sm:$0xf] %v712
    %745 = vst [vmem:[%s5 + $0x30] sm:$0xf] %v713
    %746 = vst [vmem:[%s5 + $0x34] sm:$0xf] %v714
    %747 = vst [vmem:[%s5 + $0x38] sm:$0xf] %v715
    %748 = vst [vmem:[%s5 + $0x3c] sm:$0xf] %v716
  $region29: #{resnet_forward.14} parent=0 // pred_fallthru
    _
  // Predicated region
  $region30: #{resnet_forward.14} parent=0 // pred_check
    _
  $region31: #{resnet_forward.14} parent=0 // pred_check_branch
    %750 = sbr.rel (0) target = $region33
  $region32: #{resnet_forward.14} parent=0 // pred_region
    _
  $region33: #{resnet_forward.14} parent=0 // pred_fallthru
    _
  // Predicated region
  $region34: #{resnet_forward.14} parent=0 // pred_check
    _
  $region35: #{resnet_forward.14} parent=0 // pred_check_branch
    %752 = sbr.rel (0) target = $region37
  $region36: #{resnet_forward.14} parent=0 // pred_region
    _
  $region37: #{resnet_forward.14} parent=0 // pred_fallthru
    _

// kernel: resnet_forward.15
$region0: #{resnet_forward.15}
  #allocation0 [shape = 'u32[]', space=smem, size = 0x4, offset = 0x4, fixed_abs, tag = 'smem constant byte address 0x4 - core index']
  #allocation1 [shape = 'u32[144,128]{1,0:T(1,128)}', space=vmem, size = 0x12000, scoped, tag = 'internal scratch']
  #allocation2 [shape = 'f32[32,128]{1,0:T(8,128)}', space=vmem, size = 0x4000, scoped, tag = 'scratch operand']
  %s0 = inlined_call_operand.vmem [shape: bf16[32,256], index: 0, kind: input, shape index: {}]
  %s1 = inlined_call_operand.vmem [shape: bf16[256,128], index: 1, kind: input, shape index: {}]
  %s2 = inlined_call_operand.vmem [shape: f32[1,128], index: 2, kind: input, shape index: {}]
  %s3 = inlined_call_operand.vmem [shape: f32[1,128], index: 3, kind: input, shape index: {}]
  %s4 = inlined_call_operand.vmem [shape: bf16[32,128], index: 4, kind: output, shape index: {}]
  %s5 = sld [smem:[#allocation0]]
  $region34: #{resnet_forward.15} parent=0
    _
  %s7 = ssub.s32 1, %s5
  %s8 = scalar_select 0, %s7, %s5
  // Predicated region
  $region2: #{resnet_forward.15} parent=0 // pred_check
    _
  $region3: #{resnet_forward.15} parent=0 // pred_check_branch
    %10 = sbr.rel (0) target = $region5
  $region4: #{resnet_forward.15} parent=0 // pred_region
    _
  $region5: #{resnet_forward.15} parent=0 // pred_fallthru
    _
  // Predicated region
  $region6: #{resnet_forward.15} parent=0 // pred_check
    _
  $region7: #{resnet_forward.15} parent=0 // pred_check_branch
    %12 = sbr.rel (0) target = $region9
  $region8: #{resnet_forward.15} parent=0 // pred_region
    _
  $region9: #{resnet_forward.15} parent=0 // pred_fallthru
    _
  // Predicated region
  $region10: #{resnet_forward.15} parent=0 // pred_check
    _
  $region11: #{resnet_forward.15} parent=0 // pred_check_branch
    %14 = sbr.rel (0) target = $region13
  $region12: #{resnet_forward.15} parent=0 // pred_region
    _
  $region13: #{resnet_forward.15} parent=0 // pred_fallthru
    _
  // Predicated region
  $region14: #{resnet_forward.15} parent=0 // pred_check
    _
  $region15: #{resnet_forward.15} parent=0 // pred_check_branch
    %16 = sbr.rel (0) target = $region17
  $region16: #{resnet_forward.15} parent=0 // pred_region
    _
  $region17: #{resnet_forward.15} parent=0 // pred_fallthru
    _
  %p18 = scmp.eq.s32.totalorder 0, 0
  // Predicated region
  $region18: #{resnet_forward.15} parent=0 // pred_check
    %p19 = pneg %p18
  $region19: #{resnet_forward.15} parent=0 // pred_check_branch
    %21 = sbr.rel (%p19) target = $region21
  $region20: #{resnet_forward.15} parent=0 // pred_region
    %22 = vst [vmem:[#allocation2] sm:$0xff] 0.0
    %23 = vst [vmem:[#allocation2 + $0x8] sm:$0xff] 0.0
    %24 = vst [vmem:[#allocation2 + $0x10] sm:$0xff] 0.0
    %25 = vst [vmem:[#allocation2 + $0x18] sm:$0xff] 0.0
  $region21: #{resnet_forward.15} parent=0 // pred_fallthru
    _
  %v26 = vld [vmem:[#allocation2] sm:$0xff]
  %v27 = vld [vmem:[#allocation2 + $0x8] sm:$0xff]
  %v28 = vld [vmem:[#allocation2 + $0x10] sm:$0xff]
  %v29 = vld [vmem:[#allocation2 + $0x18] sm:$0xff]
  %v30 = vld [vmem:[%s0] sm:$0xff]
  %v31 = vld [vmem:[%s0 + $0x8] sm:$0xff]
  %v32 = vld [vmem:[%s0 + $0x10] sm:$0xff]
  %v33 = vld [vmem:[%s0 + $0x18] sm:$0xff]
  %v34 = vld [vmem:[%s1] sm:$0xf]
  %v35 = vld [vmem:[%s1 + $0x4] sm:$0xf]
  %v36 = vld [vmem:[%s1 + $0x8] sm:$0xf]
  %v37 = vld [vmem:[%s1 + $0xc] sm:$0xf]
  %v38 = vld [vmem:[%s1 + $0x10] sm:$0xf]
  %v39 = vld [vmem:[%s1 + $0x14] sm:$0xf]
  %v40 = vld [vmem:[%s1 + $0x18] sm:$0xf]
  %v41 = vld [vmem:[%s1 + $0x1c] sm:$0xf]
  %v42 = vld [vmem:[%s1 + $0x20] sm:$0xf]
  %v43 = vld [vmem:[%s1 + $0x24] sm:$0xf]
  %v44 = vld [vmem:[%s1 + $0x28] sm:$0xf]
  %v45 = vld [vmem:[%s1 + $0x2c] sm:$0xf]
  %v46 = vld [vmem:[%s1 + $0x30] sm:$0xf]
  %v47 = vld [vmem:[%s1 + $0x34] sm:$0xf]
  %v48 = vld [vmem:[%s1 + $0x38] sm:$0xf]
  %v49 = vld [vmem:[%s1 + $0x3c] sm:$0xf]
  %v50 = vld [vmem:[%s1 + $0x40] sm:$0xf]
  %v51 = vld [vmem:[%s1 + $0x44] sm:$0xf]
  %v52 = vld [vmem:[%s1 + $0x48] sm:$0xf]
  %v53 = vld [vmem:[%s1 + $0x4c] sm:$0xf]
  %v54 = vld [vmem:[%s1 + $0x50] sm:$0xf]
  %v55 = vld [vmem:[%s1 + $0x54] sm:$0xf]
  %v56 = vld [vmem:[%s1 + $0x58] sm:$0xf]
  %v57 = vld [vmem:[%s1 + $0x5c] sm:$0xf]
  %v58 = vld [vmem:[%s1 + $0x60] sm:$0xf]
  %v59 = vld [vmem:[%s1 + $0x64] sm:$0xf]
  %v60 = vld [vmem:[%s1 + $0x68] sm:$0xf]
  %v61 = vld [vmem:[%s1 + $0x6c] sm:$0xf]
  %v62 = vld [vmem:[%s1 + $0x70] sm:$0xf]
  %v63 = vld [vmem:[%s1 + $0x74] sm:$0xf]
  %v64 = vld [vmem:[%s1 + $0x78] sm:$0xf]
  %v65 = vld [vmem:[%s1 + $0x7c] sm:$0xf]
  %v70 = vunpack.c.l.b16 %v30
  %v71 = vunpack.c.h.b16 %v30
  %v72 = vunpack.c.l.b16 %v31
  %v73 = vunpack.c.h.b16 %v31
  %v74 = vunpack.c.l.b16 %v32
  %v75 = vunpack.c.h.b16 %v32
  %v76 = vunpack.c.l.b16 %v33
  %v77 = vunpack.c.h.b16 %v33
  %v78 = vpack.c.b16 %v72, %v70
  %v79 = vpack.c.b16 %v73, %v71
  %v80 = vpack.c.b16 %v76, %v74
  %v81 = vpack.c.b16 %v77, %v75
  %v118 = vunpack.c.l.b16 %v34
  %v119 = vunpack.c.l.b16 %v35
  %v120 = vunpack.c.l.b16 %v36
  %v121 = vunpack.c.l.b16 %v37
  %v122 = vunpack.c.l.b16 %v38
  %v123 = vunpack.c.l.b16 %v39
  %v124 = vunpack.c.l.b16 %v40
  %v125 = vunpack.c.l.b16 %v41
  %v126 = vunpack.c.l.b16 %v42
  %v127 = vunpack.c.l.b16 %v43
  %v128 = vunpack.c.l.b16 %v44
  %v129 = vunpack.c.l.b16 %v45
  %v130 = vunpack.c.l.b16 %v46
  %v131 = vunpack.c.l.b16 %v47
  %v132 = vunpack.c.l.b16 %v48
  %v133 = vunpack.c.l.b16 %v49
  %v134 = vunpack.c.l.b16 %v50
  %v135 = vunpack.c.l.b16 %v51
  %v136 = vunpack.c.l.b16 %v52
  %v137 = vunpack.c.l.b16 %v53
  %v138 = vunpack.c.l.b16 %v54
  %v139 = vunpack.c.l.b16 %v55
  %v140 = vunpack.c.l.b16 %v56
  %v141 = vunpack.c.l.b16 %v57
  %v142 = vunpack.c.l.b16 %v58
  %v143 = vunpack.c.l.b16 %v59
  %v144 = vunpack.c.l.b16 %v60
  %v145 = vunpack.c.l.b16 %v61
  %v146 = vunpack.c.l.b16 %v62
  %v147 = vunpack.c.l.b16 %v63
  %v148 = vunpack.c.l.b16 %v64
  %v149 = vunpack.c.l.b16 %v65
  %v150 = vpack.c.b16 %v119, %v118
  %v151 = vpack.c.b16 %v121, %v120
  %v152 = vpack.c.b16 %v123, %v122
  %v153 = vpack.c.b16 %v125, %v124
  %v154 = vpack.c.b16 %v127, %v126
  %v155 = vpack.c.b16 %v129, %v128
  %v156 = vpack.c.b16 %v131, %v130
  %v157 = vpack.c.b16 %v133, %v132
  %v158 = vpack.c.b16 %v135, %v134
  %v159 = vpack.c.b16 %v137, %v136
  %v160 = vpack.c.b16 %v139, %v138
  %v161 = vpack.c.b16 %v141, %v140
  %v162 = vpack.c.b16 %v143, %v142
  %v163 = vpack.c.b16 %v145, %v144
  %v164 = vpack.c.b16 %v147, %v146
  %v165 = vpack.c.b16 %v149, %v148
  %182 = vmatprep.subr.bf16.mxu0 0
  %183 = vmatpush1.bf16.msra.mxu0 %v157
  %184 = vmatprep.subr.bf16.mxu0 0
  %185 = vmatpush1.bf16.msra.mxu0 %v156
  %186 = vmatprep.subr.bf16.mxu0 0
  %187 = vmatpush1.bf16.msra.mxu0 %v155
  %188 = vmatprep.subr.bf16.mxu0 0
  %189 = vmatpush1.bf16.msra.mxu0 %v154
  %190 = vmatprep.subr.bf16.mxu0 0
  %191 = vmatpush1.bf16.msra.mxu0 %v153
  %192 = vmatprep.subr.bf16.mxu0 0
  %193 = vmatpush1.bf16.msra.mxu0 %v152
  %194 = vmatprep.subr.bf16.mxu0 0
  %195 = vmatpush1.bf16.msra.mxu0 %v151
  %196 = vmatprep.subr.bf16.mxu0 0
  %197 = vmatpush1.bf16.msra.mxu0 %v150
  %198 = vmatprep.subr.bf16.mxu0 0
  %199 = vmatpush2.bf16.msra.mxu0 %v165
  %200 = vmatprep.subr.bf16.mxu0 0
  %201 = vmatpush2.bf16.msra.mxu0 %v164
  %202 = vmatprep.subr.bf16.mxu0 0
  %203 = vmatpush2.bf16.msra.mxu0 %v163
  %204 = vmatprep.subr.bf16.mxu0 0
  %205 = vmatpush2.bf16.msra.mxu0 %v162
  %206 = vmatprep.subr.bf16.mxu0 0
  %207 = vmatpush2.bf16.msra.mxu0 %v161
  %208 = vmatprep.subr.bf16.mxu0 0
  %209 = vmatpush2.bf16.msra.mxu0 %v160
  %210 = vmatprep.subr.bf16.mxu0 0
  %211 = vmatpush2.bf16.msra.mxu0 %v159
  %212 = vmatprep.subr.bf16.mxu0 0
  %213 = vmatpush2.bf16.msra.mxu0 %v158
  %214 = vmatprep.mubr.bf16.mxu0 %v79
  %215 = vmatmul.mubr.bf16.gmra.mxu0 %v78
  %v216 = vpop.f32.mrf.mxu0
  %v217 = vadd.f32 0.0, %v216
  %v218 = vpop.f32.mrf.mxu0
  %v219 = vpop.f32.mrf.mxu0
  %v220 = vadd.f32 0.0, %v219
  %v221 = vpop.f32.mrf.mxu0
  %222 = vmatprep.mubr.bf16.mxu0 %v81
  %223 = vmatmul.mubr.bf16.gmra.mxu0 %v80
  %v224 = vpop.f32.mrf.mxu0
  %v225 = vadd.f32 0.0, %v224
  %v226 = vpop.f32.mrf.mxu0
  %v227 = vpop.f32.mrf.mxu0
  %v228 = vadd.f32 0.0, %v227
  %v229 = vpop.f32.mrf.mxu0
  %230 = vdwg.mxu0
  %v231 = vadd.f32 %v26, %v217
  %v232 = vadd.f32 %v27, %v220
  %v233 = vadd.f32 %v28, %v225
  %v234 = vadd.f32 %v29, %v228
  %235 = vst [vmem:[#allocation2] sm:$0xff] %v231
  %236 = vst [vmem:[#allocation2 + $0x8] sm:$0xff] %v232
  %237 = vst [vmem:[#allocation2 + $0x10] sm:$0xff] %v233
  %238 = vst [vmem:[#allocation2 + $0x18] sm:$0xff] %v234
  // Predicated region
  $region22: #{resnet_forward.15} parent=0 // pred_check
    %p239 = pneg %p18
  $region23: #{resnet_forward.15} parent=0 // pred_check_branch
    %241 = sbr.rel (%p239) target = $region25
  $region24: #{resnet_forward.15} parent=0 // pred_region
    %v242 = vld [vmem:[#allocation2] sm:$0xff]
    %v243 = vld [vmem:[#allocation2 + $0x8] sm:$0xff]
    %v244 = vld [vmem:[#allocation2 + $0x10] sm:$0xff]
    %v245 = vld [vmem:[#allocation2 + $0x18] sm:$0xff]
    %v246 = vadd.f32 %v242, %v243
    %v247 = vadd.f32 %v246, %v244
    %v248 = vadd.f32 %v247, %v245
    %v249 = vrot.slane %v248, 4
    %v250 = vadd.f32 %v248, %v249
    %v251 = vrot.slane %v250, 2
    %v252 = vadd.f32 %v250, %v251
    %v253 = vrot.slane %v252, 1
    %v254 = vadd.f32 %v252, %v253
    %v255 = vmul.f32 %v254, 0.03125
    %v256 = vlaneseq
    %v257 = vshrl.u32 %v256, 7
    %v258 = vadd.s32 %v257, 8
    %v259 = vadd.s32 %v257, 16
    %v260 = vadd.s32 %v257, 24
    %vm261 = vcmp.lt.s32.totalorder %v257, 32
    %vm262 = vcmp.lt.s32.totalorder %v258, 32
    %vm263 = vcmp.lt.s32.totalorder %v259, 32
    %vm264 = vcmp.lt.s32.totalorder %v260, 32
    %v265 = vsub.f32 %v242, %v255
    %v266 = vsub.f32 %v243, %v255
    %v267 = vsub.f32 %v244, %v255
    %v268 = vsub.f32 %v245, %v255
    %v269 = vsel %vm261, %v265, 0.0
    %v270 = vsel %vm262, %v266, 0.0
    %v271 = vsel %vm263, %v267, 0.0
    %v272 = vsel %vm264, %v268, 0.0
    %v273 = vmul.f32 %v269, %v269
    %v274 = vmul.f32 %v270, %v270
    %v275 = vmul.f32 %v271, %v271
    %v276 = vmul.f32 %v272, %v272
    %v277 = vadd.f32 %v273, %v274
    %v278 = vadd.f32 %v277, %v275
    %v279 = vadd.f32 %v278, %v276
    %v280 = vrot.slane %v279, 4
    %v281 = vadd.f32 %v279, %v280
    %v282 = vrot.slane %v281, 2
    %v283 = vadd.f32 %v281, %v282
    %v284 = vrot.slane %v283, 1
    %v285 = vadd.f32 %v283, %v284
    %v286 = vmul.f32 %v285, 0.03125
    %v287 = vld [vmem:[%s2] sm:$0x1]
    %v288 = vadd.f32 %v286, 1e-05
    %v289 = vrsqrt.pop %v288
    %v290 = vmul.f32 %v287, %v289
    %v291 = vld [vmem:[%s3] sm:$0x1]
    %v292 = vmul.f32 %v255, %v290
    %v293 = vsub.f32 %v291, %v292
    %v295 = vlaneseq
    %v296 = vshrl.u32 %v295, 7
    %v297 = vsub.s32 0, %v296
    %v298 = vrot.slane %v290, %v297
    %v300 = vmul.f32 %v242, %v298
    %v301 = vmul.f32 %v243, %v298
    %v302 = vmul.f32 %v244, %v298
    %v303 = vmul.f32 %v245, %v298
    %v305 = vlaneseq
    %v306 = vshrl.u32 %v305, 7
    %v307 = vsub.s32 0, %v306
    %v308 = vrot.slane %v293, %v307
    %v310 = vadd.f32 %v300, %v308
    %v311 = vadd.f32 %v301, %v308
    %v312 = vadd.f32 %v302, %v308
    %v313 = vadd.f32 %v303, %v308
    %v314 = vmax.f32 %v310, 0.0
    %v315 = vmax.f32 %v311, 0.0
    %v316 = vmax.f32 %v312, 0.0
    %v317 = vmax.f32 %v313, 0.0
    %v318 = vpack.c.bf16 %v315, %v314
    %v319 = vpack.c.bf16 %v317, %v316
    %v322 = vunpack.c.l.b16 %v318
    %v323 = vunpack.c.h.b16 %v318
    %v324 = vunpack.c.l.b16 %v319
    %v325 = vunpack.c.h.b16 %v319
    %v326 = vpack.c.b16 %v322, %v322
    %v327 = vpack.c.b16 %v323, %v323
    %v328 = vpack.c.b16 %v324, %v324
    %v329 = vpack.c.b16 %v325, %v325
    %334 = vst [vmem:[%s4] sm:$0xf] %v326
    %335 = vst [vmem:[%s4 + $0x4] sm:$0xf] %v327
    %336 = vst [vmem:[%s4 + $0x8] sm:$0xf] %v328
    %337 = vst [vmem:[%s4 + $0xc] sm:$0xf] %v329
  $region25: #{resnet_forward.15} parent=0 // pred_fallthru
    _
  // Predicated region
  $region26: #{resnet_forward.15} parent=0 // pred_check
    _
  $region27: #{resnet_forward.15} parent=0 // pred_check_branch
    %339 = sbr.rel (0) target = $region29
  $region28: #{resnet_forward.15} parent=0 // pred_region
    _
  $region29: #{resnet_forward.15} parent=0 // pred_fallthru
    _
  // Predicated region
  $region30: #{resnet_forward.15} parent=0 // pred_check
    _
  $region31: #{resnet_forward.15} parent=0 // pred_check_branch
    %341 = sbr.rel (0) target = $region33
  $region32: #{resnet_forward.15} parent=0 // pred_region
    _
  $region33: #{resnet_forward.15} parent=0 // pred_fallthru
    _

// kernel: resnet_forward.17
$region0: #{resnet_forward.17}
  #allocation0 [shape = 'u32[]', space=smem, size = 0x4, offset = 0x4, fixed_abs, tag = 'smem constant byte address 0x4 - core index']
  #allocation1 [shape = 'u32[144,128]{1,0:T(1,128)}', space=vmem, size = 0x12000, scoped, tag = 'internal scratch']
  #allocation2 [shape = 'f32[32,128]{1,0:T(8,128)}', space=vmem, size = 0x4000, scoped, tag = 'scratch operand']
  %s0 = inlined_call_operand.vmem [shape: bf16[32,384], index: 0, kind: input, shape index: {}]
  %s1 = inlined_call_operand.vmem [shape: bf16[384,128], index: 1, kind: input, shape index: {}]
  %s2 = inlined_call_operand.vmem [shape: f32[1,128], index: 2, kind: input, shape index: {}]
  %s3 = inlined_call_operand.vmem [shape: f32[1,128], index: 3, kind: input, shape index: {}]
  %s4 = inlined_call_operand.vmem [shape: bf16[32,128], index: 4, kind: input, shape index: {}]
  %s5 = inlined_call_operand.vmem [shape: bf16[32,128], index: 5, kind: output, shape index: {}]
  %s6 = sld [smem:[#allocation0]]
  $region102: #{resnet_forward.17} parent=0
    _
  %s8 = ssub.s32 1, %s6
  %s9 = scalar_select 0, %s8, %s6
  $region1: #{resnet_forward.17} parent=0
    #allocation3 [shape = 'u8[16384]{0}', space=vmem, size = 0x4000, scoped, tag = 'input window, operand 0']
    loop: start=0, step=1, limit=5
    $region2: #{resnet_forward.17} parent=1 // loop_pre_header
      _
    $region3: #{resnet_forward.17} parent=1 // loop_header
      %s11 = sphi 0, %s15
      %p12 = scmp.ge.s32.totalorder %s11, 5
      %s21 = sphi 0, %s23
      %s24 = sphi 0, %s21
      %s25 = sphi 0, %s24
      %s41 = sphi 0, %s25
      %s47 = sphi 0, %s49
      %s50 = sphi 0, %s47
      %s51 = sphi 0, %s50
      %s67 = sphi 0, %s51
      %s71 = sphi 0, %s71
      %s73 = sphi 0, %s71
      %s74 = sphi 0, %s73
      %s88 = sphi 0, %s74
      %s92 = sphi 0, %s92
      %s94 = sphi 0, %s92
      %s95 = sphi 0, %s94
      %s109 = sphi 0, %s95
      %s113 = sphi 0, %s113
      %s115 = sphi 0, %s113
      %s116 = sphi 0, %s115
      %s130 = sphi 0, %s116
      %s134 = sphi 0, %s134
      %s136 = sphi 0, %s134
      %s137 = sphi 0, %s136
      %s151 = sphi 0, %s137
    $region4: #{resnet_forward.17} parent=1 // loop_header_branch
      %14 = sbr.rel (%p12) target = $region8
    $region5: #{resnet_forward.17} parent=1 // loop_body
      %s16 = ssub.s32 %s11, 1
      %s17 = ssub.s32 %s11, 2
      %s18 = sadd.s32 %s11, 1
      %s19 = ssub.s32 %s11, %s18
      %p20 = scmp.eq.s32.totalorder %s19, 0
      %s22 = sadd.s32 %s21, 1
      %s23 = scalar_select %p20, %s21, %s22
      %p26 = pneg %p20
      %p27 = scmp.eq.s32.totalorder %s11, 2
      %p28 = por %p26, %p27
      %p29 = scmp.ne.s32.totalorder %s21, %s24
      %p30 = scmp.eq.s32.totalorder %s11, 0
      %p31 = por %p29, %p30
      %p32 = scmp.ne.s32.totalorder %s21, %s24
      %p33 = scmp.eq.s32.totalorder %s16, 2
      %p34 = por %p32, %p33
      %p35 = scmp.ne.s32.totalorder %s24, %s25
      %p36 = scmp.eq.s32.totalorder %s16, 0
      %p37 = por %p35, %p36
      %p38 = scmp.ne.s32.totalorder %s24, %s25
      %p39 = scmp.eq.s32.totalorder %s17, 2
      %p40 = por %p38, %p39
      %p42 = scmp.ne.s32.totalorder %s25, %s41
      %p43 = scmp.eq.s32.totalorder %s17, 0
      %p44 = por %p42, %p43
      %s45 = ssub.s32 %s11, %s18
      %p46 = scmp.eq.s32.totalorder %s45, 0
      %s48 = sadd.s32 %s47, 1
      %s49 = scalar_select %p46, %s47, %s48
      %p52 = pneg %p46
      %p53 = scmp.eq.s32.totalorder %s11, 2
      %p54 = por %p52, %p53
      %p55 = scmp.ne.s32.totalorder %s47, %s50
      %p56 = scmp.eq.s32.totalorder %s11, 0
      %p57 = por %p55, %p56
      %p58 = scmp.ne.s32.totalorder %s47, %s50
      %p59 = scmp.eq.s32.totalorder %s16, 2
      %p60 = por %p58, %p59
      %p61 = scmp.ne.s32.totalorder %s50, %s51
      %p62 = scmp.eq.s32.totalorder %s16, 0
      %p63 = por %p61, %p62
      %p64 = scmp.ne.s32.totalorder %s50, %s51
      %p65 = scmp.eq.s32.totalorder %s17, 2
      %p66 = por %p64, %p65
      %p68 = scmp.ne.s32.totalorder %s51, %s67
      %p69 = scmp.eq.s32.totalorder %s17, 0
      %p70 = por %p68, %p69
      %s72 = sadd.s32 %s71, 1
      %p75 = scmp.eq.s32.totalorder %s11, 2
      %p76 = scmp.ne.s32.totalorder %s71, %s73
      %p77 = scmp.eq.s32.totalorder %s11, 0
      %p78 = por %p76, %p77
      %p79 = scmp.ne.s32.totalorder %s71, %s73
      %p80 = scmp.eq.s32.totalorder %s16, 2
      %p81 = por %p79, %p80
      %p82 = scmp.ne.s32.totalorder %s73, %s74
      %p83 = scmp.eq.s32.totalorder %s16, 0
      %p84 = por %p82, %p83
      %p85 = scmp.ne.s32.totalorder %s73, %s74
      %p86 = scmp.eq.s32.totalorder %s17, 2
      %p87 = por %p85, %p86
      %p89 = scmp.ne.s32.totalorder %s74, %s88
      %p90 = scmp.eq.s32.totalorder %s17, 0
      %p91 = por %p89, %p90
      %s93 = sadd.s32 %s92, 1
      %p96 = scmp.eq.s32.totalorder %s11, 2
      %p97 = scmp.ne.s32.totalorder %s92, %s94
      %p98 = scmp.eq.s32.totalorder %s11, 0
      %p99 = por %p97, %p98
      %p100 = scmp.ne.s32.totalorder %s92, %s94
      %p101 = scmp.eq.s32.totalorder %s16, 2
      %p102 = por %p100, %p101
      %p103 = scmp.ne.s32.totalorder %s94, %s95
      %p104 = scmp.eq.s32.totalorder %s16, 0
      %p105 = por %p103, %p104
      %p106 = scmp.ne.s32.totalorder %s94, %s95
      %p107 = scmp.eq.s32.totalorder %s17, 2
      %p108 = por %p106, %p107
      %p110 = scmp.ne.s32.totalorder %s95, %s109
      %p111 = scmp.eq.s32.totalorder %s17, 0
      %p112 = por %p110, %p111
      %s114 = sadd.s32 %s113, 1
      %p117 = scmp.eq.s32.totalorder %s11, 2
      %p118 = scmp.ne.s32.totalorder %s113, %s115
      %p119 = scmp.eq.s32.totalorder %s11, 0
      %p120 = por %p118, %p119
      %p121 = scmp.ne.s32.totalorder %s113, %s115
      %p122 = scmp.eq.s32.totalorder %s16, 2
      %p123 = por %p121, %p122
      %p124 = scmp.ne.s32.totalorder %s115, %s116
      %p125 = scmp.eq.s32.totalorder %s16, 0
      %p126 = por %p124, %p125
      %p127 = scmp.ne.s32.totalorder %s115, %s116
      %p128 = scmp.eq.s32.totalorder %s17, 2
      %p129 = por %p127, %p128
      %p131 = scmp.ne.s32.totalorder %s116, %s130
      %p132 = scmp.eq.s32.totalorder %s17, 0
      %p133 = por %p131, %p132
      %s135 = sadd.s32 %s134, 1
      %p138 = scmp.eq.s32.totalorder %s11, 2
      %p139 = scmp.ne.s32.totalorder %s134, %s136
      %p140 = scmp.eq.s32.totalorder %s11, 0
      %p141 = por %p139, %p140
      %p142 = scmp.ne.s32.totalorder %s134, %s136
      %p143 = scmp.eq.s32.totalorder %s16, 2
      %p144 = por %p142, %p143
      %p145 = scmp.ne.s32.totalorder %s136, %s137
      %p146 = scmp.eq.s32.totalorder %s16, 0
      %p147 = por %p145, %p146
      %p148 = scmp.ne.s32.totalorder %s136, %s137
      %p149 = scmp.eq.s32.totalorder %s17, 2
      %p150 = por %p148, %p149
      %p152 = scmp.ne.s32.totalorder %s137, %s151
      %p153 = scmp.eq.s32.totalorder %s17, 0
      %p154 = por %p152, %p153
      %p155 = scmp.le.s32.totalorder 1, %s11
      %p156 = scmp.lt.s32.totalorder %s11, 4
      %p157 = pnand %p155, %p156
      %p158 = pneg %p157
      // Predicated region
      $region9: #{resnet_forward.17} parent=5 // pred_check
        _
      $region10: #{resnet_forward.17} parent=5 // pred_check_branch
        %160 = sbr.rel (%p157) target = $region12
      $region11: #{resnet_forward.17} parent=5 // pred_region
        %s161 = ssub.s32 %s11, 1
        // Predicated region
        $region13: #{resnet_forward.17} parent=11 // pred_check
          %p162 = pneg %p84
        $region14: #{resnet_forward.17} parent=11 // pred_check_branch
          %164 = sbr.rel (%p162) target = $region16
        $region15: #{resnet_forward.17} parent=11 // pred_region
          _
        $region16: #{resnet_forward.17} parent=11 // pred_fallthru
          _
        // Predicated region
        $region17: #{resnet_forward.17} parent=11 // pred_check
          %p165 = pneg %p105
        $region18: #{resnet_forward.17} parent=11 // pred_check_branch
          %167 = sbr.rel (%p165) target = $region20
        $region19: #{resnet_forward.17} parent=11 // pred_region
          _
        $region20: #{resnet_forward.17} parent=11 // pred_fallthru
          _
        // Predicated region
        $region21: #{resnet_forward.17} parent=11 // pred_check
          %p168 = pneg %p126
        $region22: #{resnet_forward.17} parent=11 // pred_check_branch
          %170 = sbr.rel (%p168) target = $region24
        $region23: #{resnet_forward.17} parent=11 // pred_region
          _
        $region24: #{resnet_forward.17} parent=11 // pred_fallthru
          _
      $region12: #{resnet_forward.17} parent=5 // pred_fallthru
        _
      %p171 = scmp.lt.s32.totalorder %s11, 3
      // Predicated region
      $region25: #{resnet_forward.17} parent=5 // pred_check
        %p172 = pneg %p171
      $region26: #{resnet_forward.17} parent=5 // pred_check_branch
        %174 = sbr.rel (%p172) target = $region28
      $region27: #{resnet_forward.17} parent=5 // pred_region
        // Predicated region
        $region29: #{resnet_forward.17} parent=27 // pred_check
          %p175 = pneg %p31
        $region30: #{resnet_forward.17} parent=27 // pred_check_branch
          %177 = sbr.rel (%p175) target = $region32
        $region31: #{resnet_forward.17} parent=27 // pred_region
          %s178 = sand.u32 %s21, 1
          %s179 = sand.u32 %s21, 1
          %s180 = smul.addr %s179, 16
          %s181 = scalar_lea.vmem [#allocation3], %s180
          %s182 = smul.addr %s11, 4
          %s183 = scalar_lea.vmem %s0, %s182
          // Predicated region
          $region33: #{resnet_forward.17} parent=31 // pred_check
            _
          $region34: #{resnet_forward.17} parent=31 // pred_check_branch
            %185 = sbr.rel (0) target = $region36
          $region35: #{resnet_forward.17} parent=31 // pred_region
            // Predicated region
            $region37: #{resnet_forward.17} parent=35 // pred_check
              _
            $region38: #{resnet_forward.17} parent=35 // pred_check_branch
              %187 = sbr.rel target = $region40
            $region39: #{resnet_forward.17} parent=35 // pred_region
              // Predicated region
              $region52: #{resnet_forward.17} parent=39 // pred_check
                _
              $region53: #{resnet_forward.17} parent=39 // pred_check_branch
                %209 = sbr.rel (0) target = $region55
              $region54: #{resnet_forward.17} parent=39 // pred_region
                loop: start=0, step=1, limit=1
                $region56: #{resnet_forward.17} parent=54 // loop_pre_header
                  _
                $region57: #{resnet_forward.17} parent=54 // loop_header
                  %s211 = sphi 0, %s215
                  %p212 = scmp.ge.s32.totalorder %s211, 1
                  %s216 = sphi %s183, %s183
                  %s217 = sphi %s181, %s181
                $region58: #{resnet_forward.17} parent=54 // loop_header_branch
                  %214 = sbr.rel (%p212) target = $region62
                $region59: #{resnet_forward.17} parent=54 // loop_body
                  _
                $region60: #{resnet_forward.17} parent=54 // loop_footer
                  %s215 = sadd.s32 1, %s211
                $region61: #{resnet_forward.17} parent=54 // loop_footer_branch
                  %210 = sbr.rel target = $region57
                $region62: #{resnet_forward.17} parent=54 // loop_exit
                  _
                %s219 = ssub.s32 16, 1
                loop: start=0, step=1, limit=1
                $region63: #{resnet_forward.17} parent=54 // loop_pre_header
                  _
                $region64: #{resnet_forward.17} parent=54 // loop_header
                  %s221 = sphi 0, %s225
                  %p222 = scmp.ge.s32.totalorder %s221, 1
                  %s226 = sphi %s183, %s183
                  %s227 = sphi %s181, %s181
                $region65: #{resnet_forward.17} parent=54 // loop_header_branch
                  %224 = sbr.rel (%p222) target = $region69
                $region66: #{resnet_forward.17} parent=54 // loop_body
                  %v228 = vld [vmem:[%s226] sm:%s219]
                  %229 = vst [vmem:[%s227] sm:%s219] %v228
                  %v230 = vld [vmem:[%s226 + $0xc] sm:%s219]
                  %231 = vst [vmem:[%s227 + $0x4] sm:%s219] %v230
                  %v232 = vld [vmem:[%s226 + $0x18] sm:%s219]
                  %233 = vst [vmem:[%s227 + $0x8] sm:%s219] %v232
                  %v234 = vld [vmem:[%s226 + $0x24] sm:%s219]
                  %235 = vst [vmem:[%s227 + $0xc] sm:%s219] %v234
                $region67: #{resnet_forward.17} parent=54 // loop_footer
                  %s225 = sadd.s32 1, %s221
                $region68: #{resnet_forward.17} parent=54 // loop_footer_branch
                  %220 = sbr.rel target = $region64
                $region69: #{resnet_forward.17} parent=54 // loop_exit
                  _
              $region55: #{resnet_forward.17} parent=39 // pred_fallthru
                _
            $region40: #{resnet_forward.17} parent=35 // pred_fallthru
              _
            // Predicated region
            $region41: #{resnet_forward.17} parent=35 // pred_check
              _
            $region42: #{resnet_forward.17} parent=35 // pred_check_branch
              %189 = sbr.rel (0) target = $region44
            $region43: #{resnet_forward.17} parent=35 // pred_region
              %s191 = ssub.s32 16, 1
              loop: start=0, step=1, limit=1
              $region45: #{resnet_forward.17} parent=43 // loop_pre_header
                _
              $region46: #{resnet_forward.17} parent=43 // loop_header
                %s193 = sphi 0, %s197
                %p194 = scmp.ge.s32.totalorder %s193, 1
                %s198 = sphi %s183, %s183
                %s199 = sphi %s181, %s181
              $region47: #{resnet_forward.17} parent=43 // loop_header_branch
                %196 = sbr.rel (%p194) target = $region51
              $region48: #{resnet_forward.17} parent=43 // loop_body
                %v200 = vld [vmem:[%s198] sm:%s191]
                %201 = vst [vmem:[%s199] sm:%s191] %v200
                %v202 = vld [vmem:[%s198 + $0xc] sm:%s191]
                %203 = vst [vmem:[%s199 + $0x4] sm:%s191] %v202
                %v204 = vld [vmem:[%s198 + $0x18] sm:%s191]
                %205 = vst [vmem:[%s199 + $0x8] sm:%s191] %v204
                %v206 = vld [vmem:[%s198 + $0x24] sm:%s191]
                %207 = vst [vmem:[%s199 + $0xc] sm:%s191] %v206
              $region49: #{resnet_forward.17} parent=43 // loop_footer
                %s197 = sadd.s32 1, %s193
              $region50: #{resnet_forward.17} parent=43 // loop_footer_branch
                %192 = sbr.rel target = $region46
              $region51: #{resnet_forward.17} parent=43 // loop_exit
                _
            $region44: #{resnet_forward.17} parent=35 // pred_fallthru
              _
          $region36: #{resnet_forward.17} parent=31 // pred_fallthru
            _
          %236 = vnop
        $region32: #{resnet_forward.17} parent=27 // pred_fallthru
          _
        // Predicated region
        $region70: #{resnet_forward.17} parent=27 // pred_check
          %p237 = pneg %p57
        $region71: #{resnet_forward.17} parent=27 // pred_check_branch
          %239 = sbr.rel (%p237) target = $region73
        $region72: #{resnet_forward.17} parent=27 // pred_region
          %s240 = smul.u32 16, %s11
          %p241 = scmp.lt.s32.totalorder %s240, 47
          %s242 = scalar_select %p241, %s240, 47
          %s243 = smul.addr %s242, 4
          %s244 = scalar_lea.vmem %s1, %s243
          %s245 = smul.u32 16, %s11
        $region73: #{resnet_forward.17} parent=27 // pred_fallthru
          _
      $region28: #{resnet_forward.17} parent=5 // pred_fallthru
        _
      %p246 = scmp.le.s32.totalorder 1, %s11
      %p247 = scmp.lt.s32.totalorder %s11, 4
      %p248 = pnand %p246, %p247
      %p249 = pneg %p248
      // Predicated region
      $region74: #{resnet_forward.17} parent=5 // pred_check
        _
      $region75: #{resnet_forward.17} parent=5 // pred_check_branch
        %251 = sbr.rel (%p248) target = $region77
      $region76: #{resnet_forward.17} parent=5 // pred_region
        %s252 = ssub.s32 %s11, 1
        %s253 = sand.u32 %s24, 1
        %s254 = sand.u32 %s24, 1
        %s255 = smul.addr %s254, 16
        %s256 = scalar_lea.vmem [#allocation3], %s255
        // Predicated region
        $region78: #{resnet_forward.17} parent=76 // pred_check
          %p257 = pneg %p37
        $region79: #{resnet_forward.17} parent=76 // pred_check_branch
          %259 = sbr.rel (%p257) target = $region81
        $region80: #{resnet_forward.17} parent=76 // pred_region
          _
        $region81: #{resnet_forward.17} parent=76 // pred_fallthru
          _
        %s260 = sand.u32 %s24, 1
        %s261 = sand.u32 %s24, 1
        %s262 = smul.addr %s261, 16
        %s263 = scalar_lea.vmem [#allocation3], %s262
        %p264 = pneg %p37
        %p265 = pneg %p34
        %s266 = smul.u32 16, %s16
        %p267 = scmp.lt.s32.totalorder %s266, 47
        %s268 = scalar_select %p267, %s266, 47
        %s269 = smul.addr %s268, 4
        %s270 = scalar_lea.vmem %s1, %s269
        %p271 = pneg %p63
        %p272 = pneg %p60
        %p273 = pneg %p84
        %p274 = pneg %p81
        %p275 = pneg %p105
        %p276 = pneg %p102
        %p277 = pneg %p126
        %p278 = pneg %p123
        %p279 = pneg %p147
        %p280 = pneg %p144
        %s281 = smul.u32 16, %s16
        %p282 = scmp.lt.s32.totalorder %s281, 47
        %s283 = scalar_select %p282, %s281, 47
        %s284 = smul.addr %s283, 4
        %s285 = scalar_lea.vmem %s1, %s284
        %s286 = smul.u32 16, %s16
        %p288 = scmp.eq.s32.totalorder %s16, 0
        // Predicated region
        $region82: #{resnet_forward.17} parent=76 // pred_check
          %p289 = pneg %p288
        $region83: #{resnet_forward.17} parent=76 // pred_check_branch
          %291 = sbr.rel (%p289) target = $region85
        $region84: #{resnet_forward.17} parent=76 // pred_region
          %292 = vst [vmem:[#allocation2] sm:$0xff] 0.0
          %293 = vst [vmem:[#allocation2 + $0x8] sm:$0xff] 0.0
          %294 = vst [vmem:[#allocation2 + $0x10] sm:$0xff] 0.0
          %295 = vst [vmem:[#allocation2 + $0x18] sm:$0xff] 0.0
        $region85: #{resnet_forward.17} parent=76 // pred_fallthru
          _
        %v296 = vld [vmem:[#allocation2] sm:$0xff]
        %v297 = vld [vmem:[#allocation2 + $0x8] sm:$0xff]
        %v298 = vld [vmem:[#allocation2 + $0x10] sm:$0xff]
        %v299 = vld [vmem:[#allocation2 + $0x18] sm:$0xff]
        %v300 = vld [vmem:[%s256] sm:$0xf]
        %v301 = vld [vmem:[%s256 + $0x4] sm:$0xf]
        %v302 = vld [vmem:[%s256 + $0x8] sm:$0xf]
        %v303 = vld [vmem:[%s256 + $0xc] sm:$0xf]
        %v304 = vld [vmem:[%s285] sm:$0xf]
        %v305 = vld [vmem:[%s285 + $0x4] sm:$0xf]
        %v306 = vld [vmem:[%s285 + $0x8] sm:$0xf]
        %v307 = vld [vmem:[%s285 + $0xc] sm:$0xf]
        %v308 = vld [vmem:[%s285 + $0x10] sm:$0xf]
        %v309 = vld [vmem:[%s285 + $0x14] sm:$0xf]
        %v310 = vld [vmem:[%s285 + $0x18] sm:$0xf]
        %v311 = vld [vmem:[%s285 + $0x1c] sm:$0xf]
        %v312 = vld [vmem:[%s285 + $0x20] sm:$0xf]
        %v313 = vld [vmem:[%s285 + $0x24] sm:$0xf]
        %v314 = vld [vmem:[%s285 + $0x28] sm:$0xf]
        %v315 = vld [vmem:[%s285 + $0x2c] sm:$0xf]
        %v316 = vld [vmem:[%s285 + $0x30] sm:$0xf]
        %v317 = vld [vmem:[%s285 + $0x34] sm:$0xf]
        %v318 = vld [vmem:[%s285 + $0x38] sm:$0xf]
        %v319 = vld [vmem:[%s285 + $0x3c] sm:$0xf]
        %v324 = vunpack.c.l.b16 %v300
        %v325 = vunpack.c.l.b16 %v301
        %v326 = vunpack.c.l.b16 %v302
        %v327 = vunpack.c.l.b16 %v303
        %v328 = vpack.c.b16 %v325, %v324
        %v329 = vpack.c.b16 %v327, %v326
        %v348 = vunpack.c.l.b16 %v304
        %v349 = vunpack.c.l.b16 %v305
        %v350 = vunpack.c.l.b16 %v306
        %v351 = vunpack.c.l.b16 %v307
        %v352 = vunpack.c.l.b16 %v308
        %v353 = vunpack.c.l.b16 %v309
        %v354 = vunpack.c.l.b16 %v310
        %v355 = vunpack.c.l.b16 %v311
        %v356 = vunpack.c.l.b16 %v312
        %v357 = vunpack.c.l.b16 %v313
        %v358 = vunpack.c.l.b16 %v314
        %v359 = vunpack.c.l.b16 %v315
        %v360 = vunpack.c.l.b16 %v316
        %v361 = vunpack.c.l.b16 %v317
        %v362 = vunpack.c.l.b16 %v318
        %v363 = vunpack.c.l.b16 %v319
        %v364 = vpack.c.b16 %v349, %v348
        %v365 = vpack.c.b16 %v351, %v350
        %v366 = vpack.c.b16 %v353, %v352
        %v367 = vpack.c.b16 %v355, %v354
        %v368 = vpack.c.b16 %v357, %v356
        %v369 = vpack.c.b16 %v359, %v358
        %v370 = vpack.c.b16 %v361, %v360
        %v371 = vpack.c.b16 %v363, %v362
        %380 = vmatprep.subr.bf16.mxu0 0
        %381 = vmatpush1.bf16.msra.mxu0 %v371
        %382 = vmatprep.subr.bf16.mxu0 0
        %383 = vmatpush1.bf16.msra.mxu0 %v370
        %384 = vmatprep.subr.bf16.mxu0 0
        %385 = vmatpush1.bf16.msra.mxu0 %v369
        %386 = vmatprep.subr.bf16.mxu0 0
        %387 = vmatpush1.bf16.msra.mxu0 %v368
        %388 = vmatprep.subr.bf16.mxu0 0
        %389 = vmatpush1.bf16.msra.mxu0 %v367
        %390 = vmatprep.subr.bf16.mxu0 0
        %391 = vmatpush1.bf16.msra.mxu0 %v366
        %392 = vmatprep.subr.bf16.mxu0 0
        %393 = vmatpush1.bf16.msra.mxu0 %v365
        %394 = vmatprep.subr.bf16.mxu0 0
        %395 = vmatpush1.bf16.msra.mxu0 %v364
        %396 = vmatprep.subr.bf16.mxu0 0
        %397 = vmatpush2.bf16.msra.mxu0 0
        %398 = vmatprep.subr.bf16.mxu0 0
        %399 = vmatpush2.bf16.msra.mxu0 0
        %400 = vmatprep.subr.bf16.mxu0 0
        %401 = vmatpush2.bf16.msra.mxu0 0
        %402 = vmatprep.subr.bf16.mxu0 0
        %403 = vmatpush2.bf16.msra.mxu0 0
        %404 = vmatprep.subr.bf16.mxu0 0
        %405 = vmatpush2.bf16.msra.mxu0 0
        %406 = vmatprep.subr.bf16.mxu0 0
        %407 = vmatpush2.bf16.msra.mxu0 0
        %408 = vmatprep.subr.bf16.mxu0 0
        %409 = vmatpush2.bf16.msra.mxu0 0
        %410 = vmatprep.subr.bf16.mxu0 0
        %411 = vmatpush2.bf16.msra.mxu0 0
        %412 = vmatprep.mubr.bf16.mxu0 0
        %413 = vmatmul.mubr.bf16.gmra.mxu0 %v328
        %v414 = vpop.f32.mrf.mxu0
        %v415 = vadd.f32 0.0, %v414
        %v416 = vpop.f32.mrf.mxu0
        %v417 = vpop.f32.mrf.mxu0
        %v418 = vadd.f32 0.0, %v417
        %v419 = vpop.f32.mrf.mxu0
        %420 = vmatprep.mubr.bf16.mxu0 0
        %421 = vmatmul.mubr.bf16.gmra.mxu0 %v329
        %v422 = vpop.f32.mrf.mxu0
        %v423 = vadd.f32 0.0, %v422
        %v424 = vpop.f32.mrf.mxu0
        %v425 = vpop.f32.mrf.mxu0
        %v426 = vadd.f32 0.0, %v425
        %v427 = vpop.f32.mrf.mxu0
        %428 = vdwg.mxu0
        %v429 = vadd.f32 %v296, %v415
        %v430 = vadd.f32 %v297, %v418
        %v431 = vadd.f32 %v298, %v423
        %v432 = vadd.f32 %v299, %v426
        %433 = vst [vmem:[#allocation2] sm:$0xff] %v429
        %434 = vst [vmem:[#allocation2 + $0x8] sm:$0xff] %v430
        %435 = vst [vmem:[#allocation2 + $0x10] sm:$0xff] %v431
        %436 = vst [vmem:[#allocation2 + $0x18] sm:$0xff] %v432
        %p437 = scmp.eq.s32.totalorder %s16, 2
        // Predicated region
        $region86: #{resnet_forward.17} parent=76 // pred_check
          %p438 = pneg %p437
        $region87: #{resnet_forward.17} parent=76 // pred_check_branch
          %440 = sbr.rel (%p438) target = $region89
        $region88: #{resnet_forward.17} parent=76 // pred_region
          %v441 = vld [vmem:[#allocation2] sm:$0xff]
          %v442 = vld [vmem:[#allocation2 + $0x8] sm:$0xff]
          %v443 = vld [vmem:[#allocation2 + $0x10] sm:$0xff]
          %v444 = vld [vmem:[#allocation2 + $0x18] sm:$0xff]
          %v445 = vadd.f32 %v441, %v442
          %v446 = vadd.f32 %v445, %v443
          %v447 = vadd.f32 %v446, %v444
          %v448 = vrot.slane %v447, 4
          %v449 = vadd.f32 %v447, %v448
          %v450 = vrot.slane %v449, 2
          %v451 = vadd.f32 %v449, %v450
          %v452 = vrot.slane %v451, 1
          %v453 = vadd.f32 %v451, %v452
          %v454 = vmul.f32 %v453, 0.03125
          %v455 = vlaneseq
          %v456 = vshrl.u32 %v455, 7
          %v457 = vadd.s32 %v456, 8
          %v458 = vadd.s32 %v456, 16
          %v459 = vadd.s32 %v456, 24
          %vm460 = vcmp.lt.s32.totalorder %v456, 32
          %vm461 = vcmp.lt.s32.totalorder %v457, 32
          %vm462 = vcmp.lt.s32.totalorder %v458, 32
          %vm463 = vcmp.lt.s32.totalorder %v459, 32
          %v464 = vsub.f32 %v441, %v454
          %v465 = vsub.f32 %v442, %v454
          %v466 = vsub.f32 %v443, %v454
          %v467 = vsub.f32 %v444, %v454
          %v468 = vsel %vm460, %v464, 0.0
          %v469 = vsel %vm461, %v465, 0.0
          %v470 = vsel %vm462, %v466, 0.0
          %v471 = vsel %vm463, %v467, 0.0
          %v472 = vmul.f32 %v468, %v468
          %v473 = vmul.f32 %v469, %v469
          %v474 = vmul.f32 %v470, %v470
          %v475 = vmul.f32 %v471, %v471
          %v476 = vadd.f32 %v472, %v473
          %v477 = vadd.f32 %v476, %v474
          %v478 = vadd.f32 %v477, %v475
          %v479 = vrot.slane %v478, 4
          %v480 = vadd.f32 %v478, %v479
          %v481 = vrot.slane %v480, 2
          %v482 = vadd.f32 %v480, %v481
          %v483 = vrot.slane %v482, 1
          %v484 = vadd.f32 %v482, %v483
          %v485 = vmul.f32 %v484, 0.03125
          %v486 = vld [vmem:[%s2] sm:$0x1]
          %v487 = vadd.f32 %v485, 1e-05
          %v488 = vrsqrt.pop %v487
          %v489 = vmul.f32 %v486, %v488
          %v490 = vld [vmem:[%s3] sm:$0x1]
          %v491 = vmul.f32 %v454, %v489
          %v492 = vsub.f32 %v490, %v491
          %v494 = vlaneseq
          %v495 = vshrl.u32 %v494, 7
          %v496 = vsub.s32 0, %v495
          %v497 = vrot.slane %v489, %v496
          %v499 = vmul.f32 %v441, %v497
          %v500 = vmul.f32 %v442, %v497
          %v501 = vmul.f32 %v443, %v497
          %v502 = vmul.f32 %v444, %v497
          %v504 = vlaneseq
          %v505 = vshrl.u32 %v504, 7
          %v506 = vsub.s32 0, %v505
          %v507 = vrot.slane %v492, %v506
          %v509 = vadd.f32 %v499, %v507
          %v510 = vadd.f32 %v500, %v507
          %v511 = vadd.f32 %v501, %v507
          %v512 = vadd.f32 %v502, %v507
          %v513 = vld [vmem:[%s4] sm:$0xf]
          %v514 = vld [vmem:[%s4 + $0x4] sm:$0xf]
          %v515 = vld [vmem:[%s4 + $0x8] sm:$0xf]
          %v516 = vld [vmem:[%s4 + $0xc] sm:$0xf]
          %v517 = vunpack.c.l.bf16 %v513
          %v518 = vunpack.c.l.bf16 %v514
          %v519 = vunpack.c.l.bf16 %v515
          %v520 = vunpack.c.l.bf16 %v516
          %v521 = vadd.f32 %v509, %v517
          %v522 = vadd.f32 %v510, %v518
          %v523 = vadd.f32 %v511, %v519
          %v524 = vadd.f32 %v512, %v520
          %v525 = vmax.f32 %v521, 0.0
          %v526 = vmax.f32 %v522, 0.0
          %v527 = vmax.f32 %v523, 0.0
          %v528 = vmax.f32 %v524, 0.0
          %v529 = vpack.c.bf16 %v526, %v525
          %v530 = vpack.c.bf16 %v528, %v527
          %v533 = vunpack.c.l.b16 %v529
          %v534 = vunpack.c.h.b16 %v529
          %v535 = vunpack.c.l.b16 %v530
          %v536 = vunpack.c.h.b16 %v530
          %v537 = vpack.c.b16 %v533, %v533
          %v538 = vpack.c.b16 %v534, %v534
          %v539 = vpack.c.b16 %v535, %v535
          %v540 = vpack.c.b16 %v536, %v536
          %545 = vst [vmem:[%s5] sm:$0xf] %v537
          %546 = vst [vmem:[%s5 + $0x4] sm:$0xf] %v538
          %547 = vst [vmem:[%s5 + $0x8] sm:$0xf] %v539
          %548 = vst [vmem:[%s5 + $0xc] sm:$0xf] %v540
        $region89: #{resnet_forward.17} parent=76 // pred_fallthru
          _
        // Predicated region
        $region90: #{resnet_forward.17} parent=76 // pred_check
          %p549 = pneg %p144
        $region91: #{resnet_forward.17} parent=76 // pred_check_branch
          %551 = sbr.rel (%p549) target = $region93
        $region92: #{resnet_forward.17} parent=76 // pred_region
          _
        $region93: #{resnet_forward.17} parent=76 // pred_fallthru
          _
        // Predicated region
        $region94: #{resnet_forward.17} parent=76 // pred_check
          %p552 = pneg %p144
        $region95: #{resnet_forward.17} parent=76 // pred_check_branch
          %554 = sbr.rel (%p552) target = $region97
        $region96: #{resnet_forward.17} parent=76 // pred_region
          _
        $region97: #{resnet_forward.17} parent=76 // pred_fallthru
          _
      $region77: #{resnet_forward.17} parent=5 // pred_fallthru
        _
      %p555 = scmp.le.s32.totalorder 2, %s11
      // Predicated region
      $region98: #{resnet_forward.17} parent=5 // pred_check
        %p556 = pneg %p555
      $region99: #{resnet_forward.17} parent=5 // pred_check_branch
        %558 = sbr.rel (%p556) target = $region101
      $region100: #{resnet_forward.17} parent=5 // pred_region
        %s559 = ssub.s32 %s11, 2
      $region101: #{resnet_forward.17} parent=5 // pred_fallthru
        _
    $region6: #{resnet_forward.17} parent=1 // loop_footer
      %s15 = sadd.s32 1, %s11
    $region7: #{resnet_forward.17} parent=1 // loop_footer_branch
      %10 = sbr.rel target = $region3
    $region8: #{resnet_forward.17} parent=1 // loop_exit
      _

// kernel: resnet_forward.16
$region0: #{resnet_forward.16}
  #allocation0 [shape = 'u32[]', space=smem, size = 0x4, offset = 0x4, fixed_abs, tag = 'smem constant byte address 0x4 - core index']
  #allocation1 [shape = 'u32[144,128]{1,0:T(1,128)}', space=vmem, size = 0x12000, scoped, tag = 'internal scratch']
  #allocation2 [shape = 'f32[32,128]{1,0:T(8,128)}', space=vmem, size = 0x4000, scoped, tag = 'scratch operand']
  %s0 = inlined_call_operand.vmem [shape: bf16[32,128], index: 0, kind: input, shape index: {}]
  %s1 = inlined_call_operand.vmem [shape: bf16[128,128], index: 1, kind: input, shape index: {}]
  %s2 = inlined_call_operand.vmem [shape: f32[1,128], index: 2, kind: input, shape index: {}]
  %s3 = inlined_call_operand.vmem [shape: f32[1,128], index: 3, kind: input, shape index: {}]
  %s4 = inlined_call_operand.vmem [shape: bf16[32,128], index: 4, kind: output, shape index: {}]
  %s5 = sld [smem:[#allocation0]]
  $region34: #{resnet_forward.16} parent=0
    _
  %s7 = ssub.s32 1, %s5
  %s8 = scalar_select 0, %s7, %s5
  // Predicated region
  $region2: #{resnet_forward.16} parent=0 // pred_check
    _
  $region3: #{resnet_forward.16} parent=0 // pred_check_branch
    %10 = sbr.rel (0) target = $region5
  $region4: #{resnet_forward.16} parent=0 // pred_region
    _
  $region5: #{resnet_forward.16} parent=0 // pred_fallthru
    _
  // Predicated region
  $region6: #{resnet_forward.16} parent=0 // pred_check
    _
  $region7: #{resnet_forward.16} parent=0 // pred_check_branch
    %12 = sbr.rel (0) target = $region9
  $region8: #{resnet_forward.16} parent=0 // pred_region
    _
  $region9: #{resnet_forward.16} parent=0 // pred_fallthru
    _
  // Predicated region
  $region10: #{resnet_forward.16} parent=0 // pred_check
    _
  $region11: #{resnet_forward.16} parent=0 // pred_check_branch
    %14 = sbr.rel (0) target = $region13
  $region12: #{resnet_forward.16} parent=0 // pred_region
    _
  $region13: #{resnet_forward.16} parent=0 // pred_fallthru
    _
  // Predicated region
  $region14: #{resnet_forward.16} parent=0 // pred_check
    _
  $region15: #{resnet_forward.16} parent=0 // pred_check_branch
    %16 = sbr.rel (0) target = $region17
  $region16: #{resnet_forward.16} parent=0 // pred_region
    _
  $region17: #{resnet_forward.16} parent=0 // pred_fallthru
    _
  %p18 = scmp.eq.s32.totalorder 0, 0
  // Predicated region
  $region18: #{resnet_forward.16} parent=0 // pred_check
    %p19 = pneg %p18
  $region19: #{resnet_forward.16} parent=0 // pred_check_branch
    %21 = sbr.rel (%p19) target = $region21
  $region20: #{resnet_forward.16} parent=0 // pred_region
    %22 = vst [vmem:[#allocation2] sm:$0xff] 0.0
    %23 = vst [vmem:[#allocation2 + $0x8] sm:$0xff] 0.0
    %24 = vst [vmem:[#allocation2 + $0x10] sm:$0xff] 0.0
    %25 = vst [vmem:[#allocation2 + $0x18] sm:$0xff] 0.0
  $region21: #{resnet_forward.16} parent=0 // pred_fallthru
    _
  %v26 = vld [vmem:[#allocation2] sm:$0xff]
  %v27 = vld [vmem:[#allocation2 + $0x8] sm:$0xff]
  %v28 = vld [vmem:[#allocation2 + $0x10] sm:$0xff]
  %v29 = vld [vmem:[#allocation2 + $0x18] sm:$0xff]
  %v30 = vld [vmem:[%s0] sm:$0xf]
  %v31 = vld [vmem:[%s0 + $0x4] sm:$0xf]
  %v32 = vld [vmem:[%s0 + $0x8] sm:$0xf]
  %v33 = vld [vmem:[%s0 + $0xc] sm:$0xf]
  %v34 = vld [vmem:[%s1] sm:$0xf]
  %v35 = vld [vmem:[%s1 + $0x4] sm:$0xf]
  %v36 = vld [vmem:[%s1 + $0x8] sm:$0xf]
  %v37 = vld [vmem:[%s1 + $0xc] sm:$0xf]
  %v38 = vld [vmem:[%s1 + $0x10] sm:$0xf]
  %v39 = vld [vmem:[%s1 + $0x14] sm:$0xf]
  %v40 = vld [vmem:[%s1 + $0x18] sm:$0xf]
  %v41 = vld [vmem:[%s1 + $0x1c] sm:$0xf]
  %v42 = vld [vmem:[%s1 + $0x20] sm:$0xf]
  %v43 = vld [vmem:[%s1 + $0x24] sm:$0xf]
  %v44 = vld [vmem:[%s1 + $0x28] sm:$0xf]
  %v45 = vld [vmem:[%s1 + $0x2c] sm:$0xf]
  %v46 = vld [vmem:[%s1 + $0x30] sm:$0xf]
  %v47 = vld [vmem:[%s1 + $0x34] sm:$0xf]
  %v48 = vld [vmem:[%s1 + $0x38] sm:$0xf]
  %v49 = vld [vmem:[%s1 + $0x3c] sm:$0xf]
  %v54 = vunpack.c.l.b16 %v30
  %v55 = vunpack.c.l.b16 %v31
  %v56 = vunpack.c.l.b16 %v32
  %v57 = vunpack.c.l.b16 %v33
  %v58 = vpack.c.b16 %v55, %v54
  %v59 = vpack.c.b16 %v57, %v56
  %v78 = vunpack.c.l.b16 %v34
  %v79 = vunpack.c.l.b16 %v35
  %v80 = vunpack.c.l.b16 %v36
  %v81 = vunpack.c.l.b16 %v37
  %v82 = vunpack.c.l.b16 %v38
  %v83 = vunpack.c.l.b16 %v39
  %v84 = vunpack.c.l.b16 %v40
  %v85 = vunpack.c.l.b16 %v41
  %v86 = vunpack.c.l.b16 %v42
  %v87 = vunpack.c.l.b16 %v43
  %v88 = vunpack.c.l.b16 %v44
  %v89 = vunpack.c.l.b16 %v45
  %v90 = vunpack.c.l.b16 %v46
  %v91 = vunpack.c.l.b16 %v47
  %v92 = vunpack.c.l.b16 %v48
  %v93 = vunpack.c.l.b16 %v49
  %v94 = vpack.c.b16 %v79, %v78
  %v95 = vpack.c.b16 %v81, %v80
  %v96 = vpack.c.b16 %v83, %v82
  %v97 = vpack.c.b16 %v85, %v84
  %v98 = vpack.c.b16 %v87, %v86
  %v99 = vpack.c.b16 %v89, %v88
  %v100 = vpack.c.b16 %v91, %v90
  %v101 = vpack.c.b16 %v93, %v92
  %110 = vmatprep.subr.bf16.mxu0 0
  %111 = vmatpush1.bf16.msra.mxu0 %v101
  %112 = vmatprep.subr.bf16.mxu0 0
  %113 = vmatpush1.bf16.msra.mxu0 %v100
  %114 = vmatprep.subr.bf16.mxu0 0
  %115 = vmatpush1.bf16.msra.mxu0 %v99
  %116 = vmatprep.subr.bf16.mxu0 0
  %117 = vmatpush1.bf16.msra.mxu0 %v98
  %118 = vmatprep.subr.bf16.mxu0 0
  %119 = vmatpush1.bf16.msra.mxu0 %v97
  %120 = vmatprep.subr.bf16.mxu0 0
  %121 = vmatpush1.bf16.msra.mxu0 %v96
  %122 = vmatprep.subr.bf16.mxu0 0
  %123 = vmatpush1.bf16.msra.mxu0 %v95
  %124 = vmatprep.subr.bf16.mxu0 0
  %125 = vmatpush1.bf16.msra.mxu0 %v94
  %126 = vmatprep.subr.bf16.mxu0 0
  %127 = vmatpush2.bf16.msra.mxu0 0
  %128 = vmatprep.subr.bf16.mxu0 0
  %129 = vmatpush2.bf16.msra.mxu0 0
  %130 = vmatprep.subr.bf16.mxu0 0
  %131 = vmatpush2.bf16.msra.mxu0 0
  %132 = vmatprep.subr.bf16.mxu0 0
  %133 = vmatpush2.bf16.msra.mxu0 0
  %134 = vmatprep.subr.bf16.mxu0 0
  %135 = vmatpush2.bf16.msra.mxu0 0
  %136 = vmatprep.subr.bf16.mxu0 0
  %137 = vmatpush2.bf16.msra.mxu0 0
  %138 = vmatprep.subr.bf16.mxu0 0
  %139 = vmatpush2.bf16.msra.mxu0 0
  %140 = vmatprep.subr.bf16.mxu0 0
  %141 = vmatpush2.bf16.msra.mxu0 0
  %142 = vmatprep.mubr.bf16.mxu0 0
  %143 = vmatmul.mubr.bf16.gmra.mxu0 %v58
  %v144 = vpop.f32.mrf.mxu0
  %v145 = vadd.f32 0.0, %v144
  %v146 = vpop.f32.mrf.mxu0
  %v147 = vpop.f32.mrf.mxu0
  %v148 = vadd.f32 0.0, %v147
  %v149 = vpop.f32.mrf.mxu0
  %150 = vmatprep.mubr.bf16.mxu0 0
  %151 = vmatmul.mubr.bf16.gmra.mxu0 %v59
  %v152 = vpop.f32.mrf.mxu0
  %v153 = vadd.f32 0.0, %v152
  %v154 = vpop.f32.mrf.mxu0
  %v155 = vpop.f32.mrf.mxu0
  %v156 = vadd.f32 0.0, %v155
  %v157 = vpop.f32.mrf.mxu0
  %158 = vdwg.mxu0
  %v159 = vadd.f32 %v26, %v145
  %v160 = vadd.f32 %v27, %v148
  %v161 = vadd.f32 %v28, %v153
  %v162 = vadd.f32 %v29, %v156
  %163 = vst [vmem:[#allocation2] sm:$0xff] %v159
  %164 = vst [vmem:[#allocation2 + $0x8] sm:$0xff] %v160
  %165 = vst [vmem:[#allocation2 + $0x10] sm:$0xff] %v161
  %166 = vst [vmem:[#allocation2 + $0x18] sm:$0xff] %v162
  // Predicated region
  $region22: #{resnet_forward.16} parent=0 // pred_check
    %p167 = pneg %p18
  $region23: #{resnet_forward.16} parent=0 // pred_check_branch
    %169 = sbr.rel (%p167) target = $region25
  $region24: #{resnet_forward.16} parent=0 // pred_region
    %v170 = vld [vmem:[#allocation2] sm:$0xff]
    %v171 = vld [vmem:[#allocation2 + $0x8] sm:$0xff]
    %v172 = vld [vmem:[#allocation2 + $0x10] sm:$0xff]
    %v173 = vld [vmem:[#allocation2 + $0x18] sm:$0xff]
    %v174 = vadd.f32 %v170, %v171
    %v175 = vadd.f32 %v174, %v172
    %v176 = vadd.f32 %v175, %v173
    %v177 = vrot.slane %v176, 4
    %v178 = vadd.f32 %v176, %v177
    %v179 = vrot.slane %v178, 2
    %v180 = vadd.f32 %v178, %v179
    %v181 = vrot.slane %v180, 1
    %v182 = vadd.f32 %v180, %v181
    %v183 = vmul.f32 %v182, 0.03125
    %v184 = vlaneseq
    %v185 = vshrl.u32 %v184, 7
    %v186 = vadd.s32 %v185, 8
    %v187 = vadd.s32 %v185, 16
    %v188 = vadd.s32 %v185, 24
    %vm189 = vcmp.lt.s32.totalorder %v185, 32
    %vm190 = vcmp.lt.s32.totalorder %v186, 32
    %vm191 = vcmp.lt.s32.totalorder %v187, 32
    %vm192 = vcmp.lt.s32.totalorder %v188, 32
    %v193 = vsub.f32 %v170, %v183
    %v194 = vsub.f32 %v171, %v183
    %v195 = vsub.f32 %v172, %v183
    %v196 = vsub.f32 %v173, %v183
    %v197 = vsel %vm189, %v193, 0.0
    %v198 = vsel %vm190, %v194, 0.0
    %v199 = vsel %vm191, %v195, 0.0
    %v200 = vsel %vm192, %v196, 0.0
    %v201 = vmul.f32 %v197, %v197
    %v202 = vmul.f32 %v198, %v198
    %v203 = vmul.f32 %v199, %v199
    %v204 = vmul.f32 %v200, %v200
    %v205 = vadd.f32 %v201, %v202
    %v206 = vadd.f32 %v205, %v203
    %v207 = vadd.f32 %v206, %v204
    %v208 = vrot.slane %v207, 4
    %v209 = vadd.f32 %v207, %v208
    %v210 = vrot.slane %v209, 2
    %v211 = vadd.f32 %v209, %v210
    %v212 = vrot.slane %v211, 1
    %v213 = vadd.f32 %v211, %v212
    %v214 = vmul.f32 %v213, 0.03125
    %v215 = vld [vmem:[%s2] sm:$0x1]
    %v216 = vadd.f32 %v214, 1e-05
    %v217 = vrsqrt.pop %v216
    %v218 = vmul.f32 %v215, %v217
    %v219 = vld [vmem:[%s3] sm:$0x1]
    %v220 = vmul.f32 %v183, %v218
    %v221 = vsub.f32 %v219, %v220
    %v223 = vlaneseq
    %v224 = vshrl.u32 %v223, 7
    %v225 = vsub.s32 0, %v224
    %v226 = vrot.slane %v218, %v225
    %v228 = vmul.f32 %v170, %v226
    %v229 = vmul.f32 %v171, %v226
    %v230 = vmul.f32 %v172, %v226
    %v231 = vmul.f32 %v173, %v226
    %v233 = vlaneseq
    %v234 = vshrl.u32 %v233, 7
    %v235 = vsub.s32 0, %v234
    %v236 = vrot.slane %v221, %v235
    %v238 = vadd.f32 %v228, %v236
    %v239 = vadd.f32 %v229, %v236
    %v240 = vadd.f32 %v230, %v236
    %v241 = vadd.f32 %v231, %v236
    %v242 = vpack.c.bf16 %v239, %v238
    %v243 = vpack.c.bf16 %v241, %v240
    %v246 = vunpack.c.l.b16 %v242
    %v247 = vunpack.c.h.b16 %v242
    %v248 = vunpack.c.l.b16 %v243
    %v249 = vunpack.c.h.b16 %v243
    %v250 = vpack.c.b16 %v246, %v246
    %v251 = vpack.c.b16 %v247, %v247
    %v252 = vpack.c.b16 %v248, %v248
    %v253 = vpack.c.b16 %v249, %v249
    %258 = vst [vmem:[%s4] sm:$0xf] %v250
    %259 = vst [vmem:[%s4 + $0x4] sm:$0xf] %v251
    %260 = vst [vmem:[%s4 + $0x8] sm:$0xf] %v252
    %261 = vst [vmem:[%s4 + $0xc] sm:$0xf] %v253
  $region25: #{resnet_forward.16} parent=0 // pred_fallthru
    _
  // Predicated region
  $region26: #{resnet_forward.16} parent=0 // pred_check
    _
  $region27: #{resnet_forward.16} parent=0 // pred_check_branch
    %263 = sbr.rel (0) target = $region29
  $region28: #{resnet_forward.16} parent=0 // pred_region
    _
  $region29: #{resnet_forward.16} parent=0 // pred_fallthru
    _
  // Predicated region
  $region30: #{resnet_forward.16} parent=0 // pred_check
    _
  $region31: #{resnet_forward.16} parent=0 // pred_check_branch
    %265 = sbr.rel (0) target = $region33
  $region32: #{resnet_forward.16} parent=0 // pred_region
    _
  $region33: #{resnet_forward.16} parent=0 // pred_fallthru
    _

// kernel: resnet_forward.18
$region0: #{resnet_forward.18}
  #allocation0 [shape = 'u32[]', space=smem, size = 0x4, offset = 0x4, fixed_abs, tag = 'smem constant byte address 0x4 - core index']
  #allocation1 [shape = 'u32[144,128]{1,0:T(1,128)}', space=vmem, size = 0x12000, scoped, tag = 'internal scratch']
  #allocation2 [shape = 'f32[16,128]{1,0:T(8,128)}', space=vmem, size = 0x2000, scoped, tag = 'scratch operand']
  %s0 = inlined_call_operand.vmem [shape: bf16[16,384], index: 0, kind: input, shape index: {}]
  %s1 = inlined_call_operand.vmem [shape: bf16[384,128], index: 1, kind: input, shape index: {}]
  %s2 = inlined_call_operand.vmem [shape: f32[1,128], index: 2, kind: input, shape index: {}]
  %s3 = inlined_call_operand.vmem [shape: f32[1,128], index: 3, kind: input, shape index: {}]
  %s4 = inlined_call_operand.vmem [shape: bf16[16,128], index: 4, kind: output, shape index: {}]
  %s5 = sld [smem:[#allocation0]]
  $region98: #{resnet_forward.18} parent=0
    _
  %s7 = ssub.s32 1, %s5
  %s8 = scalar_select 0, %s7, %s5
  $region1: #{resnet_forward.18} parent=0
    #allocation3 [shape = 'u8[8192]{0}', space=vmem, size = 0x2000, scoped, tag = 'input window, operand 0']
    loop: start=0, step=1, limit=5
    $region2: #{resnet_forward.18} parent=1 // loop_pre_header
      _
    $region3: #{resnet_forward.18} parent=1 // loop_header
      %s10 = sphi 0, %s14
      %p11 = scmp.ge.s32.totalorder %s10, 5
      %s20 = sphi 0, %s22
      %s23 = sphi 0, %s20
      %s24 = sphi 0, %s23
      %s40 = sphi 0, %s24
      %s46 = sphi 0, %s48
      %s49 = sphi 0, %s46
      %s50 = sphi 0, %s49
      %s66 = sphi 0, %s50
      %s70 = sphi 0, %s70
      %s72 = sphi 0, %s70
      %s73 = sphi 0, %s72
      %s87 = sphi 0, %s73
      %s91 = sphi 0, %s91
      %s93 = sphi 0, %s91
      %s94 = sphi 0, %s93
      %s108 = sphi 0, %s94
      %s112 = sphi 0, %s112
      %s114 = sphi 0, %s112
      %s115 = sphi 0, %s114
      %s129 = sphi 0, %s115
    $region4: #{resnet_forward.18} parent=1 // loop_header_branch
      %13 = sbr.rel (%p11) target = $region8
    $region5: #{resnet_forward.18} parent=1 // loop_body
      %s15 = ssub.s32 %s10, 1
      %s16 = ssub.s32 %s10, 2
      %s17 = sadd.s32 %s10, 1
      %s18 = ssub.s32 %s10, %s17
      %p19 = scmp.eq.s32.totalorder %s18, 0
      %s21 = sadd.s32 %s20, 1
      %s22 = scalar_select %p19, %s20, %s21
      %p25 = pneg %p19
      %p26 = scmp.eq.s32.totalorder %s10, 2
      %p27 = por %p25, %p26
      %p28 = scmp.ne.s32.totalorder %s20, %s23
      %p29 = scmp.eq.s32.totalorder %s10, 0
      %p30 = por %p28, %p29
      %p31 = scmp.ne.s32.totalorder %s20, %s23
      %p32 = scmp.eq.s32.totalorder %s15, 2
      %p33 = por %p31, %p32
      %p34 = scmp.ne.s32.totalorder %s23, %s24
      %p35 = scmp.eq.s32.totalorder %s15, 0
      %p36 = por %p34, %p35
      %p37 = scmp.ne.s32.totalorder %s23, %s24
      %p38 = scmp.eq.s32.totalorder %s16, 2
      %p39 = por %p37, %p38
      %p41 = scmp.ne.s32.totalorder %s24, %s40
      %p42 = scmp.eq.s32.totalorder %s16, 0
      %p43 = por %p41, %p42
      %s44 = ssub.s32 %s10, %s17
      %p45 = scmp.eq.s32.totalorder %s44, 0
      %s47 = sadd.s32 %s46, 1
      %s48 = scalar_select %p45, %s46, %s47
      %p51 = pneg %p45
      %p52 = scmp.eq.s32.totalorder %s10, 2
      %p53 = por %p51, %p52
      %p54 = scmp.ne.s32.totalorder %s46, %s49
      %p55 = scmp.eq.s32.totalorder %s10, 0
      %p56 = por %p54, %p55
      %p57 = scmp.ne.s32.totalorder %s46, %s49
      %p58 = scmp.eq.s32.totalorder %s15, 2
      %p59 = por %p57, %p58
      %p60 = scmp.ne.s32.totalorder %s49, %s50
      %p61 = scmp.eq.s32.totalorder %s15, 0
      %p62 = por %p60, %p61
      %p63 = scmp.ne.s32.totalorder %s49, %s50
      %p64 = scmp.eq.s32.totalorder %s16, 2
      %p65 = por %p63, %p64
      %p67 = scmp.ne.s32.totalorder %s50, %s66
      %p68 = scmp.eq.s32.totalorder %s16, 0
      %p69 = por %p67, %p68
      %s71 = sadd.s32 %s70, 1
      %p74 = scmp.eq.s32.totalorder %s10, 2
      %p75 = scmp.ne.s32.totalorder %s70, %s72
      %p76 = scmp.eq.s32.totalorder %s10, 0
      %p77 = por %p75, %p76
      %p78 = scmp.ne.s32.totalorder %s70, %s72
      %p79 = scmp.eq.s32.totalorder %s15, 2
      %p80 = por %p78, %p79
      %p81 = scmp.ne.s32.totalorder %s72, %s73
      %p82 = scmp.eq.s32.totalorder %s15, 0
      %p83 = por %p81, %p82
      %p84 = scmp.ne.s32.totalorder %s72, %s73
      %p85 = scmp.eq.s32.totalorder %s16, 2
      %p86 = por %p84, %p85
      %p88 = scmp.ne.s32.totalorder %s73, %s87
      %p89 = scmp.eq.s32.totalorder %s16, 0
      %p90 = por %p88, %p89
      %s92 = sadd.s32 %s91, 1
      %p95 = scmp.eq.s32.totalorder %s10, 2
      %p96 = scmp.ne.s32.totalorder %s91, %s93
      %p97 = scmp.eq.s32.totalorder %s10, 0
      %p98 = por %p96, %p97
      %p99 = scmp.ne.s32.totalorder %s91, %s93
      %p100 = scmp.eq.s32.totalorder %s15, 2
      %p101 = por %p99, %p100
      %p102 = scmp.ne.s32.totalorder %s93, %s94
      %p103 = scmp.eq.s32.totalorder %s15, 0
      %p104 = por %p102, %p103
      %p105 = scmp.ne.s32.totalorder %s93, %s94
      %p106 = scmp.eq.s32.totalorder %s16, 2
      %p107 = por %p105, %p106
      %p109 = scmp.ne.s32.totalorder %s94, %s108
      %p110 = scmp.eq.s32.totalorder %s16, 0
      %p111 = por %p109, %p110
      %s113 = sadd.s32 %s112, 1
      %p116 = scmp.eq.s32.totalorder %s10, 2
      %p117 = scmp.ne.s32.totalorder %s112, %s114
      %p118 = scmp.eq.s32.totalorder %s10, 0
      %p119 = por %p117, %p118
      %p120 = scmp.ne.s32.totalorder %s112, %s114
      %p121 = scmp.eq.s32.totalorder %s15, 2
      %p122 = por %p120, %p121
      %p123 = scmp.ne.s32.totalorder %s114, %s115
      %p124 = scmp.eq.s32.totalorder %s15, 0
      %p125 = por %p123, %p124
      %p126 = scmp.ne.s32.totalorder %s114, %s115
      %p127 = scmp.eq.s32.totalorder %s16, 2
      %p128 = por %p126, %p127
      %p130 = scmp.ne.s32.totalorder %s115, %s129
      %p131 = scmp.eq.s32.totalorder %s16, 0
      %p132 = por %p130, %p131
      %p133 = scmp.le.s32.totalorder 1, %s10
      %p134 = scmp.lt.s32.totalorder %s10, 4
      %p135 = pnand %p133, %p134
      %p136 = pneg %p135
      // Predicated region
      $region9: #{resnet_forward.18} parent=5 // pred_check
        _
      $region10: #{resnet_forward.18} parent=5 // pred_check_branch
        %138 = sbr.rel (%p135) target = $region12
      $region11: #{resnet_forward.18} parent=5 // pred_region
        %s139 = ssub.s32 %s10, 1
        // Predicated region
        $region13: #{resnet_forward.18} parent=11 // pred_check
          %p140 = pneg %p83
        $region14: #{resnet_forward.18} parent=11 // pred_check_branch
          %142 = sbr.rel (%p140) target = $region16
        $region15: #{resnet_forward.18} parent=11 // pred_region
          _
        $region16: #{resnet_forward.18} parent=11 // pred_fallthru
          _
        // Predicated region
        $region17: #{resnet_forward.18} parent=11 // pred_check
          %p143 = pneg %p104
        $region18: #{resnet_forward.18} parent=11 // pred_check_branch
          %145 = sbr.rel (%p143) target = $region20
        $region19: #{resnet_forward.18} parent=11 // pred_region
          _
        $region20: #{resnet_forward.18} parent=11 // pred_fallthru
          _
      $region12: #{resnet_forward.18} parent=5 // pred_fallthru
        _
      %p146 = scmp.lt.s32.totalorder %s10, 3
      // Predicated region
      $region21: #{resnet_forward.18} parent=5 // pred_check
        %p147 = pneg %p146
      $region22: #{resnet_forward.18} parent=5 // pred_check_branch
        %149 = sbr.rel (%p147) target = $region24
      $region23: #{resnet_forward.18} parent=5 // pred_region
        // Predicated region
        $region25: #{resnet_forward.18} parent=23 // pred_check
          %p150 = pneg %p30
        $region26: #{resnet_forward.18} parent=23 // pred_check_branch
          %152 = sbr.rel (%p150) target = $region28
        $region27: #{resnet_forward.18} parent=23 // pred_region
          %s153 = sand.u32 %s20, 1
          %s154 = sand.u32 %s20, 1
          %s155 = smul.addr %s154, 8
          %s156 = scalar_lea.vmem [#allocation3], %s155
          %s157 = smul.addr %s10, 4
          %s158 = scalar_lea.vmem %s0, %s157
          // Predicated region
          $region29: #{resnet_forward.18} parent=27 // pred_check
            _
          $region30: #{resnet_forward.18} parent=27 // pred_check_branch
            %160 = sbr.rel (0) target = $region32
          $region31: #{resnet_forward.18} parent=27 // pred_region
            // Predicated region
            $region33: #{resnet_forward.18} parent=31 // pred_check
              _
            $region34: #{resnet_forward.18} parent=31 // pred_check_branch
              %162 = sbr.rel target = $region36
            $region35: #{resnet_forward.18} parent=31 // pred_region
              // Predicated region
              $region48: #{resnet_forward.18} parent=35 // pred_check
                _
              $region49: #{resnet_forward.18} parent=35 // pred_check_branch
                %180 = sbr.rel (0) target = $region51
              $region50: #{resnet_forward.18} parent=35 // pred_region
                loop: start=0, step=1, limit=1
                $region52: #{resnet_forward.18} parent=50 // loop_pre_header
                  _
                $region53: #{resnet_forward.18} parent=50 // loop_header
                  %s182 = sphi 0, %s186
                  %p183 = scmp.ge.s32.totalorder %s182, 1
                  %s187 = sphi %s158, %s158
                  %s188 = sphi %s156, %s156
                $region54: #{resnet_forward.18} parent=50 // loop_header_branch
                  %185 = sbr.rel (%p183) target = $region58
                $region55: #{resnet_forward.18} parent=50 // loop_body
                  _
                $region56: #{resnet_forward.18} parent=50 // loop_footer
                  %s186 = sadd.s32 1, %s182
                $region57: #{resnet_forward.18} parent=50 // loop_footer_branch
                  %181 = sbr.rel target = $region53
                $region58: #{resnet_forward.18} parent=50 // loop_exit
                  _
                %s190 = ssub.s32 16, 1
                loop: start=0, step=1, limit=1
                $region59: #{resnet_forward.18} parent=50 // loop_pre_header
                  _
                $region60: #{resnet_forward.18} parent=50 // loop_header
                  %s192 = sphi 0, %s196
                  %p193 = scmp.ge.s32.totalorder %s192, 1
                  %s197 = sphi %s158, %s158
                  %s198 = sphi %s156, %s156
                $region61: #{resnet_forward.18} parent=50 // loop_header_branch
                  %195 = sbr.rel (%p193) target = $region65
                $region62: #{resnet_forward.18} parent=50 // loop_body
                  %v199 = vld [vmem:[%s197] sm:%s190]
                  %200 = vst [vmem:[%s198] sm:%s190] %v199
                  %v201 = vld [vmem:[%s197 + $0xc] sm:%s190]
                  %202 = vst [vmem:[%s198 + $0x4] sm:%s190] %v201
                $region63: #{resnet_forward.18} parent=50 // loop_footer
                  %s196 = sadd.s32 1, %s192
                $region64: #{resnet_forward.18} parent=50 // loop_footer_branch
                  %191 = sbr.rel target = $region60
                $region65: #{resnet_forward.18} parent=50 // loop_exit
                  _
              $region51: #{resnet_forward.18} parent=35 // pred_fallthru
                _
            $region36: #{resnet_forward.18} parent=31 // pred_fallthru
              _
            // Predicated region
            $region37: #{resnet_forward.18} parent=31 // pred_check
              _
            $region38: #{resnet_forward.18} parent=31 // pred_check_branch
              %164 = sbr.rel (0) target = $region40
            $region39: #{resnet_forward.18} parent=31 // pred_region
              %s166 = ssub.s32 16, 1
              loop: start=0, step=1, limit=1
              $region41: #{resnet_forward.18} parent=39 // loop_pre_header
                _
              $region42: #{resnet_forward.18} parent=39 // loop_header
                %s168 = sphi 0, %s172
                %p169 = scmp.ge.s32.totalorder %s168, 1
                %s173 = sphi %s158, %s158
                %s174 = sphi %s156, %s156
              $region43: #{resnet_forward.18} parent=39 // loop_header_branch
                %171 = sbr.rel (%p169) target = $region47
              $region44: #{resnet_forward.18} parent=39 // loop_body
                %v175 = vld [vmem:[%s173] sm:%s166]
                %176 = vst [vmem:[%s174] sm:%s166] %v175
                %v177 = vld [vmem:[%s173 + $0xc] sm:%s166]
                %178 = vst [vmem:[%s174 + $0x4] sm:%s166] %v177
              $region45: #{resnet_forward.18} parent=39 // loop_footer
                %s172 = sadd.s32 1, %s168
              $region46: #{resnet_forward.18} parent=39 // loop_footer_branch
                %167 = sbr.rel target = $region42
              $region47: #{resnet_forward.18} parent=39 // loop_exit
                _
            $region40: #{resnet_forward.18} parent=31 // pred_fallthru
              _
          $region32: #{resnet_forward.18} parent=27 // pred_fallthru
            _
          %203 = vnop
        $region28: #{resnet_forward.18} parent=23 // pred_fallthru
          _
        // Predicated region
        $region66: #{resnet_forward.18} parent=23 // pred_check
          %p204 = pneg %p56
        $region67: #{resnet_forward.18} parent=23 // pred_check_branch
          %206 = sbr.rel (%p204) target = $region69
        $region68: #{resnet_forward.18} parent=23 // pred_region
          %s207 = smul.u32 16, %s10
          %p208 = scmp.lt.s32.totalorder %s207, 47
          %s209 = scalar_select %p208, %s207, 47
          %s210 = smul.addr %s209, 4
          %s211 = scalar_lea.vmem %s1, %s210
          %s212 = smul.u32 16, %s10
        $region69: #{resnet_forward.18} parent=23 // pred_fallthru
          _
      $region24: #{resnet_forward.18} parent=5 // pred_fallthru
        _
      %p213 = scmp.le.s32.totalorder 1, %s10
      %p214 = scmp.lt.s32.totalorder %s10, 4
      %p215 = pnand %p213, %p214
      %p216 = pneg %p215
      // Predicated region
      $region70: #{resnet_forward.18} parent=5 // pred_check
        _
      $region71: #{resnet_forward.18} parent=5 // pred_check_branch
        %218 = sbr.rel (%p215) target = $region73
      $region72: #{resnet_forward.18} parent=5 // pred_region
        %s219 = ssub.s32 %s10, 1
        %s220 = sand.u32 %s23, 1
        %s221 = sand.u32 %s23, 1
        %s222 = smul.addr %s221, 8
        %s223 = scalar_lea.vmem [#allocation3], %s222
        // Predicated region
        $region74: #{resnet_forward.18} parent=72 // pred_check
          %p224 = pneg %p36
        $region75: #{resnet_forward.18} parent=72 // pred_check_branch
          %226 = sbr.rel (%p224) target = $region77
        $region76: #{resnet_forward.18} parent=72 // pred_region
          _
        $region77: #{resnet_forward.18} parent=72 // pred_fallthru
          _
        %s227 = sand.u32 %s23, 1
        %s228 = sand.u32 %s23, 1
        %s229 = smul.addr %s228, 8
        %s230 = scalar_lea.vmem [#allocation3], %s229
        %p231 = pneg %p36
        %p232 = pneg %p33
        %s233 = smul.u32 16, %s15
        %p234 = scmp.lt.s32.totalorder %s233, 47
        %s235 = scalar_select %p234, %s233, 47
        %s236 = smul.addr %s235, 4
        %s237 = scalar_lea.vmem %s1, %s236
        %p238 = pneg %p62
        %p239 = pneg %p59
        %p240 = pneg %p83
        %p241 = pneg %p80
        %p242 = pneg %p104
        %p243 = pneg %p101
        %p244 = pneg %p125
        %p245 = pneg %p122
        %s246 = smul.u32 16, %s15
        %p247 = scmp.lt.s32.totalorder %s246, 47
        %s248 = scalar_select %p247, %s246, 47
        %s249 = smul.addr %s248, 4
        %s250 = scalar_lea.vmem %s1, %s249
        %s251 = smul.u32 16, %s15
        %p253 = scmp.eq.s32.totalorder %s15, 0
        // Predicated region
        $region78: #{resnet_forward.18} parent=72 // pred_check
          %p254 = pneg %p253
        $region79: #{resnet_forward.18} parent=72 // pred_check_branch
          %256 = sbr.rel (%p254) target = $region81
        $region80: #{resnet_forward.18} parent=72 // pred_region
          %257 = vst [vmem:[#allocation2] sm:$0xff] 0.0
          %258 = vst [vmem:[#allocation2 + $0x8] sm:$0xff] 0.0
        $region81: #{resnet_forward.18} parent=72 // pred_fallthru
          _
        %v259 = vld [vmem:[#allocation2] sm:$0xff]
        %v260 = vld [vmem:[#allocation2 + $0x8] sm:$0xff]
        %v261 = vld [vmem:[%s223] sm:$0xf]
        %v262 = vld [vmem:[%s223 + $0x4] sm:$0xf]
        %v263 = vld [vmem:[%s250] sm:$0xf]
        %v264 = vld [vmem:[%s250 + $0x4] sm:$0xf]
        %v265 = vld [vmem:[%s250 + $0x8] sm:$0xf]
        %v266 = vld [vmem:[%s250 + $0xc] sm:$0xf]
        %v267 = vld [vmem:[%s250 + $0x10] sm:$0xf]
        %v268 = vld [vmem:[%s250 + $0x14] sm:$0xf]
        %v269 = vld [vmem:[%s250 + $0x18] sm:$0xf]
        %v270 = vld [vmem:[%s250 + $0x1c] sm:$0xf]
        %v271 = vld [vmem:[%s250 + $0x20] sm:$0xf]
        %v272 = vld [vmem:[%s250 + $0x24] sm:$0xf]
        %v273 = vld [vmem:[%s250 + $0x28] sm:$0xf]
        %v274 = vld [vmem:[%s250 + $0x2c] sm:$0xf]
        %v275 = vld [vmem:[%s250 + $0x30] sm:$0xf]
        %v276 = vld [vmem:[%s250 + $0x34] sm:$0xf]
        %v277 = vld [vmem:[%s250 + $0x38] sm:$0xf]
        %v278 = vld [vmem:[%s250 + $0x3c] sm:$0xf]
        %v281 = vunpack.c.l.b16 %v261
        %v282 = vunpack.c.l.b16 %v262
        %v283 = vpack.c.b16 %v282, %v281
        %v301 = vunpack.c.l.b16 %v263
        %v302 = vunpack.c.l.b16 %v264
        %v303 = vunpack.c.l.b16 %v265
        %v304 = vunpack.c.l.b16 %v266
        %v305 = vunpack.c.l.b16 %v267
        %v306 = vunpack.c.l.b16 %v268
        %v307 = vunpack.c.l.b16 %v269
        %v308 = vunpack.c.l.b16 %v270
        %v309 = vunpack.c.l.b16 %v271
        %v310 = vunpack.c.l.b16 %v272
        %v311 = vunpack.c.l.b16 %v273
        %v312 = vunpack.c.l.b16 %v274
        %v313 = vunpack.c.l.b16 %v275
        %v314 = vunpack.c.l.b16 %v276
        %v315 = vunpack.c.l.b16 %v277
        %v316 = vunpack.c.l.b16 %v278
        %v317 = vpack.c.b16 %v302, %v301
        %v318 = vpack.c.b16 %v304, %v303
        %v319 = vpack.c.b16 %v306, %v305
        %v320 = vpack.c.b16 %v308, %v307
        %v321 = vpack.c.b16 %v310, %v309
        %v322 = vpack.c.b16 %v312, %v311
        %v323 = vpack.c.b16 %v314, %v313
        %v324 = vpack.c.b16 %v316, %v315
        %333 = vmatprep.subr.bf16.mxu0 0
        %334 = vmatpush1.bf16.msra.mxu0 %v324
        %335 = vmatprep.subr.bf16.mxu0 0
        %336 = vmatpush1.bf16.msra.mxu0 %v323
        %337 = vmatprep.subr.bf16.mxu0 0
        %338 = vmatpush1.bf16.msra.mxu0 %v322
        %339 = vmatprep.subr.bf16.mxu0 0
        %340 = vmatpush1.bf16.msra.mxu0 %v321
        %341 = vmatprep.subr.bf16.mxu0 0
        %342 = vmatpush1.bf16.msra.mxu0 %v320
        %343 = vmatprep.subr.bf16.mxu0 0
        %344 = vmatpush1.bf16.msra.mxu0 %v319
        %345 = vmatprep.subr.bf16.mxu0 0
        %346 = vmatpush1.bf16.msra.mxu0 %v318
        %347 = vmatprep.subr.bf16.mxu0 0
        %348 = vmatpush1.bf16.msra.mxu0 %v317
        %349 = vmatprep.subr.bf16.mxu0 0
        %350 = vmatpush2.bf16.msra.mxu0 0
        %351 = vmatprep.subr.bf16.mxu0 0
        %352 = vmatpush2.bf16.msra.mxu0 0
        %353 = vmatprep.subr.bf16.mxu0 0
        %354 = vmatpush2.bf16.msra.mxu0 0
        %355 = vmatprep.subr.bf16.mxu0 0
        %356 = vmatpush2.bf16.msra.mxu0 0
        %357 = vmatprep.subr.bf16.mxu0 0
        %358 = vmatpush2.bf16.msra.mxu0 0
        %359 = vmatprep.subr.bf16.mxu0 0
        %360 = vmatpush2.bf16.msra.mxu0 0
        %361 = vmatprep.subr.bf16.mxu0 0
        %362 = vmatpush2.bf16.msra.mxu0 0
        %363 = vmatprep.subr.bf16.mxu0 0
        %364 = vmatpush2.bf16.msra.mxu0 0
        %365 = vmatprep.mubr.bf16.mxu0 0
        %366 = vmatmul.mubr.bf16.gmra.mxu0 %v283
        %v367 = vpop.f32.mrf.mxu0
        %v368 = vadd.f32 0.0, %v367
        %v369 = vpop.f32.mrf.mxu0
        %v370 = vpop.f32.mrf.mxu0
        %v371 = vadd.f32 0.0, %v370
        %v372 = vpop.f32.mrf.mxu0
        %373 = vdwg.mxu0
        %v374 = vadd.f32 %v259, %v368
        %v375 = vadd.f32 %v260, %v371
        %376 = vst [vmem:[#allocation2] sm:$0xff] %v374
        %377 = vst [vmem:[#allocation2 + $0x8] sm:$0xff] %v375
        %p378 = scmp.eq.s32.totalorder %s15, 2
        // Predicated region
        $region82: #{resnet_forward.18} parent=72 // pred_check
          %p379 = pneg %p378
        $region83: #{resnet_forward.18} parent=72 // pred_check_branch
          %381 = sbr.rel (%p379) target = $region85
        $region84: #{resnet_forward.18} parent=72 // pred_region
          %v382 = vld [vmem:[#allocation2] sm:$0xff]
          %v383 = vld [vmem:[#allocation2 + $0x8] sm:$0xff]
          %v384 = vadd.f32 %v382, %v383
          %v385 = vrot.slane %v384, 4
          %v386 = vadd.f32 %v384, %v385
          %v387 = vrot.slane %v386, 2
          %v388 = vadd.f32 %v386, %v387
          %v389 = vrot.slane %v388, 1
          %v390 = vadd.f32 %v388, %v389
          %v391 = vmul.f32 %v390, 0.125
          %v392 = vlaneseq
          %v393 = vshrl.u32 %v392, 7
          %v394 = vadd.s32 %v393, 8
          %vm395 = vcmp.lt.s32.totalorder %v393, 8
          %vm396 = vcmp.lt.s32.totalorder %v394, 8
          %v397 = vsub.f32 %v382, %v391
          %v398 = vsub.f32 %v383, %v391
          %v399 = vsel %vm395, %v397, 0.0
          %v400 = vsel %vm396, %v398, 0.0
          %v401 = vmul.f32 %v399, %v399
          %v402 = vmul.f32 %v400, %v400
          %v403 = vadd.f32 %v401, %v402
          %v404 = vrot.slane %v403, 4
          %v405 = vadd.f32 %v403, %v404
          %v406 = vrot.slane %v405, 2
          %v407 = vadd.f32 %v405, %v406
          %v408 = vrot.slane %v407, 1
          %v409 = vadd.f32 %v407, %v408
          %v410 = vmul.f32 %v409, 0.125
          %v411 = vld [vmem:[%s2] sm:$0x1]
          %v412 = vadd.f32 %v410, 1e-05
          %v413 = vrsqrt.pop %v412
          %v414 = vmul.f32 %v411, %v413
          %v415 = vld [vmem:[%s3] sm:$0x1]
          %v416 = vmul.f32 %v391, %v414
          %v417 = vsub.f32 %v415, %v416
          %v419 = vlaneseq
          %v420 = vshrl.u32 %v419, 7
          %v421 = vsub.s32 0, %v420
          %v422 = vrot.slane %v414, %v421
          %v424 = vmul.f32 %v382, %v422
          %v425 = vmul.f32 %v383, %v422
          %v427 = vlaneseq
          %v428 = vshrl.u32 %v427, 7
          %v429 = vsub.s32 0, %v428
          %v430 = vrot.slane %v417, %v429
          %v432 = vadd.f32 %v424, %v430
          %v433 = vadd.f32 %v425, %v430
          %v434 = vmax.f32 %v432, 0.0
          %v435 = vmax.f32 %v433, 0.0
          %v436 = vpack.c.bf16 %v435, %v434
          %v438 = vunpack.c.l.b16 %v436
          %v439 = vunpack.c.h.b16 %v436
          %v440 = vpack.c.b16 %v438, %v438
          %v441 = vpack.c.b16 %v439, %v439
          %444 = vst [vmem:[%s4] sm:$0xf] %v440
          %445 = vst [vmem:[%s4 + $0x4] sm:$0xf] %v441
        $region85: #{resnet_forward.18} parent=72 // pred_fallthru
          _
        // Predicated region
        $region86: #{resnet_forward.18} parent=72 // pred_check
          %p446 = pneg %p122
        $region87: #{resnet_forward.18} parent=72 // pred_check_branch
          %448 = sbr.rel (%p446) target = $region89
        $region88: #{resnet_forward.18} parent=72 // pred_region
          _
        $region89: #{resnet_forward.18} parent=72 // pred_fallthru
          _
        // Predicated region
        $region90: #{resnet_forward.18} parent=72 // pred_check
          %p449 = pneg %p122
        $region91: #{resnet_forward.18} parent=72 // pred_check_branch
          %451 = sbr.rel (%p449) target = $region93
        $region92: #{resnet_forward.18} parent=72 // pred_region
          _
        $region93: #{resnet_forward.18} parent=72 // pred_fallthru
          _
      $region73: #{resnet_forward.18} parent=5 // pred_fallthru
        _
      %p452 = scmp.le.s32.totalorder 2, %s10
      // Predicated region
      $region94: #{resnet_forward.18} parent=5 // pred_check
        %p453 = pneg %p452
      $region95: #{resnet_forward.18} parent=5 // pred_check_branch
        %455 = sbr.rel (%p453) target = $region97
      $region96: #{resnet_forward.18} parent=5 // pred_region
        %s456 = ssub.s32 %s10, 2
      $region97: #{resnet_forward.18} parent=5 // pred_fallthru
        _
    $region6: #{resnet_forward.18} parent=1 // loop_footer
      %s14 = sadd.s32 1, %s10
    $region7: #{resnet_forward.18} parent=1 // loop_footer_branch
      %9 = sbr.rel target = $region3
    $region8: #{resnet_forward.18} parent=1 // loop_exit
      _

// kernel: resnet_forward.19
$region0: #{resnet_forward.19}
  #allocation0 [shape = 'u32[]', space=smem, size = 0x4, offset = 0x4, fixed_abs, tag = 'smem constant byte address 0x4 - core index']
  #allocation1 [shape = 'u32[144,128]{1,0:T(1,128)}', space=vmem, size = 0x12000, scoped, tag = 'internal scratch']
  #allocation2 [shape = 'f32[16,128]{1,0:T(8,128)}', space=vmem, size = 0x2000, scoped, tag = 'scratch operand']
  %s0 = inlined_call_operand.vmem [shape: bf16[16,128], index: 0, kind: input, shape index: {}]
  %s1 = inlined_call_operand.vmem [shape: bf16[128,128], index: 1, kind: input, shape index: {}]
  %s2 = inlined_call_operand.vmem [shape: f32[1,128], index: 2, kind: input, shape index: {}]
  %s3 = inlined_call_operand.vmem [shape: f32[1,128], index: 3, kind: input, shape index: {}]
  %s4 = inlined_call_operand.vmem [shape: bf16[16,128], index: 4, kind: output, shape index: {}]
  %s5 = sld [smem:[#allocation0]]
  $region34: #{resnet_forward.19} parent=0
    _
  %s7 = ssub.s32 1, %s5
  %s8 = scalar_select 0, %s7, %s5
  // Predicated region
  $region2: #{resnet_forward.19} parent=0 // pred_check
    _
  $region3: #{resnet_forward.19} parent=0 // pred_check_branch
    %10 = sbr.rel (0) target = $region5
  $region4: #{resnet_forward.19} parent=0 // pred_region
    _
  $region5: #{resnet_forward.19} parent=0 // pred_fallthru
    _
  // Predicated region
  $region6: #{resnet_forward.19} parent=0 // pred_check
    _
  $region7: #{resnet_forward.19} parent=0 // pred_check_branch
    %12 = sbr.rel (0) target = $region9
  $region8: #{resnet_forward.19} parent=0 // pred_region
    _
  $region9: #{resnet_forward.19} parent=0 // pred_fallthru
    _
  // Predicated region
  $region10: #{resnet_forward.19} parent=0 // pred_check
    _
  $region11: #{resnet_forward.19} parent=0 // pred_check_branch
    %14 = sbr.rel (0) target = $region13
  $region12: #{resnet_forward.19} parent=0 // pred_region
    _
  $region13: #{resnet_forward.19} parent=0 // pred_fallthru
    _
  // Predicated region
  $region14: #{resnet_forward.19} parent=0 // pred_check
    _
  $region15: #{resnet_forward.19} parent=0 // pred_check_branch
    %16 = sbr.rel (0) target = $region17
  $region16: #{resnet_forward.19} parent=0 // pred_region
    _
  $region17: #{resnet_forward.19} parent=0 // pred_fallthru
    _
  %p18 = scmp.eq.s32.totalorder 0, 0
  // Predicated region
  $region18: #{resnet_forward.19} parent=0 // pred_check
    %p19 = pneg %p18
  $region19: #{resnet_forward.19} parent=0 // pred_check_branch
    %21 = sbr.rel (%p19) target = $region21
  $region20: #{resnet_forward.19} parent=0 // pred_region
    %22 = vst [vmem:[#allocation2] sm:$0xff] 0.0
    %23 = vst [vmem:[#allocation2 + $0x8] sm:$0xff] 0.0
  $region21: #{resnet_forward.19} parent=0 // pred_fallthru
    _
  %v24 = vld [vmem:[#allocation2] sm:$0xff]
  %v25 = vld [vmem:[#allocation2 + $0x8] sm:$0xff]
  %v26 = vld [vmem:[%s0] sm:$0xf]
  %v27 = vld [vmem:[%s0 + $0x4] sm:$0xf]
  %v28 = vld [vmem:[%s1] sm:$0xf]
  %v29 = vld [vmem:[%s1 + $0x4] sm:$0xf]
  %v30 = vld [vmem:[%s1 + $0x8] sm:$0xf]
  %v31 = vld [vmem:[%s1 + $0xc] sm:$0xf]
  %v32 = vld [vmem:[%s1 + $0x10] sm:$0xf]
  %v33 = vld [vmem:[%s1 + $0x14] sm:$0xf]
  %v34 = vld [vmem:[%s1 + $0x18] sm:$0xf]
  %v35 = vld [vmem:[%s1 + $0x1c] sm:$0xf]
  %v36 = vld [vmem:[%s1 + $0x20] sm:$0xf]
  %v37 = vld [vmem:[%s1 + $0x24] sm:$0xf]
  %v38 = vld [vmem:[%s1 + $0x28] sm:$0xf]
  %v39 = vld [vmem:[%s1 + $0x2c] sm:$0xf]
  %v40 = vld [vmem:[%s1 + $0x30] sm:$0xf]
  %v41 = vld [vmem:[%s1 + $0x34] sm:$0xf]
  %v42 = vld [vmem:[%s1 + $0x38] sm:$0xf]
  %v43 = vld [vmem:[%s1 + $0x3c] sm:$0xf]
  %v46 = vunpack.c.l.b16 %v26
  %v47 = vunpack.c.l.b16 %v27
  %v48 = vpack.c.b16 %v47, %v46
  %v66 = vunpack.c.l.b16 %v28
  %v67 = vunpack.c.l.b16 %v29
  %v68 = vunpack.c.l.b16 %v30
  %v69 = vunpack.c.l.b16 %v31
  %v70 = vunpack.c.l.b16 %v32
  %v71 = vunpack.c.l.b16 %v33
  %v72 = vunpack.c.l.b16 %v34
  %v73 = vunpack.c.l.b16 %v35
  %v74 = vunpack.c.l.b16 %v36
  %v75 = vunpack.c.l.b16 %v37
  %v76 = vunpack.c.l.b16 %v38
  %v77 = vunpack.c.l.b16 %v39
  %v78 = vunpack.c.l.b16 %v40
  %v79 = vunpack.c.l.b16 %v41
  %v80 = vunpack.c.l.b16 %v42
  %v81 = vunpack.c.l.b16 %v43
  %v82 = vpack.c.b16 %v67, %v66
  %v83 = vpack.c.b16 %v69, %v68
  %v84 = vpack.c.b16 %v71, %v70
  %v85 = vpack.c.b16 %v73, %v72
  %v86 = vpack.c.b16 %v75, %v74
  %v87 = vpack.c.b16 %v77, %v76
  %v88 = vpack.c.b16 %v79, %v78
  %v89 = vpack.c.b16 %v81, %v80
  %98 = vmatprep.subr.bf16.mxu0 0
  %99 = vmatpush1.bf16.msra.mxu0 %v89
  %100 = vmatprep.subr.bf16.mxu0 0
  %101 = vmatpush1.bf16.msra.mxu0 %v88
  %102 = vmatprep.subr.bf16.mxu0 0
  %103 = vmatpush1.bf16.msra.mxu0 %v87
  %104 = vmatprep.subr.bf16.mxu0 0
  %105 = vmatpush1.bf16.msra.mxu0 %v86
  %106 = vmatprep.subr.bf16.mxu0 0
  %107 = vmatpush1.bf16.msra.mxu0 %v85
  %108 = vmatprep.subr.bf16.mxu0 0
  %109 = vmatpush1.bf16.msra.mxu0 %v84
  %110 = vmatprep.subr.bf16.mxu0 0
  %111 = vmatpush1.bf16.msra.mxu0 %v83
  %112 = vmatprep.subr.bf16.mxu0 0
  %113 = vmatpush1.bf16.msra.mxu0 %v82
  %114 = vmatprep.subr.bf16.mxu0 0
  %115 = vmatpush2.bf16.msra.mxu0 0
  %116 = vmatprep.subr.bf16.mxu0 0
  %117 = vmatpush2.bf16.msra.mxu0 0
  %118 = vmatprep.subr.bf16.mxu0 0
  %119 = vmatpush2.bf16.msra.mxu0 0
  %120 = vmatprep.subr.bf16.mxu0 0
  %121 = vmatpush2.bf16.msra.mxu0 0
  %122 = vmatprep.subr.bf16.mxu0 0
  %123 = vmatpush2.bf16.msra.mxu0 0
  %124 = vmatprep.subr.bf16.mxu0 0
  %125 = vmatpush2.bf16.msra.mxu0 0
  %126 = vmatprep.subr.bf16.mxu0 0
  %127 = vmatpush2.bf16.msra.mxu0 0
  %128 = vmatprep.subr.bf16.mxu0 0
  %129 = vmatpush2.bf16.msra.mxu0 0
  %130 = vmatprep.mubr.bf16.mxu0 0
  %131 = vmatmul.mubr.bf16.gmra.mxu0 %v48
  %v132 = vpop.f32.mrf.mxu0
  %v133 = vadd.f32 0.0, %v132
  %v134 = vpop.f32.mrf.mxu0
  %v135 = vpop.f32.mrf.mxu0
  %v136 = vadd.f32 0.0, %v135
  %v137 = vpop.f32.mrf.mxu0
  %138 = vdwg.mxu0
  %v139 = vadd.f32 %v24, %v133
  %v140 = vadd.f32 %v25, %v136
  %141 = vst [vmem:[#allocation2] sm:$0xff] %v139
  %142 = vst [vmem:[#allocation2 + $0x8] sm:$0xff] %v140
  // Predicated region
  $region22: #{resnet_forward.19} parent=0 // pred_check
    %p143 = pneg %p18
  $region23: #{resnet_forward.19} parent=0 // pred_check_branch
    %145 = sbr.rel (%p143) target = $region25
  $region24: #{resnet_forward.19} parent=0 // pred_region
    %v146 = vld [vmem:[#allocation2] sm:$0xff]
    %v147 = vld [vmem:[#allocation2 + $0x8] sm:$0xff]
    %v148 = vadd.f32 %v146, %v147
    %v149 = vrot.slane %v148, 4
    %v150 = vadd.f32 %v148, %v149
    %v151 = vrot.slane %v150, 2
    %v152 = vadd.f32 %v150, %v151
    %v153 = vrot.slane %v152, 1
    %v154 = vadd.f32 %v152, %v153
    %v155 = vmul.f32 %v154, 0.125
    %v156 = vlaneseq
    %v157 = vshrl.u32 %v156, 7
    %v158 = vadd.s32 %v157, 8
    %vm159 = vcmp.lt.s32.totalorder %v157, 8
    %vm160 = vcmp.lt.s32.totalorder %v158, 8
    %v161 = vsub.f32 %v146, %v155
    %v162 = vsub.f32 %v147, %v155
    %v163 = vsel %vm159, %v161, 0.0
    %v164 = vsel %vm160, %v162, 0.0
    %v165 = vmul.f32 %v163, %v163
    %v166 = vmul.f32 %v164, %v164
    %v167 = vadd.f32 %v165, %v166
    %v168 = vrot.slane %v167, 4
    %v169 = vadd.f32 %v167, %v168
    %v170 = vrot.slane %v169, 2
    %v171 = vadd.f32 %v169, %v170
    %v172 = vrot.slane %v171, 1
    %v173 = vadd.f32 %v171, %v172
    %v174 = vmul.f32 %v173, 0.125
    %v175 = vld [vmem:[%s2] sm:$0x1]
    %v176 = vadd.f32 %v174, 1e-05
    %v177 = vrsqrt.pop %v176
    %v178 = vmul.f32 %v175, %v177
    %v179 = vld [vmem:[%s3] sm:$0x1]
    %v180 = vmul.f32 %v155, %v178
    %v181 = vsub.f32 %v179, %v180
    %v183 = vlaneseq
    %v184 = vshrl.u32 %v183, 7
    %v185 = vsub.s32 0, %v184
    %v186 = vrot.slane %v178, %v185
    %v188 = vmul.f32 %v146, %v186
    %v189 = vmul.f32 %v147, %v186
    %v191 = vlaneseq
    %v192 = vshrl.u32 %v191, 7
    %v193 = vsub.s32 0, %v192
    %v194 = vrot.slane %v181, %v193
    %v196 = vadd.f32 %v188, %v194
    %v197 = vadd.f32 %v189, %v194
    %v198 = vpack.c.bf16 %v197, %v196
    %v200 = vunpack.c.l.b16 %v198
    %v201 = vunpack.c.h.b16 %v198
    %v202 = vpack.c.b16 %v200, %v200
    %v203 = vpack.c.b16 %v201, %v201
    %206 = vst [vmem:[%s4] sm:$0xf] %v202
    %207 = vst [vmem:[%s4 + $0x4] sm:$0xf] %v203
  $region25: #{resnet_forward.19} parent=0 // pred_fallthru
    _
  // Predicated region
  $region26: #{resnet_forward.19} parent=0 // pred_check
    _
  $region27: #{resnet_forward.19} parent=0 // pred_check_branch
    %209 = sbr.rel (0) target = $region29
  $region28: #{resnet_forward.19} parent=0 // pred_region
    _
  $region29: #{resnet_forward.19} parent=0 // pred_fallthru
    _
  // Predicated region
  $region30: #{resnet_forward.19} parent=0 // pred_check
    _
  $region31: #{resnet_forward.19} parent=0 // pred_check_branch
    %211 = sbr.rel (0) target = $region33
  $region32: #{resnet_forward.19} parent=0 // pred_region
    _
  $region33: #{resnet_forward.19} parent=0 // pred_fallthru
    _

// kernel: resnet_forward.20
$region0: #{resnet_forward.20}
  #allocation0 [shape = 'u32[]', space=smem, size = 0x4, offset = 0x4, fixed_abs, tag = 'smem constant byte address 0x4 - core index']
  #allocation1 [shape = 'u32[144,128]{1,0:T(1,128)}', space=vmem, size = 0x12000, scoped, tag = 'internal scratch']
  #allocation2 [shape = 'f32[16,128]{1,0:T(8,128)}', space=vmem, size = 0x2000, scoped, tag = 'scratch operand']
  %s0 = inlined_call_operand.vmem [shape: bf16[16,640], index: 0, kind: input, shape index: {}]
  %s1 = inlined_call_operand.vmem [shape: bf16[640,128], index: 1, kind: input, shape index: {}]
  %s2 = inlined_call_operand.vmem [shape: f32[1,128], index: 2, kind: input, shape index: {}]
  %s3 = inlined_call_operand.vmem [shape: f32[1,128], index: 3, kind: input, shape index: {}]
  %s4 = inlined_call_operand.vmem [shape: bf16[16,128], index: 4, kind: input, shape index: {}]
  %s5 = inlined_call_operand.vmem [shape: bf16[16,128], index: 5, kind: output, shape index: {}]
  %s6 = sld [smem:[#allocation0]]
  $region102: #{resnet_forward.20} parent=0
    _
  %s8 = ssub.s32 1, %s6
  %s9 = scalar_select 0, %s8, %s6
  $region1: #{resnet_forward.20} parent=0
    #allocation3 [shape = 'u8[8192]{0}', space=vmem, size = 0x2000, scoped, tag = 'input window, operand 0']
    loop: start=0, step=1, limit=7
    $region2: #{resnet_forward.20} parent=1 // loop_pre_header
      _
    $region3: #{resnet_forward.20} parent=1 // loop_header
      %s11 = sphi 0, %s15
      %p12 = scmp.ge.s32.totalorder %s11, 7
      %s21 = sphi 0, %s23
      %s24 = sphi 0, %s21
      %s25 = sphi 0, %s24
      %s41 = sphi 0, %s25
      %s47 = sphi 0, %s49
      %s50 = sphi 0, %s47
      %s51 = sphi 0, %s50
      %s67 = sphi 0, %s51
      %s71 = sphi 0, %s71
      %s73 = sphi 0, %s71
      %s74 = sphi 0, %s73
      %s88 = sphi 0, %s74
      %s92 = sphi 0, %s92
      %s94 = sphi 0, %s92
      %s95 = sphi 0, %s94
      %s109 = sphi 0, %s95
      %s113 = sphi 0, %s113
      %s115 = sphi 0, %s113
      %s116 = sphi 0, %s115
      %s130 = sphi 0, %s116
      %s134 = sphi 0, %s134
      %s136 = sphi 0, %s134
      %s137 = sphi 0, %s136
      %s151 = sphi 0, %s137
    $region4: #{resnet_forward.20} parent=1 // loop_header_branch
      %14 = sbr.rel (%p12) target = $region8
    $region5: #{resnet_forward.20} parent=1 // loop_body
      %s16 = ssub.s32 %s11, 1
      %s17 = ssub.s32 %s11, 2
      %s18 = sadd.s32 %s11, 1
      %s19 = ssub.s32 %s11, %s18
      %p20 = scmp.eq.s32.totalorder %s19, 0
      %s22 = sadd.s32 %s21, 1
      %s23 = scalar_select %p20, %s21, %s22
      %p26 = pneg %p20
      %p27 = scmp.eq.s32.totalorder %s11, 4
      %p28 = por %p26, %p27
      %p29 = scmp.ne.s32.totalorder %s21, %s24
      %p30 = scmp.eq.s32.totalorder %s11, 0
      %p31 = por %p29, %p30
      %p32 = scmp.ne.s32.totalorder %s21, %s24
      %p33 = scmp.eq.s32.totalorder %s16, 4
      %p34 = por %p32, %p33
      %p35 = scmp.ne.s32.totalorder %s24, %s25
      %p36 = scmp.eq.s32.totalorder %s16, 0
      %p37 = por %p35, %p36
      %p38 = scmp.ne.s32.totalorder %s24, %s25
      %p39 = scmp.eq.s32.totalorder %s17, 4
      %p40 = por %p38, %p39
      %p42 = scmp.ne.s32.totalorder %s25, %s41
      %p43 = scmp.eq.s32.totalorder %s17, 0
      %p44 = por %p42, %p43
      %s45 = ssub.s32 %s11, %s18
      %p46 = scmp.eq.s32.totalorder %s45, 0
      %s48 = sadd.s32 %s47, 1
      %s49 = scalar_select %p46, %s47, %s48
      %p52 = pneg %p46
      %p53 = scmp.eq.s32.totalorder %s11, 4
      %p54 = por %p52, %p53
      %p55 = scmp.ne.s32.totalorder %s47, %s50
      %p56 = scmp.eq.s32.totalorder %s11, 0
      %p57 = por %p55, %p56
      %p58 = scmp.ne.s32.totalorder %s47, %s50
      %p59 = scmp.eq.s32.totalorder %s16, 4
      %p60 = por %p58, %p59
      %p61 = scmp.ne.s32.totalorder %s50, %s51
      %p62 = scmp.eq.s32.totalorder %s16, 0
      %p63 = por %p61, %p62
      %p64 = scmp.ne.s32.totalorder %s50, %s51
      %p65 = scmp.eq.s32.totalorder %s17, 4
      %p66 = por %p64, %p65
      %p68 = scmp.ne.s32.totalorder %s51, %s67
      %p69 = scmp.eq.s32.totalorder %s17, 0
      %p70 = por %p68, %p69
      %s72 = sadd.s32 %s71, 1
      %p75 = scmp.eq.s32.totalorder %s11, 4
      %p76 = scmp.ne.s32.totalorder %s71, %s73
      %p77 = scmp.eq.s32.totalorder %s11, 0
      %p78 = por %p76, %p77
      %p79 = scmp.ne.s32.totalorder %s71, %s73
      %p80 = scmp.eq.s32.totalorder %s16, 4
      %p81 = por %p79, %p80
      %p82 = scmp.ne.s32.totalorder %s73, %s74
      %p83 = scmp.eq.s32.totalorder %s16, 0
      %p84 = por %p82, %p83
      %p85 = scmp.ne.s32.totalorder %s73, %s74
      %p86 = scmp.eq.s32.totalorder %s17, 4
      %p87 = por %p85, %p86
      %p89 = scmp.ne.s32.totalorder %s74, %s88
      %p90 = scmp.eq.s32.totalorder %s17, 0
      %p91 = por %p89, %p90
      %s93 = sadd.s32 %s92, 1
      %p96 = scmp.eq.s32.totalorder %s11, 4
      %p97 = scmp.ne.s32.totalorder %s92, %s94
      %p98 = scmp.eq.s32.totalorder %s11, 0
      %p99 = por %p97, %p98
      %p100 = scmp.ne.s32.totalorder %s92, %s94
      %p101 = scmp.eq.s32.totalorder %s16, 4
      %p102 = por %p100, %p101
      %p103 = scmp.ne.s32.totalorder %s94, %s95
      %p104 = scmp.eq.s32.totalorder %s16, 0
      %p105 = por %p103, %p104
      %p106 = scmp.ne.s32.totalorder %s94, %s95
      %p107 = scmp.eq.s32.totalorder %s17, 4
      %p108 = por %p106, %p107
      %p110 = scmp.ne.s32.totalorder %s95, %s109
      %p111 = scmp.eq.s32.totalorder %s17, 0
      %p112 = por %p110, %p111
      %s114 = sadd.s32 %s113, 1
      %p117 = scmp.eq.s32.totalorder %s11, 4
      %p118 = scmp.ne.s32.totalorder %s113, %s115
      %p119 = scmp.eq.s32.totalorder %s11, 0
      %p120 = por %p118, %p119
      %p121 = scmp.ne.s32.totalorder %s113, %s115
      %p122 = scmp.eq.s32.totalorder %s16, 4
      %p123 = por %p121, %p122
      %p124 = scmp.ne.s32.totalorder %s115, %s116
      %p125 = scmp.eq.s32.totalorder %s16, 0
      %p126 = por %p124, %p125
      %p127 = scmp.ne.s32.totalorder %s115, %s116
      %p128 = scmp.eq.s32.totalorder %s17, 4
      %p129 = por %p127, %p128
      %p131 = scmp.ne.s32.totalorder %s116, %s130
      %p132 = scmp.eq.s32.totalorder %s17, 0
      %p133 = por %p131, %p132
      %s135 = sadd.s32 %s134, 1
      %p138 = scmp.eq.s32.totalorder %s11, 4
      %p139 = scmp.ne.s32.totalorder %s134, %s136
      %p140 = scmp.eq.s32.totalorder %s11, 0
      %p141 = por %p139, %p140
      %p142 = scmp.ne.s32.totalorder %s134, %s136
      %p143 = scmp.eq.s32.totalorder %s16, 4
      %p144 = por %p142, %p143
      %p145 = scmp.ne.s32.totalorder %s136, %s137
      %p146 = scmp.eq.s32.totalorder %s16, 0
      %p147 = por %p145, %p146
      %p148 = scmp.ne.s32.totalorder %s136, %s137
      %p149 = scmp.eq.s32.totalorder %s17, 4
      %p150 = por %p148, %p149
      %p152 = scmp.ne.s32.totalorder %s137, %s151
      %p153 = scmp.eq.s32.totalorder %s17, 0
      %p154 = por %p152, %p153
      %p155 = scmp.le.s32.totalorder 1, %s11
      %p156 = scmp.lt.s32.totalorder %s11, 6
      %p157 = pnand %p155, %p156
      %p158 = pneg %p157
      // Predicated region
      $region9: #{resnet_forward.20} parent=5 // pred_check
        _
      $region10: #{resnet_forward.20} parent=5 // pred_check_branch
        %160 = sbr.rel (%p157) target = $region12
      $region11: #{resnet_forward.20} parent=5 // pred_region
        %s161 = ssub.s32 %s11, 1
        // Predicated region
        $region13: #{resnet_forward.20} parent=11 // pred_check
          %p162 = pneg %p84
        $region14: #{resnet_forward.20} parent=11 // pred_check_branch
          %164 = sbr.rel (%p162) target = $region16
        $region15: #{resnet_forward.20} parent=11 // pred_region
          _
        $region16: #{resnet_forward.20} parent=11 // pred_fallthru
          _
        // Predicated region
        $region17: #{resnet_forward.20} parent=11 // pred_check
          %p165 = pneg %p105
        $region18: #{resnet_forward.20} parent=11 // pred_check_branch
          %167 = sbr.rel (%p165) target = $region20
        $region19: #{resnet_forward.20} parent=11 // pred_region
          _
        $region20: #{resnet_forward.20} parent=11 // pred_fallthru
          _
        // Predicated region
        $region21: #{resnet_forward.20} parent=11 // pred_check
          %p168 = pneg %p126
        $region22: #{resnet_forward.20} parent=11 // pred_check_branch
          %170 = sbr.rel (%p168) target = $region24
        $region23: #{resnet_forward.20} parent=11 // pred_region
          _
        $region24: #{resnet_forward.20} parent=11 // pred_fallthru
          _
      $region12: #{resnet_forward.20} parent=5 // pred_fallthru
        _
      %p171 = scmp.lt.s32.totalorder %s11, 5
      // Predicated region
      $region25: #{resnet_forward.20} parent=5 // pred_check
        %p172 = pneg %p171
      $region26: #{resnet_forward.20} parent=5 // pred_check_branch
        %174 = sbr.rel (%p172) target = $region28
      $region27: #{resnet_forward.20} parent=5 // pred_region
        // Predicated region
        $region29: #{resnet_forward.20} parent=27 // pred_check
          %p175 = pneg %p31
        $region30: #{resnet_forward.20} parent=27 // pred_check_branch
          %177 = sbr.rel (%p175) target = $region32
        $region31: #{resnet_forward.20} parent=27 // pred_region
          %s178 = sand.u32 %s21, 1
          %s179 = sand.u32 %s21, 1
          %s180 = smul.addr %s179, 8
          %s181 = scalar_lea.vmem [#allocation3], %s180
          %s182 = smul.addr %s11, 4
          %s183 = scalar_lea.vmem %s0, %s182
          // Predicated region
          $region33: #{resnet_forward.20} parent=31 // pred_check
            _
          $region34: #{resnet_forward.20} parent=31 // pred_check_branch
            %185 = sbr.rel (0) target = $region36
          $region35: #{resnet_forward.20} parent=31 // pred_region
            // Predicated region
            $region37: #{resnet_forward.20} parent=35 // pred_check
              _
            $region38: #{resnet_forward.20} parent=35 // pred_check_branch
              %187 = sbr.rel target = $region40
            $region39: #{resnet_forward.20} parent=35 // pred_region
              // Predicated region
              $region52: #{resnet_forward.20} parent=39 // pred_check
                _
              $region53: #{resnet_forward.20} parent=39 // pred_check_branch
                %205 = sbr.rel (0) target = $region55
              $region54: #{resnet_forward.20} parent=39 // pred_region
                loop: start=0, step=1, limit=1
                $region56: #{resnet_forward.20} parent=54 // loop_pre_header
                  _
                $region57: #{resnet_forward.20} parent=54 // loop_header
                  %s207 = sphi 0, %s211
                  %p208 = scmp.ge.s32.totalorder %s207, 1
                  %s212 = sphi %s183, %s183
                  %s213 = sphi %s181, %s181
                $region58: #{resnet_forward.20} parent=54 // loop_header_branch
                  %210 = sbr.rel (%p208) target = $region62
                $region59: #{resnet_forward.20} parent=54 // loop_body
                  _
                $region60: #{resnet_forward.20} parent=54 // loop_footer
                  %s211 = sadd.s32 1, %s207
                $region61: #{resnet_forward.20} parent=54 // loop_footer_branch
                  %206 = sbr.rel target = $region57
                $region62: #{resnet_forward.20} parent=54 // loop_exit
                  _
                %s215 = ssub.s32 16, 1
                loop: start=0, step=1, limit=1
                $region63: #{resnet_forward.20} parent=54 // loop_pre_header
                  _
                $region64: #{resnet_forward.20} parent=54 // loop_header
                  %s217 = sphi 0, %s221
                  %p218 = scmp.ge.s32.totalorder %s217, 1
                  %s222 = sphi %s183, %s183
                  %s223 = sphi %s181, %s181
                $region65: #{resnet_forward.20} parent=54 // loop_header_branch
                  %220 = sbr.rel (%p218) target = $region69
                $region66: #{resnet_forward.20} parent=54 // loop_body
                  %v224 = vld [vmem:[%s222] sm:%s215]
                  %225 = vst [vmem:[%s223] sm:%s215] %v224
                  %v226 = vld [vmem:[%s222 + $0x14] sm:%s215]
                  %227 = vst [vmem:[%s223 + $0x4] sm:%s215] %v226
                $region67: #{resnet_forward.20} parent=54 // loop_footer
                  %s221 = sadd.s32 1, %s217
                $region68: #{resnet_forward.20} parent=54 // loop_footer_branch
                  %216 = sbr.rel target = $region64
                $region69: #{resnet_forward.20} parent=54 // loop_exit
                  _
              $region55: #{resnet_forward.20} parent=39 // pred_fallthru
                _
            $region40: #{resnet_forward.20} parent=35 // pred_fallthru
              _
            // Predicated region
            $region41: #{resnet_forward.20} parent=35 // pred_check
              _
            $region42: #{resnet_forward.20} parent=35 // pred_check_branch
              %189 = sbr.rel (0) target = $region44
            $region43: #{resnet_forward.20} parent=35 // pred_region
              %s191 = ssub.s32 16, 1
              loop: start=0, step=1, limit=1
              $region45: #{resnet_forward.20} parent=43 // loop_pre_header
                _
              $region46: #{resnet_forward.20} parent=43 // loop_header
                %s193 = sphi 0, %s197
                %p194 = scmp.ge.s32.totalorder %s193, 1
                %s198 = sphi %s183, %s183
                %s199 = sphi %s181, %s181
              $region47: #{resnet_forward.20} parent=43 // loop_header_branch
                %196 = sbr.rel (%p194) target = $region51
              $region48: #{resnet_forward.20} parent=43 // loop_body
                %v200 = vld [vmem:[%s198] sm:%s191]
                %201 = vst [vmem:[%s199] sm:%s191] %v200
                %v202 = vld [vmem:[%s198 + $0x14] sm:%s191]
                %203 = vst [vmem:[%s199 + $0x4] sm:%s191] %v202
              $region49: #{resnet_forward.20} parent=43 // loop_footer
                %s197 = sadd.s32 1, %s193
              $region50: #{resnet_forward.20} parent=43 // loop_footer_branch
                %192 = sbr.rel target = $region46
              $region51: #{resnet_forward.20} parent=43 // loop_exit
                _
            $region44: #{resnet_forward.20} parent=35 // pred_fallthru
              _
          $region36: #{resnet_forward.20} parent=31 // pred_fallthru
            _
          %228 = vnop
        $region32: #{resnet_forward.20} parent=27 // pred_fallthru
          _
        // Predicated region
        $region70: #{resnet_forward.20} parent=27 // pred_check
          %p229 = pneg %p57
        $region71: #{resnet_forward.20} parent=27 // pred_check_branch
          %231 = sbr.rel (%p229) target = $region73
        $region72: #{resnet_forward.20} parent=27 // pred_region
          %s232 = smul.u32 16, %s11
          %p233 = scmp.lt.s32.totalorder %s232, 79
          %s234 = scalar_select %p233, %s232, 79
          %s235 = smul.addr %s234, 4
          %s236 = scalar_lea.vmem %s1, %s235
          %s237 = smul.u32 16, %s11
        $region73: #{resnet_forward.20} parent=27 // pred_fallthru
          _
      $region28: #{resnet_forward.20} parent=5 // pred_fallthru
        _
      %p238 = scmp.le.s32.totalorder 1, %s11
      %p239 = scmp.lt.s32.totalorder %s11, 6
      %p240 = pnand %p238, %p239
      %p241 = pneg %p240
      // Predicated region
      $region74: #{resnet_forward.20} parent=5 // pred_check
        _
      $region75: #{resnet_forward.20} parent=5 // pred_check_branch
        %243 = sbr.rel (%p240) target = $region77
      $region76: #{resnet_forward.20} parent=5 // pred_region
        %s244 = ssub.s32 %s11, 1
        %s245 = sand.u32 %s24, 1
        %s246 = sand.u32 %s24, 1
        %s247 = smul.addr %s246, 8
        %s248 = scalar_lea.vmem [#allocation3], %s247
        // Predicated region
        $region78: #{resnet_forward.20} parent=76 // pred_check
          %p249 = pneg %p37
        $region79: #{resnet_forward.20} parent=76 // pred_check_branch
          %251 = sbr.rel (%p249) target = $region81
        $region80: #{resnet_forward.20} parent=76 // pred_region
          _
        $region81: #{resnet_forward.20} parent=76 // pred_fallthru
          _
        %s252 = sand.u32 %s24, 1
        %s253 = sand.u32 %s24, 1
        %s254 = smul.addr %s253, 8
        %s255 = scalar_lea.vmem [#allocation3], %s254
        %p256 = pneg %p37
        %p257 = pneg %p34
        %s258 = smul.u32 16, %s16
        %p259 = scmp.lt.s32.totalorder %s258, 79
        %s260 = scalar_select %p259, %s258, 79
        %s261 = smul.addr %s260, 4
        %s262 = scalar_lea.vmem %s1, %s261
        %p263 = pneg %p63
        %p264 = pneg %p60
        %p265 = pneg %p84
        %p266 = pneg %p81
        %p267 = pneg %p105
        %p268 = pneg %p102
        %p269 = pneg %p126
        %p270 = pneg %p123
        %p271 = pneg %p147
        %p272 = pneg %p144
        %s273 = smul.u32 16, %s16
        %p274 = scmp.lt.s32.totalorder %s273, 79
        %s275 = scalar_select %p274, %s273, 79
        %s276 = smul.addr %s275, 4
        %s277 = scalar_lea.vmem %s1, %s276
        %s278 = smul.u32 16, %s16
        %p280 = scmp.eq.s32.totalorder %s16, 0
        // Predicated region
        $region82: #{resnet_forward.20} parent=76 // pred_check
          %p281 = pneg %p280
        $region83: #{resnet_forward.20} parent=76 // pred_check_branch
          %283 = sbr.rel (%p281) target = $region85
        $region84: #{resnet_forward.20} parent=76 // pred_region
          %284 = vst [vmem:[#allocation2] sm:$0xff] 0.0
          %285 = vst [vmem:[#allocation2 + $0x8] sm:$0xff] 0.0
        $region85: #{resnet_forward.20} parent=76 // pred_fallthru
          _
        %v286 = vld [vmem:[#allocation2] sm:$0xff]
        %v287 = vld [vmem:[#allocation2 + $0x8] sm:$0xff]
        %v288 = vld [vmem:[%s248] sm:$0xf]
        %v289 = vld [vmem:[%s248 + $0x4] sm:$0xf]
        %v290 = vld [vmem:[%s277] sm:$0xf]
        %v291 = vld [vmem:[%s277 + $0x4] sm:$0xf]
        %v292 = vld [vmem:[%s277 + $0x8] sm:$0xf]
        %v293 = vld [vmem:[%s277 + $0xc] sm:$0xf]
        %v294 = vld [vmem:[%s277 + $0x10] sm:$0xf]
        %v295 = vld [vmem:[%s277 + $0x14] sm:$0xf]
        %v296 = vld [vmem:[%s277 + $0x18] sm:$0xf]
        %v297 = vld [vmem:[%s277 + $0x1c] sm:$0xf]
        %v298 = vld [vmem:[%s277 + $0x20] sm:$0xf]
        %v299 = vld [vmem:[%s277 + $0x24] sm:$0xf]
        %v300 = vld [vmem:[%s277 + $0x28] sm:$0xf]
        %v301 = vld [vmem:[%s277 + $0x2c] sm:$0xf]
        %v302 = vld [vmem:[%s277 + $0x30] sm:$0xf]
        %v303 = vld [vmem:[%s277 + $0x34] sm:$0xf]
        %v304 = vld [vmem:[%s277 + $0x38] sm:$0xf]
        %v305 = vld [vmem:[%s277 + $0x3c] sm:$0xf]
        %v308 = vunpack.c.l.b16 %v288
        %v309 = vunpack.c.l.b16 %v289
        %v310 = vpack.c.b16 %v309, %v308
        %v328 = vunpack.c.l.b16 %v290
        %v329 = vunpack.c.l.b16 %v291
        %v330 = vunpack.c.l.b16 %v292
        %v331 = vunpack.c.l.b16 %v293
        %v332 = vunpack.c.l.b16 %v294
        %v333 = vunpack.c.l.b16 %v295
        %v334 = vunpack.c.l.b16 %v296
        %v335 = vunpack.c.l.b16 %v297
        %v336 = vunpack.c.l.b16 %v298
        %v337 = vunpack.c.l.b16 %v299
        %v338 = vunpack.c.l.b16 %v300
        %v339 = vunpack.c.l.b16 %v301
        %v340 = vunpack.c.l.b16 %v302
        %v341 = vunpack.c.l.b16 %v303
        %v342 = vunpack.c.l.b16 %v304
        %v343 = vunpack.c.l.b16 %v305
        %v344 = vpack.c.b16 %v329, %v328
        %v345 = vpack.c.b16 %v331, %v330
        %v346 = vpack.c.b16 %v333, %v332
        %v347 = vpack.c.b16 %v335, %v334
        %v348 = vpack.c.b16 %v337, %v336
        %v349 = vpack.c.b16 %v339, %v338
        %v350 = vpack.c.b16 %v341, %v340
        %v351 = vpack.c.b16 %v343, %v342
        %360 = vmatprep.subr.bf16.mxu0 0
        %361 = vmatpush1.bf16.msra.mxu0 %v351
        %362 = vmatprep.subr.bf16.mxu0 0
        %363 = vmatpush1.bf16.msra.mxu0 %v350
        %364 = vmatprep.subr.bf16.mxu0 0
        %365 = vmatpush1.bf16.msra.mxu0 %v349
        %366 = vmatprep.subr.bf16.mxu0 0
        %367 = vmatpush1.bf16.msra.mxu0 %v348
        %368 = vmatprep.subr.bf16.mxu0 0
        %369 = vmatpush1.bf16.msra.mxu0 %v347
        %370 = vmatprep.subr.bf16.mxu0 0
        %371 = vmatpush1.bf16.msra.mxu0 %v346
        %372 = vmatprep.subr.bf16.mxu0 0
        %373 = vmatpush1.bf16.msra.mxu0 %v345
        %374 = vmatprep.subr.bf16.mxu0 0
        %375 = vmatpush1.bf16.msra.mxu0 %v344
        %376 = vmatprep.subr.bf16.mxu0 0
        %377 = vmatpush2.bf16.msra.mxu0 0
        %378 = vmatprep.subr.bf16.mxu0 0
        %379 = vmatpush2.bf16.msra.mxu0 0
        %380 = vmatprep.subr.bf16.mxu0 0
        %381 = vmatpush2.bf16.msra.mxu0 0
        %382 = vmatprep.subr.bf16.mxu0 0
        %383 = vmatpush2.bf16.msra.mxu0 0
        %384 = vmatprep.subr.bf16.mxu0 0
        %385 = vmatpush2.bf16.msra.mxu0 0
        %386 = vmatprep.subr.bf16.mxu0 0
        %387 = vmatpush2.bf16.msra.mxu0 0
        %388 = vmatprep.subr.bf16.mxu0 0
        %389 = vmatpush2.bf16.msra.mxu0 0
        %390 = vmatprep.subr.bf16.mxu0 0
        %391 = vmatpush2.bf16.msra.mxu0 0
        %392 = vmatprep.mubr.bf16.mxu0 0
        %393 = vmatmul.mubr.bf16.gmra.mxu0 %v310
        %v394 = vpop.f32.mrf.mxu0
        %v395 = vadd.f32 0.0, %v394
        %v396 = vpop.f32.mrf.mxu0
        %v397 = vpop.f32.mrf.mxu0
        %v398 = vadd.f32 0.0, %v397
        %v399 = vpop.f32.mrf.mxu0
        %400 = vdwg.mxu0
        %v401 = vadd.f32 %v286, %v395
        %v402 = vadd.f32 %v287, %v398
        %403 = vst [vmem:[#allocation2] sm:$0xff] %v401
        %404 = vst [vmem:[#allocation2 + $0x8] sm:$0xff] %v402
        %p405 = scmp.eq.s32.totalorder %s16, 4
        // Predicated region
        $region86: #{resnet_forward.20} parent=76 // pred_check
          %p406 = pneg %p405
        $region87: #{resnet_forward.20} parent=76 // pred_check_branch
          %408 = sbr.rel (%p406) target = $region89
        $region88: #{resnet_forward.20} parent=76 // pred_region
          %v409 = vld [vmem:[#allocation2] sm:$0xff]
          %v410 = vld [vmem:[#allocation2 + $0x8] sm:$0xff]
          %v411 = vadd.f32 %v409, %v410
          %v412 = vrot.slane %v411, 4
          %v413 = vadd.f32 %v411, %v412
          %v414 = vrot.slane %v413, 2
          %v415 = vadd.f32 %v413, %v414
          %v416 = vrot.slane %v415, 1
          %v417 = vadd.f32 %v415, %v416
          %v418 = vmul.f32 %v417, 0.125
          %v419 = vlaneseq
          %v420 = vshrl.u32 %v419, 7
          %v421 = vadd.s32 %v420, 8
          %vm422 = vcmp.lt.s32.totalorder %v420, 8
          %vm423 = vcmp.lt.s32.totalorder %v421, 8
          %v424 = vsub.f32 %v409, %v418
          %v425 = vsub.f32 %v410, %v418
          %v426 = vsel %vm422, %v424, 0.0
          %v427 = vsel %vm423, %v425, 0.0
          %v428 = vmul.f32 %v426, %v426
          %v429 = vmul.f32 %v427, %v427
          %v430 = vadd.f32 %v428, %v429
          %v431 = vrot.slane %v430, 4
          %v432 = vadd.f32 %v430, %v431
          %v433 = vrot.slane %v432, 2
          %v434 = vadd.f32 %v432, %v433
          %v435 = vrot.slane %v434, 1
          %v436 = vadd.f32 %v434, %v435
          %v437 = vmul.f32 %v436, 0.125
          %v438 = vld [vmem:[%s2] sm:$0x1]
          %v439 = vadd.f32 %v437, 1e-05
          %v440 = vrsqrt.pop %v439
          %v441 = vmul.f32 %v438, %v440
          %v442 = vld [vmem:[%s3] sm:$0x1]
          %v443 = vmul.f32 %v418, %v441
          %v444 = vsub.f32 %v442, %v443
          %v446 = vlaneseq
          %v447 = vshrl.u32 %v446, 7
          %v448 = vsub.s32 0, %v447
          %v449 = vrot.slane %v441, %v448
          %v451 = vmul.f32 %v409, %v449
          %v452 = vmul.f32 %v410, %v449
          %v454 = vlaneseq
          %v455 = vshrl.u32 %v454, 7
          %v456 = vsub.s32 0, %v455
          %v457 = vrot.slane %v444, %v456
          %v459 = vadd.f32 %v451, %v457
          %v460 = vadd.f32 %v452, %v457
          %v461 = vld [vmem:[%s4] sm:$0xf]
          %v462 = vld [vmem:[%s4 + $0x4] sm:$0xf]
          %v463 = vunpack.c.l.bf16 %v461
          %v464 = vunpack.c.l.bf16 %v462
          %v465 = vadd.f32 %v459, %v463
          %v466 = vadd.f32 %v460, %v464
          %v467 = vmax.f32 %v465, 0.0
          %v468 = vmax.f32 %v466, 0.0
          %v469 = vpack.c.bf16 %v468, %v467
          %v471 = vunpack.c.l.b16 %v469
          %v472 = vunpack.c.h.b16 %v469
          %v473 = vpack.c.b16 %v471, %v471
          %v474 = vpack.c.b16 %v472, %v472
          %477 = vst [vmem:[%s5] sm:$0xf] %v473
          %478 = vst [vmem:[%s5 + $0x4] sm:$0xf] %v474
        $region89: #{resnet_forward.20} parent=76 // pred_fallthru
          _
        // Predicated region
        $region90: #{resnet_forward.20} parent=76 // pred_check
          %p479 = pneg %p144
        $region91: #{resnet_forward.20} parent=76 // pred_check_branch
          %481 = sbr.rel (%p479) target = $region93
        $region92: #{resnet_forward.20} parent=76 // pred_region
          _
        $region93: #{resnet_forward.20} parent=76 // pred_fallthru
          _
        // Predicated region
        $region94: #{resnet_forward.20} parent=76 // pred_check
          %p482 = pneg %p144
        $region95: #{resnet_forward.20} parent=76 // pred_check_branch
          %484 = sbr.rel (%p482) target = $region97
        $region96: #{resnet_forward.20} parent=76 // pred_region
          _
        $region97: #{resnet_forward.20} parent=76 // pred_fallthru
          _
      $region77: #{resnet_forward.20} parent=5 // pred_fallthru
        _
      %p485 = scmp.le.s32.totalorder 2, %s11
      // Predicated region
      $region98: #{resnet_forward.20} parent=5 // pred_check
        %p486 = pneg %p485
      $region99: #{resnet_forward.20} parent=5 // pred_check_branch
        %488 = sbr.rel (%p486) target = $region101
      $region100: #{resnet_forward.20} parent=5 // pred_region
        %s489 = ssub.s32 %s11, 2
      $region101: #{resnet_forward.20} parent=5 // pred_fallthru
        _
    $region6: #{resnet_forward.20} parent=1 // loop_footer
      %s15 = sadd.s32 1, %s11
    $region7: #{resnet_forward.20} parent=1 // loop_footer_branch
      %10 = sbr.rel target = $region3
    $region8: #{resnet_forward.20} parent=1 // loop_exit
      _

// kernel: resnet_forward.21
$region0: #{resnet_forward.21}
  #allocation0 [shape = 'u32[]', space=smem, size = 0x4, offset = 0x4, fixed_abs, tag = 'smem constant byte address 0x4 - core index']
  #allocation1 [shape = 'u32[144,128]{1,0:T(1,128)}', space=vmem, size = 0x12000, scoped, tag = 'internal scratch']
  #allocation2 [shape = 'f32[16,128]{1,0:T(8,128)}', space=vmem, size = 0x2000, scoped, tag = 'scratch operand']
  %s0 = inlined_call_operand.vmem [shape: bf16[16,640], index: 0, kind: input, shape index: {}]
  %s1 = inlined_call_operand.vmem [shape: bf16[640,128], index: 1, kind: input, shape index: {}]
  %s2 = inlined_call_operand.vmem [shape: f32[1,128], index: 2, kind: input, shape index: {}]
  %s3 = inlined_call_operand.vmem [shape: f32[1,128], index: 3, kind: input, shape index: {}]
  %s4 = inlined_call_operand.vmem [shape: bf16[16,128], index: 4, kind: output, shape index: {}]
  %s5 = sld [smem:[#allocation0]]
  $region98: #{resnet_forward.21} parent=0
    _
  %s7 = ssub.s32 1, %s5
  %s8 = scalar_select 0, %s7, %s5
  $region1: #{resnet_forward.21} parent=0
    #allocation3 [shape = 'u8[8192]{0}', space=vmem, size = 0x2000, scoped, tag = 'input window, operand 0']
    loop: start=0, step=1, limit=7
    $region2: #{resnet_forward.21} parent=1 // loop_pre_header
      _
    $region3: #{resnet_forward.21} parent=1 // loop_header
      %s10 = sphi 0, %s14
      %p11 = scmp.ge.s32.totalorder %s10, 7
      %s20 = sphi 0, %s22
      %s23 = sphi 0, %s20
      %s24 = sphi 0, %s23
      %s40 = sphi 0, %s24
      %s46 = sphi 0, %s48
      %s49 = sphi 0, %s46
      %s50 = sphi 0, %s49
      %s66 = sphi 0, %s50
      %s70 = sphi 0, %s70
      %s72 = sphi 0, %s70
      %s73 = sphi 0, %s72
      %s87 = sphi 0, %s73
      %s91 = sphi 0, %s91
      %s93 = sphi 0, %s91
      %s94 = sphi 0, %s93
      %s108 = sphi 0, %s94
      %s112 = sphi 0, %s112
      %s114 = sphi 0, %s112
      %s115 = sphi 0, %s114
      %s129 = sphi 0, %s115
    $region4: #{resnet_forward.21} parent=1 // loop_header_branch
      %13 = sbr.rel (%p11) target = $region8
    $region5: #{resnet_forward.21} parent=1 // loop_body
      %s15 = ssub.s32 %s10, 1
      %s16 = ssub.s32 %s10, 2
      %s17 = sadd.s32 %s10, 1
      %s18 = ssub.s32 %s10, %s17
      %p19 = scmp.eq.s32.totalorder %s18, 0
      %s21 = sadd.s32 %s20, 1
      %s22 = scalar_select %p19, %s20, %s21
      %p25 = pneg %p19
      %p26 = scmp.eq.s32.totalorder %s10, 4
      %p27 = por %p25, %p26
      %p28 = scmp.ne.s32.totalorder %s20, %s23
      %p29 = scmp.eq.s32.totalorder %s10, 0
      %p30 = por %p28, %p29
      %p31 = scmp.ne.s32.totalorder %s20, %s23
      %p32 = scmp.eq.s32.totalorder %s15, 4
      %p33 = por %p31, %p32
      %p34 = scmp.ne.s32.totalorder %s23, %s24
      %p35 = scmp.eq.s32.totalorder %s15, 0
      %p36 = por %p34, %p35
      %p37 = scmp.ne.s32.totalorder %s23, %s24
      %p38 = scmp.eq.s32.totalorder %s16, 4
      %p39 = por %p37, %p38
      %p41 = scmp.ne.s32.totalorder %s24, %s40
      %p42 = scmp.eq.s32.totalorder %s16, 0
      %p43 = por %p41, %p42
      %s44 = ssub.s32 %s10, %s17
      %p45 = scmp.eq.s32.totalorder %s44, 0
      %s47 = sadd.s32 %s46, 1
      %s48 = scalar_select %p45, %s46, %s47
      %p51 = pneg %p45
      %p52 = scmp.eq.s32.totalorder %s10, 4
      %p53 = por %p51, %p52
      %p54 = scmp.ne.s32.totalorder %s46, %s49
      %p55 = scmp.eq.s32.totalorder %s10, 0
      %p56 = por %p54, %p55
      %p57 = scmp.ne.s32.totalorder %s46, %s49
      %p58 = scmp.eq.s32.totalorder %s15, 4
      %p59 = por %p57, %p58
      %p60 = scmp.ne.s32.totalorder %s49, %s50
      %p61 = scmp.eq.s32.totalorder %s15, 0
      %p62 = por %p60, %p61
      %p63 = scmp.ne.s32.totalorder %s49, %s50
      %p64 = scmp.eq.s32.totalorder %s16, 4
      %p65 = por %p63, %p64
      %p67 = scmp.ne.s32.totalorder %s50, %s66
      %p68 = scmp.eq.s32.totalorder %s16, 0
      %p69 = por %p67, %p68
      %s71 = sadd.s32 %s70, 1
      %p74 = scmp.eq.s32.totalorder %s10, 4
      %p75 = scmp.ne.s32.totalorder %s70, %s72
      %p76 = scmp.eq.s32.totalorder %s10, 0
      %p77 = por %p75, %p76
      %p78 = scmp.ne.s32.totalorder %s70, %s72
      %p79 = scmp.eq.s32.totalorder %s15, 4
      %p80 = por %p78, %p79
      %p81 = scmp.ne.s32.totalorder %s72, %s73
      %p82 = scmp.eq.s32.totalorder %s15, 0
      %p83 = por %p81, %p82
      %p84 = scmp.ne.s32.totalorder %s72, %s73
      %p85 = scmp.eq.s32.totalorder %s16, 4
      %p86 = por %p84, %p85
      %p88 = scmp.ne.s32.totalorder %s73, %s87
      %p89 = scmp.eq.s32.totalorder %s16, 0
      %p90 = por %p88, %p89
      %s92 = sadd.s32 %s91, 1
      %p95 = scmp.eq.s32.totalorder %s10, 4
      %p96 = scmp.ne.s32.totalorder %s91, %s93
      %p97 = scmp.eq.s32.totalorder %s10, 0
      %p98 = por %p96, %p97
      %p99 = scmp.ne.s32.totalorder %s91, %s93
      %p100 = scmp.eq.s32.totalorder %s15, 4
      %p101 = por %p99, %p100
      %p102 = scmp.ne.s32.totalorder %s93, %s94
      %p103 = scmp.eq.s32.totalorder %s15, 0
      %p104 = por %p102, %p103
      %p105 = scmp.ne.s32.totalorder %s93, %s94
      %p106 = scmp.eq.s32.totalorder %s16, 4
      %p107 = por %p105, %p106
      %p109 = scmp.ne.s32.totalorder %s94, %s108
      %p110 = scmp.eq.s32.totalorder %s16, 0
      %p111 = por %p109, %p110
      %s113 = sadd.s32 %s112, 1
      %p116 = scmp.eq.s32.totalorder %s10, 4
      %p117 = scmp.ne.s32.totalorder %s112, %s114
      %p118 = scmp.eq.s32.totalorder %s10, 0
      %p119 = por %p117, %p118
      %p120 = scmp.ne.s32.totalorder %s112, %s114
      %p121 = scmp.eq.s32.totalorder %s15, 4
      %p122 = por %p120, %p121
      %p123 = scmp.ne.s32.totalorder %s114, %s115
      %p124 = scmp.eq.s32.totalorder %s15, 0
      %p125 = por %p123, %p124
      %p126 = scmp.ne.s32.totalorder %s114, %s115
      %p127 = scmp.eq.s32.totalorder %s16, 4
      %p128 = por %p126, %p127
      %p130 = scmp.ne.s32.totalorder %s115, %s129
      %p131 = scmp.eq.s32.totalorder %s16, 0
      %p132 = por %p130, %p131
      %p133 = scmp.le.s32.totalorder 1, %s10
      %p134 = scmp.lt.s32.totalorder %s10, 6
      %p135 = pnand %p133, %p134
      %p136 = pneg %p135
      // Predicated region
      $region9: #{resnet_forward.21} parent=5 // pred_check
        _
      $region10: #{resnet_forward.21} parent=5 // pred_check_branch
        %138 = sbr.rel (%p135) target = $region12
      $region11: #{resnet_forward.21} parent=5 // pred_region
        %s139 = ssub.s32 %s10, 1
        // Predicated region
        $region13: #{resnet_forward.21} parent=11 // pred_check
          %p140 = pneg %p83
        $region14: #{resnet_forward.21} parent=11 // pred_check_branch
          %142 = sbr.rel (%p140) target = $region16
        $region15: #{resnet_forward.21} parent=11 // pred_region
          _
        $region16: #{resnet_forward.21} parent=11 // pred_fallthru
          _
        // Predicated region
        $region17: #{resnet_forward.21} parent=11 // pred_check
          %p143 = pneg %p104
        $region18: #{resnet_forward.21} parent=11 // pred_check_branch
          %145 = sbr.rel (%p143) target = $region20
        $region19: #{resnet_forward.21} parent=11 // pred_region
          _
        $region20: #{resnet_forward.21} parent=11 // pred_fallthru
          _
      $region12: #{resnet_forward.21} parent=5 // pred_fallthru
        _
      %p146 = scmp.lt.s32.totalorder %s10, 5
      // Predicated region
      $region21: #{resnet_forward.21} parent=5 // pred_check
        %p147 = pneg %p146
      $region22: #{resnet_forward.21} parent=5 // pred_check_branch
        %149 = sbr.rel (%p147) target = $region24
      $region23: #{resnet_forward.21} parent=5 // pred_region
        // Predicated region
        $region25: #{resnet_forward.21} parent=23 // pred_check
          %p150 = pneg %p30
        $region26: #{resnet_forward.21} parent=23 // pred_check_branch
          %152 = sbr.rel (%p150) target = $region28
        $region27: #{resnet_forward.21} parent=23 // pred_region
          %s153 = sand.u32 %s20, 1
          %s154 = sand.u32 %s20, 1
          %s155 = smul.addr %s154, 8
          %s156 = scalar_lea.vmem [#allocation3], %s155
          %s157 = smul.addr %s10, 4
          %s158 = scalar_lea.vmem %s0, %s157
          // Predicated region
          $region29: #{resnet_forward.21} parent=27 // pred_check
            _
          $region30: #{resnet_forward.21} parent=27 // pred_check_branch
            %160 = sbr.rel (0) target = $region32
          $region31: #{resnet_forward.21} parent=27 // pred_region
            // Predicated region
            $region33: #{resnet_forward.21} parent=31 // pred_check
              _
            $region34: #{resnet_forward.21} parent=31 // pred_check_branch
              %162 = sbr.rel target = $region36
            $region35: #{resnet_forward.21} parent=31 // pred_region
              // Predicated region
              $region48: #{resnet_forward.21} parent=35 // pred_check
                _
              $region49: #{resnet_forward.21} parent=35 // pred_check_branch
                %180 = sbr.rel (0) target = $region51
              $region50: #{resnet_forward.21} parent=35 // pred_region
                loop: start=0, step=1, limit=1
                $region52: #{resnet_forward.21} parent=50 // loop_pre_header
                  _
                $region53: #{resnet_forward.21} parent=50 // loop_header
                  %s182 = sphi 0, %s186
                  %p183 = scmp.ge.s32.totalorder %s182, 1
                  %s187 = sphi %s158, %s158
                  %s188 = sphi %s156, %s156
                $region54: #{resnet_forward.21} parent=50 // loop_header_branch
                  %185 = sbr.rel (%p183) target = $region58
                $region55: #{resnet_forward.21} parent=50 // loop_body
                  _
                $region56: #{resnet_forward.21} parent=50 // loop_footer
                  %s186 = sadd.s32 1, %s182
                $region57: #{resnet_forward.21} parent=50 // loop_footer_branch
                  %181 = sbr.rel target = $region53
                $region58: #{resnet_forward.21} parent=50 // loop_exit
                  _
                %s190 = ssub.s32 16, 1
                loop: start=0, step=1, limit=1
                $region59: #{resnet_forward.21} parent=50 // loop_pre_header
                  _
                $region60: #{resnet_forward.21} parent=50 // loop_header
                  %s192 = sphi 0, %s196
                  %p193 = scmp.ge.s32.totalorder %s192, 1
                  %s197 = sphi %s158, %s158
                  %s198 = sphi %s156, %s156
                $region61: #{resnet_forward.21} parent=50 // loop_header_branch
                  %195 = sbr.rel (%p193) target = $region65
                $region62: #{resnet_forward.21} parent=50 // loop_body
                  %v199 = vld [vmem:[%s197] sm:%s190]
                  %200 = vst [vmem:[%s198] sm:%s190] %v199
                  %v201 = vld [vmem:[%s197 + $0x14] sm:%s190]
                  %202 = vst [vmem:[%s198 + $0x4] sm:%s190] %v201
                $region63: #{resnet_forward.21} parent=50 // loop_footer
                  %s196 = sadd.s32 1, %s192
                $region64: #{resnet_forward.21} parent=50 // loop_footer_branch
                  %191 = sbr.rel target = $region60
                $region65: #{resnet_forward.21} parent=50 // loop_exit
                  _
              $region51: #{resnet_forward.21} parent=35 // pred_fallthru
                _
            $region36: #{resnet_forward.21} parent=31 // pred_fallthru
              _
            // Predicated region
            $region37: #{resnet_forward.21} parent=31 // pred_check
              _
            $region38: #{resnet_forward.21} parent=31 // pred_check_branch
              %164 = sbr.rel (0) target = $region40
            $region39: #{resnet_forward.21} parent=31 // pred_region
              %s166 = ssub.s32 16, 1
              loop: start=0, step=1, limit=1
              $region41: #{resnet_forward.21} parent=39 // loop_pre_header
                _
              $region42: #{resnet_forward.21} parent=39 // loop_header
                %s168 = sphi 0, %s172
                %p169 = scmp.ge.s32.totalorder %s168, 1
                %s173 = sphi %s158, %s158
                %s174 = sphi %s156, %s156
              $region43: #{resnet_forward.21} parent=39 // loop_header_branch
                %171 = sbr.rel (%p169) target = $region47
              $region44: #{resnet_forward.21} parent=39 // loop_body
                %v175 = vld [vmem:[%s173] sm:%s166]
                %176 = vst [vmem:[%s174] sm:%s166] %v175
                %v177 = vld [vmem:[%s173 + $0x14] sm:%s166]
                %178 = vst [vmem:[%s174 + $0x4] sm:%s166] %v177
              $region45: #{resnet_forward.21} parent=39 // loop_footer
                %s172 = sadd.s32 1, %s168
              $region46: #{resnet_forward.21} parent=39 // loop_footer_branch
                %167 = sbr.rel target = $region42
              $region47: #{resnet_forward.21} parent=39 // loop_exit
                _
            $region40: #{resnet_forward.21} parent=31 // pred_fallthru
              _
          $region32: #{resnet_forward.21} parent=27 // pred_fallthru
            _
          %203 = vnop
        $region28: #{resnet_forward.21} parent=23 // pred_fallthru
          _
        // Predicated region
        $region66: #{resnet_forward.21} parent=23 // pred_check
          %p204 = pneg %p56
        $region67: #{resnet_forward.21} parent=23 // pred_check_branch
          %206 = sbr.rel (%p204) target = $region69
        $region68: #{resnet_forward.21} parent=23 // pred_region
          %s207 = smul.u32 16, %s10
          %p208 = scmp.lt.s32.totalorder %s207, 79
          %s209 = scalar_select %p208, %s207, 79
          %s210 = smul.addr %s209, 4
          %s211 = scalar_lea.vmem %s1, %s210
          %s212 = smul.u32 16, %s10
        $region69: #{resnet_forward.21} parent=23 // pred_fallthru
          _
      $region24: #{resnet_forward.21} parent=5 // pred_fallthru
        _
      %p213 = scmp.le.s32.totalorder 1, %s10
      %p214 = scmp.lt.s32.totalorder %s10, 6
      %p215 = pnand %p213, %p214
      %p216 = pneg %p215
      // Predicated region
      $region70: #{resnet_forward.21} parent=5 // pred_check
        _
      $region71: #{resnet_forward.21} parent=5 // pred_check_branch
        %218 = sbr.rel (%p215) target = $region73
      $region72: #{resnet_forward.21} parent=5 // pred_region
        %s219 = ssub.s32 %s10, 1
        %s220 = sand.u32 %s23, 1
        %s221 = sand.u32 %s23, 1
        %s222 = smul.addr %s221, 8
        %s223 = scalar_lea.vmem [#allocation3], %s222
        // Predicated region
        $region74: #{resnet_forward.21} parent=72 // pred_check
          %p224 = pneg %p36
        $region75: #{resnet_forward.21} parent=72 // pred_check_branch
          %226 = sbr.rel (%p224) target = $region77
        $region76: #{resnet_forward.21} parent=72 // pred_region
          _
        $region77: #{resnet_forward.21} parent=72 // pred_fallthru
          _
        %s227 = sand.u32 %s23, 1
        %s228 = sand.u32 %s23, 1
        %s229 = smul.addr %s228, 8
        %s230 = scalar_lea.vmem [#allocation3], %s229
        %p231 = pneg %p36
        %p232 = pneg %p33
        %s233 = smul.u32 16, %s15
        %p234 = scmp.lt.s32.totalorder %s233, 79
        %s235 = scalar_select %p234, %s233, 79
        %s236 = smul.addr %s235, 4
        %s237 = scalar_lea.vmem %s1, %s236
        %p238 = pneg %p62
        %p239 = pneg %p59
        %p240 = pneg %p83
        %p241 = pneg %p80
        %p242 = pneg %p104
        %p243 = pneg %p101
        %p244 = pneg %p125
        %p245 = pneg %p122
        %s246 = smul.u32 16, %s15
        %p247 = scmp.lt.s32.totalorder %s246, 79
        %s248 = scalar_select %p247, %s246, 79
        %s249 = smul.addr %s248, 4
        %s250 = scalar_lea.vmem %s1, %s249
        %s251 = smul.u32 16, %s15
        %p253 = scmp.eq.s32.totalorder %s15, 0
        // Predicated region
        $region78: #{resnet_forward.21} parent=72 // pred_check
          %p254 = pneg %p253
        $region79: #{resnet_forward.21} parent=72 // pred_check_branch
          %256 = sbr.rel (%p254) target = $region81
        $region80: #{resnet_forward.21} parent=72 // pred_region
          %257 = vst [vmem:[#allocation2] sm:$0xff] 0.0
          %258 = vst [vmem:[#allocation2 + $0x8] sm:$0xff] 0.0
        $region81: #{resnet_forward.21} parent=72 // pred_fallthru
          _
        %v259 = vld [vmem:[#allocation2] sm:$0xff]
        %v260 = vld [vmem:[#allocation2 + $0x8] sm:$0xff]
        %v261 = vld [vmem:[%s223] sm:$0xf]
        %v262 = vld [vmem:[%s223 + $0x4] sm:$0xf]
        %v263 = vld [vmem:[%s250] sm:$0xf]
        %v264 = vld [vmem:[%s250 + $0x4] sm:$0xf]
        %v265 = vld [vmem:[%s250 + $0x8] sm:$0xf]
        %v266 = vld [vmem:[%s250 + $0xc] sm:$0xf]
        %v267 = vld [vmem:[%s250 + $0x10] sm:$0xf]
        %v268 = vld [vmem:[%s250 + $0x14] sm:$0xf]
        %v269 = vld [vmem:[%s250 + $0x18] sm:$0xf]
        %v270 = vld [vmem:[%s250 + $0x1c] sm:$0xf]
        %v271 = vld [vmem:[%s250 + $0x20] sm:$0xf]
        %v272 = vld [vmem:[%s250 + $0x24] sm:$0xf]
        %v273 = vld [vmem:[%s250 + $0x28] sm:$0xf]
        %v274 = vld [vmem:[%s250 + $0x2c] sm:$0xf]
        %v275 = vld [vmem:[%s250 + $0x30] sm:$0xf]
        %v276 = vld [vmem:[%s250 + $0x34] sm:$0xf]
        %v277 = vld [vmem:[%s250 + $0x38] sm:$0xf]
        %v278 = vld [vmem:[%s250 + $0x3c] sm:$0xf]
        %v281 = vunpack.c.l.b16 %v261
        %v282 = vunpack.c.l.b16 %v262
        %v283 = vpack.c.b16 %v282, %v281
        %v301 = vunpack.c.l.b16 %v263
        %v302 = vunpack.c.l.b16 %v264
        %v303 = vunpack.c.l.b16 %v265
        %v304 = vunpack.c.l.b16 %v266
        %v305 = vunpack.c.l.b16 %v267
        %v306 = vunpack.c.l.b16 %v268
        %v307 = vunpack.c.l.b16 %v269
        %v308 = vunpack.c.l.b16 %v270
        %v309 = vunpack.c.l.b16 %v271
        %v310 = vunpack.c.l.b16 %v272
        %v311 = vunpack.c.l.b16 %v273
        %v312 = vunpack.c.l.b16 %v274
        %v313 = vunpack.c.l.b16 %v275
        %v314 = vunpack.c.l.b16 %v276
        %v315 = vunpack.c.l.b16 %v277
        %v316 = vunpack.c.l.b16 %v278
        %v317 = vpack.c.b16 %v302, %v301
        %v318 = vpack.c.b16 %v304, %v303
        %v319 = vpack.c.b16 %v306, %v305
        %v320 = vpack.c.b16 %v308, %v307
        %v321 = vpack.c.b16 %v310, %v309
        %v322 = vpack.c.b16 %v312, %v311
        %v323 = vpack.c.b16 %v314, %v313
        %v324 = vpack.c.b16 %v316, %v315
        %333 = vmatprep.subr.bf16.mxu0 0
        %334 = vmatpush1.bf16.msra.mxu0 %v324
        %335 = vmatprep.subr.bf16.mxu0 0
        %336 = vmatpush1.bf16.msra.mxu0 %v323
        %337 = vmatprep.subr.bf16.mxu0 0
        %338 = vmatpush1.bf16.msra.mxu0 %v322
        %339 = vmatprep.subr.bf16.mxu0 0
        %340 = vmatpush1.bf16.msra.mxu0 %v321
        %341 = vmatprep.subr.bf16.mxu0 0
        %342 = vmatpush1.bf16.msra.mxu0 %v320
        %343 = vmatprep.subr.bf16.mxu0 0
        %344 = vmatpush1.bf16.msra.mxu0 %v319
        %345 = vmatprep.subr.bf16.mxu0 0
        %346 = vmatpush1.bf16.msra.mxu0 %v318
        %347 = vmatprep.subr.bf16.mxu0 0
        %348 = vmatpush1.bf16.msra.mxu0 %v317
        %349 = vmatprep.subr.bf16.mxu0 0
        %350 = vmatpush2.bf16.msra.mxu0 0
        %351 = vmatprep.subr.bf16.mxu0 0
        %352 = vmatpush2.bf16.msra.mxu0 0
        %353 = vmatprep.subr.bf16.mxu0 0
        %354 = vmatpush2.bf16.msra.mxu0 0
        %355 = vmatprep.subr.bf16.mxu0 0
        %356 = vmatpush2.bf16.msra.mxu0 0
        %357 = vmatprep.subr.bf16.mxu0 0
        %358 = vmatpush2.bf16.msra.mxu0 0
        %359 = vmatprep.subr.bf16.mxu0 0
        %360 = vmatpush2.bf16.msra.mxu0 0
        %361 = vmatprep.subr.bf16.mxu0 0
        %362 = vmatpush2.bf16.msra.mxu0 0
        %363 = vmatprep.subr.bf16.mxu0 0
        %364 = vmatpush2.bf16.msra.mxu0 0
        %365 = vmatprep.mubr.bf16.mxu0 0
        %366 = vmatmul.mubr.bf16.gmra.mxu0 %v283
        %v367 = vpop.f32.mrf.mxu0
        %v368 = vadd.f32 0.0, %v367
        %v369 = vpop.f32.mrf.mxu0
        %v370 = vpop.f32.mrf.mxu0
        %v371 = vadd.f32 0.0, %v370
        %v372 = vpop.f32.mrf.mxu0
        %373 = vdwg.mxu0
        %v374 = vadd.f32 %v259, %v368
        %v375 = vadd.f32 %v260, %v371
        %376 = vst [vmem:[#allocation2] sm:$0xff] %v374
        %377 = vst [vmem:[#allocation2 + $0x8] sm:$0xff] %v375
        %p378 = scmp.eq.s32.totalorder %s15, 4
        // Predicated region
        $region82: #{resnet_forward.21} parent=72 // pred_check
          %p379 = pneg %p378
        $region83: #{resnet_forward.21} parent=72 // pred_check_branch
          %381 = sbr.rel (%p379) target = $region85
        $region84: #{resnet_forward.21} parent=72 // pred_region
          %v382 = vld [vmem:[#allocation2] sm:$0xff]
          %v383 = vld [vmem:[#allocation2 + $0x8] sm:$0xff]
          %v384 = vadd.f32 %v382, %v383
          %v385 = vrot.slane %v384, 4
          %v386 = vadd.f32 %v384, %v385
          %v387 = vrot.slane %v386, 2
          %v388 = vadd.f32 %v386, %v387
          %v389 = vrot.slane %v388, 1
          %v390 = vadd.f32 %v388, %v389
          %v391 = vmul.f32 %v390, 0.5
          %v392 = vlaneseq
          %v393 = vshrl.u32 %v392, 7
          %v394 = vadd.s32 %v393, 8
          %vm395 = vcmp.lt.s32.totalorder %v393, 2
          %vm396 = vcmp.lt.s32.totalorder %v394, 2
          %v397 = vsub.f32 %v382, %v391
          %v398 = vsub.f32 %v383, %v391
          %v399 = vsel %vm395, %v397, 0.0
          %v400 = vsel %vm396, %v398, 0.0
          %v401 = vmul.f32 %v399, %v399
          %v402 = vmul.f32 %v400, %v400
          %v403 = vadd.f32 %v401, %v402
          %v404 = vrot.slane %v403, 4
          %v405 = vadd.f32 %v403, %v404
          %v406 = vrot.slane %v405, 2
          %v407 = vadd.f32 %v405, %v406
          %v408 = vrot.slane %v407, 1
          %v409 = vadd.f32 %v407, %v408
          %v410 = vmul.f32 %v409, 0.5
          %v411 = vld [vmem:[%s2] sm:$0x1]
          %v412 = vadd.f32 %v410, 1e-05
          %v413 = vrsqrt.pop %v412
          %v414 = vmul.f32 %v411, %v413
          %v415 = vld [vmem:[%s3] sm:$0x1]
          %v416 = vmul.f32 %v391, %v414
          %v417 = vsub.f32 %v415, %v416
          %v419 = vlaneseq
          %v420 = vshrl.u32 %v419, 7
          %v421 = vsub.s32 0, %v420
          %v422 = vrot.slane %v414, %v421
          %v424 = vmul.f32 %v382, %v422
          %v425 = vmul.f32 %v383, %v422
          %v427 = vlaneseq
          %v428 = vshrl.u32 %v427, 7
          %v429 = vsub.s32 0, %v428
          %v430 = vrot.slane %v417, %v429
          %v432 = vadd.f32 %v424, %v430
          %v433 = vadd.f32 %v425, %v430
          %v434 = vmax.f32 %v432, 0.0
          %v435 = vmax.f32 %v433, 0.0
          %v436 = vpack.c.bf16 %v435, %v434
          %v438 = vunpack.c.l.b16 %v436
          %v439 = vunpack.c.h.b16 %v436
          %v440 = vpack.c.b16 %v438, %v438
          %v441 = vpack.c.b16 %v439, %v439
          %444 = vst [vmem:[%s4] sm:$0xf] %v440
          %445 = vst [vmem:[%s4 + $0x4] sm:$0xf] %v441
        $region85: #{resnet_forward.21} parent=72 // pred_fallthru
          _
        // Predicated region
        $region86: #{resnet_forward.21} parent=72 // pred_check
          %p446 = pneg %p122
        $region87: #{resnet_forward.21} parent=72 // pred_check_branch
          %448 = sbr.rel (%p446) target = $region89
        $region88: #{resnet_forward.21} parent=72 // pred_region
          _
        $region89: #{resnet_forward.21} parent=72 // pred_fallthru
          _
        // Predicated region
        $region90: #{resnet_forward.21} parent=72 // pred_check
          %p449 = pneg %p122
        $region91: #{resnet_forward.21} parent=72 // pred_check_branch
          %451 = sbr.rel (%p449) target = $region93
        $region92: #{resnet_forward.21} parent=72 // pred_region
          _
        $region93: #{resnet_forward.21} parent=72 // pred_fallthru
          _
      $region73: #{resnet_forward.21} parent=5 // pred_fallthru
        _
      %p452 = scmp.le.s32.totalorder 2, %s10
      // Predicated region
      $region94: #{resnet_forward.21} parent=5 // pred_check
        %p453 = pneg %p452
      $region95: #{resnet_forward.21} parent=5 // pred_check_branch
        %455 = sbr.rel (%p453) target = $region97
      $region96: #{resnet_forward.21} parent=5 // pred_region
        %s456 = ssub.s32 %s10, 2
      $region97: #{resnet_forward.21} parent=5 // pred_fallthru
        _
    $region6: #{resnet_forward.21} parent=1 // loop_footer
      %s14 = sadd.s32 1, %s10
    $region7: #{resnet_forward.21} parent=1 // loop_footer_branch
      %9 = sbr.rel target = $region3
    $region8: #{resnet_forward.21} parent=1 // loop_exit
      _

// kernel: resnet_forward.22
$region0: #{resnet_forward.22}
  #allocation0 [shape = 'u32[]', space=smem, size = 0x4, offset = 0x4, fixed_abs, tag = 'smem constant byte address 0x4 - core index']
  #allocation1 [shape = 'u32[144,128]{1,0:T(1,128)}', space=vmem, size = 0x12000, scoped, tag = 'internal scratch']
  #allocation2 [shape = 'f32[16,128]{1,0:T(8,128)}', space=vmem, size = 0x2000, scoped, tag = 'scratch operand']
  %s0 = inlined_call_operand.vmem [shape: bf16[16,128], index: 0, kind: input, shape index: {}]
  %s1 = inlined_call_operand.vmem [shape: bf16[128,128], index: 1, kind: input, shape index: {}]
  %s2 = inlined_call_operand.vmem [shape: f32[1,128], index: 2, kind: input, shape index: {}]
  %s3 = inlined_call_operand.vmem [shape: f32[1,128], index: 3, kind: input, shape index: {}]
  %s4 = inlined_call_operand.vmem [shape: bf16[16,128], index: 4, kind: output, shape index: {}]
  %s5 = sld [smem:[#allocation0]]
  $region34: #{resnet_forward.22} parent=0
    _
  %s7 = ssub.s32 1, %s5
  %s8 = scalar_select 0, %s7, %s5
  // Predicated region
  $region2: #{resnet_forward.22} parent=0 // pred_check
    _
  $region3: #{resnet_forward.22} parent=0 // pred_check_branch
    %10 = sbr.rel (0) target = $region5
  $region4: #{resnet_forward.22} parent=0 // pred_region
    _
  $region5: #{resnet_forward.22} parent=0 // pred_fallthru
    _
  // Predicated region
  $region6: #{resnet_forward.22} parent=0 // pred_check
    _
  $region7: #{resnet_forward.22} parent=0 // pred_check_branch
    %12 = sbr.rel (0) target = $region9
  $region8: #{resnet_forward.22} parent=0 // pred_region
    _
  $region9: #{resnet_forward.22} parent=0 // pred_fallthru
    _
  // Predicated region
  $region10: #{resnet_forward.22} parent=0 // pred_check
    _
  $region11: #{resnet_forward.22} parent=0 // pred_check_branch
    %14 = sbr.rel (0) target = $region13
  $region12: #{resnet_forward.22} parent=0 // pred_region
    _
  $region13: #{resnet_forward.22} parent=0 // pred_fallthru
    _
  // Predicated region
  $region14: #{resnet_forward.22} parent=0 // pred_check
    _
  $region15: #{resnet_forward.22} parent=0 // pred_check_branch
    %16 = sbr.rel (0) target = $region17
  $region16: #{resnet_forward.22} parent=0 // pred_region
    _
  $region17: #{resnet_forward.22} parent=0 // pred_fallthru
    _
  %p18 = scmp.eq.s32.totalorder 0, 0
  // Predicated region
  $region18: #{resnet_forward.22} parent=0 // pred_check
    %p19 = pneg %p18
  $region19: #{resnet_forward.22} parent=0 // pred_check_branch
    %21 = sbr.rel (%p19) target = $region21
  $region20: #{resnet_forward.22} parent=0 // pred_region
    %22 = vst [vmem:[#allocation2] sm:$0xff] 0.0
    %23 = vst [vmem:[#allocation2 + $0x8] sm:$0xff] 0.0
  $region21: #{resnet_forward.22} parent=0 // pred_fallthru
    _
  %v24 = vld [vmem:[#allocation2] sm:$0xff]
  %v25 = vld [vmem:[#allocation2 + $0x8] sm:$0xff]
  %v26 = vld [vmem:[%s0] sm:$0xf]
  %v27 = vld [vmem:[%s0 + $0x4] sm:$0xf]
  %v28 = vld [vmem:[%s1] sm:$0xf]
  %v29 = vld [vmem:[%s1 + $0x4] sm:$0xf]
  %v30 = vld [vmem:[%s1 + $0x8] sm:$0xf]
  %v31 = vld [vmem:[%s1 + $0xc] sm:$0xf]
  %v32 = vld [vmem:[%s1 + $0x10] sm:$0xf]
  %v33 = vld [vmem:[%s1 + $0x14] sm:$0xf]
  %v34 = vld [vmem:[%s1 + $0x18] sm:$0xf]
  %v35 = vld [vmem:[%s1 + $0x1c] sm:$0xf]
  %v36 = vld [vmem:[%s1 + $0x20] sm:$0xf]
  %v37 = vld [vmem:[%s1 + $0x24] sm:$0xf]
  %v38 = vld [vmem:[%s1 + $0x28] sm:$0xf]
  %v39 = vld [vmem:[%s1 + $0x2c] sm:$0xf]
  %v40 = vld [vmem:[%s1 + $0x30] sm:$0xf]
  %v41 = vld [vmem:[%s1 + $0x34] sm:$0xf]
  %v42 = vld [vmem:[%s1 + $0x38] sm:$0xf]
  %v43 = vld [vmem:[%s1 + $0x3c] sm:$0xf]
  %v46 = vunpack.c.l.b16 %v26
  %v47 = vunpack.c.l.b16 %v27
  %v48 = vpack.c.b16 %v47, %v46
  %v66 = vunpack.c.l.b16 %v28
  %v67 = vunpack.c.l.b16 %v29
  %v68 = vunpack.c.l.b16 %v30
  %v69 = vunpack.c.l.b16 %v31
  %v70 = vunpack.c.l.b16 %v32
  %v71 = vunpack.c.l.b16 %v33
  %v72 = vunpack.c.l.b16 %v34
  %v73 = vunpack.c.l.b16 %v35
  %v74 = vunpack.c.l.b16 %v36
  %v75 = vunpack.c.l.b16 %v37
  %v76 = vunpack.c.l.b16 %v38
  %v77 = vunpack.c.l.b16 %v39
  %v78 = vunpack.c.l.b16 %v40
  %v79 = vunpack.c.l.b16 %v41
  %v80 = vunpack.c.l.b16 %v42
  %v81 = vunpack.c.l.b16 %v43
  %v82 = vpack.c.b16 %v67, %v66
  %v83 = vpack.c.b16 %v69, %v68
  %v84 = vpack.c.b16 %v71, %v70
  %v85 = vpack.c.b16 %v73, %v72
  %v86 = vpack.c.b16 %v75, %v74
  %v87 = vpack.c.b16 %v77, %v76
  %v88 = vpack.c.b16 %v79, %v78
  %v89 = vpack.c.b16 %v81, %v80
  %98 = vmatprep.subr.bf16.mxu0 0
  %99 = vmatpush1.bf16.msra.mxu0 %v89
  %100 = vmatprep.subr.bf16.mxu0 0
  %101 = vmatpush1.bf16.msra.mxu0 %v88
  %102 = vmatprep.subr.bf16.mxu0 0
  %103 = vmatpush1.bf16.msra.mxu0 %v87
  %104 = vmatprep.subr.bf16.mxu0 0
  %105 = vmatpush1.bf16.msra.mxu0 %v86
  %106 = vmatprep.subr.bf16.mxu0 0
  %107 = vmatpush1.bf16.msra.mxu0 %v85
  %108 = vmatprep.subr.bf16.mxu0 0
  %109 = vmatpush1.bf16.msra.mxu0 %v84
  %110 = vmatprep.subr.bf16.mxu0 0
  %111 = vmatpush1.bf16.msra.mxu0 %v83
  %112 = vmatprep.subr.bf16.mxu0 0
  %113 = vmatpush1.bf16.msra.mxu0 %v82
  %114 = vmatprep.subr.bf16.mxu0 0
  %115 = vmatpush2.bf16.msra.mxu0 0
  %116 = vmatprep.subr.bf16.mxu0 0
  %117 = vmatpush2.bf16.msra.mxu0 0
  %118 = vmatprep.subr.bf16.mxu0 0
  %119 = vmatpush2.bf16.msra.mxu0 0
  %120 = vmatprep.subr.bf16.mxu0 0
  %121 = vmatpush2.bf16.msra.mxu0 0
  %122 = vmatprep.subr.bf16.mxu0 0
  %123 = vmatpush2.bf16.msra.mxu0 0
  %124 = vmatprep.subr.bf16.mxu0 0
  %125 = vmatpush2.bf16.msra.mxu0 0
  %126 = vmatprep.subr.bf16.mxu0 0
  %127 = vmatpush2.bf16.msra.mxu0 0
  %128 = vmatprep.subr.bf16.mxu0 0
  %129 = vmatpush2.bf16.msra.mxu0 0
  %130 = vmatprep.mubr.bf16.mxu0 0
  %131 = vmatmul.mubr.bf16.gmra.mxu0 %v48
  %v132 = vpop.f32.mrf.mxu0
  %v133 = vadd.f32 0.0, %v132
  %v134 = vpop.f32.mrf.mxu0
  %v135 = vpop.f32.mrf.mxu0
  %v136 = vadd.f32 0.0, %v135
  %v137 = vpop.f32.mrf.mxu0
  %138 = vdwg.mxu0
  %v139 = vadd.f32 %v24, %v133
  %v140 = vadd.f32 %v25, %v136
  %141 = vst [vmem:[#allocation2] sm:$0xff] %v139
  %142 = vst [vmem:[#allocation2 + $0x8] sm:$0xff] %v140
  // Predicated region
  $region22: #{resnet_forward.22} parent=0 // pred_check
    %p143 = pneg %p18
  $region23: #{resnet_forward.22} parent=0 // pred_check_branch
    %145 = sbr.rel (%p143) target = $region25
  $region24: #{resnet_forward.22} parent=0 // pred_region
    %v146 = vld [vmem:[#allocation2] sm:$0xff]
    %v147 = vld [vmem:[#allocation2 + $0x8] sm:$0xff]
    %v148 = vadd.f32 %v146, %v147
    %v149 = vrot.slane %v148, 4
    %v150 = vadd.f32 %v148, %v149
    %v151 = vrot.slane %v150, 2
    %v152 = vadd.f32 %v150, %v151
    %v153 = vrot.slane %v152, 1
    %v154 = vadd.f32 %v152, %v153
    %v155 = vmul.f32 %v154, 0.5
    %v156 = vlaneseq
    %v157 = vshrl.u32 %v156, 7
    %v158 = vadd.s32 %v157, 8
    %vm159 = vcmp.lt.s32.totalorder %v157, 2
    %vm160 = vcmp.lt.s32.totalorder %v158, 2
    %v161 = vsub.f32 %v146, %v155
    %v162 = vsub.f32 %v147, %v155
    %v163 = vsel %vm159, %v161, 0.0
    %v164 = vsel %vm160, %v162, 0.0
    %v165 = vmul.f32 %v163, %v163
    %v166 = vmul.f32 %v164, %v164
    %v167 = vadd.f32 %v165, %v166
    %v168 = vrot.slane %v167, 4
    %v169 = vadd.f32 %v167, %v168
    %v170 = vrot.slane %v169, 2
    %v171 = vadd.f32 %v169, %v170
    %v172 = vrot.slane %v171, 1
    %v173 = vadd.f32 %v171, %v172
    %v174 = vmul.f32 %v173, 0.5
    %v175 = vld [vmem:[%s2] sm:$0x1]
    %v176 = vadd.f32 %v174, 1e-05
    %v177 = vrsqrt.pop %v176
    %v178 = vmul.f32 %v175, %v177
    %v179 = vld [vmem:[%s3] sm:$0x1]
    %v180 = vmul.f32 %v155, %v178
    %v181 = vsub.f32 %v179, %v180
    %v183 = vlaneseq
    %v184 = vshrl.u32 %v183, 7
    %v185 = vsub.s32 0, %v184
    %v186 = vrot.slane %v178, %v185
    %v188 = vmul.f32 %v146, %v186
    %v189 = vmul.f32 %v147, %v186
    %v191 = vlaneseq
    %v192 = vshrl.u32 %v191, 7
    %v193 = vsub.s32 0, %v192
    %v194 = vrot.slane %v181, %v193
    %v196 = vadd.f32 %v188, %v194
    %v197 = vadd.f32 %v189, %v194
    %v198 = vpack.c.bf16 %v197, %v196
    %v200 = vunpack.c.l.b16 %v198
    %v201 = vunpack.c.h.b16 %v198
    %v202 = vpack.c.b16 %v200, %v200
    %v203 = vpack.c.b16 %v201, %v201
    %206 = vst [vmem:[%s4] sm:$0xf] %v202
    %207 = vst [vmem:[%s4 + $0x4] sm:$0xf] %v203
  $region25: #{resnet_forward.22} parent=0 // pred_fallthru
    _
  // Predicated region
  $region26: #{resnet_forward.22} parent=0 // pred_check
    _
  $region27: #{resnet_forward.22} parent=0 // pred_check_branch
    %209 = sbr.rel (0) target = $region29
  $region28: #{resnet_forward.22} parent=0 // pred_region
    _
  $region29: #{resnet_forward.22} parent=0 // pred_fallthru
    _
  // Predicated region
  $region30: #{resnet_forward.22} parent=0 // pred_check
    _
  $region31: #{resnet_forward.22} parent=0 // pred_check_branch
    %211 = sbr.rel (0) target = $region33
  $region32: #{resnet_forward.22} parent=0 // pred_region
    _
  $region33: #{resnet_forward.22} parent=0 // pred_fallthru
    _

// kernel: resnet_forward.23
$region0: #{resnet_forward.23}
  #allocation0 [shape = 'u32[]', space=smem, size = 0x4, offset = 0x4, fixed_abs, tag = 'smem constant byte address 0x4 - core index']
  #allocation1 [shape = 'u32[144,128]{1,0:T(1,128)}', space=vmem, size = 0x12000, scoped, tag = 'internal scratch']
  #allocation2 [shape = 'f32[16,128]{1,0:T(8,128)}', space=vmem, size = 0x2000, scoped, tag = 'scratch operand']
  %s0 = inlined_call_operand.vmem [shape: bf16[16,1152], index: 0, kind: input, shape index: {}]
  %s1 = inlined_call_operand.vmem [shape: bf16[1152,128], index: 1, kind: input, shape index: {}]
  %s2 = inlined_call_operand.vmem [shape: f32[1,128], index: 2, kind: input, shape index: {}]
  %s3 = inlined_call_operand.vmem [shape: f32[1,128], index: 3, kind: input, shape index: {}]
  %s4 = inlined_call_operand.vmem [shape: bf16[16,128], index: 4, kind: input, shape index: {}]
  %s5 = inlined_call_operand.vmem [shape: bf16[16,128], index: 5, kind: output, shape index: {}]
  %s6 = sld [smem:[#allocation0]]
  $region102: #{resnet_forward.23} parent=0
    _
  %s8 = ssub.s32 1, %s6
  %s9 = scalar_select 0, %s8, %s6
  $region1: #{resnet_forward.23} parent=0
    #allocation3 [shape = 'u8[8192]{0}', space=vmem, size = 0x2000, scoped, tag = 'input window, operand 0']
    loop: start=0, step=1, limit=11
    $region2: #{resnet_forward.23} parent=1 // loop_pre_header
      _
    $region3: #{resnet_forward.23} parent=1 // loop_header
      %s11 = sphi 0, %s15
      %p12 = scmp.ge.s32.totalorder %s11, 11
      %s21 = sphi 0, %s23
      %s24 = sphi 0, %s21
      %s25 = sphi 0, %s24
      %s41 = sphi 0, %s25
      %s47 = sphi 0, %s49
      %s50 = sphi 0, %s47
      %s51 = sphi 0, %s50
      %s67 = sphi 0, %s51
      %s71 = sphi 0, %s71
      %s73 = sphi 0, %s71
      %s74 = sphi 0, %s73
      %s88 = sphi 0, %s74
      %s92 = sphi 0, %s92
      %s94 = sphi 0, %s92
      %s95 = sphi 0, %s94
      %s109 = sphi 0, %s95
      %s113 = sphi 0, %s113
      %s115 = sphi 0, %s113
      %s116 = sphi 0, %s115
      %s130 = sphi 0, %s116
      %s134 = sphi 0, %s134
      %s136 = sphi 0, %s134
      %s137 = sphi 0, %s136
      %s151 = sphi 0, %s137
    $region4: #{resnet_forward.23} parent=1 // loop_header_branch
      %14 = sbr.rel (%p12) target = $region8
    $region5: #{resnet_forward.23} parent=1 // loop_body
      %s16 = ssub.s32 %s11, 1
      %s17 = ssub.s32 %s11, 2
      %s18 = sadd.s32 %s11, 1
      %s19 = ssub.s32 %s11, %s18
      %p20 = scmp.eq.s32.totalorder %s19, 0
      %s22 = sadd.s32 %s21, 1
      %s23 = scalar_select %p20, %s21, %s22
      %p26 = pneg %p20
      %p27 = scmp.eq.s32.totalorder %s11, 8
      %p28 = por %p26, %p27
      %p29 = scmp.ne.s32.totalorder %s21, %s24
      %p30 = scmp.eq.s32.totalorder %s11, 0
      %p31 = por %p29, %p30
      %p32 = scmp.ne.s32.totalorder %s21, %s24
      %p33 = scmp.eq.s32.totalorder %s16, 8
      %p34 = por %p32, %p33
      %p35 = scmp.ne.s32.totalorder %s24, %s25
      %p36 = scmp.eq.s32.totalorder %s16, 0
      %p37 = por %p35, %p36
      %p38 = scmp.ne.s32.totalorder %s24, %s25
      %p39 = scmp.eq.s32.totalorder %s17, 8
      %p40 = por %p38, %p39
      %p42 = scmp.ne.s32.totalorder %s25, %s41
      %p43 = scmp.eq.s32.totalorder %s17, 0
      %p44 = por %p42, %p43
      %s45 = ssub.s32 %s11, %s18
      %p46 = scmp.eq.s32.totalorder %s45, 0
      %s48 = sadd.s32 %s47, 1
      %s49 = scalar_select %p46, %s47, %s48
      %p52 = pneg %p46
      %p53 = scmp.eq.s32.totalorder %s11, 8
      %p54 = por %p52, %p53
      %p55 = scmp.ne.s32.totalorder %s47, %s50
      %p56 = scmp.eq.s32.totalorder %s11, 0
      %p57 = por %p55, %p56
      %p58 = scmp.ne.s32.totalorder %s47, %s50
      %p59 = scmp.eq.s32.totalorder %s16, 8
      %p60 = por %p58, %p59
      %p61 = scmp.ne.s32.totalorder %s50, %s51
      %p62 = scmp.eq.s32.totalorder %s16, 0
      %p63 = por %p61, %p62
      %p64 = scmp.ne.s32.totalorder %s50, %s51
      %p65 = scmp.eq.s32.totalorder %s17, 8
      %p66 = por %p64, %p65
      %p68 = scmp.ne.s32.totalorder %s51, %s67
      %p69 = scmp.eq.s32.totalorder %s17, 0
      %p70 = por %p68, %p69
      %s72 = sadd.s32 %s71, 1
      %p75 = scmp.eq.s32.totalorder %s11, 8
      %p76 = scmp.ne.s32.totalorder %s71, %s73
      %p77 = scmp.eq.s32.totalorder %s11, 0
      %p78 = por %p76, %p77
      %p79 = scmp.ne.s32.totalorder %s71, %s73
      %p80 = scmp.eq.s32.totalorder %s16, 8
      %p81 = por %p79, %p80
      %p82 = scmp.ne.s32.totalorder %s73, %s74
      %p83 = scmp.eq.s32.totalorder %s16, 0
      %p84 = por %p82, %p83
      %p85 = scmp.ne.s32.totalorder %s73, %s74
      %p86 = scmp.eq.s32.totalorder %s17, 8
      %p87 = por %p85, %p86
      %p89 = scmp.ne.s32.totalorder %s74, %s88
      %p90 = scmp.eq.s32.totalorder %s17, 0
      %p91 = por %p89, %p90
      %s93 = sadd.s32 %s92, 1
      %p96 = scmp.eq.s32.totalorder %s11, 8
      %p97 = scmp.ne.s32.totalorder %s92, %s94
      %p98 = scmp.eq.s32.totalorder %s11, 0
      %p99 = por %p97, %p98
      %p100 = scmp.ne.s32.totalorder %s92, %s94
      %p101 = scmp.eq.s32.totalorder %s16, 8
      %p102 = por %p100, %p101
      %p103 = scmp.ne.s32.totalorder %s94, %s95
      %p104 = scmp.eq.s32.totalorder %s16, 0
      %p105 = por %p103, %p104
      %p106 = scmp.ne.s32.totalorder %s94, %s95
      %p107 = scmp.eq.s32.totalorder %s17, 8
      %p108 = por %p106, %p107
      %p110 = scmp.ne.s32.totalorder %s95, %s109
      %p111 = scmp.eq.s32.totalorder %s17, 0
      %p112 = por %p110, %p111
      %s114 = sadd.s32 %s113, 1
      %p117 = scmp.eq.s32.totalorder %s11, 8
      %p118 = scmp.ne.s32.totalorder %s113, %s115
      %p119 = scmp.eq.s32.totalorder %s11, 0
      %p120 = por %p118, %p119
      %p121 = scmp.ne.s32.totalorder %s113, %s115
      %p122 = scmp.eq.s32.totalorder %s16, 8
      %p123 = por %p121, %p122
      %p124 = scmp.ne.s32.totalorder %s115, %s116
      %p125 = scmp.eq.s32.totalorder %s16, 0
      %p126 = por %p124, %p125
      %p127 = scmp.ne.s32.totalorder %s115, %s116
      %p128 = scmp.eq.s32.totalorder %s17, 8
      %p129 = por %p127, %p128
      %p131 = scmp.ne.s32.totalorder %s116, %s130
      %p132 = scmp.eq.s32.totalorder %s17, 0
      %p133 = por %p131, %p132
      %s135 = sadd.s32 %s134, 1
      %p138 = scmp.eq.s32.totalorder %s11, 8
      %p139 = scmp.ne.s32.totalorder %s134, %s136
      %p140 = scmp.eq.s32.totalorder %s11, 0
      %p141 = por %p139, %p140
      %p142 = scmp.ne.s32.totalorder %s134, %s136
      %p143 = scmp.eq.s32.totalorder %s16, 8
      %p144 = por %p142, %p143
      %p145 = scmp.ne.s32.totalorder %s136, %s137
      %p146 = scmp.eq.s32.totalorder %s16, 0
      %p147 = por %p145, %p146
      %p148 = scmp.ne.s32.totalorder %s136, %s137
      %p149 = scmp.eq.s32.totalorder %s17, 8
      %p150 = por %p148, %p149
      %p152 = scmp.ne.s32.totalorder %s137, %s151
      %p153 = scmp.eq.s32.totalorder %s17, 0
      %p154 = por %p152, %p153
      %p155 = scmp.le.s32.totalorder 1, %s11
      %p156 = scmp.lt.s32.totalorder %s11, 10
      %p157 = pnand %p155, %p156
      %p158 = pneg %p157
      // Predicated region
      $region9: #{resnet_forward.23} parent=5 // pred_check
        _
      $region10: #{resnet_forward.23} parent=5 // pred_check_branch
        %160 = sbr.rel (%p157) target = $region12
      $region11: #{resnet_forward.23} parent=5 // pred_region
        %s161 = ssub.s32 %s11, 1
        // Predicated region
        $region13: #{resnet_forward.23} parent=11 // pred_check
          %p162 = pneg %p84
        $region14: #{resnet_forward.23} parent=11 // pred_check_branch
          %164 = sbr.rel (%p162) target = $region16
        $region15: #{resnet_forward.23} parent=11 // pred_region
          _
        $region16: #{resnet_forward.23} parent=11 // pred_fallthru
          _
        // Predicated region
        $region17: #{resnet_forward.23} parent=11 // pred_check
          %p165 = pneg %p105
        $region18: #{resnet_forward.23} parent=11 // pred_check_branch
          %167 = sbr.rel (%p165) target = $region20
        $region19: #{resnet_forward.23} parent=11 // pred_region
          _
        $region20: #{resnet_forward.23} parent=11 // pred_fallthru
          _
        // Predicated region
        $region21: #{resnet_forward.23} parent=11 // pred_check
          %p168 = pneg %p126
        $region22: #{resnet_forward.23} parent=11 // pred_check_branch
          %170 = sbr.rel (%p168) target = $region24
        $region23: #{resnet_forward.23} parent=11 // pred_region
          _
        $region24: #{resnet_forward.23} parent=11 // pred_fallthru
          _
      $region12: #{resnet_forward.23} parent=5 // pred_fallthru
        _
      %p171 = scmp.lt.s32.totalorder %s11, 9
      // Predicated region
      $region25: #{resnet_forward.23} parent=5 // pred_check
        %p172 = pneg %p171
      $region26: #{resnet_forward.23} parent=5 // pred_check_branch
        %174 = sbr.rel (%p172) target = $region28
      $region27: #{resnet_forward.23} parent=5 // pred_region
        // Predicated region
        $region29: #{resnet_forward.23} parent=27 // pred_check
          %p175 = pneg %p31
        $region30: #{resnet_forward.23} parent=27 // pred_check_branch
          %177 = sbr.rel (%p175) target = $region32
        $region31: #{resnet_forward.23} parent=27 // pred_region
          %s178 = sand.u32 %s21, 1
          %s179 = sand.u32 %s21, 1
          %s180 = smul.addr %s179, 8
          %s181 = scalar_lea.vmem [#allocation3], %s180
          %s182 = smul.addr %s11, 4
          %s183 = scalar_lea.vmem %s0, %s182
          // Predicated region
          $region33: #{resnet_forward.23} parent=31 // pred_check
            _
          $region34: #{resnet_forward.23} parent=31 // pred_check_branch
            %185 = sbr.rel (0) target = $region36
          $region35: #{resnet_forward.23} parent=31 // pred_region
            // Predicated region
            $region37: #{resnet_forward.23} parent=35 // pred_check
              _
            $region38: #{resnet_forward.23} parent=35 // pred_check_branch
              %187 = sbr.rel target = $region40
            $region39: #{resnet_forward.23} parent=35 // pred_region
              // Predicated region
              $region52: #{resnet_forward.23} parent=39 // pred_check
                _
              $region53: #{resnet_forward.23} parent=39 // pred_check_branch
                %205 = sbr.rel (0) target = $region55
              $region54: #{resnet_forward.23} parent=39 // pred_region
                loop: start=0, step=1, limit=1
                $region56: #{resnet_forward.23} parent=54 // loop_pre_header
                  _
                $region57: #{resnet_forward.23} parent=54 // loop_header
                  %s207 = sphi 0, %s211
                  %p208 = scmp.ge.s32.totalorder %s207, 1
                  %s212 = sphi %s183, %s183
                  %s213 = sphi %s181, %s181
                $region58: #{resnet_forward.23} parent=54 // loop_header_branch
                  %210 = sbr.rel (%p208) target = $region62
                $region59: #{resnet_forward.23} parent=54 // loop_body
                  _
                $region60: #{resnet_forward.23} parent=54 // loop_footer
                  %s211 = sadd.s32 1, %s207
                $region61: #{resnet_forward.23} parent=54 // loop_footer_branch
                  %206 = sbr.rel target = $region57
                $region62: #{resnet_forward.23} parent=54 // loop_exit
                  _
                %s215 = ssub.s32 16, 1
                loop: start=0, step=1, limit=1
                $region63: #{resnet_forward.23} parent=54 // loop_pre_header
                  _
                $region64: #{resnet_forward.23} parent=54 // loop_header
                  %s217 = sphi 0, %s221
                  %p218 = scmp.ge.s32.totalorder %s217, 1
                  %s222 = sphi %s183, %s183
                  %s223 = sphi %s181, %s181
                $region65: #{resnet_forward.23} parent=54 // loop_header_branch
                  %220 = sbr.rel (%p218) target = $region69
                $region66: #{resnet_forward.23} parent=54 // loop_body
                  %v224 = vld [vmem:[%s222] sm:%s215]
                  %225 = vst [vmem:[%s223] sm:%s215] %v224
                  %v226 = vld [vmem:[%s222 + $0x24] sm:%s215]
                  %227 = vst [vmem:[%s223 + $0x4] sm:%s215] %v226
                $region67: #{resnet_forward.23} parent=54 // loop_footer
                  %s221 = sadd.s32 1, %s217
                $region68: #{resnet_forward.23} parent=54 // loop_footer_branch
                  %216 = sbr.rel target = $region64
                $region69: #{resnet_forward.23} parent=54 // loop_exit
                  _
              $region55: #{resnet_forward.23} parent=39 // pred_fallthru
                _
            $region40: #{resnet_forward.23} parent=35 // pred_fallthru
              _
            // Predicated region
            $region41: #{resnet_forward.23} parent=35 // pred_check
              _
            $region42: #{resnet_forward.23} parent=35 // pred_check_branch
              %189 = sbr.rel (0) target = $region44
            $region43: #{resnet_forward.23} parent=35 // pred_region
              %s191 = ssub.s32 16, 1
              loop: start=0, step=1, limit=1
              $region45: #{resnet_forward.23} parent=43 // loop_pre_header
                _
              $region46: #{resnet_forward.23} parent=43 // loop_header
                %s193 = sphi 0, %s197
                %p194 = scmp.ge.s32.totalorder %s193, 1
                %s198 = sphi %s183, %s183
                %s199 = sphi %s181, %s181
              $region47: #{resnet_forward.23} parent=43 // loop_header_branch
                %196 = sbr.rel (%p194) target = $region51
              $region48: #{resnet_forward.23} parent=43 // loop_body
                %v200 = vld [vmem:[%s198] sm:%s191]
                %201 = vst [vmem:[%s199] sm:%s191] %v200
                %v202 = vld [vmem:[%s198 + $0x24] sm:%s191]
                %203 = vst [vmem:[%s199 + $0x4] sm:%s191] %v202
              $region49: #{resnet_forward.23} parent=43 // loop_footer
                %s197 = sadd.s32 1, %s193
              $region50: #{resnet_forward.23} parent=43 // loop_footer_branch
                %192 = sbr.rel target = $region46
              $region51: #{resnet_forward.23} parent=43 // loop_exit
                _
            $region44: #{resnet_forward.23} parent=35 // pred_fallthru
              _
          $region36: #{resnet_forward.23} parent=31 // pred_fallthru
            _
          %228 = vnop
        $region32: #{resnet_forward.23} parent=27 // pred_fallthru
          _
        // Predicated region
        $region70: #{resnet_forward.23} parent=27 // pred_check
          %p229 = pneg %p57
        $region71: #{resnet_forward.23} parent=27 // pred_check_branch
          %231 = sbr.rel (%p229) target = $region73
        $region72: #{resnet_forward.23} parent=27 // pred_region
          %s232 = smul.u32 16, %s11
          %p233 = scmp.lt.s32.totalorder %s232, 143
          %s234 = scalar_select %p233, %s232, 143
          %s235 = smul.addr %s234, 4
          %s236 = scalar_lea.vmem %s1, %s235
          %s237 = smul.u32 16, %s11
        $region73: #{resnet_forward.23} parent=27 // pred_fallthru
          _
      $region28: #{resnet_forward.23} parent=5 // pred_fallthru
        _
      %p238 = scmp.le.s32.totalorder 1, %s11
      %p239 = scmp.lt.s32.totalorder %s11, 10
      %p240 = pnand %p238, %p239
      %p241 = pneg %p240
      // Predicated region
      $region74: #{resnet_forward.23} parent=5 // pred_check
        _
      $region75: #{resnet_forward.23} parent=5 // pred_check_branch
        %243 = sbr.rel (%p240) target = $region77
      $region76: #{resnet_forward.23} parent=5 // pred_region
        %s244 = ssub.s32 %s11, 1
        %s245 = sand.u32 %s24, 1
        %s246 = sand.u32 %s24, 1
        %s247 = smul.addr %s246, 8
        %s248 = scalar_lea.vmem [#allocation3], %s247
        // Predicated region
        $region78: #{resnet_forward.23} parent=76 // pred_check
          %p249 = pneg %p37
        $region79: #{resnet_forward.23} parent=76 // pred_check_branch
          %251 = sbr.rel (%p249) target = $region81
        $region80: #{resnet_forward.23} parent=76 // pred_region
          _
        $region81: #{resnet_forward.23} parent=76 // pred_fallthru
          _
        %s252 = sand.u32 %s24, 1
        %s253 = sand.u32 %s24, 1
        %s254 = smul.addr %s253, 8
        %s255 = scalar_lea.vmem [#allocation3], %s254
        %p256 = pneg %p37
        %p257 = pneg %p34
        %s258 = smul.u32 16, %s16
        %p259 = scmp.lt.s32.totalorder %s258, 143
        %s260 = scalar_select %p259, %s258, 143
        %s261 = smul.addr %s260, 4
        %s262 = scalar_lea.vmem %s1, %s261
        %p263 = pneg %p63
        %p264 = pneg %p60
        %p265 = pneg %p84
        %p266 = pneg %p81
        %p267 = pneg %p105
        %p268 = pneg %p102
        %p269 = pneg %p126
        %p270 = pneg %p123
        %p271 = pneg %p147
        %p272 = pneg %p144
        %s273 = smul.u32 16, %s16
        %p274 = scmp.lt.s32.totalorder %s273, 143
        %s275 = scalar_select %p274, %s273, 143
        %s276 = smul.addr %s275, 4
        %s277 = scalar_lea.vmem %s1, %s276
        %s278 = smul.u32 16, %s16
        %p280 = scmp.eq.s32.totalorder %s16, 0
        // Predicated region
        $region82: #{resnet_forward.23} parent=76 // pred_check
          %p281 = pneg %p280
        $region83: #{resnet_forward.23} parent=76 // pred_check_branch
          %283 = sbr.rel (%p281) target = $region85
        $region84: #{resnet_forward.23} parent=76 // pred_region
          %284 = vst [vmem:[#allocation2] sm:$0xff] 0.0
          %285 = vst [vmem:[#allocation2 + $0x8] sm:$0xff] 0.0
        $region85: #{resnet_forward.23} parent=76 // pred_fallthru
          _
        %v286 = vld [vmem:[#allocation2] sm:$0xff]
        %v287 = vld [vmem:[#allocation2 + $0x8] sm:$0xff]
        %v288 = vld [vmem:[%s248] sm:$0xf]
        %v289 = vld [vmem:[%s248 + $0x4] sm:$0xf]
        %v290 = vld [vmem:[%s277] sm:$0xf]
        %v291 = vld [vmem:[%s277 + $0x4] sm:$0xf]
        %v292 = vld [vmem:[%s277 + $0x8] sm:$0xf]
        %v293 = vld [vmem:[%s277 + $0xc] sm:$0xf]
        %v294 = vld [vmem:[%s277 + $0x10] sm:$0xf]
        %v295 = vld [vmem:[%s277 + $0x14] sm:$0xf]
        %v296 = vld [vmem:[%s277 + $0x18] sm:$0xf]
        %v297 = vld [vmem:[%s277 + $0x1c] sm:$0xf]
        %v298 = vld [vmem:[%s277 + $0x20] sm:$0xf]
        %v299 = vld [vmem:[%s277 + $0x24] sm:$0xf]
        %v300 = vld [vmem:[%s277 + $0x28] sm:$0xf]
        %v301 = vld [vmem:[%s277 + $0x2c] sm:$0xf]
        %v302 = vld [vmem:[%s277 + $0x30] sm:$0xf]
        %v303 = vld [vmem:[%s277 + $0x34] sm:$0xf]
        %v304 = vld [vmem:[%s277 + $0x38] sm:$0xf]
        %v305 = vld [vmem:[%s277 + $0x3c] sm:$0xf]
        %v308 = vunpack.c.l.b16 %v288
        %v309 = vunpack.c.l.b16 %v289
        %v310 = vpack.c.b16 %v309, %v308
        %v328 = vunpack.c.l.b16 %v290
        %v329 = vunpack.c.l.b16 %v291
        %v330 = vunpack.c.l.b16 %v292
        %v331 = vunpack.c.l.b16 %v293
        %v332 = vunpack.c.l.b16 %v294
        %v333 = vunpack.c.l.b16 %v295
        %v334 = vunpack.c.l.b16 %v296
        %v335 = vunpack.c.l.b16 %v297
        %v336 = vunpack.c.l.b16 %v298
        %v337 = vunpack.c.l.b16 %v299
        %v338 = vunpack.c.l.b16 %v300
        %v339 = vunpack.c.l.b16 %v301
        %v340 = vunpack.c.l.b16 %v302
        %v341 = vunpack.c.l.b16 %v303
        %v342 = vunpack.c.l.b16 %v304
        %v343 = vunpack.c.l.b16 %v305
        %v344 = vpack.c.b16 %v329, %v328
        %v345 = vpack.c.b16 %v331, %v330
        %v346 = vpack.c.b16 %v333, %v332
        %v347 = vpack.c.b16 %v335, %v334
        %v348 = vpack.c.b16 %v337, %v336
        %v349 = vpack.c.b16 %v339, %v338
        %v350 = vpack.c.b16 %v341, %v340
        %v351 = vpack.c.b16 %v343, %v342
        %360 = vmatprep.subr.bf16.mxu0 0
        %361 = vmatpush1.bf16.msra.mxu0 %v351
        %362 = vmatprep.subr.bf16.mxu0 0
        %363 = vmatpush1.bf16.msra.mxu0 %v350
        %364 = vmatprep.subr.bf16.mxu0 0
        %365 = vmatpush1.bf16.msra.mxu0 %v349
        %366 = vmatprep.subr.bf16.mxu0 0
        %367 = vmatpush1.bf16.msra.mxu0 %v348
        %368 = vmatprep.subr.bf16.mxu0 0
        %369 = vmatpush1.bf16.msra.mxu0 %v347
        %370 = vmatprep.subr.bf16.mxu0 0
        %371 = vmatpush1.bf16.msra.mxu0 %v346
        %372 = vmatprep.subr.bf16.mxu0 0
        %373 = vmatpush1.bf16.msra.mxu0 %v345
        %374 = vmatprep.subr.bf16.mxu0 0
        %375 = vmatpush1.bf16.msra.mxu0 %v344
        %376 = vmatprep.subr.bf16.mxu0 0
        %377 = vmatpush2.bf16.msra.mxu0 0
        %378 = vmatprep.subr.bf16.mxu0 0
        %379 = vmatpush2.bf16.msra.mxu0 0
        %380 = vmatprep.subr.bf16.mxu0 0
        %381 = vmatpush2.bf16.msra.mxu0 0
        %382 = vmatprep.subr.bf16.mxu0 0
        %383 = vmatpush2.bf16.msra.mxu0 0
        %384 = vmatprep.subr.bf16.mxu0 0
        %385 = vmatpush2.bf16.msra.mxu0 0
        %386 = vmatprep.subr.bf16.mxu0 0
        %387 = vmatpush2.bf16.msra.mxu0 0
        %388 = vmatprep.subr.bf16.mxu0 0
        %389 = vmatpush2.bf16.msra.mxu0 0
        %390 = vmatprep.subr.bf16.mxu0 0
        %391 = vmatpush2.bf16.msra.mxu0 0
        %392 = vmatprep.mubr.bf16.mxu0 0
        %393 = vmatmul.mubr.bf16.gmra.mxu0 %v310
        %v394 = vpop.f32.mrf.mxu0
        %v395 = vadd.f32 0.0, %v394
        %v396 = vpop.f32.mrf.mxu0
        %v397 = vpop.f32.mrf.mxu0
        %v398 = vadd.f32 0.0, %v397
        %v399 = vpop.f32.mrf.mxu0
        %400 = vdwg.mxu0
        %v401 = vadd.f32 %v286, %v395
        %v402 = vadd.f32 %v287, %v398
        %403 = vst [vmem:[#allocation2] sm:$0xff] %v401
        %404 = vst [vmem:[#allocation2 + $0x8] sm:$0xff] %v402
        %p405 = scmp.eq.s32.totalorder %s16, 8
        // Predicated region
        $region86: #{resnet_forward.23} parent=76 // pred_check
          %p406 = pneg %p405
        $region87: #{resnet_forward.23} parent=76 // pred_check_branch
          %408 = sbr.rel (%p406) target = $region89
        $region88: #{resnet_forward.23} parent=76 // pred_region
          %v409 = vld [vmem:[#allocation2] sm:$0xff]
          %v410 = vld [vmem:[#allocation2 + $0x8] sm:$0xff]
          %v411 = vadd.f32 %v409, %v410
          %v412 = vrot.slane %v411, 4
          %v413 = vadd.f32 %v411, %v412
          %v414 = vrot.slane %v413, 2
          %v415 = vadd.f32 %v413, %v414
          %v416 = vrot.slane %v415, 1
          %v417 = vadd.f32 %v415, %v416
          %v418 = vmul.f32 %v417, 0.5
          %v419 = vlaneseq
          %v420 = vshrl.u32 %v419, 7
          %v421 = vadd.s32 %v420, 8
          %vm422 = vcmp.lt.s32.totalorder %v420, 2
          %vm423 = vcmp.lt.s32.totalorder %v421, 2
          %v424 = vsub.f32 %v409, %v418
          %v425 = vsub.f32 %v410, %v418
          %v426 = vsel %vm422, %v424, 0.0
          %v427 = vsel %vm423, %v425, 0.0
          %v428 = vmul.f32 %v426, %v426
          %v429 = vmul.f32 %v427, %v427
          %v430 = vadd.f32 %v428, %v429
          %v431 = vrot.slane %v430, 4
          %v432 = vadd.f32 %v430, %v431
          %v433 = vrot.slane %v432, 2
          %v434 = vadd.f32 %v432, %v433
          %v435 = vrot.slane %v434, 1
          %v436 = vadd.f32 %v434, %v435
          %v437 = vmul.f32 %v436, 0.5
          %v438 = vld [vmem:[%s2] sm:$0x1]
          %v439 = vadd.f32 %v437, 1e-05
          %v440 = vrsqrt.pop %v439
          %v441 = vmul.f32 %v438, %v440
          %v442 = vld [vmem:[%s3] sm:$0x1]
          %v443 = vmul.f32 %v418, %v441
          %v444 = vsub.f32 %v442, %v443
          %v446 = vlaneseq
          %v447 = vshrl.u32 %v446, 7
          %v448 = vsub.s32 0, %v447
          %v449 = vrot.slane %v441, %v448
          %v451 = vmul.f32 %v409, %v449
          %v452 = vmul.f32 %v410, %v449
          %v454 = vlaneseq
          %v455 = vshrl.u32 %v454, 7
          %v456 = vsub.s32 0, %v455
          %v457 = vrot.slane %v444, %v456
          %v459 = vadd.f32 %v451, %v457
          %v460 = vadd.f32 %v452, %v457
          %v461 = vld [vmem:[%s4] sm:$0xf]
          %v462 = vld [vmem:[%s4 + $0x4] sm:$0xf]
          %v463 = vunpack.c.l.bf16 %v461
          %v464 = vunpack.c.l.bf16 %v462
          %v465 = vadd.f32 %v459, %v463
          %v466 = vadd.f32 %v460, %v464
          %v467 = vmax.f32 %v465, 0.0
          %v468 = vmax.f32 %v466, 0.0
          %v469 = vpack.c.bf16 %v468, %v467
          %v471 = vunpack.c.l.b16 %v469
          %v472 = vunpack.c.h.b16 %v469
          %v473 = vpack.c.b16 %v471, %v471
          %v474 = vpack.c.b16 %v472, %v472
          %477 = vst [vmem:[%s5] sm:$0xf] %v473
          %478 = vst [vmem:[%s5 + $0x4] sm:$0xf] %v474
        $region89: #{resnet_forward.23} parent=76 // pred_fallthru
          _
        // Predicated region
        $region90: #{resnet_forward.23} parent=76 // pred_check
          %p479 = pneg %p144
        $region91: #{resnet_forward.23} parent=76 // pred_check_branch
          %481 = sbr.rel (%p479) target = $region93
        $region92: #{resnet_forward.23} parent=76 // pred_region
          _
        $region93: #{resnet_forward.23} parent=76 // pred_fallthru
          _
        // Predicated region
        $region94: #{resnet_forward.23} parent=76 // pred_check
          %p482 = pneg %p144
        $region95: #{resnet_forward.23} parent=76 // pred_check_branch
          %484 = sbr.rel (%p482) target = $region97
        $region96: #{resnet_forward.23} parent=76 // pred_region
          _
        $region97: #{resnet_forward.23} parent=76 // pred_fallthru
          _
      $region77: #{resnet_forward.23} parent=5 // pred_fallthru
        _
      %p485 = scmp.le.s32.totalorder 2, %s11
      // Predicated region
      $region98: #{resnet_forward.23} parent=5 // pred_check
        %p486 = pneg %p485
      $region99: #{resnet_forward.23} parent=5 // pred_check_branch
        %488 = sbr.rel (%p486) target = $region101
      $region100: #{resnet_forward.23} parent=5 // pred_region
        %s489 = ssub.s32 %s11, 2
      $region101: #{resnet_forward.23} parent=5 // pred_fallthru
        _
    $region6: #{resnet_forward.23} parent=1 // loop_footer
      %s15 = sadd.s32 1, %s11
    $region7: #{resnet_forward.23} parent=1 // loop_footer_branch
      %10 = sbr.rel target = $region3
    $region8: #{resnet_forward.23} parent=1 // loop_exit
      _

</llo_original>
